<compile_context>
chip_gen: v5e
topology: v5e:2x2
jax: 0.10.0
libtpu: 0.0.40
codegen_flags: <defaults>
</compile_context>

<pallas_src>
import functools
import math

import jax
import jax.numpy as jnp
from jax.experimental import pallas as pl
from jax.experimental.pallas import tpu as pltpu


# ----------------------------------------------------------------------------
# Pallas kernel: encode TB news items (or TB user histories) per grid step
# ----------------------------------------------------------------------------
def encoder_kernel(x_ref, m_ref, w_ref, b_ref, out_ref, *, num_heads):
    """x_ref: (TB, L, D) bf16, m_ref: (TB, L) f32, out_ref: (TB, D) f32.

    w_ref: (D, 5D) bf16 slab = [wq/sqrt(dh) | wk | wv | wo | wa]
    b_ref: (8, D)  f32  slab = [bq/sqrt(dh), bk, bv, bo, ba, qv, 0, 0]
    """
    tb, L, D = x_ref.shape
    dh = D // num_heads
    M = tb * L
    neg = jnp.float32(-1e9)
    bf16 = jnp.bfloat16

    x = x_ref[...].reshape(M, D)                         # (M, D) bf16
    keym = m_ref[...] > 0.5                              # (TB, L) bool
    keym3 = keym[:, None, :]                             # hoisted broadcast
    b = b_ref[...]                                       # (8, D) f32

    # --- fused Q/K/V projection: one (M,128)@(128,384) bf16 matmul, f32 acc ---
    qkv = jnp.dot(x, w_ref[:, 0:3 * D], preferred_element_type=jnp.float32)
    q = (qkv[:, 0 * D:1 * D] + b[0:1]).astype(bf16).reshape(tb, L, D)
    k = (qkv[:, 1 * D:2 * D] + b[1:2]).astype(bf16).reshape(tb, L, D)
    v = (qkv[:, 2 * D:3 * D] + b[2:3]).astype(bf16).reshape(tb, L, D)

    # --- multi-head self-attention (1/sqrt(dh) already folded into wq/bq) ---
    heads = []
    for h in range(num_heads):                           # static unroll (small)
        lo = h * dh
        qh = q[:, :, lo:lo + dh]                         # (TB, L, dh) bf16
        kh = k[:, :, lo:lo + dh]
        vh = v[:, :, lo:lo + dh]
        s = jnp.einsum('bld,bmd->blm', qh, kh,
                       preferred_element_type=jnp.float32)       # (TB, L, L)
        s = jnp.where(keym3, s, neg)                     # mask padded keys
        s = s - jnp.max(s, axis=-1, keepdims=True)
        e = jnp.exp(s)
        p = e * pl.reciprocal(jnp.sum(e, axis=-1, keepdims=True), approx=True)
        heads.append(jnp.einsum('blm,bmd->bld', p.astype(bf16), vh,
                                preferred_element_type=jnp.float32)
                     .astype(bf16))                      # (TB, L, dh) bf16

    # concat(heads) -> single K=128 output projection
    attn_b = jnp.concatenate(heads, axis=-1).reshape(M, D)            # (M,D) bf16
    attn = jnp.dot(attn_b, w_ref[:, 3 * D:4 * D],
                   preferred_element_type=jnp.float32) + b[3:4]       # (M,D) f32

    # --- additive attention pooling ---
    u = jnp.tanh(jnp.dot(attn.astype(bf16), w_ref[:, 4 * D:5 * D],
                         preferred_element_type=jnp.float32) + b[4:5])
    qvec = b[5:6].reshape(1, 1, D)
    sc = jnp.sum(u.reshape(tb, L, D) * qvec, axis=-1)                 # (TB, L)
    sc = jnp.where(keym, sc, neg)
    sc = sc - jnp.max(sc, axis=-1, keepdims=True)
    e = jnp.exp(sc)
    w = e * pl.reciprocal(jnp.sum(e, axis=-1, keepdims=True), approx=True)
    # Weighted sum over L on the VPU/XLU (no M=1 MXU matmuls).
    out_ref[...] = jnp.sum(w[:, :, None] * attn.reshape(tb, L, D), axis=1)


# ----------------------------------------------------------------------------
# Wrappers
# ----------------------------------------------------------------------------
def _pick_tb(n, block_items):
    """Items per grid step: big blocks to amortize per-step overhead, but keep
    the grid length >= 2 when possible (v7x has 2 TensorCores)."""
    tb = min(block_items, n)
    if tb >= n and n > 8:
        tb = -(-n // 2)                      # ceil(n/2) -> at least 2 steps
    tb = max(8, -(-tb // 8) * 8)             # sublane-aligned
    return tb


def _pack_encoder_params(p, num_heads):
    D = p['wq'].shape[0]
    dh = D // num_heads
    scale = jnp.float32(1.0 / math.sqrt(dh))
    w_slab = jnp.concatenate(
        [p['wq'] * scale, p['wk'], p['wv'], p['wo'], p['wa']],
        axis=1).astype(jnp.bfloat16)                               # (D, 5D)
    zero = jnp.zeros((D,), jnp.float32)
    b_slab = jnp.stack(
        [p['bq'][0] * scale, p['bk'][0], p['bv'][0], p['bo'][0],
         p['ba'][0], p['qv'][0], zero, zero], axis=0).astype(jnp.float32)  # (8,D)
    return w_slab, b_slab


def encoder_apply(x, mask, p, num_heads, block_items=64):
    """x: (N, L, D), mask: (N, L) -> (N, D) pooled vectors (f32)."""
    N, L, D = x.shape
    tb = _pick_tb(N, block_items)
    n_pad = (-N) % tb
    if n_pad:
        x = jnp.concatenate([x, jnp.zeros((n_pad, L, D), x.dtype)], axis=0)
        mask = jnp.concatenate([mask, jnp.zeros((n_pad, L), mask.dtype)], axis=0)
    Np = N + n_pad

    x = x.astype(jnp.bfloat16)               # bf16 MXU operands / half the DMA
    mask = mask.astype(jnp.float32)
    w_slab, b_slab = _pack_encoder_params(p, num_heads)

    out = pl.pallas_call(
        functools.partial(encoder_kernel, num_heads=num_heads),
        out_shape=jax.ShapeDtypeStruct((Np, D), jnp.float32),
        grid=(Np // tb,),
        in_specs=[
            pl.BlockSpec((tb, L, D), lambda i: (i, 0, 0)),   # token embeddings
            pl.BlockSpec((tb, L), lambda i: (i, 0)),         # key-padding mask
            pl.BlockSpec((D, 5 * D), lambda i: (0, 0)),      # fused weight slab
            pl.BlockSpec((8, D), lambda i: (0, 0)),          # bias / query slab
        ],
        out_specs=pl.BlockSpec((tb, D), lambda i: (i, 0)),
        compiler_params=pltpu.CompilerParams(
            dimension_semantics=("parallel",),
            vmem_limit_bytes=32 * 1024 * 1024),
    )(x, mask, w_slab, b_slab)
    return out[:N]


def nrms_forward(params, clicked_ids, clicked_mask, cand_ids, cand_mask,
                 num_heads, block_items=64):
    emb_tab = params['embedding'].astype(jnp.bfloat16)   # halve gather HBM bytes
    B, Nclk, L = clicked_ids.shape
    _, Ncand, _ = cand_ids.shape
    D = emb_tab.shape[1]

    # Embedding lookup (glue, plain JAX); dropout is identity in eval mode.
    # Clicked + candidate titles share the news encoder -> single fused call.
    all_ids = jnp.concatenate([clicked_ids.reshape(B * Nclk, L),
                               cand_ids.reshape(B * Ncand, L)], axis=0)
    all_mask = jnp.concatenate([clicked_mask.reshape(B * Nclk, L),
                                cand_mask.reshape(B * Ncand, L)], axis=0)
    all_emb = jnp.take(emb_tab, all_ids.reshape(-1), axis=0).reshape(-1, L, D)
    # TODO(synk): move the gather in-kernel (scalar-prefetched ids + DMA from
    # the HBM-resident table) to drop the remaining HBM round trip at scale.
    news_vec = encoder_apply(all_emb, all_mask, params['news'],
                             num_heads, block_items)
    clicked_vec = news_vec[:B * Nclk].reshape(B, Nclk, D)
    cand_vec = news_vec[B * Nclk:].reshape(B, Ncand, D)

    # User encoder: no mask in the PyTorch call -> all positions valid.
    user_vec = encoder_apply(clicked_vec, jnp.ones((B, Nclk), jnp.float32),
                             params['user'], num_heads, block_items)   # (B, D)

    # (candidate_news_vec @ final_representation).squeeze(-1) -> sigmoid.
    scores = jnp.einsum('bnd,bd->bn', cand_vec, user_vec)
    click_probability = jax.nn.sigmoid(scores)
    # TODO(synk): F.binary_cross_entropy loss path skipped (clicked=None in eval).
    return {'loss': None, 'logits': click_probability}


# ----------------------------------------------------------------------------
# Pure-JAX reference (for correctness check)
# ----------------------------------------------------------------------------
def _encoder_ref(x, mask, p, num_heads):
    N, L, D = x.shape
    dh = D // num_heads
    q = x @ p['wq'] + p['bq']
    k = x @ p['wk'] + p['bk']
    v = x @ p['wv'] + p['bv']
    qh = q.reshape(N, L, num_heads, dh)
    kh = k.reshape(N, L, num_heads, dh)
    vh = v.reshape(N, L, num_heads, dh)
    s = jnp.einsum('nlhd,nmhd->nhlm', qh, kh) / math.sqrt(dh)
    keym = (mask > 0.5)[:, None, None, :]
    s = jnp.where(keym, s, -1e9)
    a = jax.nn.softmax(s, axis=-1)
    o = jnp.einsum('nhlm,nmhd->nlhd', a, vh).reshape(N, L, D)
    o = o @ p['wo'] + p['bo']
    u = jnp.tanh(o @ p['wa'] + p['ba'])
    sc = jnp.einsum('nld,d->nl', u, p['qv'][0])
    sc = jnp.where(mask > 0.5, sc, -1e9)
    w = jax.nn.softmax(sc, axis=-1)
    return jnp.einsum('nl,nld->nd', w, o)


def nrms_forward_ref(params, clicked_ids, clicked_mask, cand_ids, cand_mask, num_heads):
    emb_tab = params['embedding']
    B, Nclk, L = clicked_ids.shape
    _, Ncand, _ = cand_ids.shape
    D = emb_tab.shape[1]
    clk_emb = jnp.take(emb_tab, clicked_ids.reshape(-1), axis=0).reshape(B * Nclk, L, D)
    clicked_vec = _encoder_ref(clk_emb, clicked_mask.reshape(B * Nclk, L),
                               params['news'], num_heads).reshape(B, Nclk, D)
    user_vec = _encoder_ref(clicked_vec, jnp.ones((B, Nclk), jnp.float32),
                            params['user'], num_heads)
    cand_emb = jnp.take(emb_tab, cand_ids.reshape(-1), axis=0).reshape(B * Ncand, L, D)
    cand_vec = _encoder_ref(cand_emb, cand_mask.reshape(B * Ncand, L),
                            params['news'], num_heads).reshape(B, Ncand, D)
    scores = jnp.einsum('bnd,bd->bn', cand_vec, user_vec)
    return jax.nn.sigmoid(scores)


# ----------------------------------------------------------------------------
# Deterministic parameter / input construction
# ----------------------------------------------------------------------------
def init_encoder_params(key, d):
    ks = jax.random.split(key, 7)
    g = lambda k, s: (0.02 * jax.random.normal(k, s, jnp.float32))
    return {
        'wq': g(ks[0], (d, d)), 'wk': g(ks[1], (d, d)), 'wv': g(ks[2], (d, d)),
        'wo': g(ks[3], (d, d)),
        'bq': jnp.zeros((1, d), jnp.float32), 'bk': jnp.zeros((1, d), jnp.float32),
        'bv': jnp.zeros((1, d), jnp.float32), 'bo': jnp.zeros((1, d), jnp.float32),
        'wa': g(ks[4], (d, d)), 'ba': jnp.zeros((1, d), jnp.float32),
        'qv': g(ks[5], (1, d)),
    }


if __name__ == "__main__":
    # Small shapes consistent with the NRMS forward signature.
    B, N_CLICKED, N_CAND, CTX_LEN = 2, 8, 2, 16
    VOCAB, D_EMBED, NUM_HEADS = 100, 128, 4

    root = jax.random.PRNGKey(0)
    k_emb, k_news, k_user, k_ids1, k_ids2, k_len1, k_len2 = jax.random.split(root, 7)

    embedding = 0.1 * jax.random.normal(k_emb, (VOCAB, D_EMBED), jnp.float32)
    embedding = embedding.at[0].set(0.0)  # padding_idx=0
    params = {
        'embedding': embedding,
        'news': init_encoder_params(k_news, D_EMBED),
        'user': init_encoder_params(k_user, D_EMBED),
    }

    def make_batch(kid, klen, n_news):
        ids = jax.random.randint(kid, (B, n_news, CTX_LEN), 1, VOCAB)
        lens = jax.random.randint(klen, (B, n_news, 1), CTX_LEN // 2, CTX_LEN + 1)
        pos = jnp.arange(CTX_LEN)[None, None, :]
        ids = jnp.where(pos < lens, ids, 0)
        mask = (ids != 0).astype(jnp.float32)
        return ids, mask

    clicked_ids, clicked_mask = make_batch(k_ids1, k_len1, N_CLICKED)
    cand_ids, cand_mask = make_batch(k_ids2, k_len2, N_CAND)

    out = nrms_forward(params, clicked_ids, clicked_mask, cand_ids, cand_mask, NUM_HEADS)
    probs = jax.block_until_ready(out['logits'])

    # Full-model reference check (bf16 MXU operands -> relaxed tolerance).
    ref = jax.block_until_ready(
        nrms_forward_ref(params, clicked_ids, clicked_mask, cand_ids, cand_mask, NUM_HEADS))
    assert probs.shape == (B, N_CAND)
    assert jnp.allclose(probs, ref, rtol=5e-2, atol=5e-3), (probs, ref)

    # Stronger check: news-encoder outputs vs. the pure-JAX reference encoder.
    clk_emb = jnp.take(embedding, clicked_ids.reshape(-1), axis=0).reshape(
        B * N_CLICKED, CTX_LEN, D_EMBED)
    enc_kernel_out = jax.block_until_ready(
        encoder_apply(clk_emb, clicked_mask.reshape(B * N_CLICKED, CTX_LEN),
                      params['news'], NUM_HEADS))
    enc_ref_out = _encoder_ref(clk_emb, clicked_mask.reshape(B * N_CLICKED, CTX_LEN),
                               params['news'], NUM_HEADS)
    assert jnp.allclose(enc_kernel_out, enc_ref_out, rtol=5e-2, atol=1e-3)

    print("KERNEL_OK")
</pallas_src>

<mosaic_0001>
module attributes {stable_mosaic.version = 11 : i64} {
  func.func @encoder_kernel(%arg0: i32, %arg1: memref<16x16x128xbf16, #tpu.memory_space<vmem>>, %arg2: memref<16x16xf32, #tpu.memory_space<vmem>>, %arg3: memref<128x640xbf16, #tpu.memory_space<vmem>>, %arg4: memref<8x128xf32, #tpu.memory_space<vmem>>, %arg5: memref<16x128xf32, #tpu.memory_space<vmem>>) attributes {dimension_semantics = [#tpu.dimension_semantics<parallel>], iteration_bounds = array<i64: 2>, scalar_prefetch = 0 : i64, scratch_operands = 0 : i64, tpu.core_type = #tpu.core_type<tc>, window_params = [{transform_indices = @transform_0, window_bounds = array<i64: 16, 16, 128>}, {transform_indices = @transform_1, window_bounds = array<i64: 16, 16>}, {pipeline_mode = #tpu.pipeline_mode<synchronous>, transform_indices = @transform_2, window_bounds = array<i64: 128, 640>}, {pipeline_mode = #tpu.pipeline_mode<synchronous>, transform_indices = @transform_3, window_bounds = array<i64: 8, 128>}, {transform_indices = @transform_4, window_bounds = array<i64: 16, 128>}]} {
    %c0 = arith.constant 0 : index
    %c0_0 = arith.constant 0 : index
    %c0_1 = arith.constant 0 : index
    %0 = vector.load %arg1[%c0, %c0_0, %c0_1] : memref<16x16x128xbf16, #tpu.memory_space<vmem>>, vector<16x16x128xbf16>
    %1 = vector.shape_cast %0 : vector<16x16x128xbf16> to vector<256x128xbf16>
    %c0_2 = arith.constant 0 : index
    %c0_3 = arith.constant 0 : index
    %2 = vector.load %arg2[%c0_2, %c0_3] : memref<16x16xf32, #tpu.memory_space<vmem>>, vector<16x16xf32>
    %cst = arith.constant 5.000000e-01 : f32
    %3 = vector.broadcast %cst : f32 to vector<16x16xf32>
    %4 = arith.cmpf ogt, %2, %3 : vector<16x16xf32>
    %5 = vector.shape_cast %4 : vector<16x16xi1> to vector<16x1x16xi1>
    %c0_4 = arith.constant 0 : index
    %c0_5 = arith.constant 0 : index
    %6 = vector.load %arg4[%c0_4, %c0_5] : memref<8x128xf32, #tpu.memory_space<vmem>>, vector<8x128xf32>
    %c0_6 = arith.constant 0 : index
    %c0_7 = arith.constant 0 : index
    %7 = vector.load %arg3[%c0_6, %c0_7] : memref<128x640xbf16, #tpu.memory_space<vmem>>, vector<128x384xbf16>
    %cst_8 = arith.constant dense<0.000000e+00> : vector<256x384xf32>
    %8 = tpu.matmul %1, %7, %cst_8 {dimension_numbers = #tpu.dot_dimension_numbers<[1], [0], [0], [1], [0, 0, 1, 1], [], []>} : vector<256x128xbf16>, vector<128x384xbf16>, vector<256x384xf32> -> vector<256x384xf32>
    %9 = vector.extract_strided_slice %8 {offsets = [0, 0], sizes = [256, 128], strides = [1, 1]} : vector<256x384xf32> to vector<256x128xf32>
    %10 = vector.extract_strided_slice %6 {offsets = [0, 0], sizes = [1, 128], strides = [1, 1]} : vector<8x128xf32> to vector<1x128xf32>
    %11 = vector.broadcast %10 : vector<1x128xf32> to vector<256x128xf32>
    %12 = arith.addf %9, %11 : vector<256x128xf32>
    %13 = arith.truncf %12 : vector<256x128xf32> to vector<256x128xbf16>
    %14 = vector.shape_cast %13 : vector<256x128xbf16> to vector<16x16x128xbf16>
    %15 = vector.extract_strided_slice %8 {offsets = [0, 128], sizes = [256, 128], strides = [1, 1]} : vector<256x384xf32> to vector<256x128xf32>
    %16 = vector.extract_strided_slice %6 {offsets = [1, 0], sizes = [1, 128], strides = [1, 1]} : vector<8x128xf32> to vector<1x128xf32>
    %17 = vector.broadcast %16 : vector<1x128xf32> to vector<256x128xf32>
    %18 = arith.addf %15, %17 : vector<256x128xf32>
    %19 = arith.truncf %18 : vector<256x128xf32> to vector<256x128xbf16>
    %20 = vector.shape_cast %19 : vector<256x128xbf16> to vector<16x16x128xbf16>
    %21 = vector.extract_strided_slice %8 {offsets = [0, 256], sizes = [256, 128], strides = [1, 1]} : vector<256x384xf32> to vector<256x128xf32>
    %22 = vector.extract_strided_slice %6 {offsets = [2, 0], sizes = [1, 128], strides = [1, 1]} : vector<8x128xf32> to vector<1x128xf32>
    %23 = vector.broadcast %22 : vector<1x128xf32> to vector<256x128xf32>
    %24 = arith.addf %21, %23 : vector<256x128xf32>
    %25 = arith.truncf %24 : vector<256x128xf32> to vector<256x128xbf16>
    %26 = vector.shape_cast %25 : vector<256x128xbf16> to vector<16x16x128xbf16>
    %27 = vector.extract_strided_slice %14 {offsets = [0, 0, 0], sizes = [16, 16, 32], strides = [1, 1, 1]} : vector<16x16x128xbf16> to vector<16x16x32xbf16>
    %28 = vector.extract_strided_slice %20 {offsets = [0, 0, 0], sizes = [16, 16, 32], strides = [1, 1, 1]} : vector<16x16x128xbf16> to vector<16x16x32xbf16>
    %29 = vector.extract_strided_slice %26 {offsets = [0, 0, 0], sizes = [16, 16, 32], strides = [1, 1, 1]} : vector<16x16x128xbf16> to vector<16x16x32xbf16>
    "tpu.trace_start"() <{level = 10 : i32, message = "bld,bmd->blm"}> : () -> ()
    %cst_9 = arith.constant dense<0.000000e+00> : vector<16x16x16xf32>
    %30 = tpu.matmul %27, %28, %cst_9 {dimension_numbers = #tpu.dot_dimension_numbers<[2], [2], [1], [1], [0, 0, 0, 1, 1, 1], [0], [0]>} : vector<16x16x32xbf16>, vector<16x16x32xbf16>, vector<16x16x16xf32> -> vector<16x16x16xf32>
    %cst_10 = arith.constant -1.000000e+09 : f32
    "tpu.trace_stop"() : () -> ()
    %31 = vector.shape_cast %5 : vector<16x1x16xi1> to vector<16x1x16xi1>
    %32 = vector.broadcast %31 : vector<16x1x16xi1> to vector<16x16x16xi1>
    %33 = vector.broadcast %cst_10 : f32 to vector<16x16x16xf32>
    %34 = arith.select %32, %30, %33 : vector<16x16x16xi1>, vector<16x16x16xf32>
    %cst_11 = arith.constant dense<0xFF800000> : vector<16x16xf32>
    %35 = vector.multi_reduction <maximumf>, %34, %cst_11 [2] : vector<16x16x16xf32> to vector<16x16xf32>
    %36 = vector.shape_cast %35 : vector<16x16xf32> to vector<16x16x1xf32>
    %37 = vector.broadcast %36 : vector<16x16x1xf32> to vector<16x16x16xf32>
    %38 = arith.subf %34, %37 : vector<16x16x16xf32>
    %39 = math.exp %38 : vector<16x16x16xf32>
    %cst_12 = arith.constant dense<0.000000e+00> : vector<16x16xf32>
    %40 = vector.multi_reduction <add>, %39, %cst_12 [2] : vector<16x16x16xf32> to vector<16x16xf32>
    %41 = vector.shape_cast %40 : vector<16x16xf32> to vector<16x16x1xf32>
    %42 = tpu.reciprocal %41 {approx = true} : vector<16x16x1xf32> -> vector<16x16x1xf32>
    %43 = vector.broadcast %42 : vector<16x16x1xf32> to vector<16x16x16xf32>
    %44 = arith.mulf %39, %43 : vector<16x16x16xf32>
    %45 = arith.truncf %44 : vector<16x16x16xf32> to vector<16x16x16xbf16>
    "tpu.trace_start"() <{level = 10 : i32, message = "blm,bmd->bld"}> : () -> ()
    %cst_13 = arith.constant dense<0.000000e+00> : vector<16x16x32xf32>
    %46 = tpu.matmul %45, %29, %cst_13 {dimension_numbers = #tpu.dot_dimension_numbers<[2], [1], [1], [2], [0, 0, 0, 1, 1, 2], [0], [0]>} : vector<16x16x16xbf16>, vector<16x16x32xbf16>, vector<16x16x32xf32> -> vector<16x16x32xf32>
    "tpu.trace_stop"() : () -> ()
    %47 = arith.truncf %46 : vector<16x16x32xf32> to vector<16x16x32xbf16>
    %48 = vector.extract_strided_slice %14 {offsets = [0, 0, 32], sizes = [16, 16, 32], strides = [1, 1, 1]} : vector<16x16x128xbf16> to vector<16x16x32xbf16>
    %49 = vector.extract_strided_slice %20 {offsets = [0, 0, 32], sizes = [16, 16, 32], strides = [1, 1, 1]} : vector<16x16x128xbf16> to vector<16x16x32xbf16>
    %50 = vector.extract_strided_slice %26 {offsets = [0, 0, 32], sizes = [16, 16, 32], strides = [1, 1, 1]} : vector<16x16x128xbf16> to vector<16x16x32xbf16>
    "tpu.trace_start"() <{level = 10 : i32, message = "bld,bmd->blm"}> : () -> ()
    %cst_14 = arith.constant dense<0.000000e+00> : vector<16x16x16xf32>
    %51 = tpu.matmul %48, %49, %cst_14 {dimension_numbers = #tpu.dot_dimension_numbers<[2], [2], [1], [1], [0, 0, 0, 1, 1, 1], [0], [0]>} : vector<16x16x32xbf16>, vector<16x16x32xbf16>, vector<16x16x16xf32> -> vector<16x16x16xf32>
    %cst_15 = arith.constant -1.000000e+09 : f32
    "tpu.trace_stop"() : () -> ()
    %52 = vector.shape_cast %5 : vector<16x1x16xi1> to vector<16x1x16xi1>
    %53 = vector.broadcast %52 : vector<16x1x16xi1> to vector<16x16x16xi1>
    %54 = vector.broadcast %cst_15 : f32 to vector<16x16x16xf32>
    %55 = arith.select %53, %51, %54 : vector<16x16x16xi1>, vector<16x16x16xf32>
    %cst_16 = arith.constant dense<0xFF800000> : vector<16x16xf32>
    %56 = vector.multi_reduction <maximumf>, %55, %cst_16 [2] : vector<16x16x16xf32> to vector<16x16xf32>
    %57 = vector.shape_cast %56 : vector<16x16xf32> to vector<16x16x1xf32>
    %58 = vector.broadcast %57 : vector<16x16x1xf32> to vector<16x16x16xf32>
    %59 = arith.subf %55, %58 : vector<16x16x16xf32>
    %60 = math.exp %59 : vector<16x16x16xf32>
    %cst_17 = arith.constant dense<0.000000e+00> : vector<16x16xf32>
    %61 = vector.multi_reduction <add>, %60, %cst_17 [2] : vector<16x16x16xf32> to vector<16x16xf32>
    %62 = vector.shape_cast %61 : vector<16x16xf32> to vector<16x16x1xf32>
    %63 = tpu.reciprocal %62 {approx = true} : vector<16x16x1xf32> -> vector<16x16x1xf32>
    %64 = vector.broadcast %63 : vector<16x16x1xf32> to vector<16x16x16xf32>
    %65 = arith.mulf %60, %64 : vector<16x16x16xf32>
    %66 = arith.truncf %65 : vector<16x16x16xf32> to vector<16x16x16xbf16>
    "tpu.trace_start"() <{level = 10 : i32, message = "blm,bmd->bld"}> : () -> ()
    %cst_18 = arith.constant dense<0.000000e+00> : vector<16x16x32xf32>
    %67 = tpu.matmul %66, %50, %cst_18 {dimension_numbers = #tpu.dot_dimension_numbers<[2], [1], [1], [2], [0, 0, 0, 1, 1, 2], [0], [0]>} : vector<16x16x16xbf16>, vector<16x16x32xbf16>, vector<16x16x32xf32> -> vector<16x16x32xf32>
    "tpu.trace_stop"() : () -> ()
    %68 = arith.truncf %67 : vector<16x16x32xf32> to vector<16x16x32xbf16>
    %69 = vector.extract_strided_slice %14 {offsets = [0, 0, 64], sizes = [16, 16, 32], strides = [1, 1, 1]} : vector<16x16x128xbf16> to vector<16x16x32xbf16>
    %70 = vector.extract_strided_slice %20 {offsets = [0, 0, 64], sizes = [16, 16, 32], strides = [1, 1, 1]} : vector<16x16x128xbf16> to vector<16x16x32xbf16>
    %71 = vector.extract_strided_slice %26 {offsets = [0, 0, 64], sizes = [16, 16, 32], strides = [1, 1, 1]} : vector<16x16x128xbf16> to vector<16x16x32xbf16>
    "tpu.trace_start"() <{level = 10 : i32, message = "bld,bmd->blm"}> : () -> ()
    %cst_19 = arith.constant dense<0.000000e+00> : vector<16x16x16xf32>
    %72 = tpu.matmul %69, %70, %cst_19 {dimension_numbers = #tpu.dot_dimension_numbers<[2], [2], [1], [1], [0, 0, 0, 1, 1, 1], [0], [0]>} : vector<16x16x32xbf16>, vector<16x16x32xbf16>, vector<16x16x16xf32> -> vector<16x16x16xf32>
    %cst_20 = arith.constant -1.000000e+09 : f32
    "tpu.trace_stop"() : () -> ()
    %73 = vector.shape_cast %5 : vector<16x1x16xi1> to vector<16x1x16xi1>
    %74 = vector.broadcast %73 : vector<16x1x16xi1> to vector<16x16x16xi1>
    %75 = vector.broadcast %cst_20 : f32 to vector<16x16x16xf32>
    %76 = arith.select %74, %72, %75 : vector<16x16x16xi1>, vector<16x16x16xf32>
    %cst_21 = arith.constant dense<0xFF800000> : vector<16x16xf32>
    %77 = vector.multi_reduction <maximumf>, %76, %cst_21 [2] : vector<16x16x16xf32> to vector<16x16xf32>
    %78 = vector.shape_cast %77 : vector<16x16xf32> to vector<16x16x1xf32>
    %79 = vector.broadcast %78 : vector<16x16x1xf32> to vector<16x16x16xf32>
    %80 = arith.subf %76, %79 : vector<16x16x16xf32>
    %81 = math.exp %80 : vector<16x16x16xf32>
    %cst_22 = arith.constant dense<0.000000e+00> : vector<16x16xf32>
    %82 = vector.multi_reduction <add>, %81, %cst_22 [2] : vector<16x16x16xf32> to vector<16x16xf32>
    %83 = vector.shape_cast %82 : vector<16x16xf32> to vector<16x16x1xf32>
    %84 = tpu.reciprocal %83 {approx = true} : vector<16x16x1xf32> -> vector<16x16x1xf32>
    %85 = vector.broadcast %84 : vector<16x16x1xf32> to vector<16x16x16xf32>
    %86 = arith.mulf %81, %85 : vector<16x16x16xf32>
    %87 = arith.truncf %86 : vector<16x16x16xf32> to vector<16x16x16xbf16>
    "tpu.trace_start"() <{level = 10 : i32, message = "blm,bmd->bld"}> : () -> ()
    %cst_23 = arith.constant dense<0.000000e+00> : vector<16x16x32xf32>
    %88 = tpu.matmul %87, %71, %cst_23 {dimension_numbers = #tpu.dot_dimension_numbers<[2], [1], [1], [2], [0, 0, 0, 1, 1, 2], [0], [0]>} : vector<16x16x16xbf16>, vector<16x16x32xbf16>, vector<16x16x32xf32> -> vector<16x16x32xf32>
    "tpu.trace_stop"() : () -> ()
    %89 = arith.truncf %88 : vector<16x16x32xf32> to vector<16x16x32xbf16>
    %90 = vector.extract_strided_slice %14 {offsets = [0, 0, 96], sizes = [16, 16, 32], strides = [1, 1, 1]} : vector<16x16x128xbf16> to vector<16x16x32xbf16>
    %91 = vector.extract_strided_slice %20 {offsets = [0, 0, 96], sizes = [16, 16, 32], strides = [1, 1, 1]} : vector<16x16x128xbf16> to vector<16x16x32xbf16>
    %92 = vector.extract_strided_slice %26 {offsets = [0, 0, 96], sizes = [16, 16, 32], strides = [1, 1, 1]} : vector<16x16x128xbf16> to vector<16x16x32xbf16>
    "tpu.trace_start"() <{level = 10 : i32, message = "bld,bmd->blm"}> : () -> ()
    %cst_24 = arith.constant dense<0.000000e+00> : vector<16x16x16xf32>
    %93 = tpu.matmul %90, %91, %cst_24 {dimension_numbers = #tpu.dot_dimension_numbers<[2], [2], [1], [1], [0, 0, 0, 1, 1, 1], [0], [0]>} : vector<16x16x32xbf16>, vector<16x16x32xbf16>, vector<16x16x16xf32> -> vector<16x16x16xf32>
    %cst_25 = arith.constant -1.000000e+09 : f32
    "tpu.trace_stop"() : () -> ()
    %94 = vector.shape_cast %5 : vector<16x1x16xi1> to vector<16x1x16xi1>
    %95 = vector.broadcast %94 : vector<16x1x16xi1> to vector<16x16x16xi1>
    %96 = vector.broadcast %cst_25 : f32 to vector<16x16x16xf32>
    %97 = arith.select %95, %93, %96 : vector<16x16x16xi1>, vector<16x16x16xf32>
    %cst_26 = arith.constant dense<0xFF800000> : vector<16x16xf32>
    %98 = vector.multi_reduction <maximumf>, %97, %cst_26 [2] : vector<16x16x16xf32> to vector<16x16xf32>
    %99 = vector.shape_cast %98 : vector<16x16xf32> to vector<16x16x1xf32>
    %100 = vector.broadcast %99 : vector<16x16x1xf32> to vector<16x16x16xf32>
    %101 = arith.subf %97, %100 : vector<16x16x16xf32>
    %102 = math.exp %101 : vector<16x16x16xf32>
    %cst_27 = arith.constant dense<0.000000e+00> : vector<16x16xf32>
    %103 = vector.multi_reduction <add>, %102, %cst_27 [2] : vector<16x16x16xf32> to vector<16x16xf32>
    %104 = vector.shape_cast %103 : vector<16x16xf32> to vector<16x16x1xf32>
    %105 = tpu.reciprocal %104 {approx = true} : vector<16x16x1xf32> -> vector<16x16x1xf32>
    %106 = vector.broadcast %105 : vector<16x16x1xf32> to vector<16x16x16xf32>
    %107 = arith.mulf %102, %106 : vector<16x16x16xf32>
    %108 = arith.truncf %107 : vector<16x16x16xf32> to vector<16x16x16xbf16>
    "tpu.trace_start"() <{level = 10 : i32, message = "blm,bmd->bld"}> : () -> ()
    %cst_28 = arith.constant dense<0.000000e+00> : vector<16x16x32xf32>
    %109 = tpu.matmul %108, %92, %cst_28 {dimension_numbers = #tpu.dot_dimension_numbers<[2], [1], [1], [2], [0, 0, 0, 1, 1, 2], [0], [0]>} : vector<16x16x16xbf16>, vector<16x16x32xbf16>, vector<16x16x32xf32> -> vector<16x16x32xf32>
    "tpu.trace_stop"() : () -> ()
    %110 = arith.truncf %109 : vector<16x16x32xf32> to vector<16x16x32xbf16>
    %111 = tpu.concatenate %47, %68, %89, %110 in 2 : vector<16x16x32xbf16>, vector<16x16x32xbf16>, vector<16x16x32xbf16>, vector<16x16x32xbf16> -> vector<16x16x128xbf16>
    %112 = vector.shape_cast %111 : vector<16x16x128xbf16> to vector<256x128xbf16>
    %c0_29 = arith.constant 0 : index
    %c384 = arith.constant 384 : index
    %113 = vector.load %arg3[%c0_29, %c384] : memref<128x640xbf16, #tpu.memory_space<vmem>>, vector<128x128xbf16>
    %cst_30 = arith.constant dense<0.000000e+00> : vector<256x128xf32>
    %114 = tpu.matmul %112, %113, %cst_30 {dimension_numbers = #tpu.dot_dimension_numbers<[1], [0], [0], [1], [0, 0, 1, 1], [], []>} : vector<256x128xbf16>, vector<128x128xbf16>, vector<256x128xf32> -> vector<256x128xf32>
    %115 = vector.extract_strided_slice %6 {offsets = [3, 0], sizes = [1, 128], strides = [1, 1]} : vector<8x128xf32> to vector<1x128xf32>
    %116 = vector.broadcast %115 : vector<1x128xf32> to vector<256x128xf32>
    %117 = arith.addf %114, %116 : vector<256x128xf32>
    %118 = arith.truncf %117 : vector<256x128xf32> to vector<256x128xbf16>
    %c0_31 = arith.constant 0 : index
    %c512 = arith.constant 512 : index
    %119 = vector.load %arg3[%c0_31, %c512] : memref<128x640xbf16, #tpu.memory_space<vmem>>, vector<128x128xbf16>
    %cst_32 = arith.constant dense<0.000000e+00> : vector<256x128xf32>
    %120 = tpu.matmul %118, %119, %cst_32 {dimension_numbers = #tpu.dot_dimension_numbers<[1], [0], [0], [1], [0, 0, 1, 1], [], []>} : vector<256x128xbf16>, vector<128x128xbf16>, vector<256x128xf32> -> vector<256x128xf32>
    %121 = vector.extract_strided_slice %6 {offsets = [4, 0], sizes = [1, 128], strides = [1, 1]} : vector<8x128xf32> to vector<1x128xf32>
    %122 = vector.broadcast %121 : vector<1x128xf32> to vector<256x128xf32>
    %123 = arith.addf %120, %122 : vector<256x128xf32>
    %124 = math.tanh %123 : vector<256x128xf32>
    %125 = vector.extract_strided_slice %6 {offsets = [5, 0], sizes = [1, 128], strides = [1, 1]} : vector<8x128xf32> to vector<1x128xf32>
    %126 = vector.shape_cast %125 : vector<1x128xf32> to vector<1x1x128xf32>
    %127 = vector.shape_cast %124 : vector<256x128xf32> to vector<16x16x128xf32>
    %128 = vector.broadcast %126 : vector<1x1x128xf32> to vector<16x16x128xf32>
    %129 = arith.mulf %127, %128 : vector<16x16x128xf32>
    %cst_33 = arith.constant dense<0.000000e+00> : vector<16x16xf32>
    %130 = vector.multi_reduction <add>, %129, %cst_33 [2] : vector<16x16x128xf32> to vector<16x16xf32>
    %cst_34 = arith.constant -1.000000e+09 : f32
    %131 = vector.broadcast %cst_34 : f32 to vector<16x16xf32>
    %132 = arith.select %4, %130, %131 : vector<16x16xi1>, vector<16x16xf32>
    %cst_35 = arith.constant dense<0xFF800000> : vector<16xf32>
    %133 = vector.multi_reduction <maximumf>, %132, %cst_35 [1] : vector<16x16xf32> to vector<16xf32>
    %134 = vector.shape_cast %133 : vector<16xf32> to vector<16x1xf32>
    %135 = vector.broadcast %134 : vector<16x1xf32> to vector<16x16xf32>
    %136 = arith.subf %132, %135 : vector<16x16xf32>
    %137 = math.exp %136 : vector<16x16xf32>
    %cst_36 = arith.constant dense<0.000000e+00> : vector<16xf32>
    %138 = vector.multi_reduction <add>, %137, %cst_36 [1] : vector<16x16xf32> to vector<16xf32>
    %139 = vector.shape_cast %138 : vector<16xf32> to vector<16x1xf32>
    %140 = tpu.reciprocal %139 {approx = true} : vector<16x1xf32> -> vector<16x1xf32>
    %141 = vector.broadcast %140 : vector<16x1xf32> to vector<16x16xf32>
    %142 = arith.mulf %137, %141 : vector<16x16xf32>
    %143 = vector.shape_cast %142 : vector<16x16xf32> to vector<16x16x1xf32>
    %144 = vector.shape_cast %117 : vector<256x128xf32> to vector<16x16x128xf32>
    %145 = vector.broadcast %143 : vector<16x16x1xf32> to vector<16x16x128xf32>
    %146 = arith.mulf %145, %144 : vector<16x16x128xf32>
    %cst_37 = arith.constant dense<0.000000e+00> : vector<16x128xf32>
    %147 = vector.multi_reduction <add>, %146, %cst_37 [1] : vector<16x16x128xf32> to vector<16x128xf32>
    %c0_38 = arith.constant 0 : index
    %c0_39 = arith.constant 0 : index
    %148 = vector.load %arg5[%c0_38, %c0_39] : memref<16x128xf32, #tpu.memory_space<vmem>>, vector<16x128xf32>
    tpu.vector_store %arg5[%c0_38, %c0_39], %147 {strides = array<i32>} : memref<16x128xf32, #tpu.memory_space<vmem>>, vector<16x128xf32>,
    return
  }
  func.func @transform_0(%arg0: i32) -> (i32, i32, i32) {
    %c0_i32 = arith.constant 0 : i32
    %c0_i32_0 = arith.constant 0 : i32
    %c0_i32_1 = arith.constant 0 : i32
    return %arg0, %c0_i32, %c0_i32_0 : i32, i32, i32
  }
  func.func @transform_1(%arg0: i32) -> (i32, i32) {
    %c0_i32 = arith.constant 0 : i32
    %c0_i32_0 = arith.constant 0 : i32
    return %arg0, %c0_i32 : i32, i32
  }
  func.func @transform_2(%arg0: i32) -> (i32, i32) {
    %c0_i32 = arith.constant 0 : i32
    %c0_i32_0 = arith.constant 0 : i32
    %c0_i32_1 = arith.constant 0 : i32
    return %c0_i32, %c0_i32_0 : i32, i32
  }
  func.func @transform_3(%arg0: i32) -> (i32, i32) {
    %c0_i32 = arith.constant 0 : i32
    %c0_i32_0 = arith.constant 0 : i32
    %c0_i32_1 = arith.constant 0 : i32
    return %c0_i32, %c0_i32_0 : i32, i32
  }
  func.func @transform_4(%arg0: i32) -> (i32, i32) {
    %c0_i32 = arith.constant 0 : i32
    %c0_i32_0 = arith.constant 0 : i32
    return %arg0, %c0_i32 : i32, i32
  }
}

</mosaic_0001>

<llo_original>
// kernel: tpu_custom_call.1
$region0: #{tpu_custom_call.1}
  #allocation0 [shape = 'u32[]', space=smem, size = 0x4, offset = 0x4, fixed_abs, tag = 'smem constant byte address 0x4 - core index']
  #allocation1 [shape = 'u32[72,128]{1,0:T(1,128)}', space=vmem, size = 0x9000, scoped, tag = 'internal scratch']
  %s0 = inlined_call_operand.hbm [shape: bf16[32,16,128], index: 0, kind: input, shape index: {}]
  %s1 = inlined_call_operand.vmem [shape: f32[32,16], index: 1, kind: input, shape index: {}]
  %s2 = inlined_call_operand.hbm [shape: bf16[128,640], index: 2, kind: input, shape index: {}]
  %s3 = inlined_call_operand.vmem [shape: f32[8,128], index: 3, kind: input, shape index: {}]
  %s4 = inlined_call_operand.hbm [shape: f32[32,128], index: 4, kind: output, shape index: {}]
  %s5 = sld [smem:[#allocation0]]
  $region57: #{tpu_custom_call.1} parent=0
    _
  %s7 = ssub.s32 1, %s5
  %s8 = scalar_select 0, %s7, %s5
  $region1: #{tpu_custom_call.1} parent=0
    #allocation2 [shape = 'u8[131072]{0}', space=vmem, size = 0x20000, scoped, tag = 'input window, operand 0']
    #allocation3 [shape = 's32[2]{0}', space=sflag, size = 0x8, scoped, tag = 'scoped memory for tpu_custom_call.1']
    #allocation4 [shape = 's32[2]{0}', space=sflag, size = 0x8, scoped, tag = 'scoped memory for tpu_custom_call.1']
    #allocation5 [shape = 'u8[163840]{0}', space=vmem, size = 0x28000, scoped, tag = 'input window, operand 2, single buffered']
    #allocation6 [shape = 's32[1]{0}', space=sflag, size = 0x4, scoped, tag = 'scoped memory for tpu_custom_call.1']
    #allocation7 [shape = 'u8[16384]{0}', space=vmem, size = 0x4000, scoped, tag = 'output window, operand 0']
    %9 = vsyncpa [#allocation3], 0
    %s10 = scalar_lea.sflag [#allocation3], 1
    %11 = vsyncpa %s10, 0
    %12 = vsyncpa [#allocation6], 0
    %13 = vsyncpa [#allocation4], 0
    %s14 = scalar_lea.sflag [#allocation4], 1
    %15 = vsyncpa %s14, 0
    loop: start=0, step=1, limit=4
    $region2: #{tpu_custom_call.1} parent=1 // loop_pre_header
      _
    $region3: #{tpu_custom_call.1} parent=1 // loop_header
      %s17 = sphi 0, %s21
      %p18 = scmp.ge.s32.totalorder %s17, 4
      %s27 = sphi 0, %s29
      %s30 = sphi 0, %s27
      %s31 = sphi 0, %s30
      %s47 = sphi 0, %s31
      %s53 = sphi 0, %s55
      %s56 = sphi 0, %s53
      %s57 = sphi 0, %s56
      %s73 = sphi 0, %s57
      %s77 = sphi 0, %s77
      %s79 = sphi 0, %s77
      %s80 = sphi 0, %s79
      %s94 = sphi 0, %s80
      %s98 = sphi 0, %s98
      %s100 = sphi 0, %s98
      %s101 = sphi 0, %s100
      %s115 = sphi 0, %s101
      %s121 = sphi 0, %s123
      %s124 = sphi 0, %s121
      %s125 = sphi 0, %s124
      %s141 = sphi 0, %s125
    $region4: #{tpu_custom_call.1} parent=1 // loop_header_branch
      %20 = sbr.rel (%p18) target = $region8
    $region5: #{tpu_custom_call.1} parent=1 // loop_body
      %s22 = ssub.s32 %s17, 1
      %s23 = ssub.s32 %s17, 2
      %s24 = sadd.s32 %s17, 1
      %s25 = ssub.s32 %s17, %s24
      %p26 = scmp.eq.s32.totalorder %s25, 0
      %s28 = sadd.s32 %s27, 1
      %s29 = scalar_select %p26, %s27, %s28
      %p32 = pneg %p26
      %p33 = scmp.eq.s32.totalorder %s17, 1
      %p34 = por %p32, %p33
      %p35 = scmp.ne.s32.totalorder %s27, %s30
      %p36 = scmp.eq.s32.totalorder %s17, 0
      %p37 = por %p35, %p36
      %p38 = scmp.ne.s32.totalorder %s27, %s30
      %p39 = scmp.eq.s32.totalorder %s22, 1
      %p40 = por %p38, %p39
      %p41 = scmp.ne.s32.totalorder %s30, %s31
      %p42 = scmp.eq.s32.totalorder %s22, 0
      %p43 = por %p41, %p42
      %p44 = scmp.ne.s32.totalorder %s30, %s31
      %p45 = scmp.eq.s32.totalorder %s23, 1
      %p46 = por %p44, %p45
      %p48 = scmp.ne.s32.totalorder %s31, %s47
      %p49 = scmp.eq.s32.totalorder %s23, 0
      %p50 = por %p48, %p49
      %s51 = ssub.s32 %s17, %s24
      %p52 = scmp.eq.s32.totalorder %s51, 0
      %s54 = sadd.s32 %s53, 1
      %s55 = scalar_select %p52, %s53, %s54
      %p58 = pneg %p52
      %p59 = scmp.eq.s32.totalorder %s17, 1
      %p60 = por %p58, %p59
      %p61 = scmp.ne.s32.totalorder %s53, %s56
      %p62 = scmp.eq.s32.totalorder %s17, 0
      %p63 = por %p61, %p62
      %p64 = scmp.ne.s32.totalorder %s53, %s56
      %p65 = scmp.eq.s32.totalorder %s22, 1
      %p66 = por %p64, %p65
      %p67 = scmp.ne.s32.totalorder %s56, %s57
      %p68 = scmp.eq.s32.totalorder %s22, 0
      %p69 = por %p67, %p68
      %p70 = scmp.ne.s32.totalorder %s56, %s57
      %p71 = scmp.eq.s32.totalorder %s23, 1
      %p72 = por %p70, %p71
      %p74 = scmp.ne.s32.totalorder %s57, %s73
      %p75 = scmp.eq.s32.totalorder %s23, 0
      %p76 = por %p74, %p75
      %s78 = sadd.s32 %s77, 1
      %p81 = scmp.eq.s32.totalorder %s17, 1
      %p82 = scmp.ne.s32.totalorder %s77, %s79
      %p83 = scmp.eq.s32.totalorder %s17, 0
      %p84 = por %p82, %p83
      %p85 = scmp.ne.s32.totalorder %s77, %s79
      %p86 = scmp.eq.s32.totalorder %s22, 1
      %p87 = por %p85, %p86
      %p88 = scmp.ne.s32.totalorder %s79, %s80
      %p89 = scmp.eq.s32.totalorder %s22, 0
      %p90 = por %p88, %p89
      %p91 = scmp.ne.s32.totalorder %s79, %s80
      %p92 = scmp.eq.s32.totalorder %s23, 1
      %p93 = por %p91, %p92
      %p95 = scmp.ne.s32.totalorder %s80, %s94
      %p96 = scmp.eq.s32.totalorder %s23, 0
      %p97 = por %p95, %p96
      %s99 = sadd.s32 %s98, 1
      %p102 = scmp.eq.s32.totalorder %s17, 1
      %p103 = scmp.ne.s32.totalorder %s98, %s100
      %p104 = scmp.eq.s32.totalorder %s17, 0
      %p105 = por %p103, %p104
      %p106 = scmp.ne.s32.totalorder %s98, %s100
      %p107 = scmp.eq.s32.totalorder %s22, 1
      %p108 = por %p106, %p107
      %p109 = scmp.ne.s32.totalorder %s100, %s101
      %p110 = scmp.eq.s32.totalorder %s22, 0
      %p111 = por %p109, %p110
      %p112 = scmp.ne.s32.totalorder %s100, %s101
      %p113 = scmp.eq.s32.totalorder %s23, 1
      %p114 = por %p112, %p113
      %p116 = scmp.ne.s32.totalorder %s101, %s115
      %p117 = scmp.eq.s32.totalorder %s23, 0
      %p118 = por %p116, %p117
      %s119 = ssub.s32 %s17, %s24
      %p120 = scmp.eq.s32.totalorder %s119, 0
      %s122 = sadd.s32 %s121, 1
      %s123 = scalar_select %p120, %s121, %s122
      %p126 = pneg %p120
      %p127 = scmp.eq.s32.totalorder %s17, 1
      %p128 = por %p126, %p127
      %p129 = scmp.ne.s32.totalorder %s121, %s124
      %p130 = scmp.eq.s32.totalorder %s17, 0
      %p131 = por %p129, %p130
      %p132 = scmp.ne.s32.totalorder %s121, %s124
      %p133 = scmp.eq.s32.totalorder %s22, 1
      %p134 = por %p132, %p133
      %p135 = scmp.ne.s32.totalorder %s124, %s125
      %p136 = scmp.eq.s32.totalorder %s22, 0
      %p137 = por %p135, %p136
      %p138 = scmp.ne.s32.totalorder %s124, %s125
      %p139 = scmp.eq.s32.totalorder %s23, 1
      %p140 = por %p138, %p139
      %p142 = scmp.ne.s32.totalorder %s125, %s141
      %p143 = scmp.eq.s32.totalorder %s23, 0
      %p144 = por %p142, %p143
      %p145 = scmp.le.s32.totalorder 1, %s17
      %p146 = scmp.lt.s32.totalorder %s17, 3
      %p147 = pnand %p145, %p146
      %p148 = pneg %p147
      // Predicated region
      $region9: #{tpu_custom_call.1} parent=5 // pred_check
        _
      $region10: #{tpu_custom_call.1} parent=5 // pred_check_branch
        %150 = sbr.rel (%p147) target = $region12
      $region11: #{tpu_custom_call.1} parent=5 // pred_region
        %s151 = ssub.s32 %s17, 1
        // Predicated region
        $region13: #{tpu_custom_call.1} parent=11 // pred_check
          %p152 = pneg %p90
        $region14: #{tpu_custom_call.1} parent=11 // pred_check_branch
          %154 = sbr.rel (%p152) target = $region16
        $region15: #{tpu_custom_call.1} parent=11 // pred_region
          %156 = vsyncadd [#allocation6], 0
          %s157 = sshll.u32 %s2, 4
          %s158 = int_to_ptr.hbm [resolvable:$true] %s157
          %s159 = sshll.u32 [#allocation5], 4
          %s160 = int_to_ptr.vmem [resolvable:$true] %s159
          %165 = dma.hbm_to_vmem [thread:$0]  %s158, 5120, %s160, [#allocation6], 320, 320, 20
        $region16: #{tpu_custom_call.1} parent=11 // pred_fallthru
          _
        // Predicated region
        $region17: #{tpu_custom_call.1} parent=11 // pred_check
          %p166 = pneg %p111
        $region18: #{tpu_custom_call.1} parent=11 // pred_check_branch
          %168 = sbr.rel (%p166) target = $region20
        $region19: #{tpu_custom_call.1} parent=11 // pred_region
          _
        $region20: #{tpu_custom_call.1} parent=11 // pred_fallthru
          _
      $region12: #{tpu_custom_call.1} parent=5 // pred_fallthru
        _
      %p169 = scmp.lt.s32.totalorder %s17, 2
      // Predicated region
      $region21: #{tpu_custom_call.1} parent=5 // pred_check
        %p170 = pneg %p169
      $region22: #{tpu_custom_call.1} parent=5 // pred_check_branch
        %172 = sbr.rel (%p170) target = $region24
      $region23: #{tpu_custom_call.1} parent=5 // pred_region
        // Predicated region
        $region25: #{tpu_custom_call.1} parent=23 // pred_check
          %p173 = pneg %p37
        $region26: #{tpu_custom_call.1} parent=23 // pred_check_branch
          %175 = sbr.rel (%p173) target = $region28
        $region27: #{tpu_custom_call.1} parent=23 // pred_region
          %s176 = sand.u32 %s27, 1
          %s177 = scalar_lea.sflag [#allocation3], %s176
          %s178 = sand.u32 %s27, 1
          %s179 = smul.addr %s178, 128
          %s180 = scalar_lea.vmem [#allocation2], %s179
          %s181 = smul.u32 16, %s17
          %183 = vsyncadd %s177, 0
          %s184 = smul.addr %s181, 2
          %s185 = smul.addr %s184, 4
          %s186 = scalar_lea.hbm %s0, %s185
          %s187 = sshll.u32 %s186, 4
          %s188 = int_to_ptr.hbm [resolvable:$true] %s187
          %s189 = sshll.u32 %s180, 4
          %s190 = int_to_ptr.vmem [resolvable:$true] %s189
          %195 = dma.hbm_to_vmem [thread:$0]  %s188, 2048, %s190, %s177, 64, 64, 4
        $region28: #{tpu_custom_call.1} parent=23 // pred_fallthru
          _
        // Predicated region
        $region29: #{tpu_custom_call.1} parent=23 // pred_check
          %p196 = pneg %p63
        $region30: #{tpu_custom_call.1} parent=23 // pred_check_branch
          %198 = sbr.rel (%p196) target = $region32
        $region31: #{tpu_custom_call.1} parent=23 // pred_region
          %s199 = smul.u32 2, %s17
          %p200 = scmp.lt.s32.totalorder %s199, 3
          %s201 = scalar_select %p200, %s199, 3
          %s202 = smul.addr %s201, 8
          %s203 = scalar_lea.vmem %s1, %s202
          %s204 = smul.u32 2, %s17
        $region32: #{tpu_custom_call.1} parent=23 // pred_fallthru
          _
      $region24: #{tpu_custom_call.1} parent=5 // pred_fallthru
        _
      %p205 = scmp.le.s32.totalorder 1, %s17
      %p206 = scmp.lt.s32.totalorder %s17, 3
      %p207 = pnand %p205, %p206
      %p208 = pneg %p207
      // Predicated region
      $region33: #{tpu_custom_call.1} parent=5 // pred_check
        _
      $region34: #{tpu_custom_call.1} parent=5 // pred_check_branch
        %210 = sbr.rel (%p207) target = $region36
      $region35: #{tpu_custom_call.1} parent=5 // pred_region
        %s211 = ssub.s32 %s17, 1
        %s212 = sand.u32 %s30, 1
        %s213 = scalar_lea.sflag [#allocation3], %s212
        %s214 = sand.u32 %s30, 1
        %s215 = smul.addr %s214, 128
        %s216 = scalar_lea.vmem [#allocation2], %s215
        // Predicated region
        $region37: #{tpu_custom_call.1} parent=35 // pred_check
          %p217 = pneg %p43
        $region38: #{tpu_custom_call.1} parent=35 // pred_check_branch
          %219 = sbr.rel (%p217) target = $region40
        $region39: #{tpu_custom_call.1} parent=35 // pred_region
          %221 = dma.done %s213, 2048
        $region40: #{tpu_custom_call.1} parent=35 // pred_fallthru
          _
        // Predicated region
        $region41: #{tpu_custom_call.1} parent=35 // pred_check
          %p222 = pneg %p90
        $region42: #{tpu_custom_call.1} parent=35 // pred_check_branch
          %224 = sbr.rel (%p222) target = $region44
        $region43: #{tpu_custom_call.1} parent=35 // pred_region
          %226 = dma.done [#allocation6], 5120
        $region44: #{tpu_custom_call.1} parent=35 // pred_fallthru
          _
        %s227 = sand.u32 %s30, 1
        %s228 = scalar_lea.sflag [#allocation3], %s227
        %s229 = sand.u32 %s30, 1
        %s230 = smul.addr %s229, 128
        %s231 = scalar_lea.vmem [#allocation2], %s230
        %p232 = pneg %p43
        %p233 = pneg %p40
        %s234 = smul.u32 2, %s22
        %p235 = scmp.lt.s32.totalorder %s234, 3
        %s236 = scalar_select %p235, %s234, 3
        %s237 = smul.addr %s236, 8
        %s238 = scalar_lea.vmem %s1, %s237
        %p239 = pneg %p69
        %p240 = pneg %p66
        %p241 = pneg %p90
        %p242 = pneg %p87
        %p243 = pneg %p111
        %p244 = pneg %p108
        %p245 = pneg %p137
        %p246 = pneg %p134
        %s247 = sand.u32 %s124, 1
        %s248 = scalar_lea.sflag [#allocation4], %s247
        %s249 = sand.u32 %s124, 1
        %s250 = smul.addr %s249, 16
        %s251 = scalar_lea.vmem [#allocation7], %s250
        %s252 = smul.u32 16, %s22
        %s253 = smul.u32 2, %s22
        %p254 = scmp.lt.s32.totalorder %s253, 3
        %s255 = scalar_select %p254, %s253, 3
        %s256 = smul.addr %s255, 8
        %s257 = scalar_lea.vmem %s1, %s256
        %s258 = smul.u32 2, %s22
        %s259 = smul.u32 2, %s22
        %v261 = vld [vmem:[%s216] sm:$0xf]
        %v262 = vld [vmem:[%s216 + $0x4] sm:$0xf]
        %v263 = vld [vmem:[%s216 + $0x8] sm:$0xf]
        %v264 = vld [vmem:[%s216 + $0xc] sm:$0xf]
        %v265 = vld [vmem:[%s216 + $0x10] sm:$0xf]
        %v266 = vld [vmem:[%s216 + $0x14] sm:$0xf]
        %v267 = vld [vmem:[%s216 + $0x18] sm:$0xf]
        %v268 = vld [vmem:[%s216 + $0x1c] sm:$0xf]
        %v269 = vld [vmem:[%s216 + $0x20] sm:$0xf]
        %v270 = vld [vmem:[%s216 + $0x24] sm:$0xf]
        %v271 = vld [vmem:[%s216 + $0x28] sm:$0xf]
        %v272 = vld [vmem:[%s216 + $0x2c] sm:$0xf]
        %v273 = vld [vmem:[%s216 + $0x30] sm:$0xf]
        %v274 = vld [vmem:[%s216 + $0x34] sm:$0xf]
        %v275 = vld [vmem:[%s216 + $0x38] sm:$0xf]
        %v276 = vld [vmem:[%s216 + $0x3c] sm:$0xf]
        %v277 = vld [vmem:[%s216 + $0x40] sm:$0xf]
        %v278 = vld [vmem:[%s216 + $0x44] sm:$0xf]
        %v279 = vld [vmem:[%s216 + $0x48] sm:$0xf]
        %v280 = vld [vmem:[%s216 + $0x4c] sm:$0xf]
        %v281 = vld [vmem:[%s216 + $0x50] sm:$0xf]
        %v282 = vld [vmem:[%s216 + $0x54] sm:$0xf]
        %v283 = vld [vmem:[%s216 + $0x58] sm:$0xf]
        %v284 = vld [vmem:[%s216 + $0x5c] sm:$0xf]
        %v285 = vld [vmem:[%s216 + $0x60] sm:$0xf]
        %v286 = vld [vmem:[%s216 + $0x64] sm:$0xf]
        %v287 = vld [vmem:[%s216 + $0x68] sm:$0xf]
        %v288 = vld [vmem:[%s216 + $0x6c] sm:$0xf]
        %v289 = vld [vmem:[%s216 + $0x70] sm:$0xf]
        %v290 = vld [vmem:[%s216 + $0x74] sm:$0xf]
        %v291 = vld [vmem:[%s216 + $0x78] sm:$0xf]
        %v292 = vld [vmem:[%s216 + $0x7c] sm:$0xf]
        %v293 = vld [vmem:[%s257] sm:$0xff]
        %v294 = vld [vmem:[%s257 + $0x8] sm:$0xff]
        %vm295 = vcmp.gt.f32.partialorder %v293, 0.5
        %vm296 = vcmp.gt.f32.partialorder %v294, 0.5
        %v297 = vsel %vm295, 1, 0
        %v298 = vsel %vm296, 1, 0
        %v299 = vrot.slane %v297, 1
        %v300 = vrot.slane %v297, 2
        %v301 = vrot.slane %v297, 3
        %v302 = vrot.slane %v297, 4
        %v303 = vrot.slane %v297, 5
        %v304 = vrot.slane %v297, 6
        %v305 = vrot.slane %v297, 7
        %v306 = vrot.slane %v298, 1
        %v307 = vrot.slane %v298, 2
        %v308 = vrot.slane %v298, 3
        %v309 = vrot.slane %v298, 4
        %v310 = vrot.slane %v298, 5
        %v311 = vrot.slane %v298, 6
        %v312 = vrot.slane %v298, 7
        %vm313 = vcmp.ne.s32.totalorder %v299, 0
        %vm314 = vcmp.ne.s32.totalorder %v300, 0
        %vm315 = vcmp.ne.s32.totalorder %v301, 0
        %vm316 = vcmp.ne.s32.totalorder %v302, 0
        %vm317 = vcmp.ne.s32.totalorder %v303, 0
        %vm318 = vcmp.ne.s32.totalorder %v304, 0
        %vm319 = vcmp.ne.s32.totalorder %v305, 0
        %vm320 = vcmp.ne.s32.totalorder %v306, 0
        %vm321 = vcmp.ne.s32.totalorder %v307, 0
        %vm322 = vcmp.ne.s32.totalorder %v308, 0
        %vm323 = vcmp.ne.s32.totalorder %v309, 0
        %vm324 = vcmp.ne.s32.totalorder %v310, 0
        %vm325 = vcmp.ne.s32.totalorder %v311, 0
        %vm326 = vcmp.ne.s32.totalorder %v312, 0
        %v327 = vld [vmem:[%s3] sm:$0xff]
        %v328 = vld [vmem:[#allocation5] sm:$0xff]
        %v329 = vld [vmem:[#allocation5 + $0x8] sm:$0xf]
        %v330 = vld [vmem:[#allocation5 + $0x14] sm:$0xff]
        %v331 = vld [vmem:[#allocation5 + $0x1c] sm:$0xf]
        %v332 = vld [vmem:[#allocation5 + $0x28] sm:$0xff]
        %v333 = vld [vmem:[#allocation5 + $0x30] sm:$0xf]
        %v334 = vld [vmem:[#allocation5 + $0x3c] sm:$0xff]
        %v335 = vld [vmem:[#allocation5 + $0x44] sm:$0xf]
        %v336 = vld [vmem:[#allocation5 + $0x50] sm:$0xff]
        %v337 = vld [vmem:[#allocation5 + $0x58] sm:$0xf]
        %v338 = vld [vmem:[#allocation5 + $0x64] sm:$0xff]
        %v339 = vld [vmem:[#allocation5 + $0x6c] sm:$0xf]
        %v340 = vld [vmem:[#allocation5 + $0x78] sm:$0xff]
        %v341 = vld [vmem:[#allocation5 + $0x80] sm:$0xf]
        %v342 = vld [vmem:[#allocation5 + $0x8c] sm:$0xff]
        %v343 = vld [vmem:[#allocation5 + $0x94] sm:$0xf]
        %v344 = vld [vmem:[#allocation5 + $0xa0] sm:$0xff]
        %v345 = vld [vmem:[#allocation5 + $0xa8] sm:$0xf]
        %v346 = vld [vmem:[#allocation5 + $0xb4] sm:$0xff]
        %v347 = vld [vmem:[#allocation5 + $0xbc] sm:$0xf]
        %v348 = vld [vmem:[#allocation5 + $0xc8] sm:$0xff]
        %v349 = vld [vmem:[#allocation5 + $0xd0] sm:$0xf]
        %v350 = vld [vmem:[#allocation5 + $0xdc] sm:$0xff]
        %v351 = vld [vmem:[#allocation5 + $0xe4] sm:$0xf]
        %v352 = vld [vmem:[#allocation5 + $0xf0] sm:$0xff]
        %v353 = vld [vmem:[#allocation5 + $0xf8] sm:$0xf]
        %v354 = vld [vmem:[#allocation5 + $0x104] sm:$0xff]
        %v355 = vld [vmem:[#allocation5 + $0x10c] sm:$0xf]
        %v356 = vld [vmem:[#allocation5 + $0x118] sm:$0xff]
        %v357 = vld [vmem:[#allocation5 + $0x120] sm:$0xf]
        %v358 = vld [vmem:[#allocation5 + $0x12c] sm:$0xff]
        %v359 = vld [vmem:[#allocation5 + $0x134] sm:$0xf]
        %v392 = vunpack.c.l.b16 %v261
        %v393 = vunpack.c.l.b16 %v262
        %v394 = vunpack.c.l.b16 %v263
        %v395 = vunpack.c.l.b16 %v264
        %v396 = vunpack.c.l.b16 %v265
        %v397 = vunpack.c.l.b16 %v266
        %v398 = vunpack.c.l.b16 %v267
        %v399 = vunpack.c.l.b16 %v268
        %v400 = vunpack.c.l.b16 %v269
        %v401 = vunpack.c.l.b16 %v270
        %v402 = vunpack.c.l.b16 %v271
        %v403 = vunpack.c.l.b16 %v272
        %v404 = vunpack.c.l.b16 %v273
        %v405 = vunpack.c.l.b16 %v274
        %v406 = vunpack.c.l.b16 %v275
        %v407 = vunpack.c.l.b16 %v276
        %v408 = vunpack.c.l.b16 %v277
        %v409 = vunpack.c.l.b16 %v278
        %v410 = vunpack.c.l.b16 %v279
        %v411 = vunpack.c.l.b16 %v280
        %v412 = vunpack.c.l.b16 %v281
        %v413 = vunpack.c.l.b16 %v282
        %v414 = vunpack.c.l.b16 %v283
        %v415 = vunpack.c.l.b16 %v284
        %v416 = vunpack.c.l.b16 %v285
        %v417 = vunpack.c.l.b16 %v286
        %v418 = vunpack.c.l.b16 %v287
        %v419 = vunpack.c.l.b16 %v288
        %v420 = vunpack.c.l.b16 %v289
        %v421 = vunpack.c.l.b16 %v290
        %v422 = vunpack.c.l.b16 %v291
        %v423 = vunpack.c.l.b16 %v292
        %v424 = vpack.c.b16 %v393, %v392
        %v425 = vpack.c.b16 %v395, %v394
        %v426 = vpack.c.b16 %v397, %v396
        %v427 = vpack.c.b16 %v399, %v398
        %v428 = vpack.c.b16 %v401, %v400
        %v429 = vpack.c.b16 %v403, %v402
        %v430 = vpack.c.b16 %v405, %v404
        %v431 = vpack.c.b16 %v407, %v406
        %v432 = vpack.c.b16 %v409, %v408
        %v433 = vpack.c.b16 %v411, %v410
        %v434 = vpack.c.b16 %v413, %v412
        %v435 = vpack.c.b16 %v415, %v414
        %v436 = vpack.c.b16 %v417, %v416
        %v437 = vpack.c.b16 %v419, %v418
        %v438 = vpack.c.b16 %v421, %v420
        %v439 = vpack.c.b16 %v423, %v422
        %v488 = vunpack.c.l.b16 %v328
        %v489 = vunpack.c.h.b16 %v328
        %v490 = vunpack.c.l.b16 %v329
        %v491 = vunpack.c.l.b16 %v330
        %v492 = vunpack.c.h.b16 %v330
        %v493 = vunpack.c.l.b16 %v331
        %v494 = vunpack.c.l.b16 %v332
        %v495 = vunpack.c.h.b16 %v332
        %v496 = vunpack.c.l.b16 %v333
        %v497 = vunpack.c.l.b16 %v334
        %v498 = vunpack.c.h.b16 %v334
        %v499 = vunpack.c.l.b16 %v335
        %v500 = vunpack.c.l.b16 %v336
        %v501 = vunpack.c.h.b16 %v336
        %v502 = vunpack.c.l.b16 %v337
        %v503 = vunpack.c.l.b16 %v338
        %v504 = vunpack.c.h.b16 %v338
        %v505 = vunpack.c.l.b16 %v339
        %v506 = vunpack.c.l.b16 %v340
        %v507 = vunpack.c.h.b16 %v340
        %v508 = vunpack.c.l.b16 %v341
        %v509 = vunpack.c.l.b16 %v342
        %v510 = vunpack.c.h.b16 %v342
        %v511 = vunpack.c.l.b16 %v343
        %v512 = vunpack.c.l.b16 %v344
        %v513 = vunpack.c.h.b16 %v344
        %v514 = vunpack.c.l.b16 %v345
        %v515 = vunpack.c.l.b16 %v346
        %v516 = vunpack.c.h.b16 %v346
        %v517 = vunpack.c.l.b16 %v347
        %v518 = vunpack.c.l.b16 %v348
        %v519 = vunpack.c.h.b16 %v348
        %v520 = vunpack.c.l.b16 %v349
        %v521 = vunpack.c.l.b16 %v350
        %v522 = vunpack.c.h.b16 %v350
        %v523 = vunpack.c.l.b16 %v351
        %v524 = vunpack.c.l.b16 %v352
        %v525 = vunpack.c.h.b16 %v352
        %v526 = vunpack.c.l.b16 %v353
        %v527 = vunpack.c.l.b16 %v354
        %v528 = vunpack.c.h.b16 %v354
        %v529 = vunpack.c.l.b16 %v355
        %v530 = vunpack.c.l.b16 %v356
        %v531 = vunpack.c.h.b16 %v356
        %v532 = vunpack.c.l.b16 %v357
        %v533 = vunpack.c.l.b16 %v358
        %v534 = vunpack.c.h.b16 %v358
        %v535 = vunpack.c.l.b16 %v359
        %v536 = vpack.c.b16 %v491, %v488
        %v537 = vpack.c.b16 %v492, %v489
        %v538 = vpack.c.b16 %v493, %v490
        %v539 = vpack.c.b16 %v497, %v494
        %v540 = vpack.c.b16 %v498, %v495
        %v541 = vpack.c.b16 %v499, %v496
        %v542 = vpack.c.b16 %v503, %v500
        %v543 = vpack.c.b16 %v504, %v501
        %v544 = vpack.c.b16 %v505, %v502
        %v545 = vpack.c.b16 %v509, %v506
        %v546 = vpack.c.b16 %v510, %v507
        %v547 = vpack.c.b16 %v511, %v508
        %v548 = vpack.c.b16 %v515, %v512
        %v549 = vpack.c.b16 %v516, %v513
        %v550 = vpack.c.b16 %v517, %v514
        %v551 = vpack.c.b16 %v521, %v518
        %v552 = vpack.c.b16 %v522, %v519
        %v553 = vpack.c.b16 %v523, %v520
        %v554 = vpack.c.b16 %v527, %v524
        %v555 = vpack.c.b16 %v528, %v525
        %v556 = vpack.c.b16 %v529, %v526
        %v557 = vpack.c.b16 %v533, %v530
        %v558 = vpack.c.b16 %v534, %v531
        %v559 = vpack.c.b16 %v535, %v532
        %584 = vmatpush.bf16.msra.mxu0 %v557
        %585 = vmatpush.bf16.msra.mxu0 %v554
        %586 = vmatpush.bf16.msra.mxu0 %v551
        %587 = vmatpush.bf16.msra.mxu0 %v548
        %588 = vmatpush.bf16.msra.mxu0 %v545
        %589 = vmatpush.bf16.msra.mxu0 %v542
        %590 = vmatpush.bf16.msra.mxu0 %v539
        %591 = vmatpush.bf16.msra.mxu0 %v536
        %592 = vmatmul.bf16.gmra.mxu0 %v424
        %v593 = vpop.f32.mrf.mxu0
        %v594 = vadd.f32 0.0, %v593
        %v595 = vpop.f32.mrf.mxu0
        %v596 = vadd.f32 0.0, %v595
        %597 = vmatmul.bf16.gmra.mxu0 %v425
        %v598 = vpop.f32.mrf.mxu0
        %v599 = vadd.f32 0.0, %v598
        %v600 = vpop.f32.mrf.mxu0
        %v601 = vadd.f32 0.0, %v600
        %602 = vmatmul.bf16.gmra.mxu0 %v426
        %v603 = vpop.f32.mrf.mxu0
        %v604 = vadd.f32 0.0, %v603
        %v605 = vpop.f32.mrf.mxu0
        %v606 = vadd.f32 0.0, %v605
        %607 = vmatmul.bf16.gmra.mxu0 %v427
        %v608 = vpop.f32.mrf.mxu0
        %v609 = vadd.f32 0.0, %v608
        %v610 = vpop.f32.mrf.mxu0
        %v611 = vadd.f32 0.0, %v610
        %612 = vmatmul.bf16.gmra.mxu0 %v428
        %v613 = vpop.f32.mrf.mxu0
        %v614 = vadd.f32 0.0, %v613
        %v615 = vpop.f32.mrf.mxu0
        %v616 = vadd.f32 0.0, %v615
        %617 = vmatmul.bf16.gmra.mxu0 %v429
        %v618 = vpop.f32.mrf.mxu0
        %v619 = vadd.f32 0.0, %v618
        %v620 = vpop.f32.mrf.mxu0
        %v621 = vadd.f32 0.0, %v620
        %622 = vmatmul.bf16.gmra.mxu0 %v430
        %v623 = vpop.f32.mrf.mxu0
        %v624 = vadd.f32 0.0, %v623
        %v625 = vpop.f32.mrf.mxu0
        %v626 = vadd.f32 0.0, %v625
        %627 = vmatmul.bf16.gmra.mxu0 %v431
        %v628 = vpop.f32.mrf.mxu0
        %v629 = vadd.f32 0.0, %v628
        %v630 = vpop.f32.mrf.mxu0
        %v631 = vadd.f32 0.0, %v630
        %632 = vmatmul.bf16.gmra.mxu0 %v432
        %v633 = vpop.f32.mrf.mxu0
        %v634 = vadd.f32 0.0, %v633
        %v635 = vpop.f32.mrf.mxu0
        %v636 = vadd.f32 0.0, %v635
        %637 = vmatmul.bf16.gmra.mxu0 %v433
        %v638 = vpop.f32.mrf.mxu0
        %v639 = vadd.f32 0.0, %v638
        %v640 = vpop.f32.mrf.mxu0
        %v641 = vadd.f32 0.0, %v640
        %642 = vmatmul.bf16.gmra.mxu0 %v434
        %v643 = vpop.f32.mrf.mxu0
        %v644 = vadd.f32 0.0, %v643
        %v645 = vpop.f32.mrf.mxu0
        %v646 = vadd.f32 0.0, %v645
        %647 = vmatmul.bf16.gmra.mxu0 %v435
        %v648 = vpop.f32.mrf.mxu0
        %v649 = vadd.f32 0.0, %v648
        %v650 = vpop.f32.mrf.mxu0
        %v651 = vadd.f32 0.0, %v650
        %652 = vmatmul.bf16.gmra.mxu0 %v436
        %v653 = vpop.f32.mrf.mxu0
        %v654 = vadd.f32 0.0, %v653
        %v655 = vpop.f32.mrf.mxu0
        %v656 = vadd.f32 0.0, %v655
        %657 = vmatmul.bf16.gmra.mxu0 %v437
        %v658 = vpop.f32.mrf.mxu0
        %v659 = vadd.f32 0.0, %v658
        %v660 = vpop.f32.mrf.mxu0
        %v661 = vadd.f32 0.0, %v660
        %662 = vmatmul.bf16.gmra.mxu0 %v438
        %v663 = vpop.f32.mrf.mxu0
        %v664 = vadd.f32 0.0, %v663
        %v665 = vpop.f32.mrf.mxu0
        %v666 = vadd.f32 0.0, %v665
        %667 = vmatmul.bf16.gmra.mxu0 %v439
        %v668 = vpop.f32.mrf.mxu0
        %v669 = vadd.f32 0.0, %v668
        %v670 = vpop.f32.mrf.mxu0
        %v671 = vadd.f32 0.0, %v670
        %672 = vdwg.mxu0
        %673 = vmatpush.bf16.msra.mxu0 %v558
        %674 = vmatpush.bf16.msra.mxu0 %v555
        %675 = vmatpush.bf16.msra.mxu0 %v552
        %676 = vmatpush.bf16.msra.mxu0 %v549
        %677 = vmatpush.bf16.msra.mxu0 %v546
        %678 = vmatpush.bf16.msra.mxu0 %v543
        %679 = vmatpush.bf16.msra.mxu0 %v540
        %680 = vmatpush.bf16.msra.mxu0 %v537
        %681 = vmatmul.bf16.gmra.mxu0 %v424
        %v682 = vpop.f32.mrf.mxu0
        %v683 = vadd.f32 0.0, %v682
        %v684 = vpop.f32.mrf.mxu0
        %v685 = vadd.f32 0.0, %v684
        %686 = vmatmul.bf16.gmra.mxu0 %v425
        %v687 = vpop.f32.mrf.mxu0
        %v688 = vadd.f32 0.0, %v687
        %v689 = vpop.f32.mrf.mxu0
        %v690 = vadd.f32 0.0, %v689
        %691 = vmatmul.bf16.gmra.mxu0 %v426
        %v692 = vpop.f32.mrf.mxu0
        %v693 = vadd.f32 0.0, %v692
        %v694 = vpop.f32.mrf.mxu0
        %v695 = vadd.f32 0.0, %v694
        %696 = vmatmul.bf16.gmra.mxu0 %v427
        %v697 = vpop.f32.mrf.mxu0
        %v698 = vadd.f32 0.0, %v697
        %v699 = vpop.f32.mrf.mxu0
        %v700 = vadd.f32 0.0, %v699
        %701 = vmatmul.bf16.gmra.mxu0 %v428
        %v702 = vpop.f32.mrf.mxu0
        %v703 = vadd.f32 0.0, %v702
        %v704 = vpop.f32.mrf.mxu0
        %v705 = vadd.f32 0.0, %v704
        %706 = vmatmul.bf16.gmra.mxu0 %v429
        %v707 = vpop.f32.mrf.mxu0
        %v708 = vadd.f32 0.0, %v707
        %v709 = vpop.f32.mrf.mxu0
        %v710 = vadd.f32 0.0, %v709
        %711 = vmatmul.bf16.gmra.mxu0 %v430
        %v712 = vpop.f32.mrf.mxu0
        %v713 = vadd.f32 0.0, %v712
        %v714 = vpop.f32.mrf.mxu0
        %v715 = vadd.f32 0.0, %v714
        %716 = vmatmul.bf16.gmra.mxu0 %v431
        %v717 = vpop.f32.mrf.mxu0
        %v718 = vadd.f32 0.0, %v717
        %v719 = vpop.f32.mrf.mxu0
        %v720 = vadd.f32 0.0, %v719
        %721 = vmatmul.bf16.gmra.mxu0 %v432
        %v722 = vpop.f32.mrf.mxu0
        %v723 = vadd.f32 0.0, %v722
        %v724 = vpop.f32.mrf.mxu0
        %v725 = vadd.f32 0.0, %v724
        %726 = vmatmul.bf16.gmra.mxu0 %v433
        %v727 = vpop.f32.mrf.mxu0
        %v728 = vadd.f32 0.0, %v727
        %v729 = vpop.f32.mrf.mxu0
        %v730 = vadd.f32 0.0, %v729
        %731 = vmatmul.bf16.gmra.mxu0 %v434
        %v732 = vpop.f32.mrf.mxu0
        %v733 = vadd.f32 0.0, %v732
        %v734 = vpop.f32.mrf.mxu0
        %v735 = vadd.f32 0.0, %v734
        %736 = vmatmul.bf16.gmra.mxu0 %v435
        %v737 = vpop.f32.mrf.mxu0
        %v738 = vadd.f32 0.0, %v737
        %v739 = vpop.f32.mrf.mxu0
        %v740 = vadd.f32 0.0, %v739
        %741 = vmatmul.bf16.gmra.mxu0 %v436
        %v742 = vpop.f32.mrf.mxu0
        %v743 = vadd.f32 0.0, %v742
        %v744 = vpop.f32.mrf.mxu0
        %v745 = vadd.f32 0.0, %v744
        %746 = vmatmul.bf16.gmra.mxu0 %v437
        %v747 = vpop.f32.mrf.mxu0
        %v748 = vadd.f32 0.0, %v747
        %v749 = vpop.f32.mrf.mxu0
        %v750 = vadd.f32 0.0, %v749
        %751 = vmatmul.bf16.gmra.mxu0 %v438
        %v752 = vpop.f32.mrf.mxu0
        %v753 = vadd.f32 0.0, %v752
        %v754 = vpop.f32.mrf.mxu0
        %v755 = vadd.f32 0.0, %v754
        %756 = vmatmul.bf16.gmra.mxu0 %v439
        %v757 = vpop.f32.mrf.mxu0
        %v758 = vadd.f32 0.0, %v757
        %v759 = vpop.f32.mrf.mxu0
        %v760 = vadd.f32 0.0, %v759
        %761 = vdwg.mxu0
        %762 = vmatpush.bf16.msra.mxu0 %v559
        %763 = vmatpush.bf16.msra.mxu0 %v556
        %764 = vmatpush.bf16.msra.mxu0 %v553
        %765 = vmatpush.bf16.msra.mxu0 %v550
        %766 = vmatpush.bf16.msra.mxu0 %v547
        %767 = vmatpush.bf16.msra.mxu0 %v544
        %768 = vmatpush.bf16.msra.mxu0 %v541
        %769 = vmatpush.bf16.msra.mxu0 %v538
        %770 = vmatmul.bf16.gmra.mxu0 %v424
        %v771 = vpop.f32.mrf.mxu0
        %v772 = vadd.f32 0.0, %v771
        %v773 = vpop.f32.mrf.mxu0
        %v774 = vadd.f32 0.0, %v773
        %775 = vmatmul.bf16.gmra.mxu0 %v425
        %v776 = vpop.f32.mrf.mxu0
        %v777 = vadd.f32 0.0, %v776
        %v778 = vpop.f32.mrf.mxu0
        %v779 = vadd.f32 0.0, %v778
        %780 = vmatmul.bf16.gmra.mxu0 %v426
        %v781 = vpop.f32.mrf.mxu0
        %v782 = vadd.f32 0.0, %v781
        %v783 = vpop.f32.mrf.mxu0
        %v784 = vadd.f32 0.0, %v783
        %785 = vmatmul.bf16.gmra.mxu0 %v427
        %v786 = vpop.f32.mrf.mxu0
        %v787 = vadd.f32 0.0, %v786
        %v788 = vpop.f32.mrf.mxu0
        %v789 = vadd.f32 0.0, %v788
        %790 = vmatmul.bf16.gmra.mxu0 %v428
        %v791 = vpop.f32.mrf.mxu0
        %v792 = vadd.f32 0.0, %v791
        %v793 = vpop.f32.mrf.mxu0
        %v794 = vadd.f32 0.0, %v793
        %795 = vmatmul.bf16.gmra.mxu0 %v429
        %v796 = vpop.f32.mrf.mxu0
        %v797 = vadd.f32 0.0, %v796
        %v798 = vpop.f32.mrf.mxu0
        %v799 = vadd.f32 0.0, %v798
        %800 = vmatmul.bf16.gmra.mxu0 %v430
        %v801 = vpop.f32.mrf.mxu0
        %v802 = vadd.f32 0.0, %v801
        %v803 = vpop.f32.mrf.mxu0
        %v804 = vadd.f32 0.0, %v803
        %805 = vmatmul.bf16.gmra.mxu0 %v431
        %v806 = vpop.f32.mrf.mxu0
        %v807 = vadd.f32 0.0, %v806
        %v808 = vpop.f32.mrf.mxu0
        %v809 = vadd.f32 0.0, %v808
        %810 = vmatmul.bf16.gmra.mxu0 %v432
        %v811 = vpop.f32.mrf.mxu0
        %v812 = vadd.f32 0.0, %v811
        %v813 = vpop.f32.mrf.mxu0
        %v814 = vadd.f32 0.0, %v813
        %815 = vmatmul.bf16.gmra.mxu0 %v433
        %v816 = vpop.f32.mrf.mxu0
        %v817 = vadd.f32 0.0, %v816
        %v818 = vpop.f32.mrf.mxu0
        %v819 = vadd.f32 0.0, %v818
        %820 = vmatmul.bf16.gmra.mxu0 %v434
        %v821 = vpop.f32.mrf.mxu0
        %v822 = vadd.f32 0.0, %v821
        %v823 = vpop.f32.mrf.mxu0
        %v824 = vadd.f32 0.0, %v823
        %825 = vmatmul.bf16.gmra.mxu0 %v435
        %v826 = vpop.f32.mrf.mxu0
        %v827 = vadd.f32 0.0, %v826
        %v828 = vpop.f32.mrf.mxu0
        %v829 = vadd.f32 0.0, %v828
        %830 = vmatmul.bf16.gmra.mxu0 %v436
        %v831 = vpop.f32.mrf.mxu0
        %v832 = vadd.f32 0.0, %v831
        %v833 = vpop.f32.mrf.mxu0
        %v834 = vadd.f32 0.0, %v833
        %835 = vmatmul.bf16.gmra.mxu0 %v437
        %v836 = vpop.f32.mrf.mxu0
        %v837 = vadd.f32 0.0, %v836
        %v838 = vpop.f32.mrf.mxu0
        %v839 = vadd.f32 0.0, %v838
        %840 = vmatmul.bf16.gmra.mxu0 %v438
        %v841 = vpop.f32.mrf.mxu0
        %v842 = vadd.f32 0.0, %v841
        %v843 = vpop.f32.mrf.mxu0
        %v844 = vadd.f32 0.0, %v843
        %845 = vmatmul.bf16.gmra.mxu0 %v439
        %v846 = vpop.f32.mrf.mxu0
        %v847 = vadd.f32 0.0, %v846
        %v848 = vpop.f32.mrf.mxu0
        %v849 = vadd.f32 0.0, %v848
        %850 = vdwg.mxu0
        %v851 = vperm.slane %v327, 0
        %v852 = vadd.f32 %v594, %v851
        %v853 = vadd.f32 %v596, %v851
        %v854 = vadd.f32 %v599, %v851
        %v855 = vadd.f32 %v601, %v851
        %v856 = vadd.f32 %v604, %v851
        %v857 = vadd.f32 %v606, %v851
        %v858 = vadd.f32 %v609, %v851
        %v859 = vadd.f32 %v611, %v851
        %v860 = vadd.f32 %v614, %v851
        %v861 = vadd.f32 %v616, %v851
        %v862 = vadd.f32 %v619, %v851
        %v863 = vadd.f32 %v621, %v851
        %v864 = vadd.f32 %v624, %v851
        %v865 = vadd.f32 %v626, %v851
        %v866 = vadd.f32 %v629, %v851
        %v867 = vadd.f32 %v631, %v851
        %v868 = vadd.f32 %v634, %v851
        %v869 = vadd.f32 %v636, %v851
        %v870 = vadd.f32 %v639, %v851
        %v871 = vadd.f32 %v641, %v851
        %v872 = vadd.f32 %v644, %v851
        %v873 = vadd.f32 %v646, %v851
        %v874 = vadd.f32 %v649, %v851
        %v875 = vadd.f32 %v651, %v851
        %v876 = vadd.f32 %v654, %v851
        %v877 = vadd.f32 %v656, %v851
        %v878 = vadd.f32 %v659, %v851
        %v879 = vadd.f32 %v661, %v851
        %v880 = vadd.f32 %v664, %v851
        %v881 = vadd.f32 %v666, %v851
        %v882 = vadd.f32 %v669, %v851
        %v883 = vadd.f32 %v671, %v851
        %v884 = vpack.c.bf16 %v852, %v852
        %v885 = vpack.c.bf16 %v853, %v853
        %v886 = vpack.c.bf16 %v854, %v854
        %v887 = vpack.c.bf16 %v855, %v855
        %v888 = vpack.c.bf16 %v856, %v856
        %v889 = vpack.c.bf16 %v857, %v857
        %v890 = vpack.c.bf16 %v858, %v858
        %v891 = vpack.c.bf16 %v859, %v859
        %v892 = vpack.c.bf16 %v860, %v860
        %v893 = vpack.c.bf16 %v861, %v861
        %v894 = vpack.c.bf16 %v862, %v862
        %v895 = vpack.c.bf16 %v863, %v863
        %v896 = vpack.c.bf16 %v864, %v864
        %v897 = vpack.c.bf16 %v865, %v865
        %v898 = vpack.c.bf16 %v866, %v866
        %v899 = vpack.c.bf16 %v867, %v867
        %v900 = vpack.c.bf16 %v868, %v868
        %v901 = vpack.c.bf16 %v869, %v869
        %v902 = vpack.c.bf16 %v870, %v870
        %v903 = vpack.c.bf16 %v871, %v871
        %v904 = vpack.c.bf16 %v872, %v872
        %v905 = vpack.c.bf16 %v873, %v873
        %v906 = vpack.c.bf16 %v874, %v874
        %v907 = vpack.c.bf16 %v875, %v875
        %v908 = vpack.c.bf16 %v876, %v876
        %v909 = vpack.c.bf16 %v877, %v877
        %v910 = vpack.c.bf16 %v878, %v878
        %v911 = vpack.c.bf16 %v879, %v879
        %v912 = vpack.c.bf16 %v880, %v880
        %v913 = vpack.c.bf16 %v881, %v881
        %v914 = vpack.c.bf16 %v882, %v882
        %v915 = vpack.c.bf16 %v883, %v883
        %v916 = vperm.slane %v327, 1
        %v917 = vadd.f32 %v683, %v916
        %v918 = vadd.f32 %v685, %v916
        %v919 = vadd.f32 %v688, %v916
        %v920 = vadd.f32 %v690, %v916
        %v921 = vadd.f32 %v693, %v916
        %v922 = vadd.f32 %v695, %v916
        %v923 = vadd.f32 %v698, %v916
        %v924 = vadd.f32 %v700, %v916
        %v925 = vadd.f32 %v703, %v916
        %v926 = vadd.f32 %v705, %v916
        %v927 = vadd.f32 %v708, %v916
        %v928 = vadd.f32 %v710, %v916
        %v929 = vadd.f32 %v713, %v916
        %v930 = vadd.f32 %v715, %v916
        %v931 = vadd.f32 %v718, %v916
        %v932 = vadd.f32 %v720, %v916
        %v933 = vadd.f32 %v723, %v916
        %v934 = vadd.f32 %v725, %v916
        %v935 = vadd.f32 %v728, %v916
        %v936 = vadd.f32 %v730, %v916
        %v937 = vadd.f32 %v733, %v916
        %v938 = vadd.f32 %v735, %v916
        %v939 = vadd.f32 %v738, %v916
        %v940 = vadd.f32 %v740, %v916
        %v941 = vadd.f32 %v743, %v916
        %v942 = vadd.f32 %v745, %v916
        %v943 = vadd.f32 %v748, %v916
        %v944 = vadd.f32 %v750, %v916
        %v945 = vadd.f32 %v753, %v916
        %v946 = vadd.f32 %v755, %v916
        %v947 = vadd.f32 %v758, %v916
        %v948 = vadd.f32 %v760, %v916
        %v949 = vpack.c.bf16 %v917, %v917
        %v950 = vpack.c.bf16 %v918, %v918
        %v951 = vpack.c.bf16 %v919, %v919
        %v952 = vpack.c.bf16 %v920, %v920
        %v953 = vpack.c.bf16 %v921, %v921
        %v954 = vpack.c.bf16 %v922, %v922
        %v955 = vpack.c.bf16 %v923, %v923
        %v956 = vpack.c.bf16 %v924, %v924
        %v957 = vpack.c.bf16 %v925, %v925
        %v958 = vpack.c.bf16 %v926, %v926
        %v959 = vpack.c.bf16 %v927, %v927
        %v960 = vpack.c.bf16 %v928, %v928
        %v961 = vpack.c.bf16 %v929, %v929
        %v962 = vpack.c.bf16 %v930, %v930
        %v963 = vpack.c.bf16 %v931, %v931
        %v964 = vpack.c.bf16 %v932, %v932
        %v965 = vpack.c.bf16 %v933, %v933
        %v966 = vpack.c.bf16 %v934, %v934
        %v967 = vpack.c.bf16 %v935, %v935
        %v968 = vpack.c.bf16 %v936, %v936
        %v969 = vpack.c.bf16 %v937, %v937
        %v970 = vpack.c.bf16 %v938, %v938
        %v971 = vpack.c.bf16 %v939, %v939
        %v972 = vpack.c.bf16 %v940, %v940
        %v973 = vpack.c.bf16 %v941, %v941
        %v974 = vpack.c.bf16 %v942, %v942
        %v975 = vpack.c.bf16 %v943, %v943
        %v976 = vpack.c.bf16 %v944, %v944
        %v977 = vpack.c.bf16 %v945, %v945
        %v978 = vpack.c.bf16 %v946, %v946
        %v979 = vpack.c.bf16 %v947, %v947
        %v980 = vpack.c.bf16 %v948, %v948
        %v981 = vperm.slane %v327, 2
        %v982 = vadd.f32 %v772, %v981
        %v983 = vadd.f32 %v774, %v981
        %v984 = vadd.f32 %v777, %v981
        %v985 = vadd.f32 %v779, %v981
        %v986 = vadd.f32 %v782, %v981
        %v987 = vadd.f32 %v784, %v981
        %v988 = vadd.f32 %v787, %v981
        %v989 = vadd.f32 %v789, %v981
        %v990 = vadd.f32 %v792, %v981
        %v991 = vadd.f32 %v794, %v981
        %v992 = vadd.f32 %v797, %v981
        %v993 = vadd.f32 %v799, %v981
        %v994 = vadd.f32 %v802, %v981
        %v995 = vadd.f32 %v804, %v981
        %v996 = vadd.f32 %v807, %v981
        %v997 = vadd.f32 %v809, %v981
        %v998 = vadd.f32 %v812, %v981
        %v999 = vadd.f32 %v814, %v981
        %v1000 = vadd.f32 %v817, %v981
        %v1001 = vadd.f32 %v819, %v981
        %v1002 = vadd.f32 %v822, %v981
        %v1003 = vadd.f32 %v824, %v981
        %v1004 = vadd.f32 %v827, %v981
        %v1005 = vadd.f32 %v829, %v981
        %v1006 = vadd.f32 %v832, %v981
        %v1007 = vadd.f32 %v834, %v981
        %v1008 = vadd.f32 %v837, %v981
        %v1009 = vadd.f32 %v839, %v981
        %v1010 = vadd.f32 %v842, %v981
        %v1011 = vadd.f32 %v844, %v981
        %v1012 = vadd.f32 %v847, %v981
        %v1013 = vadd.f32 %v849, %v981
        %v1014 = vpack.c.bf16 %v982, %v982
        %v1015 = vpack.c.bf16 %v983, %v983
        %v1016 = vpack.c.bf16 %v984, %v984
        %v1017 = vpack.c.bf16 %v985, %v985
        %v1018 = vpack.c.bf16 %v986, %v986
        %v1019 = vpack.c.bf16 %v987, %v987
        %v1020 = vpack.c.bf16 %v988, %v988
        %v1021 = vpack.c.bf16 %v989, %v989
        %v1022 = vpack.c.bf16 %v990, %v990
        %v1023 = vpack.c.bf16 %v991, %v991
        %v1024 = vpack.c.bf16 %v992, %v992
        %v1025 = vpack.c.bf16 %v993, %v993
        %v1026 = vpack.c.bf16 %v994, %v994
        %v1027 = vpack.c.bf16 %v995, %v995
        %v1028 = vpack.c.bf16 %v996, %v996
        %v1029 = vpack.c.bf16 %v997, %v997
        %v1030 = vpack.c.bf16 %v998, %v998
        %v1031 = vpack.c.bf16 %v999, %v999
        %v1032 = vpack.c.bf16 %v1000, %v1000
        %v1033 = vpack.c.bf16 %v1001, %v1001
        %v1034 = vpack.c.bf16 %v1002, %v1002
        %v1035 = vpack.c.bf16 %v1003, %v1003
        %v1036 = vpack.c.bf16 %v1004, %v1004
        %v1037 = vpack.c.bf16 %v1005, %v1005
        %v1038 = vpack.c.bf16 %v1006, %v1006
        %v1039 = vpack.c.bf16 %v1007, %v1007
        %v1040 = vpack.c.bf16 %v1008, %v1008
        %v1041 = vpack.c.bf16 %v1009, %v1009
        %v1042 = vpack.c.bf16 %v1010, %v1010
        %v1043 = vpack.c.bf16 %v1011, %v1011
        %v1044 = vpack.c.bf16 %v1012, %v1012
        %v1045 = vpack.c.bf16 %v1013, %v1013
        %v1048 = vunpack.c.l.b16 %v884
        %v1049 = vunpack.c.l.b16 %v885
        %v1050 = vpack.c.b16 %v1049, %v1048
        %v1053 = vunpack.c.l.b16 %v949
        %v1054 = vunpack.c.l.b16 %v950
        %v1055 = vpack.c.b16 %v1054, %v1053
        %vm1056 = vcmask 261120
        %v1058 = vsel %vm1056, %v1050, 0
        %v1061 = vsel %vm1056, %v1055, 0
        %1063 = vmatpush.bf16.xpose.msra.mxu0 0
        %1064 = vmatpush.bf16.xpose.msra.mxu0 0
        %1065 = vmatpush.bf16.xpose.msra.mxu0 0
        %1066 = vmatpush.bf16.xpose.msra.mxu0 0
        %1067 = vmatpush.bf16.xpose.msra.mxu0 0
        %1068 = vmatpush.bf16.xpose.msra.mxu0 0
        %1069 = vmatpush.bf16.xpose.msra.mxu0 0
        %1070 = vmatpush.bf16.xpose.msra.mxu0 %v1061
        %1071 = vmatmul.bf16.gmra.mxu0 %v1058
        %v1072 = vpop.f32.mrf.mxu0
        %v1073 = vadd.f32 0.0, %v1072
        %v1074 = vpop.f32.mrf.mxu0
        %v1075 = vadd.f32 0.0, %v1074
        %1076 = vdwg.mxu0
        %v1079 = vunpack.c.l.b16 %v886
        %v1080 = vunpack.c.l.b16 %v887
        %v1081 = vpack.c.b16 %v1080, %v1079
        %v1084 = vunpack.c.l.b16 %v951
        %v1085 = vunpack.c.l.b16 %v952
        %v1086 = vpack.c.b16 %v1085, %v1084
        %v1088 = vsel %vm1056, %v1081, 0
        %v1091 = vsel %vm1056, %v1086, 0
        %1093 = vmatpush.bf16.xpose.msra.mxu0 0
        %1094 = vmatpush.bf16.xpose.msra.mxu0 0
        %1095 = vmatpush.bf16.xpose.msra.mxu0 0
        %1096 = vmatpush.bf16.xpose.msra.mxu0 0
        %1097 = vmatpush.bf16.xpose.msra.mxu0 0
        %1098 = vmatpush.bf16.xpose.msra.mxu0 0
        %1099 = vmatpush.bf16.xpose.msra.mxu0 0
        %1100 = vmatpush.bf16.xpose.msra.mxu0 %v1091
        %1101 = vmatmul.bf16.gmra.mxu0 %v1088
        %v1102 = vpop.f32.mrf.mxu0
        %v1103 = vadd.f32 0.0, %v1102
        %v1104 = vpop.f32.mrf.mxu0
        %v1105 = vadd.f32 0.0, %v1104
        %1106 = vdwg.mxu0
        %v1109 = vunpack.c.l.b16 %v888
        %v1110 = vunpack.c.l.b16 %v889
        %v1111 = vpack.c.b16 %v1110, %v1109
        %v1114 = vunpack.c.l.b16 %v953
        %v1115 = vunpack.c.l.b16 %v954
        %v1116 = vpack.c.b16 %v1115, %v1114
        %v1118 = vsel %vm1056, %v1111, 0
        %v1121 = vsel %vm1056, %v1116, 0
        %1123 = vmatpush.bf16.xpose.msra.mxu0 0
        %1124 = vmatpush.bf16.xpose.msra.mxu0 0
        %1125 = vmatpush.bf16.xpose.msra.mxu0 0
        %1126 = vmatpush.bf16.xpose.msra.mxu0 0
        %1127 = vmatpush.bf16.xpose.msra.mxu0 0
        %1128 = vmatpush.bf16.xpose.msra.mxu0 0
        %1129 = vmatpush.bf16.xpose.msra.mxu0 0
        %1130 = vmatpush.bf16.xpose.msra.mxu0 %v1121
        %1131 = vmatmul.bf16.gmra.mxu0 %v1118
        %v1132 = vpop.f32.mrf.mxu0
        %v1133 = vadd.f32 0.0, %v1132
        %v1134 = vpop.f32.mrf.mxu0
        %v1135 = vadd.f32 0.0, %v1134
        %1136 = vdwg.mxu0
        %v1139 = vunpack.c.l.b16 %v890
        %v1140 = vunpack.c.l.b16 %v891
        %v1141 = vpack.c.b16 %v1140, %v1139
        %v1144 = vunpack.c.l.b16 %v955
        %v1145 = vunpack.c.l.b16 %v956
        %v1146 = vpack.c.b16 %v1145, %v1144
        %v1148 = vsel %vm1056, %v1141, 0
        %v1151 = vsel %vm1056, %v1146, 0
        %1153 = vmatpush.bf16.xpose.msra.mxu0 0
        %1154 = vmatpush.bf16.xpose.msra.mxu0 0
        %1155 = vmatpush.bf16.xpose.msra.mxu0 0
        %1156 = vmatpush.bf16.xpose.msra.mxu0 0
        %1157 = vmatpush.bf16.xpose.msra.mxu0 0
        %1158 = vmatpush.bf16.xpose.msra.mxu0 0
        %1159 = vmatpush.bf16.xpose.msra.mxu0 0
        %1160 = vmatpush.bf16.xpose.msra.mxu0 %v1151
        %1161 = vmatmul.bf16.gmra.mxu0 %v1148
        %v1162 = vpop.f32.mrf.mxu0
        %v1163 = vadd.f32 0.0, %v1162
        %v1164 = vpop.f32.mrf.mxu0
        %v1165 = vadd.f32 0.0, %v1164
        %1166 = vdwg.mxu0
        %v1169 = vunpack.c.l.b16 %v892
        %v1170 = vunpack.c.l.b16 %v893
        %v1171 = vpack.c.b16 %v1170, %v1169
        %v1174 = vunpack.c.l.b16 %v957
        %v1175 = vunpack.c.l.b16 %v958
        %v1176 = vpack.c.b16 %v1175, %v1174
        %v1178 = vsel %vm1056, %v1171, 0
        %v1181 = vsel %vm1056, %v1176, 0
        %1183 = vmatpush.bf16.xpose.msra.mxu0 0
        %1184 = vmatpush.bf16.xpose.msra.mxu0 0
        %1185 = vmatpush.bf16.xpose.msra.mxu0 0
        %1186 = vmatpush.bf16.xpose.msra.mxu0 0
        %1187 = vmatpush.bf16.xpose.msra.mxu0 0
        %1188 = vmatpush.bf16.xpose.msra.mxu0 0
        %1189 = vmatpush.bf16.xpose.msra.mxu0 0
        %1190 = vmatpush.bf16.xpose.msra.mxu0 %v1181
        %1191 = vmatmul.bf16.gmra.mxu0 %v1178
        %v1192 = vpop.f32.mrf.mxu0
        %v1193 = vadd.f32 0.0, %v1192
        %v1194 = vpop.f32.mrf.mxu0
        %v1195 = vadd.f32 0.0, %v1194
        %1196 = vdwg.mxu0
        %v1199 = vunpack.c.l.b16 %v894
        %v1200 = vunpack.c.l.b16 %v895
        %v1201 = vpack.c.b16 %v1200, %v1199
        %v1204 = vunpack.c.l.b16 %v959
        %v1205 = vunpack.c.l.b16 %v960
        %v1206 = vpack.c.b16 %v1205, %v1204
        %v1208 = vsel %vm1056, %v1201, 0
        %v1211 = vsel %vm1056, %v1206, 0
        %1213 = vmatpush.bf16.xpose.msra.mxu0 0
        %1214 = vmatpush.bf16.xpose.msra.mxu0 0
        %1215 = vmatpush.bf16.xpose.msra.mxu0 0
        %1216 = vmatpush.bf16.xpose.msra.mxu0 0
        %1217 = vmatpush.bf16.xpose.msra.mxu0 0
        %1218 = vmatpush.bf16.xpose.msra.mxu0 0
        %1219 = vmatpush.bf16.xpose.msra.mxu0 0
        %1220 = vmatpush.bf16.xpose.msra.mxu0 %v1211
        %1221 = vmatmul.bf16.gmra.mxu0 %v1208
        %v1222 = vpop.f32.mrf.mxu0
        %v1223 = vadd.f32 0.0, %v1222
        %v1224 = vpop.f32.mrf.mxu0
        %v1225 = vadd.f32 0.0, %v1224
        %1226 = vdwg.mxu0
        %v1229 = vunpack.c.l.b16 %v896
        %v1230 = vunpack.c.l.b16 %v897
        %v1231 = vpack.c.b16 %v1230, %v1229
        %v1234 = vunpack.c.l.b16 %v961
        %v1235 = vunpack.c.l.b16 %v962
        %v1236 = vpack.c.b16 %v1235, %v1234
        %v1238 = vsel %vm1056, %v1231, 0
        %v1241 = vsel %vm1056, %v1236, 0
        %1243 = vmatpush.bf16.xpose.msra.mxu0 0
        %1244 = vmatpush.bf16.xpose.msra.mxu0 0
        %1245 = vmatpush.bf16.xpose.msra.mxu0 0
        %1246 = vmatpush.bf16.xpose.msra.mxu0 0
        %1247 = vmatpush.bf16.xpose.msra.mxu0 0
        %1248 = vmatpush.bf16.xpose.msra.mxu0 0
        %1249 = vmatpush.bf16.xpose.msra.mxu0 0
        %1250 = vmatpush.bf16.xpose.msra.mxu0 %v1241
        %1251 = vmatmul.bf16.gmra.mxu0 %v1238
        %v1252 = vpop.f32.mrf.mxu0
        %v1253 = vadd.f32 0.0, %v1252
        %v1254 = vpop.f32.mrf.mxu0
        %v1255 = vadd.f32 0.0, %v1254
        %1256 = vdwg.mxu0
        %v1259 = vunpack.c.l.b16 %v898
        %v1260 = vunpack.c.l.b16 %v899
        %v1261 = vpack.c.b16 %v1260, %v1259
        %v1264 = vunpack.c.l.b16 %v963
        %v1265 = vunpack.c.l.b16 %v964
        %v1266 = vpack.c.b16 %v1265, %v1264
        %v1268 = vsel %vm1056, %v1261, 0
        %v1271 = vsel %vm1056, %v1266, 0
        %1273 = vmatpush.bf16.xpose.msra.mxu0 0
        %1274 = vmatpush.bf16.xpose.msra.mxu0 0
        %1275 = vmatpush.bf16.xpose.msra.mxu0 0
        %1276 = vmatpush.bf16.xpose.msra.mxu0 0
        %1277 = vmatpush.bf16.xpose.msra.mxu0 0
        %1278 = vmatpush.bf16.xpose.msra.mxu0 0
        %1279 = vmatpush.bf16.xpose.msra.mxu0 0
        %1280 = vmatpush.bf16.xpose.msra.mxu0 %v1271
        %1281 = vmatmul.bf16.gmra.mxu0 %v1268
        %v1282 = vpop.f32.mrf.mxu0
        %v1283 = vadd.f32 0.0, %v1282
        %v1284 = vpop.f32.mrf.mxu0
        %v1285 = vadd.f32 0.0, %v1284
        %1286 = vdwg.mxu0
        %v1289 = vunpack.c.l.b16 %v900
        %v1290 = vunpack.c.l.b16 %v901
        %v1291 = vpack.c.b16 %v1290, %v1289
        %v1294 = vunpack.c.l.b16 %v965
        %v1295 = vunpack.c.l.b16 %v966
        %v1296 = vpack.c.b16 %v1295, %v1294
        %v1298 = vsel %vm1056, %v1291, 0
        %v1301 = vsel %vm1056, %v1296, 0
        %1303 = vmatpush.bf16.xpose.msra.mxu0 0
        %1304 = vmatpush.bf16.xpose.msra.mxu0 0
        %1305 = vmatpush.bf16.xpose.msra.mxu0 0
        %1306 = vmatpush.bf16.xpose.msra.mxu0 0
        %1307 = vmatpush.bf16.xpose.msra.mxu0 0
        %1308 = vmatpush.bf16.xpose.msra.mxu0 0
        %1309 = vmatpush.bf16.xpose.msra.mxu0 0
        %1310 = vmatpush.bf16.xpose.msra.mxu0 %v1301
        %1311 = vmatmul.bf16.gmra.mxu0 %v1298
        %v1312 = vpop.f32.mrf.mxu0
        %v1313 = vadd.f32 0.0, %v1312
        %v1314 = vpop.f32.mrf.mxu0
        %v1315 = vadd.f32 0.0, %v1314
        %1316 = vdwg.mxu0
        %v1319 = vunpack.c.l.b16 %v902
        %v1320 = vunpack.c.l.b16 %v903
        %v1321 = vpack.c.b16 %v1320, %v1319
        %v1324 = vunpack.c.l.b16 %v967
        %v1325 = vunpack.c.l.b16 %v968
        %v1326 = vpack.c.b16 %v1325, %v1324
        %v1328 = vsel %vm1056, %v1321, 0
        %v1331 = vsel %vm1056, %v1326, 0
        %1333 = vmatpush.bf16.xpose.msra.mxu0 0
        %1334 = vmatpush.bf16.xpose.msra.mxu0 0
        %1335 = vmatpush.bf16.xpose.msra.mxu0 0
        %1336 = vmatpush.bf16.xpose.msra.mxu0 0
        %1337 = vmatpush.bf16.xpose.msra.mxu0 0
        %1338 = vmatpush.bf16.xpose.msra.mxu0 0
        %1339 = vmatpush.bf16.xpose.msra.mxu0 0
        %1340 = vmatpush.bf16.xpose.msra.mxu0 %v1331
        %1341 = vmatmul.bf16.gmra.mxu0 %v1328
        %v1342 = vpop.f32.mrf.mxu0
        %v1343 = vadd.f32 0.0, %v1342
        %v1344 = vpop.f32.mrf.mxu0
        %v1345 = vadd.f32 0.0, %v1344
        %1346 = vdwg.mxu0
        %v1349 = vunpack.c.l.b16 %v904
        %v1350 = vunpack.c.l.b16 %v905
        %v1351 = vpack.c.b16 %v1350, %v1349
        %v1354 = vunpack.c.l.b16 %v969
        %v1355 = vunpack.c.l.b16 %v970
        %v1356 = vpack.c.b16 %v1355, %v1354
        %v1358 = vsel %vm1056, %v1351, 0
        %v1361 = vsel %vm1056, %v1356, 0
        %1363 = vmatpush.bf16.xpose.msra.mxu0 0
        %1364 = vmatpush.bf16.xpose.msra.mxu0 0
        %1365 = vmatpush.bf16.xpose.msra.mxu0 0
        %1366 = vmatpush.bf16.xpose.msra.mxu0 0
        %1367 = vmatpush.bf16.xpose.msra.mxu0 0
        %1368 = vmatpush.bf16.xpose.msra.mxu0 0
        %1369 = vmatpush.bf16.xpose.msra.mxu0 0
        %1370 = vmatpush.bf16.xpose.msra.mxu0 %v1361
        %1371 = vmatmul.bf16.gmra.mxu0 %v1358
        %v1372 = vpop.f32.mrf.mxu0
        %v1373 = vadd.f32 0.0, %v1372
        %v1374 = vpop.f32.mrf.mxu0
        %v1375 = vadd.f32 0.0, %v1374
        %1376 = vdwg.mxu0
        %v1379 = vunpack.c.l.b16 %v906
        %v1380 = vunpack.c.l.b16 %v907
        %v1381 = vpack.c.b16 %v1380, %v1379
        %v1384 = vunpack.c.l.b16 %v971
        %v1385 = vunpack.c.l.b16 %v972
        %v1386 = vpack.c.b16 %v1385, %v1384
        %v1388 = vsel %vm1056, %v1381, 0
        %v1391 = vsel %vm1056, %v1386, 0
        %1393 = vmatpush.bf16.xpose.msra.mxu0 0
        %1394 = vmatpush.bf16.xpose.msra.mxu0 0
        %1395 = vmatpush.bf16.xpose.msra.mxu0 0
        %1396 = vmatpush.bf16.xpose.msra.mxu0 0
        %1397 = vmatpush.bf16.xpose.msra.mxu0 0
        %1398 = vmatpush.bf16.xpose.msra.mxu0 0
        %1399 = vmatpush.bf16.xpose.msra.mxu0 0
        %1400 = vmatpush.bf16.xpose.msra.mxu0 %v1391
        %1401 = vmatmul.bf16.gmra.mxu0 %v1388
        %v1402 = vpop.f32.mrf.mxu0
        %v1403 = vadd.f32 0.0, %v1402
        %v1404 = vpop.f32.mrf.mxu0
        %v1405 = vadd.f32 0.0, %v1404
        %1406 = vdwg.mxu0
        %v1409 = vunpack.c.l.b16 %v908
        %v1410 = vunpack.c.l.b16 %v909
        %v1411 = vpack.c.b16 %v1410, %v1409
        %v1414 = vunpack.c.l.b16 %v973
        %v1415 = vunpack.c.l.b16 %v974
        %v1416 = vpack.c.b16 %v1415, %v1414
        %v1418 = vsel %vm1056, %v1411, 0
        %v1421 = vsel %vm1056, %v1416, 0
        %1423 = vmatpush.bf16.xpose.msra.mxu0 0
        %1424 = vmatpush.bf16.xpose.msra.mxu0 0
        %1425 = vmatpush.bf16.xpose.msra.mxu0 0
        %1426 = vmatpush.bf16.xpose.msra.mxu0 0
        %1427 = vmatpush.bf16.xpose.msra.mxu0 0
        %1428 = vmatpush.bf16.xpose.msra.mxu0 0
        %1429 = vmatpush.bf16.xpose.msra.mxu0 0
        %1430 = vmatpush.bf16.xpose.msra.mxu0 %v1421
        %1431 = vmatmul.bf16.gmra.mxu0 %v1418
        %v1432 = vpop.f32.mrf.mxu0
        %v1433 = vadd.f32 0.0, %v1432
        %v1434 = vpop.f32.mrf.mxu0
        %v1435 = vadd.f32 0.0, %v1434
        %1436 = vdwg.mxu0
        %v1439 = vunpack.c.l.b16 %v910
        %v1440 = vunpack.c.l.b16 %v911
        %v1441 = vpack.c.b16 %v1440, %v1439
        %v1444 = vunpack.c.l.b16 %v975
        %v1445 = vunpack.c.l.b16 %v976
        %v1446 = vpack.c.b16 %v1445, %v1444
        %v1448 = vsel %vm1056, %v1441, 0
        %v1451 = vsel %vm1056, %v1446, 0
        %1453 = vmatpush.bf16.xpose.msra.mxu0 0
        %1454 = vmatpush.bf16.xpose.msra.mxu0 0
        %1455 = vmatpush.bf16.xpose.msra.mxu0 0
        %1456 = vmatpush.bf16.xpose.msra.mxu0 0
        %1457 = vmatpush.bf16.xpose.msra.mxu0 0
        %1458 = vmatpush.bf16.xpose.msra.mxu0 0
        %1459 = vmatpush.bf16.xpose.msra.mxu0 0
        %1460 = vmatpush.bf16.xpose.msra.mxu0 %v1451
        %1461 = vmatmul.bf16.gmra.mxu0 %v1448
        %v1462 = vpop.f32.mrf.mxu0
        %v1463 = vadd.f32 0.0, %v1462
        %v1464 = vpop.f32.mrf.mxu0
        %v1465 = vadd.f32 0.0, %v1464
        %1466 = vdwg.mxu0
        %v1469 = vunpack.c.l.b16 %v912
        %v1470 = vunpack.c.l.b16 %v913
        %v1471 = vpack.c.b16 %v1470, %v1469
        %v1474 = vunpack.c.l.b16 %v977
        %v1475 = vunpack.c.l.b16 %v978
        %v1476 = vpack.c.b16 %v1475, %v1474
        %v1478 = vsel %vm1056, %v1471, 0
        %v1481 = vsel %vm1056, %v1476, 0
        %1483 = vmatpush.bf16.xpose.msra.mxu0 0
        %1484 = vmatpush.bf16.xpose.msra.mxu0 0
        %1485 = vmatpush.bf16.xpose.msra.mxu0 0
        %1486 = vmatpush.bf16.xpose.msra.mxu0 0
        %1487 = vmatpush.bf16.xpose.msra.mxu0 0
        %1488 = vmatpush.bf16.xpose.msra.mxu0 0
        %1489 = vmatpush.bf16.xpose.msra.mxu0 0
        %1490 = vmatpush.bf16.xpose.msra.mxu0 %v1481
        %1491 = vmatmul.bf16.gmra.mxu0 %v1478
        %v1492 = vpop.f32.mrf.mxu0
        %v1493 = vadd.f32 0.0, %v1492
        %v1494 = vpop.f32.mrf.mxu0
        %v1495 = vadd.f32 0.0, %v1494
        %1496 = vdwg.mxu0
        %v1499 = vunpack.c.l.b16 %v914
        %v1500 = vunpack.c.l.b16 %v915
        %v1501 = vpack.c.b16 %v1500, %v1499
        %v1504 = vunpack.c.l.b16 %v979
        %v1505 = vunpack.c.l.b16 %v980
        %v1506 = vpack.c.b16 %v1505, %v1504
        %v1508 = vsel %vm1056, %v1501, 0
        %v1511 = vsel %vm1056, %v1506, 0
        %1513 = vmatpush.bf16.xpose.msra.mxu0 0
        %1514 = vmatpush.bf16.xpose.msra.mxu0 0
        %1515 = vmatpush.bf16.xpose.msra.mxu0 0
        %1516 = vmatpush.bf16.xpose.msra.mxu0 0
        %1517 = vmatpush.bf16.xpose.msra.mxu0 0
        %1518 = vmatpush.bf16.xpose.msra.mxu0 0
        %1519 = vmatpush.bf16.xpose.msra.mxu0 0
        %1520 = vmatpush.bf16.xpose.msra.mxu0 %v1511
        %1521 = vmatmul.bf16.gmra.mxu0 %v1508
        %v1522 = vpop.f32.mrf.mxu0
        %v1523 = vadd.f32 0.0, %v1522
        %v1524 = vpop.f32.mrf.mxu0
        %v1525 = vadd.f32 0.0, %v1524
        %1526 = vdwg.mxu0
        %v1527 = vsel %vm313, 1, 0
        %v1528 = vsel %vm314, 1, 0
        %v1529 = vsel %vm315, 1, 0
        %v1530 = vsel %vm316, 1, 0
        %v1531 = vsel %vm317, 1, 0
        %v1532 = vsel %vm318, 1, 0
        %v1533 = vsel %vm319, 1, 0
        %v1534 = vsel %vm320, 1, 0
        %v1535 = vsel %vm321, 1, 0
        %v1536 = vsel %vm322, 1, 0
        %v1537 = vsel %vm323, 1, 0
        %v1538 = vsel %vm324, 1, 0
        %v1539 = vsel %vm325, 1, 0
        %v1540 = vsel %vm326, 1, 0
        %v1541 = vperm.slane %v297, 0
        %v1542 = vperm.slane %v1527, 0
        %v1543 = vperm.slane %v1528, 0
        %v1544 = vperm.slane %v1529, 0
        %v1545 = vperm.slane %v1530, 0
        %v1546 = vperm.slane %v1531, 0
        %v1547 = vperm.slane %v1532, 0
        %v1548 = vperm.slane %v1533, 0
        %v1549 = vperm.slane %v298, 0
        %v1550 = vperm.slane %v1534, 0
        %v1551 = vperm.slane %v1535, 0
        %v1552 = vperm.slane %v1536, 0
        %v1553 = vperm.slane %v1537, 0
        %v1554 = vperm.slane %v1538, 0
        %v1555 = vperm.slane %v1539, 0
        %v1556 = vperm.slane %v1540, 0
        %vm1557 = vcmp.eq.s32.totalorder %v1541, 1
        %vm1558 = vcmp.eq.s32.totalorder %v1542, 1
        %vm1559 = vcmp.eq.s32.totalorder %v1543, 1
        %vm1560 = vcmp.eq.s32.totalorder %v1544, 1
        %vm1561 = vcmp.eq.s32.totalorder %v1545, 1
        %vm1562 = vcmp.eq.s32.totalorder %v1546, 1
        %vm1563 = vcmp.eq.s32.totalorder %v1547, 1
        %vm1564 = vcmp.eq.s32.totalorder %v1548, 1
        %vm1565 = vcmp.eq.s32.totalorder %v1549, 1
        %vm1566 = vcmp.eq.s32.totalorder %v1550, 1
        %vm1567 = vcmp.eq.s32.totalorder %v1551, 1
        %vm1568 = vcmp.eq.s32.totalorder %v1552, 1
        %vm1569 = vcmp.eq.s32.totalorder %v1553, 1
        %vm1570 = vcmp.eq.s32.totalorder %v1554, 1
        %vm1571 = vcmp.eq.s32.totalorder %v1555, 1
        %vm1572 = vcmp.eq.s32.totalorder %v1556, 1
        %v1573 = vsel %vm1557, %v1073, -1e+09
        %v1574 = vsel %vm1557, %v1075, -1e+09
        %v1575 = vsel %vm1558, %v1103, -1e+09
        %v1576 = vsel %vm1558, %v1105, -1e+09
        %v1577 = vsel %vm1559, %v1133, -1e+09
        %v1578 = vsel %vm1559, %v1135, -1e+09
        %v1579 = vsel %vm1560, %v1163, -1e+09
        %v1580 = vsel %vm1560, %v1165, -1e+09
        %v1581 = vsel %vm1561, %v1193, -1e+09
        %v1582 = vsel %vm1561, %v1195, -1e+09
        %v1583 = vsel %vm1562, %v1223, -1e+09
        %v1584 = vsel %vm1562, %v1225, -1e+09
        %v1585 = vsel %vm1563, %v1253, -1e+09
        %v1586 = vsel %vm1563, %v1255, -1e+09
        %v1587 = vsel %vm1564, %v1283, -1e+09
        %v1588 = vsel %vm1564, %v1285, -1e+09
        %v1589 = vsel %vm1565, %v1313, -1e+09
        %v1590 = vsel %vm1565, %v1315, -1e+09
        %v1591 = vsel %vm1566, %v1343, -1e+09
        %v1592 = vsel %vm1566, %v1345, -1e+09
        %v1593 = vsel %vm1567, %v1373, -1e+09
        %v1594 = vsel %vm1567, %v1375, -1e+09
        %v1595 = vsel %vm1568, %v1403, -1e+09
        %v1596 = vsel %vm1568, %v1405, -1e+09
        %v1597 = vsel %vm1569, %v1433, -1e+09
        %v1598 = vsel %vm1569, %v1435, -1e+09
        %v1599 = vsel %vm1570, %v1463, -1e+09
        %v1600 = vsel %vm1570, %v1465, -1e+09
        %v1601 = vsel %vm1571, %v1493, -1e+09
        %v1602 = vsel %vm1571, %v1495, -1e+09
        %v1603 = vsel %vm1572, %v1523, -1e+09
        %v1604 = vsel %vm1572, %v1525, -1e+09
        %vm1605 = vcmask 130048
        %v1606 = vsel %vm1605, %v1573, -inf
        %1607 = vmax.xlane.f32.xlu0 %v1606
        %v1608 = vpop.xlane.xlu0 %1607
        %v1609 = vsel %vm1605, %v1574, -inf
        %1610 = vmax.xlane.f32.xlu0 %v1609
        %v1611 = vpop.xlane.xlu0 %1610
        %v1612 = vsel %vm1605, %v1575, -inf
        %1613 = vmax.xlane.f32.xlu0 %v1612
        %v1614 = vpop.xlane.xlu0 %1613
        %v1615 = vsel %vm1605, %v1576, -inf
        %1616 = vmax.xlane.f32.xlu0 %v1615
        %v1617 = vpop.xlane.xlu0 %1616
        %v1618 = vsel %vm1605, %v1577, -inf
        %1619 = vmax.xlane.f32.xlu0 %v1618
        %v1620 = vpop.xlane.xlu0 %1619
        %v1621 = vsel %vm1605, %v1578, -inf
        %1622 = vmax.xlane.f32.xlu0 %v1621
        %v1623 = vpop.xlane.xlu0 %1622
        %v1624 = vsel %vm1605, %v1579, -inf
        %1625 = vmax.xlane.f32.xlu0 %v1624
        %v1626 = vpop.xlane.xlu0 %1625
        %v1627 = vsel %vm1605, %v1580, -inf
        %1628 = vmax.xlane.f32.xlu0 %v1627
        %v1629 = vpop.xlane.xlu0 %1628
        %v1630 = vsel %vm1605, %v1581, -inf
        %1631 = vmax.xlane.f32.xlu0 %v1630
        %v1632 = vpop.xlane.xlu0 %1631
        %v1633 = vsel %vm1605, %v1582, -inf
        %1634 = vmax.xlane.f32.xlu0 %v1633
        %v1635 = vpop.xlane.xlu0 %1634
        %v1636 = vsel %vm1605, %v1583, -inf
        %1637 = vmax.xlane.f32.xlu0 %v1636
        %v1638 = vpop.xlane.xlu0 %1637
        %v1639 = vsel %vm1605, %v1584, -inf
        %1640 = vmax.xlane.f32.xlu0 %v1639
        %v1641 = vpop.xlane.xlu0 %1640
        %v1642 = vsel %vm1605, %v1585, -inf
        %1643 = vmax.xlane.f32.xlu0 %v1642
        %v1644 = vpop.xlane.xlu0 %1643
        %v1645 = vsel %vm1605, %v1586, -inf
        %1646 = vmax.xlane.f32.xlu0 %v1645
        %v1647 = vpop.xlane.xlu0 %1646
        %v1648 = vsel %vm1605, %v1587, -inf
        %1649 = vmax.xlane.f32.xlu0 %v1648
        %v1650 = vpop.xlane.xlu0 %1649
        %v1651 = vsel %vm1605, %v1588, -inf
        %1652 = vmax.xlane.f32.xlu0 %v1651
        %v1653 = vpop.xlane.xlu0 %1652
        %v1654 = vsel %vm1605, %v1589, -inf
        %1655 = vmax.xlane.f32.xlu0 %v1654
        %v1656 = vpop.xlane.xlu0 %1655
        %v1657 = vsel %vm1605, %v1590, -inf
        %1658 = vmax.xlane.f32.xlu0 %v1657
        %v1659 = vpop.xlane.xlu0 %1658
        %v1660 = vsel %vm1605, %v1591, -inf
        %1661 = vmax.xlane.f32.xlu0 %v1660
        %v1662 = vpop.xlane.xlu0 %1661
        %v1663 = vsel %vm1605, %v1592, -inf
        %1664 = vmax.xlane.f32.xlu0 %v1663
        %v1665 = vpop.xlane.xlu0 %1664
        %v1666 = vsel %vm1605, %v1593, -inf
        %1667 = vmax.xlane.f32.xlu0 %v1666
        %v1668 = vpop.xlane.xlu0 %1667
        %v1669 = vsel %vm1605, %v1594, -inf
        %1670 = vmax.xlane.f32.xlu0 %v1669
        %v1671 = vpop.xlane.xlu0 %1670
        %v1672 = vsel %vm1605, %v1595, -inf
        %1673 = vmax.xlane.f32.xlu0 %v1672
        %v1674 = vpop.xlane.xlu0 %1673
        %v1675 = vsel %vm1605, %v1596, -inf
        %1676 = vmax.xlane.f32.xlu0 %v1675
        %v1677 = vpop.xlane.xlu0 %1676
        %v1678 = vsel %vm1605, %v1597, -inf
        %1679 = vmax.xlane.f32.xlu0 %v1678
        %v1680 = vpop.xlane.xlu0 %1679
        %v1681 = vsel %vm1605, %v1598, -inf
        %1682 = vmax.xlane.f32.xlu0 %v1681
        %v1683 = vpop.xlane.xlu0 %1682
        %v1684 = vsel %vm1605, %v1599, -inf
        %1685 = vmax.xlane.f32.xlu0 %v1684
        %v1686 = vpop.xlane.xlu0 %1685
        %v1687 = vsel %vm1605, %v1600, -inf
        %1688 = vmax.xlane.f32.xlu0 %v1687
        %v1689 = vpop.xlane.xlu0 %1688
        %v1690 = vsel %vm1605, %v1601, -inf
        %1691 = vmax.xlane.f32.xlu0 %v1690
        %v1692 = vpop.xlane.xlu0 %1691
        %v1693 = vsel %vm1605, %v1602, -inf
        %1694 = vmax.xlane.f32.xlu0 %v1693
        %v1695 = vpop.xlane.xlu0 %1694
        %v1696 = vsel %vm1605, %v1603, -inf
        %1697 = vmax.xlane.f32.xlu0 %v1696
        %v1698 = vpop.xlane.xlu0 %1697
        %v1699 = vsel %vm1605, %v1604, -inf
        %1700 = vmax.xlane.f32.xlu0 %v1699
        %v1701 = vpop.xlane.xlu0 %1700
        %v1702 = vsub.f32 %v1573, %v1608
        %v1703 = vsub.f32 %v1574, %v1611
        %v1704 = vsub.f32 %v1575, %v1614
        %v1705 = vsub.f32 %v1576, %v1617
        %v1706 = vsub.f32 %v1577, %v1620
        %v1707 = vsub.f32 %v1578, %v1623
        %v1708 = vsub.f32 %v1579, %v1626
        %v1709 = vsub.f32 %v1580, %v1629
        %v1710 = vsub.f32 %v1581, %v1632
        %v1711 = vsub.f32 %v1582, %v1635
        %v1712 = vsub.f32 %v1583, %v1638
        %v1713 = vsub.f32 %v1584, %v1641
        %v1714 = vsub.f32 %v1585, %v1644
        %v1715 = vsub.f32 %v1586, %v1647
        %v1716 = vsub.f32 %v1587, %v1650
        %v1717 = vsub.f32 %v1588, %v1653
        %v1718 = vsub.f32 %v1589, %v1656
        %v1719 = vsub.f32 %v1590, %v1659
        %v1720 = vsub.f32 %v1591, %v1662
        %v1721 = vsub.f32 %v1592, %v1665
        %v1722 = vsub.f32 %v1593, %v1668
        %v1723 = vsub.f32 %v1594, %v1671
        %v1724 = vsub.f32 %v1595, %v1674
        %v1725 = vsub.f32 %v1596, %v1677
        %v1726 = vsub.f32 %v1597, %v1680
        %v1727 = vsub.f32 %v1598, %v1683
        %v1728 = vsub.f32 %v1599, %v1686
        %v1729 = vsub.f32 %v1600, %v1689
        %v1730 = vsub.f32 %v1601, %v1692
        %v1731 = vsub.f32 %v1602, %v1695
        %v1732 = vsub.f32 %v1603, %v1698
        %v1733 = vsub.f32 %v1604, %v1701
        %v1734 = vmul.f32 %v1702, 1.442695
        %v1735 = vpow.pop %v1734
        %v1736 = vmul.f32 %v1703, 1.442695
        %v1737 = vpow.pop %v1736
        %v1738 = vmul.f32 %v1704, 1.442695
        %v1739 = vpow.pop %v1738
        %v1740 = vmul.f32 %v1705, 1.442695
        %v1741 = vpow.pop %v1740
        %v1742 = vmul.f32 %v1706, 1.442695
        %v1743 = vpow.pop %v1742
        %v1744 = vmul.f32 %v1707, 1.442695
        %v1745 = vpow.pop %v1744
        %v1746 = vmul.f32 %v1708, 1.442695
        %v1747 = vpow.pop %v1746
        %v1748 = vmul.f32 %v1709, 1.442695
        %v1749 = vpow.pop %v1748
        %v1750 = vmul.f32 %v1710, 1.442695
        %v1751 = vpow.pop %v1750
        %v1752 = vmul.f32 %v1711, 1.442695
        %v1753 = vpow.pop %v1752
        %v1754 = vmul.f32 %v1712, 1.442695
        %v1755 = vpow.pop %v1754
        %v1756 = vmul.f32 %v1713, 1.442695
        %v1757 = vpow.pop %v1756
        %v1758 = vmul.f32 %v1714, 1.442695
        %v1759 = vpow.pop %v1758
        %v1760 = vmul.f32 %v1715, 1.442695
        %v1761 = vpow.pop %v1760
        %v1762 = vmul.f32 %v1716, 1.442695
        %v1763 = vpow.pop %v1762
        %v1764 = vmul.f32 %v1717, 1.442695
        %v1765 = vpow.pop %v1764
        %v1766 = vmul.f32 %v1718, 1.442695
        %v1767 = vpow.pop %v1766
        %v1768 = vmul.f32 %v1719, 1.442695
        %v1769 = vpow.pop %v1768
        %v1770 = vmul.f32 %v1720, 1.442695
        %v1771 = vpow.pop %v1770
        %v1772 = vmul.f32 %v1721, 1.442695
        %v1773 = vpow.pop %v1772
        %v1774 = vmul.f32 %v1722, 1.442695
        %v1775 = vpow.pop %v1774
        %v1776 = vmul.f32 %v1723, 1.442695
        %v1777 = vpow.pop %v1776
        %v1778 = vmul.f32 %v1724, 1.442695
        %v1779 = vpow.pop %v1778
        %v1780 = vmul.f32 %v1725, 1.442695
        %v1781 = vpow.pop %v1780
        %v1782 = vmul.f32 %v1726, 1.442695
        %v1783 = vpow.pop %v1782
        %v1784 = vmul.f32 %v1727, 1.442695
        %v1785 = vpow.pop %v1784
        %v1786 = vmul.f32 %v1728, 1.442695
        %v1787 = vpow.pop %v1786
        %v1788 = vmul.f32 %v1729, 1.442695
        %v1789 = vpow.pop %v1788
        %v1790 = vmul.f32 %v1730, 1.442695
        %v1791 = vpow.pop %v1790
        %v1792 = vmul.f32 %v1731, 1.442695
        %v1793 = vpow.pop %v1792
        %v1794 = vmul.f32 %v1732, 1.442695
        %v1795 = vpow.pop %v1794
        %v1796 = vmul.f32 %v1733, 1.442695
        %v1797 = vpow.pop %v1796
        %v1798 = vsel %vm1605, %v1735, 0.0
        %1799 = vadd.xlane.f32.xlu0 %v1798
        %v1800 = vpop.xlane.xlu0 %1799
        %v1801 = vsel %vm1605, %v1737, 0.0
        %1802 = vadd.xlane.f32.xlu0 %v1801
        %v1803 = vpop.xlane.xlu0 %1802
        %v1804 = vsel %vm1605, %v1739, 0.0
        %1805 = vadd.xlane.f32.xlu0 %v1804
        %v1806 = vpop.xlane.xlu0 %1805
        %v1807 = vsel %vm1605, %v1741, 0.0
        %1808 = vadd.xlane.f32.xlu0 %v1807
        %v1809 = vpop.xlane.xlu0 %1808
        %v1810 = vsel %vm1605, %v1743, 0.0
        %1811 = vadd.xlane.f32.xlu0 %v1810
        %v1812 = vpop.xlane.xlu0 %1811
        %v1813 = vsel %vm1605, %v1745, 0.0
        %1814 = vadd.xlane.f32.xlu0 %v1813
        %v1815 = vpop.xlane.xlu0 %1814
        %v1816 = vsel %vm1605, %v1747, 0.0
        %1817 = vadd.xlane.f32.xlu0 %v1816
        %v1818 = vpop.xlane.xlu0 %1817
        %v1819 = vsel %vm1605, %v1749, 0.0
        %1820 = vadd.xlane.f32.xlu0 %v1819
        %v1821 = vpop.xlane.xlu0 %1820
        %v1822 = vsel %vm1605, %v1751, 0.0
        %1823 = vadd.xlane.f32.xlu0 %v1822
        %v1824 = vpop.xlane.xlu0 %1823
        %v1825 = vsel %vm1605, %v1753, 0.0
        %1826 = vadd.xlane.f32.xlu0 %v1825
        %v1827 = vpop.xlane.xlu0 %1826
        %v1828 = vsel %vm1605, %v1755, 0.0
        %1829 = vadd.xlane.f32.xlu0 %v1828
        %v1830 = vpop.xlane.xlu0 %1829
        %v1831 = vsel %vm1605, %v1757, 0.0
        %1832 = vadd.xlane.f32.xlu0 %v1831
        %v1833 = vpop.xlane.xlu0 %1832
        %v1834 = vsel %vm1605, %v1759, 0.0
        %1835 = vadd.xlane.f32.xlu0 %v1834
        %v1836 = vpop.xlane.xlu0 %1835
        %v1837 = vsel %vm1605, %v1761, 0.0
        %1838 = vadd.xlane.f32.xlu0 %v1837
        %v1839 = vpop.xlane.xlu0 %1838
        %v1840 = vsel %vm1605, %v1763, 0.0
        %1841 = vadd.xlane.f32.xlu0 %v1840
        %v1842 = vpop.xlane.xlu0 %1841
        %v1843 = vsel %vm1605, %v1765, 0.0
        %1844 = vadd.xlane.f32.xlu0 %v1843
        %v1845 = vpop.xlane.xlu0 %1844
        %v1846 = vsel %vm1605, %v1767, 0.0
        %1847 = vadd.xlane.f32.xlu0 %v1846
        %v1848 = vpop.xlane.xlu0 %1847
        %v1849 = vsel %vm1605, %v1769, 0.0
        %1850 = vadd.xlane.f32.xlu0 %v1849
        %v1851 = vpop.xlane.xlu0 %1850
        %v1852 = vsel %vm1605, %v1771, 0.0
        %1853 = vadd.xlane.f32.xlu0 %v1852
        %v1854 = vpop.xlane.xlu0 %1853
        %v1855 = vsel %vm1605, %v1773, 0.0
        %1856 = vadd.xlane.f32.xlu0 %v1855
        %v1857 = vpop.xlane.xlu0 %1856
        %v1858 = vsel %vm1605, %v1775, 0.0
        %1859 = vadd.xlane.f32.xlu0 %v1858
        %v1860 = vpop.xlane.xlu0 %1859
        %v1861 = vsel %vm1605, %v1777, 0.0
        %1862 = vadd.xlane.f32.xlu0 %v1861
        %v1863 = vpop.xlane.xlu0 %1862
        %v1864 = vsel %vm1605, %v1779, 0.0
        %1865 = vadd.xlane.f32.xlu0 %v1864
        %v1866 = vpop.xlane.xlu0 %1865
        %v1867 = vsel %vm1605, %v1781, 0.0
        %1868 = vadd.xlane.f32.xlu0 %v1867
        %v1869 = vpop.xlane.xlu0 %1868
        %v1870 = vsel %vm1605, %v1783, 0.0
        %1871 = vadd.xlane.f32.xlu0 %v1870
        %v1872 = vpop.xlane.xlu0 %1871
        %v1873 = vsel %vm1605, %v1785, 0.0
        %1874 = vadd.xlane.f32.xlu0 %v1873
        %v1875 = vpop.xlane.xlu0 %1874
        %v1876 = vsel %vm1605, %v1787, 0.0
        %1877 = vadd.xlane.f32.xlu0 %v1876
        %v1878 = vpop.xlane.xlu0 %1877
        %v1879 = vsel %vm1605, %v1789, 0.0
        %1880 = vadd.xlane.f32.xlu0 %v1879
        %v1881 = vpop.xlane.xlu0 %1880
        %v1882 = vsel %vm1605, %v1791, 0.0
        %1883 = vadd.xlane.f32.xlu0 %v1882
        %v1884 = vpop.xlane.xlu0 %1883
        %v1885 = vsel %vm1605, %v1793, 0.0
        %1886 = vadd.xlane.f32.xlu0 %v1885
        %v1887 = vpop.xlane.xlu0 %1886
        %v1888 = vsel %vm1605, %v1795, 0.0
        %1889 = vadd.xlane.f32.xlu0 %v1888
        %v1890 = vpop.xlane.xlu0 %1889
        %v1891 = vsel %vm1605, %v1797, 0.0
        %1892 = vadd.xlane.f32.xlu0 %v1891
        %v1893 = vpop.xlane.xlu0 %1892
        %v1894 = vrcp.pop %v1800
        %v1895 = vrcp.pop %v1803
        %v1896 = vrcp.pop %v1806
        %v1897 = vrcp.pop %v1809
        %v1898 = vrcp.pop %v1812
        %v1899 = vrcp.pop %v1815
        %v1900 = vrcp.pop %v1818
        %v1901 = vrcp.pop %v1821
        %v1902 = vrcp.pop %v1824
        %v1903 = vrcp.pop %v1827
        %v1904 = vrcp.pop %v1830
        %v1905 = vrcp.pop %v1833
        %v1906 = vrcp.pop %v1836
        %v1907 = vrcp.pop %v1839
        %v1908 = vrcp.pop %v1842
        %v1909 = vrcp.pop %v1845
        %v1910 = vrcp.pop %v1848
        %v1911 = vrcp.pop %v1851
        %v1912 = vrcp.pop %v1854
        %v1913 = vrcp.pop %v1857
        %v1914 = vrcp.pop %v1860
        %v1915 = vrcp.pop %v1863
        %v1916 = vrcp.pop %v1866
        %v1917 = vrcp.pop %v1869
        %v1918 = vrcp.pop %v1872
        %v1919 = vrcp.pop %v1875
        %v1920 = vrcp.pop %v1878
        %v1921 = vrcp.pop %v1881
        %v1922 = vrcp.pop %v1884
        %v1923 = vrcp.pop %v1887
        %v1924 = vrcp.pop %v1890
        %v1925 = vrcp.pop %v1893
        %v1926 = vmul.f32 %v1735, %v1894
        %v1927 = vmul.f32 %v1737, %v1895
        %v1928 = vmul.f32 %v1739, %v1896
        %v1929 = vmul.f32 %v1741, %v1897
        %v1930 = vmul.f32 %v1743, %v1898
        %v1931 = vmul.f32 %v1745, %v1899
        %v1932 = vmul.f32 %v1747, %v1900
        %v1933 = vmul.f32 %v1749, %v1901
        %v1934 = vmul.f32 %v1751, %v1902
        %v1935 = vmul.f32 %v1753, %v1903
        %v1936 = vmul.f32 %v1755, %v1904
        %v1937 = vmul.f32 %v1757, %v1905
        %v1938 = vmul.f32 %v1759, %v1906
        %v1939 = vmul.f32 %v1761, %v1907
        %v1940 = vmul.f32 %v1763, %v1908
        %v1941 = vmul.f32 %v1765, %v1909
        %v1942 = vmul.f32 %v1767, %v1910
        %v1943 = vmul.f32 %v1769, %v1911
        %v1944 = vmul.f32 %v1771, %v1912
        %v1945 = vmul.f32 %v1773, %v1913
        %v1946 = vmul.f32 %v1775, %v1914
        %v1947 = vmul.f32 %v1777, %v1915
        %v1948 = vmul.f32 %v1779, %v1916
        %v1949 = vmul.f32 %v1781, %v1917
        %v1950 = vmul.f32 %v1783, %v1918
        %v1951 = vmul.f32 %v1785, %v1919
        %v1952 = vmul.f32 %v1787, %v1920
        %v1953 = vmul.f32 %v1789, %v1921
        %v1954 = vmul.f32 %v1791, %v1922
        %v1955 = vmul.f32 %v1793, %v1923
        %v1956 = vmul.f32 %v1795, %v1924
        %v1957 = vmul.f32 %v1797, %v1925
        %v1958 = vpack.c.bf16 %v1926, %v1926
        %v1959 = vpack.c.bf16 %v1927, %v1927
        %v1960 = vpack.c.bf16 %v1928, %v1928
        %v1961 = vpack.c.bf16 %v1929, %v1929
        %v1962 = vpack.c.bf16 %v1930, %v1930
        %v1963 = vpack.c.bf16 %v1931, %v1931
        %v1964 = vpack.c.bf16 %v1932, %v1932
        %v1965 = vpack.c.bf16 %v1933, %v1933
        %v1966 = vpack.c.bf16 %v1934, %v1934
        %v1967 = vpack.c.bf16 %v1935, %v1935
        %v1968 = vpack.c.bf16 %v1936, %v1936
        %v1969 = vpack.c.bf16 %v1937, %v1937
        %v1970 = vpack.c.bf16 %v1938, %v1938
        %v1971 = vpack.c.bf16 %v1939, %v1939
        %v1972 = vpack.c.bf16 %v1940, %v1940
        %v1973 = vpack.c.bf16 %v1941, %v1941
        %v1974 = vpack.c.bf16 %v1942, %v1942
        %v1975 = vpack.c.bf16 %v1943, %v1943
        %v1976 = vpack.c.bf16 %v1944, %v1944
        %v1977 = vpack.c.bf16 %v1945, %v1945
        %v1978 = vpack.c.bf16 %v1946, %v1946
        %v1979 = vpack.c.bf16 %v1947, %v1947
        %v1980 = vpack.c.bf16 %v1948, %v1948
        %v1981 = vpack.c.bf16 %v1949, %v1949
        %v1982 = vpack.c.bf16 %v1950, %v1950
        %v1983 = vpack.c.bf16 %v1951, %v1951
        %v1984 = vpack.c.bf16 %v1952, %v1952
        %v1985 = vpack.c.bf16 %v1953, %v1953
        %v1986 = vpack.c.bf16 %v1954, %v1954
        %v1987 = vpack.c.bf16 %v1955, %v1955
        %v1988 = vpack.c.bf16 %v1956, %v1956
        %v1989 = vpack.c.bf16 %v1957, %v1957
        %v1992 = vunpack.c.l.b16 %v1958
        %v1993 = vunpack.c.l.b16 %v1959
        %v1994 = vpack.c.b16 %v1993, %v1992
        %v1997 = vunpack.c.l.b16 %v1014
        %v1998 = vunpack.c.l.b16 %v1015
        %v1999 = vpack.c.b16 %v1998, %v1997
        %v2002 = vsel %vm1605, %v1994, 0
        %2004 = vmatpush.bf16.msra.mxu0 0
        %2005 = vmatpush.bf16.msra.mxu0 0
        %2006 = vmatpush.bf16.msra.mxu0 0
        %2007 = vmatpush.bf16.msra.mxu0 0
        %2008 = vmatpush.bf16.msra.mxu0 0
        %2009 = vmatpush.bf16.msra.mxu0 0
        %2010 = vmatpush.bf16.msra.mxu0 0
        %2011 = vmatpush.bf16.msra.mxu0 %v1999
        %2012 = vmatmul.bf16.gmra.mxu0 %v2002
        %v2013 = vpop.f32.mrf.mxu0
        %v2014 = vadd.f32 0.0, %v2013
        %v2015 = vpop.f32.mrf.mxu0
        %v2016 = vadd.f32 0.0, %v2015
        %2017 = vdwg.mxu0
        %v2020 = vunpack.c.l.b16 %v1960
        %v2021 = vunpack.c.l.b16 %v1961
        %v2022 = vpack.c.b16 %v2021, %v2020
        %v2025 = vunpack.c.l.b16 %v1016
        %v2026 = vunpack.c.l.b16 %v1017
        %v2027 = vpack.c.b16 %v2026, %v2025
        %v2030 = vsel %vm1605, %v2022, 0
        %2032 = vmatpush.bf16.msra.mxu0 0
        %2033 = vmatpush.bf16.msra.mxu0 0
        %2034 = vmatpush.bf16.msra.mxu0 0
        %2035 = vmatpush.bf16.msra.mxu0 0
        %2036 = vmatpush.bf16.msra.mxu0 0
        %2037 = vmatpush.bf16.msra.mxu0 0
        %2038 = vmatpush.bf16.msra.mxu0 0
        %2039 = vmatpush.bf16.msra.mxu0 %v2027
        %2040 = vmatmul.bf16.gmra.mxu0 %v2030
        %v2041 = vpop.f32.mrf.mxu0
        %v2042 = vadd.f32 0.0, %v2041
        %v2043 = vpop.f32.mrf.mxu0
        %v2044 = vadd.f32 0.0, %v2043
        %2045 = vdwg.mxu0
        %v2048 = vunpack.c.l.b16 %v1962
        %v2049 = vunpack.c.l.b16 %v1963
        %v2050 = vpack.c.b16 %v2049, %v2048
        %v2053 = vunpack.c.l.b16 %v1018
        %v2054 = vunpack.c.l.b16 %v1019
        %v2055 = vpack.c.b16 %v2054, %v2053
        %v2058 = vsel %vm1605, %v2050, 0
        %2060 = vmatpush.bf16.msra.mxu0 0
        %2061 = vmatpush.bf16.msra.mxu0 0
        %2062 = vmatpush.bf16.msra.mxu0 0
        %2063 = vmatpush.bf16.msra.mxu0 0
        %2064 = vmatpush.bf16.msra.mxu0 0
        %2065 = vmatpush.bf16.msra.mxu0 0
        %2066 = vmatpush.bf16.msra.mxu0 0
        %2067 = vmatpush.bf16.msra.mxu0 %v2055
        %2068 = vmatmul.bf16.gmra.mxu0 %v2058
        %v2069 = vpop.f32.mrf.mxu0
        %v2070 = vadd.f32 0.0, %v2069
        %v2071 = vpop.f32.mrf.mxu0
        %v2072 = vadd.f32 0.0, %v2071
        %2073 = vdwg.mxu0
        %v2076 = vunpack.c.l.b16 %v1964
        %v2077 = vunpack.c.l.b16 %v1965
        %v2078 = vpack.c.b16 %v2077, %v2076
        %v2081 = vunpack.c.l.b16 %v1020
        %v2082 = vunpack.c.l.b16 %v1021
        %v2083 = vpack.c.b16 %v2082, %v2081
        %v2086 = vsel %vm1605, %v2078, 0
        %2088 = vmatpush.bf16.msra.mxu0 0
        %2089 = vmatpush.bf16.msra.mxu0 0
        %2090 = vmatpush.bf16.msra.mxu0 0
        %2091 = vmatpush.bf16.msra.mxu0 0
        %2092 = vmatpush.bf16.msra.mxu0 0
        %2093 = vmatpush.bf16.msra.mxu0 0
        %2094 = vmatpush.bf16.msra.mxu0 0
        %2095 = vmatpush.bf16.msra.mxu0 %v2083
        %2096 = vmatmul.bf16.gmra.mxu0 %v2086
        %v2097 = vpop.f32.mrf.mxu0
        %v2098 = vadd.f32 0.0, %v2097
        %v2099 = vpop.f32.mrf.mxu0
        %v2100 = vadd.f32 0.0, %v2099
        %2101 = vdwg.mxu0
        %v2104 = vunpack.c.l.b16 %v1966
        %v2105 = vunpack.c.l.b16 %v1967
        %v2106 = vpack.c.b16 %v2105, %v2104
        %v2109 = vunpack.c.l.b16 %v1022
        %v2110 = vunpack.c.l.b16 %v1023
        %v2111 = vpack.c.b16 %v2110, %v2109
        %v2114 = vsel %vm1605, %v2106, 0
        %2116 = vmatpush.bf16.msra.mxu0 0
        %2117 = vmatpush.bf16.msra.mxu0 0
        %2118 = vmatpush.bf16.msra.mxu0 0
        %2119 = vmatpush.bf16.msra.mxu0 0
        %2120 = vmatpush.bf16.msra.mxu0 0
        %2121 = vmatpush.bf16.msra.mxu0 0
        %2122 = vmatpush.bf16.msra.mxu0 0
        %2123 = vmatpush.bf16.msra.mxu0 %v2111
        %2124 = vmatmul.bf16.gmra.mxu0 %v2114
        %v2125 = vpop.f32.mrf.mxu0
        %v2126 = vadd.f32 0.0, %v2125
        %v2127 = vpop.f32.mrf.mxu0
        %v2128 = vadd.f32 0.0, %v2127
        %2129 = vdwg.mxu0
        %v2132 = vunpack.c.l.b16 %v1968
        %v2133 = vunpack.c.l.b16 %v1969
        %v2134 = vpack.c.b16 %v2133, %v2132
        %v2137 = vunpack.c.l.b16 %v1024
        %v2138 = vunpack.c.l.b16 %v1025
        %v2139 = vpack.c.b16 %v2138, %v2137
        %v2142 = vsel %vm1605, %v2134, 0
        %2144 = vmatpush.bf16.msra.mxu0 0
        %2145 = vmatpush.bf16.msra.mxu0 0
        %2146 = vmatpush.bf16.msra.mxu0 0
        %2147 = vmatpush.bf16.msra.mxu0 0
        %2148 = vmatpush.bf16.msra.mxu0 0
        %2149 = vmatpush.bf16.msra.mxu0 0
        %2150 = vmatpush.bf16.msra.mxu0 0
        %2151 = vmatpush.bf16.msra.mxu0 %v2139
        %2152 = vmatmul.bf16.gmra.mxu0 %v2142
        %v2153 = vpop.f32.mrf.mxu0
        %v2154 = vadd.f32 0.0, %v2153
        %v2155 = vpop.f32.mrf.mxu0
        %v2156 = vadd.f32 0.0, %v2155
        %2157 = vdwg.mxu0
        %v2160 = vunpack.c.l.b16 %v1970
        %v2161 = vunpack.c.l.b16 %v1971
        %v2162 = vpack.c.b16 %v2161, %v2160
        %v2165 = vunpack.c.l.b16 %v1026
        %v2166 = vunpack.c.l.b16 %v1027
        %v2167 = vpack.c.b16 %v2166, %v2165
        %v2170 = vsel %vm1605, %v2162, 0
        %2172 = vmatpush.bf16.msra.mxu0 0
        %2173 = vmatpush.bf16.msra.mxu0 0
        %2174 = vmatpush.bf16.msra.mxu0 0
        %2175 = vmatpush.bf16.msra.mxu0 0
        %2176 = vmatpush.bf16.msra.mxu0 0
        %2177 = vmatpush.bf16.msra.mxu0 0
        %2178 = vmatpush.bf16.msra.mxu0 0
        %2179 = vmatpush.bf16.msra.mxu0 %v2167
        %2180 = vmatmul.bf16.gmra.mxu0 %v2170
        %v2181 = vpop.f32.mrf.mxu0
        %v2182 = vadd.f32 0.0, %v2181
        %v2183 = vpop.f32.mrf.mxu0
        %v2184 = vadd.f32 0.0, %v2183
        %2185 = vdwg.mxu0
        %v2188 = vunpack.c.l.b16 %v1972
        %v2189 = vunpack.c.l.b16 %v1973
        %v2190 = vpack.c.b16 %v2189, %v2188
        %v2193 = vunpack.c.l.b16 %v1028
        %v2194 = vunpack.c.l.b16 %v1029
        %v2195 = vpack.c.b16 %v2194, %v2193
        %v2198 = vsel %vm1605, %v2190, 0
        %2200 = vmatpush.bf16.msra.mxu0 0
        %2201 = vmatpush.bf16.msra.mxu0 0
        %2202 = vmatpush.bf16.msra.mxu0 0
        %2203 = vmatpush.bf16.msra.mxu0 0
        %2204 = vmatpush.bf16.msra.mxu0 0
        %2205 = vmatpush.bf16.msra.mxu0 0
        %2206 = vmatpush.bf16.msra.mxu0 0
        %2207 = vmatpush.bf16.msra.mxu0 %v2195
        %2208 = vmatmul.bf16.gmra.mxu0 %v2198
        %v2209 = vpop.f32.mrf.mxu0
        %v2210 = vadd.f32 0.0, %v2209
        %v2211 = vpop.f32.mrf.mxu0
        %v2212 = vadd.f32 0.0, %v2211
        %2213 = vdwg.mxu0
        %v2216 = vunpack.c.l.b16 %v1974
        %v2217 = vunpack.c.l.b16 %v1975
        %v2218 = vpack.c.b16 %v2217, %v2216
        %v2221 = vunpack.c.l.b16 %v1030
        %v2222 = vunpack.c.l.b16 %v1031
        %v2223 = vpack.c.b16 %v2222, %v2221
        %v2226 = vsel %vm1605, %v2218, 0
        %2228 = vmatpush.bf16.msra.mxu0 0
        %2229 = vmatpush.bf16.msra.mxu0 0
        %2230 = vmatpush.bf16.msra.mxu0 0
        %2231 = vmatpush.bf16.msra.mxu0 0
        %2232 = vmatpush.bf16.msra.mxu0 0
        %2233 = vmatpush.bf16.msra.mxu0 0
        %2234 = vmatpush.bf16.msra.mxu0 0
        %2235 = vmatpush.bf16.msra.mxu0 %v2223
        %2236 = vmatmul.bf16.gmra.mxu0 %v2226
        %v2237 = vpop.f32.mrf.mxu0
        %v2238 = vadd.f32 0.0, %v2237
        %v2239 = vpop.f32.mrf.mxu0
        %v2240 = vadd.f32 0.0, %v2239
        %2241 = vdwg.mxu0
        %v2244 = vunpack.c.l.b16 %v1976
        %v2245 = vunpack.c.l.b16 %v1977
        %v2246 = vpack.c.b16 %v2245, %v2244
        %v2249 = vunpack.c.l.b16 %v1032
        %v2250 = vunpack.c.l.b16 %v1033
        %v2251 = vpack.c.b16 %v2250, %v2249
        %v2254 = vsel %vm1605, %v2246, 0
        %2256 = vmatpush.bf16.msra.mxu0 0
        %2257 = vmatpush.bf16.msra.mxu0 0
        %2258 = vmatpush.bf16.msra.mxu0 0
        %2259 = vmatpush.bf16.msra.mxu0 0
        %2260 = vmatpush.bf16.msra.mxu0 0
        %2261 = vmatpush.bf16.msra.mxu0 0
        %2262 = vmatpush.bf16.msra.mxu0 0
        %2263 = vmatpush.bf16.msra.mxu0 %v2251
        %2264 = vmatmul.bf16.gmra.mxu0 %v2254
        %v2265 = vpop.f32.mrf.mxu0
        %v2266 = vadd.f32 0.0, %v2265
        %v2267 = vpop.f32.mrf.mxu0
        %v2268 = vadd.f32 0.0, %v2267
        %2269 = vdwg.mxu0
        %v2272 = vunpack.c.l.b16 %v1978
        %v2273 = vunpack.c.l.b16 %v1979
        %v2274 = vpack.c.b16 %v2273, %v2272
        %v2277 = vunpack.c.l.b16 %v1034
        %v2278 = vunpack.c.l.b16 %v1035
        %v2279 = vpack.c.b16 %v2278, %v2277
        %v2282 = vsel %vm1605, %v2274, 0
        %2284 = vmatpush.bf16.msra.mxu0 0
        %2285 = vmatpush.bf16.msra.mxu0 0
        %2286 = vmatpush.bf16.msra.mxu0 0
        %2287 = vmatpush.bf16.msra.mxu0 0
        %2288 = vmatpush.bf16.msra.mxu0 0
        %2289 = vmatpush.bf16.msra.mxu0 0
        %2290 = vmatpush.bf16.msra.mxu0 0
        %2291 = vmatpush.bf16.msra.mxu0 %v2279
        %2292 = vmatmul.bf16.gmra.mxu0 %v2282
        %v2293 = vpop.f32.mrf.mxu0
        %v2294 = vadd.f32 0.0, %v2293
        %v2295 = vpop.f32.mrf.mxu0
        %v2296 = vadd.f32 0.0, %v2295
        %2297 = vdwg.mxu0
        %v2300 = vunpack.c.l.b16 %v1980
        %v2301 = vunpack.c.l.b16 %v1981
        %v2302 = vpack.c.b16 %v2301, %v2300
        %v2305 = vunpack.c.l.b16 %v1036
        %v2306 = vunpack.c.l.b16 %v1037
        %v2307 = vpack.c.b16 %v2306, %v2305
        %v2310 = vsel %vm1605, %v2302, 0
        %2312 = vmatpush.bf16.msra.mxu0 0
        %2313 = vmatpush.bf16.msra.mxu0 0
        %2314 = vmatpush.bf16.msra.mxu0 0
        %2315 = vmatpush.bf16.msra.mxu0 0
        %2316 = vmatpush.bf16.msra.mxu0 0
        %2317 = vmatpush.bf16.msra.mxu0 0
        %2318 = vmatpush.bf16.msra.mxu0 0
        %2319 = vmatpush.bf16.msra.mxu0 %v2307
        %2320 = vmatmul.bf16.gmra.mxu0 %v2310
        %v2321 = vpop.f32.mrf.mxu0
        %v2322 = vadd.f32 0.0, %v2321
        %v2323 = vpop.f32.mrf.mxu0
        %v2324 = vadd.f32 0.0, %v2323
        %2325 = vdwg.mxu0
        %v2328 = vunpack.c.l.b16 %v1982
        %v2329 = vunpack.c.l.b16 %v1983
        %v2330 = vpack.c.b16 %v2329, %v2328
        %v2333 = vunpack.c.l.b16 %v1038
        %v2334 = vunpack.c.l.b16 %v1039
        %v2335 = vpack.c.b16 %v2334, %v2333
        %v2338 = vsel %vm1605, %v2330, 0
        %2340 = vmatpush.bf16.msra.mxu0 0
        %2341 = vmatpush.bf16.msra.mxu0 0
        %2342 = vmatpush.bf16.msra.mxu0 0
        %2343 = vmatpush.bf16.msra.mxu0 0
        %2344 = vmatpush.bf16.msra.mxu0 0
        %2345 = vmatpush.bf16.msra.mxu0 0
        %2346 = vmatpush.bf16.msra.mxu0 0
        %2347 = vmatpush.bf16.msra.mxu0 %v2335
        %2348 = vmatmul.bf16.gmra.mxu0 %v2338
        %v2349 = vpop.f32.mrf.mxu0
        %v2350 = vadd.f32 0.0, %v2349
        %v2351 = vpop.f32.mrf.mxu0
        %v2352 = vadd.f32 0.0, %v2351
        %2353 = vdwg.mxu0
        %v2356 = vunpack.c.l.b16 %v1984
        %v2357 = vunpack.c.l.b16 %v1985
        %v2358 = vpack.c.b16 %v2357, %v2356
        %v2361 = vunpack.c.l.b16 %v1040
        %v2362 = vunpack.c.l.b16 %v1041
        %v2363 = vpack.c.b16 %v2362, %v2361
        %v2366 = vsel %vm1605, %v2358, 0
        %2368 = vmatpush.bf16.msra.mxu0 0
        %2369 = vmatpush.bf16.msra.mxu0 0
        %2370 = vmatpush.bf16.msra.mxu0 0
        %2371 = vmatpush.bf16.msra.mxu0 0
        %2372 = vmatpush.bf16.msra.mxu0 0
        %2373 = vmatpush.bf16.msra.mxu0 0
        %2374 = vmatpush.bf16.msra.mxu0 0
        %2375 = vmatpush.bf16.msra.mxu0 %v2363
        %2376 = vmatmul.bf16.gmra.mxu0 %v2366
        %v2377 = vpop.f32.mrf.mxu0
        %v2378 = vadd.f32 0.0, %v2377
        %v2379 = vpop.f32.mrf.mxu0
        %v2380 = vadd.f32 0.0, %v2379
        %2381 = vdwg.mxu0
        %v2384 = vunpack.c.l.b16 %v1986
        %v2385 = vunpack.c.l.b16 %v1987
        %v2386 = vpack.c.b16 %v2385, %v2384
        %v2389 = vunpack.c.l.b16 %v1042
        %v2390 = vunpack.c.l.b16 %v1043
        %v2391 = vpack.c.b16 %v2390, %v2389
        %v2394 = vsel %vm1605, %v2386, 0
        %2396 = vmatpush.bf16.msra.mxu0 0
        %2397 = vmatpush.bf16.msra.mxu0 0
        %2398 = vmatpush.bf16.msra.mxu0 0
        %2399 = vmatpush.bf16.msra.mxu0 0
        %2400 = vmatpush.bf16.msra.mxu0 0
        %2401 = vmatpush.bf16.msra.mxu0 0
        %2402 = vmatpush.bf16.msra.mxu0 0
        %2403 = vmatpush.bf16.msra.mxu0 %v2391
        %2404 = vmatmul.bf16.gmra.mxu0 %v2394
        %v2405 = vpop.f32.mrf.mxu0
        %v2406 = vadd.f32 0.0, %v2405
        %v2407 = vpop.f32.mrf.mxu0
        %v2408 = vadd.f32 0.0, %v2407
        %2409 = vdwg.mxu0
        %v2412 = vunpack.c.l.b16 %v1988
        %v2413 = vunpack.c.l.b16 %v1989
        %v2414 = vpack.c.b16 %v2413, %v2412
        %v2417 = vunpack.c.l.b16 %v1044
        %v2418 = vunpack.c.l.b16 %v1045
        %v2419 = vpack.c.b16 %v2418, %v2417
        %v2422 = vsel %vm1605, %v2414, 0
        %2424 = vmatpush.bf16.msra.mxu0 0
        %2425 = vmatpush.bf16.msra.mxu0 0
        %2426 = vmatpush.bf16.msra.mxu0 0
        %2427 = vmatpush.bf16.msra.mxu0 0
        %2428 = vmatpush.bf16.msra.mxu0 0
        %2429 = vmatpush.bf16.msra.mxu0 0
        %2430 = vmatpush.bf16.msra.mxu0 0
        %2431 = vmatpush.bf16.msra.mxu0 %v2419
        %2432 = vmatmul.bf16.gmra.mxu0 %v2422
        %v2433 = vpop.f32.mrf.mxu0
        %v2434 = vadd.f32 0.0, %v2433
        %v2435 = vpop.f32.mrf.mxu0
        %v2436 = vadd.f32 0.0, %v2435
        %2437 = vdwg.mxu0
        %v2438 = vpack.c.bf16 %v2014, %v2014
        %v2439 = vpack.c.bf16 %v2016, %v2016
        %v2440 = vpack.c.bf16 %v2042, %v2042
        %v2441 = vpack.c.bf16 %v2044, %v2044
        %v2442 = vpack.c.bf16 %v2070, %v2070
        %v2443 = vpack.c.bf16 %v2072, %v2072
        %v2444 = vpack.c.bf16 %v2098, %v2098
        %v2445 = vpack.c.bf16 %v2100, %v2100
        %v2446 = vpack.c.bf16 %v2126, %v2126
        %v2447 = vpack.c.bf16 %v2128, %v2128
        %v2448 = vpack.c.bf16 %v2154, %v2154
        %v2449 = vpack.c.bf16 %v2156, %v2156
        %v2450 = vpack.c.bf16 %v2182, %v2182
        %v2451 = vpack.c.bf16 %v2184, %v2184
        %v2452 = vpack.c.bf16 %v2210, %v2210
        %v2453 = vpack.c.bf16 %v2212, %v2212
        %v2454 = vpack.c.bf16 %v2238, %v2238
        %v2455 = vpack.c.bf16 %v2240, %v2240
        %v2456 = vpack.c.bf16 %v2266, %v2266
        %v2457 = vpack.c.bf16 %v2268, %v2268
        %v2458 = vpack.c.bf16 %v2294, %v2294
        %v2459 = vpack.c.bf16 %v2296, %v2296
        %v2460 = vpack.c.bf16 %v2322, %v2322
        %v2461 = vpack.c.bf16 %v2324, %v2324
        %v2462 = vpack.c.bf16 %v2350, %v2350
        %v2463 = vpack.c.bf16 %v2352, %v2352
        %v2464 = vpack.c.bf16 %v2378, %v2378
        %v2465 = vpack.c.bf16 %v2380, %v2380
        %v2466 = vpack.c.bf16 %v2406, %v2406
        %v2467 = vpack.c.bf16 %v2408, %v2408
        %v2468 = vpack.c.bf16 %v2434, %v2434
        %v2469 = vpack.c.bf16 %v2436, %v2436
        %2470 = vrot.lane.b32.xlu0 %v1050, 96
        %v2471 = vpop.permute.xlu0 %2470
        %2472 = vrot.lane.b32.xlu0 %v1055, 96
        %v2473 = vpop.permute.xlu0 %2472
        %v2475 = vsel %vm1056, %v2471, 0
        %v2478 = vsel %vm1056, %v2473, 0
        %2480 = vmatpush.bf16.xpose.msra.mxu0 0
        %2481 = vmatpush.bf16.xpose.msra.mxu0 0
        %2482 = vmatpush.bf16.xpose.msra.mxu0 0
        %2483 = vmatpush.bf16.xpose.msra.mxu0 0
        %2484 = vmatpush.bf16.xpose.msra.mxu0 0
        %2485 = vmatpush.bf16.xpose.msra.mxu0 0
        %2486 = vmatpush.bf16.xpose.msra.mxu0 0
        %2487 = vmatpush.bf16.xpose.msra.mxu0 %v2478
        %2488 = vmatmul.bf16.gmra.mxu0 %v2475
        %v2489 = vpop.f32.mrf.mxu0
        %v2490 = vadd.f32 0.0, %v2489
        %v2491 = vpop.f32.mrf.mxu0
        %v2492 = vadd.f32 0.0, %v2491
        %2493 = vdwg.mxu0
        %2494 = vrot.lane.b32.xlu0 %v1081, 96
        %v2495 = vpop.permute.xlu0 %2494
        %2496 = vrot.lane.b32.xlu0 %v1086, 96
        %v2497 = vpop.permute.xlu0 %2496
        %v2499 = vsel %vm1056, %v2495, 0
        %v2502 = vsel %vm1056, %v2497, 0
        %2504 = vmatpush.bf16.xpose.msra.mxu0 0
        %2505 = vmatpush.bf16.xpose.msra.mxu0 0
        %2506 = vmatpush.bf16.xpose.msra.mxu0 0
        %2507 = vmatpush.bf16.xpose.msra.mxu0 0
        %2508 = vmatpush.bf16.xpose.msra.mxu0 0
        %2509 = vmatpush.bf16.xpose.msra.mxu0 0
        %2510 = vmatpush.bf16.xpose.msra.mxu0 0
        %2511 = vmatpush.bf16.xpose.msra.mxu0 %v2502
        %2512 = vmatmul.bf16.gmra.mxu0 %v2499
        %v2513 = vpop.f32.mrf.mxu0
        %v2514 = vadd.f32 0.0, %v2513
        %v2515 = vpop.f32.mrf.mxu0
        %v2516 = vadd.f32 0.0, %v2515
        %2517 = vdwg.mxu0
        %2518 = vrot.lane.b32.xlu0 %v1111, 96
        %v2519 = vpop.permute.xlu0 %2518
        %2520 = vrot.lane.b32.xlu0 %v1116, 96
        %v2521 = vpop.permute.xlu0 %2520
        %v2523 = vsel %vm1056, %v2519, 0
        %v2526 = vsel %vm1056, %v2521, 0
        %2528 = vmatpush.bf16.xpose.msra.mxu0 0
        %2529 = vmatpush.bf16.xpose.msra.mxu0 0
        %2530 = vmatpush.bf16.xpose.msra.mxu0 0
        %2531 = vmatpush.bf16.xpose.msra.mxu0 0
        %2532 = vmatpush.bf16.xpose.msra.mxu0 0
        %2533 = vmatpush.bf16.xpose.msra.mxu0 0
        %2534 = vmatpush.bf16.xpose.msra.mxu0 0
        %2535 = vmatpush.bf16.xpose.msra.mxu0 %v2526
        %2536 = vmatmul.bf16.gmra.mxu0 %v2523
        %v2537 = vpop.f32.mrf.mxu0
        %v2538 = vadd.f32 0.0, %v2537
        %v2539 = vpop.f32.mrf.mxu0
        %v2540 = vadd.f32 0.0, %v2539
        %2541 = vdwg.mxu0
        %2542 = vrot.lane.b32.xlu0 %v1141, 96
        %v2543 = vpop.permute.xlu0 %2542
        %2544 = vrot.lane.b32.xlu0 %v1146, 96
        %v2545 = vpop.permute.xlu0 %2544
        %v2547 = vsel %vm1056, %v2543, 0
        %v2550 = vsel %vm1056, %v2545, 0
        %2552 = vmatpush.bf16.xpose.msra.mxu0 0
        %2553 = vmatpush.bf16.xpose.msra.mxu0 0
        %2554 = vmatpush.bf16.xpose.msra.mxu0 0
        %2555 = vmatpush.bf16.xpose.msra.mxu0 0
        %2556 = vmatpush.bf16.xpose.msra.mxu0 0
        %2557 = vmatpush.bf16.xpose.msra.mxu0 0
        %2558 = vmatpush.bf16.xpose.msra.mxu0 0
        %2559 = vmatpush.bf16.xpose.msra.mxu0 %v2550
        %2560 = vmatmul.bf16.gmra.mxu0 %v2547
        %v2561 = vpop.f32.mrf.mxu0
        %v2562 = vadd.f32 0.0, %v2561
        %v2563 = vpop.f32.mrf.mxu0
        %v2564 = vadd.f32 0.0, %v2563
        %2565 = vdwg.mxu0
        %2566 = vrot.lane.b32.xlu0 %v1171, 96
        %v2567 = vpop.permute.xlu0 %2566
        %2568 = vrot.lane.b32.xlu0 %v1176, 96
        %v2569 = vpop.permute.xlu0 %2568
        %v2571 = vsel %vm1056, %v2567, 0
        %v2574 = vsel %vm1056, %v2569, 0
        %2576 = vmatpush.bf16.xpose.msra.mxu0 0
        %2577 = vmatpush.bf16.xpose.msra.mxu0 0
        %2578 = vmatpush.bf16.xpose.msra.mxu0 0
        %2579 = vmatpush.bf16.xpose.msra.mxu0 0
        %2580 = vmatpush.bf16.xpose.msra.mxu0 0
        %2581 = vmatpush.bf16.xpose.msra.mxu0 0
        %2582 = vmatpush.bf16.xpose.msra.mxu0 0
        %2583 = vmatpush.bf16.xpose.msra.mxu0 %v2574
        %2584 = vmatmul.bf16.gmra.mxu0 %v2571
        %v2585 = vpop.f32.mrf.mxu0
        %v2586 = vadd.f32 0.0, %v2585
        %v2587 = vpop.f32.mrf.mxu0
        %v2588 = vadd.f32 0.0, %v2587
        %2589 = vdwg.mxu0
        %2590 = vrot.lane.b32.xlu0 %v1201, 96
        %v2591 = vpop.permute.xlu0 %2590
        %2592 = vrot.lane.b32.xlu0 %v1206, 96
        %v2593 = vpop.permute.xlu0 %2592
        %v2595 = vsel %vm1056, %v2591, 0
        %v2598 = vsel %vm1056, %v2593, 0
        %2600 = vmatpush.bf16.xpose.msra.mxu0 0
        %2601 = vmatpush.bf16.xpose.msra.mxu0 0
        %2602 = vmatpush.bf16.xpose.msra.mxu0 0
        %2603 = vmatpush.bf16.xpose.msra.mxu0 0
        %2604 = vmatpush.bf16.xpose.msra.mxu0 0
        %2605 = vmatpush.bf16.xpose.msra.mxu0 0
        %2606 = vmatpush.bf16.xpose.msra.mxu0 0
        %2607 = vmatpush.bf16.xpose.msra.mxu0 %v2598
        %2608 = vmatmul.bf16.gmra.mxu0 %v2595
        %v2609 = vpop.f32.mrf.mxu0
        %v2610 = vadd.f32 0.0, %v2609
        %v2611 = vpop.f32.mrf.mxu0
        %v2612 = vadd.f32 0.0, %v2611
        %2613 = vdwg.mxu0
        %2614 = vrot.lane.b32.xlu0 %v1231, 96
        %v2615 = vpop.permute.xlu0 %2614
        %2616 = vrot.lane.b32.xlu0 %v1236, 96
        %v2617 = vpop.permute.xlu0 %2616
        %v2619 = vsel %vm1056, %v2615, 0
        %v2622 = vsel %vm1056, %v2617, 0
        %2624 = vmatpush.bf16.xpose.msra.mxu0 0
        %2625 = vmatpush.bf16.xpose.msra.mxu0 0
        %2626 = vmatpush.bf16.xpose.msra.mxu0 0
        %2627 = vmatpush.bf16.xpose.msra.mxu0 0
        %2628 = vmatpush.bf16.xpose.msra.mxu0 0
        %2629 = vmatpush.bf16.xpose.msra.mxu0 0
        %2630 = vmatpush.bf16.xpose.msra.mxu0 0
        %2631 = vmatpush.bf16.xpose.msra.mxu0 %v2622
        %2632 = vmatmul.bf16.gmra.mxu0 %v2619
        %v2633 = vpop.f32.mrf.mxu0
        %v2634 = vadd.f32 0.0, %v2633
        %v2635 = vpop.f32.mrf.mxu0
        %v2636 = vadd.f32 0.0, %v2635
        %2637 = vdwg.mxu0
        %2638 = vrot.lane.b32.xlu0 %v1261, 96
        %v2639 = vpop.permute.xlu0 %2638
        %2640 = vrot.lane.b32.xlu0 %v1266, 96
        %v2641 = vpop.permute.xlu0 %2640
        %v2643 = vsel %vm1056, %v2639, 0
        %v2646 = vsel %vm1056, %v2641, 0
        %2648 = vmatpush.bf16.xpose.msra.mxu0 0
        %2649 = vmatpush.bf16.xpose.msra.mxu0 0
        %2650 = vmatpush.bf16.xpose.msra.mxu0 0
        %2651 = vmatpush.bf16.xpose.msra.mxu0 0
        %2652 = vmatpush.bf16.xpose.msra.mxu0 0
        %2653 = vmatpush.bf16.xpose.msra.mxu0 0
        %2654 = vmatpush.bf16.xpose.msra.mxu0 0
        %2655 = vmatpush.bf16.xpose.msra.mxu0 %v2646
        %2656 = vmatmul.bf16.gmra.mxu0 %v2643
        %v2657 = vpop.f32.mrf.mxu0
        %v2658 = vadd.f32 0.0, %v2657
        %v2659 = vpop.f32.mrf.mxu0
        %v2660 = vadd.f32 0.0, %v2659
        %2661 = vdwg.mxu0
        %2662 = vrot.lane.b32.xlu0 %v1291, 96
        %v2663 = vpop.permute.xlu0 %2662
        %2664 = vrot.lane.b32.xlu0 %v1296, 96
        %v2665 = vpop.permute.xlu0 %2664
        %v2667 = vsel %vm1056, %v2663, 0
        %v2670 = vsel %vm1056, %v2665, 0
        %2672 = vmatpush.bf16.xpose.msra.mxu0 0
        %2673 = vmatpush.bf16.xpose.msra.mxu0 0
        %2674 = vmatpush.bf16.xpose.msra.mxu0 0
        %2675 = vmatpush.bf16.xpose.msra.mxu0 0
        %2676 = vmatpush.bf16.xpose.msra.mxu0 0
        %2677 = vmatpush.bf16.xpose.msra.mxu0 0
        %2678 = vmatpush.bf16.xpose.msra.mxu0 0
        %2679 = vmatpush.bf16.xpose.msra.mxu0 %v2670
        %2680 = vmatmul.bf16.gmra.mxu0 %v2667
        %v2681 = vpop.f32.mrf.mxu0
        %v2682 = vadd.f32 0.0, %v2681
        %v2683 = vpop.f32.mrf.mxu0
        %v2684 = vadd.f32 0.0, %v2683
        %2685 = vdwg.mxu0
        %2686 = vrot.lane.b32.xlu0 %v1321, 96
        %v2687 = vpop.permute.xlu0 %2686
        %2688 = vrot.lane.b32.xlu0 %v1326, 96
        %v2689 = vpop.permute.xlu0 %2688
        %v2691 = vsel %vm1056, %v2687, 0
        %v2694 = vsel %vm1056, %v2689, 0
        %2696 = vmatpush.bf16.xpose.msra.mxu0 0
        %2697 = vmatpush.bf16.xpose.msra.mxu0 0
        %2698 = vmatpush.bf16.xpose.msra.mxu0 0
        %2699 = vmatpush.bf16.xpose.msra.mxu0 0
        %2700 = vmatpush.bf16.xpose.msra.mxu0 0
        %2701 = vmatpush.bf16.xpose.msra.mxu0 0
        %2702 = vmatpush.bf16.xpose.msra.mxu0 0
        %2703 = vmatpush.bf16.xpose.msra.mxu0 %v2694
        %2704 = vmatmul.bf16.gmra.mxu0 %v2691
        %v2705 = vpop.f32.mrf.mxu0
        %v2706 = vadd.f32 0.0, %v2705
        %v2707 = vpop.f32.mrf.mxu0
        %v2708 = vadd.f32 0.0, %v2707
        %2709 = vdwg.mxu0
        %2710 = vrot.lane.b32.xlu0 %v1351, 96
        %v2711 = vpop.permute.xlu0 %2710
        %2712 = vrot.lane.b32.xlu0 %v1356, 96
        %v2713 = vpop.permute.xlu0 %2712
        %v2715 = vsel %vm1056, %v2711, 0
        %v2718 = vsel %vm1056, %v2713, 0
        %2720 = vmatpush.bf16.xpose.msra.mxu0 0
        %2721 = vmatpush.bf16.xpose.msra.mxu0 0
        %2722 = vmatpush.bf16.xpose.msra.mxu0 0
        %2723 = vmatpush.bf16.xpose.msra.mxu0 0
        %2724 = vmatpush.bf16.xpose.msra.mxu0 0
        %2725 = vmatpush.bf16.xpose.msra.mxu0 0
        %2726 = vmatpush.bf16.xpose.msra.mxu0 0
        %2727 = vmatpush.bf16.xpose.msra.mxu0 %v2718
        %2728 = vmatmul.bf16.gmra.mxu0 %v2715
        %v2729 = vpop.f32.mrf.mxu0
        %v2730 = vadd.f32 0.0, %v2729
        %v2731 = vpop.f32.mrf.mxu0
        %v2732 = vadd.f32 0.0, %v2731
        %2733 = vdwg.mxu0
        %2734 = vrot.lane.b32.xlu0 %v1381, 96
        %v2735 = vpop.permute.xlu0 %2734
        %2736 = vrot.lane.b32.xlu0 %v1386, 96
        %v2737 = vpop.permute.xlu0 %2736
        %v2739 = vsel %vm1056, %v2735, 0
        %v2742 = vsel %vm1056, %v2737, 0
        %2744 = vmatpush.bf16.xpose.msra.mxu0 0
        %2745 = vmatpush.bf16.xpose.msra.mxu0 0
        %2746 = vmatpush.bf16.xpose.msra.mxu0 0
        %2747 = vmatpush.bf16.xpose.msra.mxu0 0
        %2748 = vmatpush.bf16.xpose.msra.mxu0 0
        %2749 = vmatpush.bf16.xpose.msra.mxu0 0
        %2750 = vmatpush.bf16.xpose.msra.mxu0 0
        %2751 = vmatpush.bf16.xpose.msra.mxu0 %v2742
        %2752 = vmatmul.bf16.gmra.mxu0 %v2739
        %v2753 = vpop.f32.mrf.mxu0
        %v2754 = vadd.f32 0.0, %v2753
        %v2755 = vpop.f32.mrf.mxu0
        %v2756 = vadd.f32 0.0, %v2755
        %2757 = vdwg.mxu0
        %2758 = vrot.lane.b32.xlu0 %v1411, 96
        %v2759 = vpop.permute.xlu0 %2758
        %2760 = vrot.lane.b32.xlu0 %v1416, 96
        %v2761 = vpop.permute.xlu0 %2760
        %v2763 = vsel %vm1056, %v2759, 0
        %v2766 = vsel %vm1056, %v2761, 0
        %2768 = vmatpush.bf16.xpose.msra.mxu0 0
        %2769 = vmatpush.bf16.xpose.msra.mxu0 0
        %2770 = vmatpush.bf16.xpose.msra.mxu0 0
        %2771 = vmatpush.bf16.xpose.msra.mxu0 0
        %2772 = vmatpush.bf16.xpose.msra.mxu0 0
        %2773 = vmatpush.bf16.xpose.msra.mxu0 0
        %2774 = vmatpush.bf16.xpose.msra.mxu0 0
        %2775 = vmatpush.bf16.xpose.msra.mxu0 %v2766
        %2776 = vmatmul.bf16.gmra.mxu0 %v2763
        %v2777 = vpop.f32.mrf.mxu0
        %v2778 = vadd.f32 0.0, %v2777
        %v2779 = vpop.f32.mrf.mxu0
        %v2780 = vadd.f32 0.0, %v2779
        %2781 = vdwg.mxu0
        %2782 = vrot.lane.b32.xlu0 %v1441, 96
        %v2783 = vpop.permute.xlu0 %2782
        %2784 = vrot.lane.b32.xlu0 %v1446, 96
        %v2785 = vpop.permute.xlu0 %2784
        %v2787 = vsel %vm1056, %v2783, 0
        %v2790 = vsel %vm1056, %v2785, 0
        %2792 = vmatpush.bf16.xpose.msra.mxu0 0
        %2793 = vmatpush.bf16.xpose.msra.mxu0 0
        %2794 = vmatpush.bf16.xpose.msra.mxu0 0
        %2795 = vmatpush.bf16.xpose.msra.mxu0 0
        %2796 = vmatpush.bf16.xpose.msra.mxu0 0
        %2797 = vmatpush.bf16.xpose.msra.mxu0 0
        %2798 = vmatpush.bf16.xpose.msra.mxu0 0
        %2799 = vmatpush.bf16.xpose.msra.mxu0 %v2790
        %2800 = vmatmul.bf16.gmra.mxu0 %v2787
        %v2801 = vpop.f32.mrf.mxu0
        %v2802 = vadd.f32 0.0, %v2801
        %v2803 = vpop.f32.mrf.mxu0
        %v2804 = vadd.f32 0.0, %v2803
        %2805 = vdwg.mxu0
        %2806 = vrot.lane.b32.xlu0 %v1471, 96
        %v2807 = vpop.permute.xlu0 %2806
        %2808 = vrot.lane.b32.xlu0 %v1476, 96
        %v2809 = vpop.permute.xlu0 %2808
        %v2811 = vsel %vm1056, %v2807, 0
        %v2814 = vsel %vm1056, %v2809, 0
        %2816 = vmatpush.bf16.xpose.msra.mxu0 0
        %2817 = vmatpush.bf16.xpose.msra.mxu0 0
        %2818 = vmatpush.bf16.xpose.msra.mxu0 0
        %2819 = vmatpush.bf16.xpose.msra.mxu0 0
        %2820 = vmatpush.bf16.xpose.msra.mxu0 0
        %2821 = vmatpush.bf16.xpose.msra.mxu0 0
        %2822 = vmatpush.bf16.xpose.msra.mxu0 0
        %2823 = vmatpush.bf16.xpose.msra.mxu0 %v2814
        %2824 = vmatmul.bf16.gmra.mxu0 %v2811
        %v2825 = vpop.f32.mrf.mxu0
        %v2826 = vadd.f32 0.0, %v2825
        %v2827 = vpop.f32.mrf.mxu0
        %v2828 = vadd.f32 0.0, %v2827
        %2829 = vdwg.mxu0
        %2830 = vrot.lane.b32.xlu0 %v1501, 96
        %v2831 = vpop.permute.xlu0 %2830
        %2832 = vrot.lane.b32.xlu0 %v1506, 96
        %v2833 = vpop.permute.xlu0 %2832
        %v2835 = vsel %vm1056, %v2831, 0
        %v2838 = vsel %vm1056, %v2833, 0
        %2840 = vmatpush.bf16.xpose.msra.mxu0 0
        %2841 = vmatpush.bf16.xpose.msra.mxu0 0
        %2842 = vmatpush.bf16.xpose.msra.mxu0 0
        %2843 = vmatpush.bf16.xpose.msra.mxu0 0
        %2844 = vmatpush.bf16.xpose.msra.mxu0 0
        %2845 = vmatpush.bf16.xpose.msra.mxu0 0
        %2846 = vmatpush.bf16.xpose.msra.mxu0 0
        %2847 = vmatpush.bf16.xpose.msra.mxu0 %v2838
        %2848 = vmatmul.bf16.gmra.mxu0 %v2835
        %v2849 = vpop.f32.mrf.mxu0
        %v2850 = vadd.f32 0.0, %v2849
        %v2851 = vpop.f32.mrf.mxu0
        %v2852 = vadd.f32 0.0, %v2851
        %2853 = vdwg.mxu0
        %v2854 = vsel %vm1557, %v2490, -1e+09
        %v2855 = vsel %vm1557, %v2492, -1e+09
        %v2856 = vsel %vm1558, %v2514, -1e+09
        %v2857 = vsel %vm1558, %v2516, -1e+09
        %v2858 = vsel %vm1559, %v2538, -1e+09
        %v2859 = vsel %vm1559, %v2540, -1e+09
        %v2860 = vsel %vm1560, %v2562, -1e+09
        %v2861 = vsel %vm1560, %v2564, -1e+09
        %v2862 = vsel %vm1561, %v2586, -1e+09
        %v2863 = vsel %vm1561, %v2588, -1e+09
        %v2864 = vsel %vm1562, %v2610, -1e+09
        %v2865 = vsel %vm1562, %v2612, -1e+09
        %v2866 = vsel %vm1563, %v2634, -1e+09
        %v2867 = vsel %vm1563, %v2636, -1e+09
        %v2868 = vsel %vm1564, %v2658, -1e+09
        %v2869 = vsel %vm1564, %v2660, -1e+09
        %v2870 = vsel %vm1565, %v2682, -1e+09
        %v2871 = vsel %vm1565, %v2684, -1e+09
        %v2872 = vsel %vm1566, %v2706, -1e+09
        %v2873 = vsel %vm1566, %v2708, -1e+09
        %v2874 = vsel %vm1567, %v2730, -1e+09
        %v2875 = vsel %vm1567, %v2732, -1e+09
        %v2876 = vsel %vm1568, %v2754, -1e+09
        %v2877 = vsel %vm1568, %v2756, -1e+09
        %v2878 = vsel %vm1569, %v2778, -1e+09
        %v2879 = vsel %vm1569, %v2780, -1e+09
        %v2880 = vsel %vm1570, %v2802, -1e+09
        %v2881 = vsel %vm1570, %v2804, -1e+09
        %v2882 = vsel %vm1571, %v2826, -1e+09
        %v2883 = vsel %vm1571, %v2828, -1e+09
        %v2884 = vsel %vm1572, %v2850, -1e+09
        %v2885 = vsel %vm1572, %v2852, -1e+09
        %v2886 = vsel %vm1605, %v2854, -inf
        %2887 = vmax.xlane.f32.xlu0 %v2886
        %v2888 = vpop.xlane.xlu0 %2887
        %v2889 = vsel %vm1605, %v2855, -inf
        %2890 = vmax.xlane.f32.xlu0 %v2889
        %v2891 = vpop.xlane.xlu0 %2890
        %v2892 = vsel %vm1605, %v2856, -inf
        %2893 = vmax.xlane.f32.xlu0 %v2892
        %v2894 = vpop.xlane.xlu0 %2893
        %v2895 = vsel %vm1605, %v2857, -inf
        %2896 = vmax.xlane.f32.xlu0 %v2895
        %v2897 = vpop.xlane.xlu0 %2896
        %v2898 = vsel %vm1605, %v2858, -inf
        %2899 = vmax.xlane.f32.xlu0 %v2898
        %v2900 = vpop.xlane.xlu0 %2899
        %v2901 = vsel %vm1605, %v2859, -inf
        %2902 = vmax.xlane.f32.xlu0 %v2901
        %v2903 = vpop.xlane.xlu0 %2902
        %v2904 = vsel %vm1605, %v2860, -inf
        %2905 = vmax.xlane.f32.xlu0 %v2904
        %v2906 = vpop.xlane.xlu0 %2905
        %v2907 = vsel %vm1605, %v2861, -inf
        %2908 = vmax.xlane.f32.xlu0 %v2907
        %v2909 = vpop.xlane.xlu0 %2908
        %v2910 = vsel %vm1605, %v2862, -inf
        %2911 = vmax.xlane.f32.xlu0 %v2910
        %v2912 = vpop.xlane.xlu0 %2911
        %v2913 = vsel %vm1605, %v2863, -inf
        %2914 = vmax.xlane.f32.xlu0 %v2913
        %v2915 = vpop.xlane.xlu0 %2914
        %v2916 = vsel %vm1605, %v2864, -inf
        %2917 = vmax.xlane.f32.xlu0 %v2916
        %v2918 = vpop.xlane.xlu0 %2917
        %v2919 = vsel %vm1605, %v2865, -inf
        %2920 = vmax.xlane.f32.xlu0 %v2919
        %v2921 = vpop.xlane.xlu0 %2920
        %v2922 = vsel %vm1605, %v2866, -inf
        %2923 = vmax.xlane.f32.xlu0 %v2922
        %v2924 = vpop.xlane.xlu0 %2923
        %v2925 = vsel %vm1605, %v2867, -inf
        %2926 = vmax.xlane.f32.xlu0 %v2925
        %v2927 = vpop.xlane.xlu0 %2926
        %v2928 = vsel %vm1605, %v2868, -inf
        %2929 = vmax.xlane.f32.xlu0 %v2928
        %v2930 = vpop.xlane.xlu0 %2929
        %v2931 = vsel %vm1605, %v2869, -inf
        %2932 = vmax.xlane.f32.xlu0 %v2931
        %v2933 = vpop.xlane.xlu0 %2932
        %v2934 = vsel %vm1605, %v2870, -inf
        %2935 = vmax.xlane.f32.xlu0 %v2934
        %v2936 = vpop.xlane.xlu0 %2935
        %v2937 = vsel %vm1605, %v2871, -inf
        %2938 = vmax.xlane.f32.xlu0 %v2937
        %v2939 = vpop.xlane.xlu0 %2938
        %v2940 = vsel %vm1605, %v2872, -inf
        %2941 = vmax.xlane.f32.xlu0 %v2940
        %v2942 = vpop.xlane.xlu0 %2941
        %v2943 = vsel %vm1605, %v2873, -inf
        %2944 = vmax.xlane.f32.xlu0 %v2943
        %v2945 = vpop.xlane.xlu0 %2944
        %v2946 = vsel %vm1605, %v2874, -inf
        %2947 = vmax.xlane.f32.xlu0 %v2946
        %v2948 = vpop.xlane.xlu0 %2947
        %v2949 = vsel %vm1605, %v2875, -inf
        %2950 = vmax.xlane.f32.xlu0 %v2949
        %v2951 = vpop.xlane.xlu0 %2950
        %v2952 = vsel %vm1605, %v2876, -inf
        %2953 = vmax.xlane.f32.xlu0 %v2952
        %v2954 = vpop.xlane.xlu0 %2953
        %v2955 = vsel %vm1605, %v2877, -inf
        %2956 = vmax.xlane.f32.xlu0 %v2955
        %v2957 = vpop.xlane.xlu0 %2956
        %v2958 = vsel %vm1605, %v2878, -inf
        %2959 = vmax.xlane.f32.xlu0 %v2958
        %v2960 = vpop.xlane.xlu0 %2959
        %v2961 = vsel %vm1605, %v2879, -inf
        %2962 = vmax.xlane.f32.xlu0 %v2961
        %v2963 = vpop.xlane.xlu0 %2962
        %v2964 = vsel %vm1605, %v2880, -inf
        %2965 = vmax.xlane.f32.xlu0 %v2964
        %v2966 = vpop.xlane.xlu0 %2965
        %v2967 = vsel %vm1605, %v2881, -inf
        %2968 = vmax.xlane.f32.xlu0 %v2967
        %v2969 = vpop.xlane.xlu0 %2968
        %v2970 = vsel %vm1605, %v2882, -inf
        %2971 = vmax.xlane.f32.xlu0 %v2970
        %v2972 = vpop.xlane.xlu0 %2971
        %v2973 = vsel %vm1605, %v2883, -inf
        %2974 = vmax.xlane.f32.xlu0 %v2973
        %v2975 = vpop.xlane.xlu0 %2974
        %v2976 = vsel %vm1605, %v2884, -inf
        %2977 = vmax.xlane.f32.xlu0 %v2976
        %v2978 = vpop.xlane.xlu0 %2977
        %v2979 = vsel %vm1605, %v2885, -inf
        %2980 = vmax.xlane.f32.xlu0 %v2979
        %v2981 = vpop.xlane.xlu0 %2980
        %v2982 = vsub.f32 %v2854, %v2888
        %v2983 = vsub.f32 %v2855, %v2891
        %v2984 = vsub.f32 %v2856, %v2894
        %v2985 = vsub.f32 %v2857, %v2897
        %v2986 = vsub.f32 %v2858, %v2900
        %v2987 = vsub.f32 %v2859, %v2903
        %v2988 = vsub.f32 %v2860, %v2906
        %v2989 = vsub.f32 %v2861, %v2909
        %v2990 = vsub.f32 %v2862, %v2912
        %v2991 = vsub.f32 %v2863, %v2915
        %v2992 = vsub.f32 %v2864, %v2918
        %v2993 = vsub.f32 %v2865, %v2921
        %v2994 = vsub.f32 %v2866, %v2924
        %v2995 = vsub.f32 %v2867, %v2927
        %v2996 = vsub.f32 %v2868, %v2930
        %v2997 = vsub.f32 %v2869, %v2933
        %v2998 = vsub.f32 %v2870, %v2936
        %v2999 = vsub.f32 %v2871, %v2939
        %v3000 = vsub.f32 %v2872, %v2942
        %v3001 = vsub.f32 %v2873, %v2945
        %v3002 = vsub.f32 %v2874, %v2948
        %v3003 = vsub.f32 %v2875, %v2951
        %v3004 = vsub.f32 %v2876, %v2954
        %v3005 = vsub.f32 %v2877, %v2957
        %v3006 = vsub.f32 %v2878, %v2960
        %v3007 = vsub.f32 %v2879, %v2963
        %v3008 = vsub.f32 %v2880, %v2966
        %v3009 = vsub.f32 %v2881, %v2969
        %v3010 = vsub.f32 %v2882, %v2972
        %v3011 = vsub.f32 %v2883, %v2975
        %v3012 = vsub.f32 %v2884, %v2978
        %v3013 = vsub.f32 %v2885, %v2981
        %v3014 = vmul.f32 %v2982, 1.442695
        %v3015 = vpow.pop %v3014
        %v3016 = vmul.f32 %v2983, 1.442695
        %v3017 = vpow.pop %v3016
        %v3018 = vmul.f32 %v2984, 1.442695
        %v3019 = vpow.pop %v3018
        %v3020 = vmul.f32 %v2985, 1.442695
        %v3021 = vpow.pop %v3020
        %v3022 = vmul.f32 %v2986, 1.442695
        %v3023 = vpow.pop %v3022
        %v3024 = vmul.f32 %v2987, 1.442695
        %v3025 = vpow.pop %v3024
        %v3026 = vmul.f32 %v2988, 1.442695
        %v3027 = vpow.pop %v3026
        %v3028 = vmul.f32 %v2989, 1.442695
        %v3029 = vpow.pop %v3028
        %v3030 = vmul.f32 %v2990, 1.442695
        %v3031 = vpow.pop %v3030
        %v3032 = vmul.f32 %v2991, 1.442695
        %v3033 = vpow.pop %v3032
        %v3034 = vmul.f32 %v2992, 1.442695
        %v3035 = vpow.pop %v3034
        %v3036 = vmul.f32 %v2993, 1.442695
        %v3037 = vpow.pop %v3036
        %v3038 = vmul.f32 %v2994, 1.442695
        %v3039 = vpow.pop %v3038
        %v3040 = vmul.f32 %v2995, 1.442695
        %v3041 = vpow.pop %v3040
        %v3042 = vmul.f32 %v2996, 1.442695
        %v3043 = vpow.pop %v3042
        %v3044 = vmul.f32 %v2997, 1.442695
        %v3045 = vpow.pop %v3044
        %v3046 = vmul.f32 %v2998, 1.442695
        %v3047 = vpow.pop %v3046
        %v3048 = vmul.f32 %v2999, 1.442695
        %v3049 = vpow.pop %v3048
        %v3050 = vmul.f32 %v3000, 1.442695
        %v3051 = vpow.pop %v3050
        %v3052 = vmul.f32 %v3001, 1.442695
        %v3053 = vpow.pop %v3052
        %v3054 = vmul.f32 %v3002, 1.442695
        %v3055 = vpow.pop %v3054
        %v3056 = vmul.f32 %v3003, 1.442695
        %v3057 = vpow.pop %v3056
        %v3058 = vmul.f32 %v3004, 1.442695
        %v3059 = vpow.pop %v3058
        %v3060 = vmul.f32 %v3005, 1.442695
        %v3061 = vpow.pop %v3060
        %v3062 = vmul.f32 %v3006, 1.442695
        %v3063 = vpow.pop %v3062
        %v3064 = vmul.f32 %v3007, 1.442695
        %v3065 = vpow.pop %v3064
        %v3066 = vmul.f32 %v3008, 1.442695
        %v3067 = vpow.pop %v3066
        %v3068 = vmul.f32 %v3009, 1.442695
        %v3069 = vpow.pop %v3068
        %v3070 = vmul.f32 %v3010, 1.442695
        %v3071 = vpow.pop %v3070
        %v3072 = vmul.f32 %v3011, 1.442695
        %v3073 = vpow.pop %v3072
        %v3074 = vmul.f32 %v3012, 1.442695
        %v3075 = vpow.pop %v3074
        %v3076 = vmul.f32 %v3013, 1.442695
        %v3077 = vpow.pop %v3076
        %v3078 = vsel %vm1605, %v3015, 0.0
        %3079 = vadd.xlane.f32.xlu0 %v3078
        %v3080 = vpop.xlane.xlu0 %3079
        %v3081 = vsel %vm1605, %v3017, 0.0
        %3082 = vadd.xlane.f32.xlu0 %v3081
        %v3083 = vpop.xlane.xlu0 %3082
        %v3084 = vsel %vm1605, %v3019, 0.0
        %3085 = vadd.xlane.f32.xlu0 %v3084
        %v3086 = vpop.xlane.xlu0 %3085
        %v3087 = vsel %vm1605, %v3021, 0.0
        %3088 = vadd.xlane.f32.xlu0 %v3087
        %v3089 = vpop.xlane.xlu0 %3088
        %v3090 = vsel %vm1605, %v3023, 0.0
        %3091 = vadd.xlane.f32.xlu0 %v3090
        %v3092 = vpop.xlane.xlu0 %3091
        %v3093 = vsel %vm1605, %v3025, 0.0
        %3094 = vadd.xlane.f32.xlu0 %v3093
        %v3095 = vpop.xlane.xlu0 %3094
        %v3096 = vsel %vm1605, %v3027, 0.0
        %3097 = vadd.xlane.f32.xlu0 %v3096
        %v3098 = vpop.xlane.xlu0 %3097
        %v3099 = vsel %vm1605, %v3029, 0.0
        %3100 = vadd.xlane.f32.xlu0 %v3099
        %v3101 = vpop.xlane.xlu0 %3100
        %v3102 = vsel %vm1605, %v3031, 0.0
        %3103 = vadd.xlane.f32.xlu0 %v3102
        %v3104 = vpop.xlane.xlu0 %3103
        %v3105 = vsel %vm1605, %v3033, 0.0
        %3106 = vadd.xlane.f32.xlu0 %v3105
        %v3107 = vpop.xlane.xlu0 %3106
        %v3108 = vsel %vm1605, %v3035, 0.0
        %3109 = vadd.xlane.f32.xlu0 %v3108
        %v3110 = vpop.xlane.xlu0 %3109
        %v3111 = vsel %vm1605, %v3037, 0.0
        %3112 = vadd.xlane.f32.xlu0 %v3111
        %v3113 = vpop.xlane.xlu0 %3112
        %v3114 = vsel %vm1605, %v3039, 0.0
        %3115 = vadd.xlane.f32.xlu0 %v3114
        %v3116 = vpop.xlane.xlu0 %3115
        %v3117 = vsel %vm1605, %v3041, 0.0
        %3118 = vadd.xlane.f32.xlu0 %v3117
        %v3119 = vpop.xlane.xlu0 %3118
        %v3120 = vsel %vm1605, %v3043, 0.0
        %3121 = vadd.xlane.f32.xlu0 %v3120
        %v3122 = vpop.xlane.xlu0 %3121
        %v3123 = vsel %vm1605, %v3045, 0.0
        %3124 = vadd.xlane.f32.xlu0 %v3123
        %v3125 = vpop.xlane.xlu0 %3124
        %v3126 = vsel %vm1605, %v3047, 0.0
        %3127 = vadd.xlane.f32.xlu0 %v3126
        %v3128 = vpop.xlane.xlu0 %3127
        %v3129 = vsel %vm1605, %v3049, 0.0
        %3130 = vadd.xlane.f32.xlu0 %v3129
        %v3131 = vpop.xlane.xlu0 %3130
        %v3132 = vsel %vm1605, %v3051, 0.0
        %3133 = vadd.xlane.f32.xlu0 %v3132
        %v3134 = vpop.xlane.xlu0 %3133
        %v3135 = vsel %vm1605, %v3053, 0.0
        %3136 = vadd.xlane.f32.xlu0 %v3135
        %v3137 = vpop.xlane.xlu0 %3136
        %v3138 = vsel %vm1605, %v3055, 0.0
        %3139 = vadd.xlane.f32.xlu0 %v3138
        %v3140 = vpop.xlane.xlu0 %3139
        %v3141 = vsel %vm1605, %v3057, 0.0
        %3142 = vadd.xlane.f32.xlu0 %v3141
        %v3143 = vpop.xlane.xlu0 %3142
        %v3144 = vsel %vm1605, %v3059, 0.0
        %3145 = vadd.xlane.f32.xlu0 %v3144
        %v3146 = vpop.xlane.xlu0 %3145
        %v3147 = vsel %vm1605, %v3061, 0.0
        %3148 = vadd.xlane.f32.xlu0 %v3147
        %v3149 = vpop.xlane.xlu0 %3148
        %v3150 = vsel %vm1605, %v3063, 0.0
        %3151 = vadd.xlane.f32.xlu0 %v3150
        %v3152 = vpop.xlane.xlu0 %3151
        %v3153 = vsel %vm1605, %v3065, 0.0
        %3154 = vadd.xlane.f32.xlu0 %v3153
        %v3155 = vpop.xlane.xlu0 %3154
        %v3156 = vsel %vm1605, %v3067, 0.0
        %3157 = vadd.xlane.f32.xlu0 %v3156
        %v3158 = vpop.xlane.xlu0 %3157
        %v3159 = vsel %vm1605, %v3069, 0.0
        %3160 = vadd.xlane.f32.xlu0 %v3159
        %v3161 = vpop.xlane.xlu0 %3160
        %v3162 = vsel %vm1605, %v3071, 0.0
        %3163 = vadd.xlane.f32.xlu0 %v3162
        %v3164 = vpop.xlane.xlu0 %3163
        %v3165 = vsel %vm1605, %v3073, 0.0
        %3166 = vadd.xlane.f32.xlu0 %v3165
        %v3167 = vpop.xlane.xlu0 %3166
        %v3168 = vsel %vm1605, %v3075, 0.0
        %3169 = vadd.xlane.f32.xlu0 %v3168
        %v3170 = vpop.xlane.xlu0 %3169
        %v3171 = vsel %vm1605, %v3077, 0.0
        %3172 = vadd.xlane.f32.xlu0 %v3171
        %v3173 = vpop.xlane.xlu0 %3172
        %v3174 = vrcp.pop %v3080
        %v3175 = vrcp.pop %v3083
        %v3176 = vrcp.pop %v3086
        %v3177 = vrcp.pop %v3089
        %v3178 = vrcp.pop %v3092
        %v3179 = vrcp.pop %v3095
        %v3180 = vrcp.pop %v3098
        %v3181 = vrcp.pop %v3101
        %v3182 = vrcp.pop %v3104
        %v3183 = vrcp.pop %v3107
        %v3184 = vrcp.pop %v3110
        %v3185 = vrcp.pop %v3113
        %v3186 = vrcp.pop %v3116
        %v3187 = vrcp.pop %v3119
        %v3188 = vrcp.pop %v3122
        %v3189 = vrcp.pop %v3125
        %v3190 = vrcp.pop %v3128
        %v3191 = vrcp.pop %v3131
        %v3192 = vrcp.pop %v3134
        %v3193 = vrcp.pop %v3137
        %v3194 = vrcp.pop %v3140
        %v3195 = vrcp.pop %v3143
        %v3196 = vrcp.pop %v3146
        %v3197 = vrcp.pop %v3149
        %v3198 = vrcp.pop %v3152
        %v3199 = vrcp.pop %v3155
        %v3200 = vrcp.pop %v3158
        %v3201 = vrcp.pop %v3161
        %v3202 = vrcp.pop %v3164
        %v3203 = vrcp.pop %v3167
        %v3204 = vrcp.pop %v3170
        %v3205 = vrcp.pop %v3173
        %v3206 = vmul.f32 %v3015, %v3174
        %v3207 = vmul.f32 %v3017, %v3175
        %v3208 = vmul.f32 %v3019, %v3176
        %v3209 = vmul.f32 %v3021, %v3177
        %v3210 = vmul.f32 %v3023, %v3178
        %v3211 = vmul.f32 %v3025, %v3179
        %v3212 = vmul.f32 %v3027, %v3180
        %v3213 = vmul.f32 %v3029, %v3181
        %v3214 = vmul.f32 %v3031, %v3182
        %v3215 = vmul.f32 %v3033, %v3183
        %v3216 = vmul.f32 %v3035, %v3184
        %v3217 = vmul.f32 %v3037, %v3185
        %v3218 = vmul.f32 %v3039, %v3186
        %v3219 = vmul.f32 %v3041, %v3187
        %v3220 = vmul.f32 %v3043, %v3188
        %v3221 = vmul.f32 %v3045, %v3189
        %v3222 = vmul.f32 %v3047, %v3190
        %v3223 = vmul.f32 %v3049, %v3191
        %v3224 = vmul.f32 %v3051, %v3192
        %v3225 = vmul.f32 %v3053, %v3193
        %v3226 = vmul.f32 %v3055, %v3194
        %v3227 = vmul.f32 %v3057, %v3195
        %v3228 = vmul.f32 %v3059, %v3196
        %v3229 = vmul.f32 %v3061, %v3197
        %v3230 = vmul.f32 %v3063, %v3198
        %v3231 = vmul.f32 %v3065, %v3199
        %v3232 = vmul.f32 %v3067, %v3200
        %v3233 = vmul.f32 %v3069, %v3201
        %v3234 = vmul.f32 %v3071, %v3202
        %v3235 = vmul.f32 %v3073, %v3203
        %v3236 = vmul.f32 %v3075, %v3204
        %v3237 = vmul.f32 %v3077, %v3205
        %v3238 = vpack.c.bf16 %v3206, %v3206
        %v3239 = vpack.c.bf16 %v3207, %v3207
        %v3240 = vpack.c.bf16 %v3208, %v3208
        %v3241 = vpack.c.bf16 %v3209, %v3209
        %v3242 = vpack.c.bf16 %v3210, %v3210
        %v3243 = vpack.c.bf16 %v3211, %v3211
        %v3244 = vpack.c.bf16 %v3212, %v3212
        %v3245 = vpack.c.bf16 %v3213, %v3213
        %v3246 = vpack.c.bf16 %v3214, %v3214
        %v3247 = vpack.c.bf16 %v3215, %v3215
        %v3248 = vpack.c.bf16 %v3216, %v3216
        %v3249 = vpack.c.bf16 %v3217, %v3217
        %v3250 = vpack.c.bf16 %v3218, %v3218
        %v3251 = vpack.c.bf16 %v3219, %v3219
        %v3252 = vpack.c.bf16 %v3220, %v3220
        %v3253 = vpack.c.bf16 %v3221, %v3221
        %v3254 = vpack.c.bf16 %v3222, %v3222
        %v3255 = vpack.c.bf16 %v3223, %v3223
        %v3256 = vpack.c.bf16 %v3224, %v3224
        %v3257 = vpack.c.bf16 %v3225, %v3225
        %v3258 = vpack.c.bf16 %v3226, %v3226
        %v3259 = vpack.c.bf16 %v3227, %v3227
        %v3260 = vpack.c.bf16 %v3228, %v3228
        %v3261 = vpack.c.bf16 %v3229, %v3229
        %v3262 = vpack.c.bf16 %v3230, %v3230
        %v3263 = vpack.c.bf16 %v3231, %v3231
        %v3264 = vpack.c.bf16 %v3232, %v3232
        %v3265 = vpack.c.bf16 %v3233, %v3233
        %v3266 = vpack.c.bf16 %v3234, %v3234
        %v3267 = vpack.c.bf16 %v3235, %v3235
        %v3268 = vpack.c.bf16 %v3236, %v3236
        %v3269 = vpack.c.bf16 %v3237, %v3237
        %v3272 = vunpack.c.l.b16 %v3238
        %v3273 = vunpack.c.l.b16 %v3239
        %v3274 = vpack.c.b16 %v3273, %v3272
        %3275 = vrot.lane.b32.xlu0 %v1999, 96
        %v3276 = vpop.permute.xlu0 %3275
        %v3279 = vsel %vm1605, %v3274, 0
        %3281 = vmatpush.bf16.msra.mxu0 0
        %3282 = vmatpush.bf16.msra.mxu0 0
        %3283 = vmatpush.bf16.msra.mxu0 0
        %3284 = vmatpush.bf16.msra.mxu0 0
        %3285 = vmatpush.bf16.msra.mxu0 0
        %3286 = vmatpush.bf16.msra.mxu0 0
        %3287 = vmatpush.bf16.msra.mxu0 0
        %3288 = vmatpush.bf16.msra.mxu0 %v3276
        %3289 = vmatmul.bf16.gmra.mxu0 %v3279
        %v3290 = vpop.f32.mrf.mxu0
        %v3291 = vadd.f32 0.0, %v3290
        %v3292 = vpop.f32.mrf.mxu0
        %v3293 = vadd.f32 0.0, %v3292
        %3294 = vdwg.mxu0
        %v3297 = vunpack.c.l.b16 %v3240
        %v3298 = vunpack.c.l.b16 %v3241
        %v3299 = vpack.c.b16 %v3298, %v3297
        %3300 = vrot.lane.b32.xlu0 %v2027, 96
        %v3301 = vpop.permute.xlu0 %3300
        %v3304 = vsel %vm1605, %v3299, 0
        %3306 = vmatpush.bf16.msra.mxu0 0
        %3307 = vmatpush.bf16.msra.mxu0 0
        %3308 = vmatpush.bf16.msra.mxu0 0
        %3309 = vmatpush.bf16.msra.mxu0 0
        %3310 = vmatpush.bf16.msra.mxu0 0
        %3311 = vmatpush.bf16.msra.mxu0 0
        %3312 = vmatpush.bf16.msra.mxu0 0
        %3313 = vmatpush.bf16.msra.mxu0 %v3301
        %3314 = vmatmul.bf16.gmra.mxu0 %v3304
        %v3315 = vpop.f32.mrf.mxu0
        %v3316 = vadd.f32 0.0, %v3315
        %v3317 = vpop.f32.mrf.mxu0
        %v3318 = vadd.f32 0.0, %v3317
        %3319 = vdwg.mxu0
        %v3322 = vunpack.c.l.b16 %v3242
        %v3323 = vunpack.c.l.b16 %v3243
        %v3324 = vpack.c.b16 %v3323, %v3322
        %3325 = vrot.lane.b32.xlu0 %v2055, 96
        %v3326 = vpop.permute.xlu0 %3325
        %v3329 = vsel %vm1605, %v3324, 0
        %3331 = vmatpush.bf16.msra.mxu0 0
        %3332 = vmatpush.bf16.msra.mxu0 0
        %3333 = vmatpush.bf16.msra.mxu0 0
        %3334 = vmatpush.bf16.msra.mxu0 0
        %3335 = vmatpush.bf16.msra.mxu0 0
        %3336 = vmatpush.bf16.msra.mxu0 0
        %3337 = vmatpush.bf16.msra.mxu0 0
        %3338 = vmatpush.bf16.msra.mxu0 %v3326
        %3339 = vmatmul.bf16.gmra.mxu0 %v3329
        %v3340 = vpop.f32.mrf.mxu0
        %v3341 = vadd.f32 0.0, %v3340
        %v3342 = vpop.f32.mrf.mxu0
        %v3343 = vadd.f32 0.0, %v3342
        %3344 = vdwg.mxu0
        %v3347 = vunpack.c.l.b16 %v3244
        %v3348 = vunpack.c.l.b16 %v3245
        %v3349 = vpack.c.b16 %v3348, %v3347
        %3350 = vrot.lane.b32.xlu0 %v2083, 96
        %v3351 = vpop.permute.xlu0 %3350
        %v3354 = vsel %vm1605, %v3349, 0
        %3356 = vmatpush.bf16.msra.mxu0 0
        %3357 = vmatpush.bf16.msra.mxu0 0
        %3358 = vmatpush.bf16.msra.mxu0 0
        %3359 = vmatpush.bf16.msra.mxu0 0
        %3360 = vmatpush.bf16.msra.mxu0 0
        %3361 = vmatpush.bf16.msra.mxu0 0
        %3362 = vmatpush.bf16.msra.mxu0 0
        %3363 = vmatpush.bf16.msra.mxu0 %v3351
        %3364 = vmatmul.bf16.gmra.mxu0 %v3354
        %v3365 = vpop.f32.mrf.mxu0
        %v3366 = vadd.f32 0.0, %v3365
        %v3367 = vpop.f32.mrf.mxu0
        %v3368 = vadd.f32 0.0, %v3367
        %3369 = vdwg.mxu0
        %v3372 = vunpack.c.l.b16 %v3246
        %v3373 = vunpack.c.l.b16 %v3247
        %v3374 = vpack.c.b16 %v3373, %v3372
        %3375 = vrot.lane.b32.xlu0 %v2111, 96
        %v3376 = vpop.permute.xlu0 %3375
        %v3379 = vsel %vm1605, %v3374, 0
        %3381 = vmatpush.bf16.msra.mxu0 0
        %3382 = vmatpush.bf16.msra.mxu0 0
        %3383 = vmatpush.bf16.msra.mxu0 0
        %3384 = vmatpush.bf16.msra.mxu0 0
        %3385 = vmatpush.bf16.msra.mxu0 0
        %3386 = vmatpush.bf16.msra.mxu0 0
        %3387 = vmatpush.bf16.msra.mxu0 0
        %3388 = vmatpush.bf16.msra.mxu0 %v3376
        %3389 = vmatmul.bf16.gmra.mxu0 %v3379
        %v3390 = vpop.f32.mrf.mxu0
        %v3391 = vadd.f32 0.0, %v3390
        %v3392 = vpop.f32.mrf.mxu0
        %v3393 = vadd.f32 0.0, %v3392
        %3394 = vdwg.mxu0
        %v3397 = vunpack.c.l.b16 %v3248
        %v3398 = vunpack.c.l.b16 %v3249
        %v3399 = vpack.c.b16 %v3398, %v3397
        %3400 = vrot.lane.b32.xlu0 %v2139, 96
        %v3401 = vpop.permute.xlu0 %3400
        %v3404 = vsel %vm1605, %v3399, 0
        %3406 = vmatpush.bf16.msra.mxu0 0
        %3407 = vmatpush.bf16.msra.mxu0 0
        %3408 = vmatpush.bf16.msra.mxu0 0
        %3409 = vmatpush.bf16.msra.mxu0 0
        %3410 = vmatpush.bf16.msra.mxu0 0
        %3411 = vmatpush.bf16.msra.mxu0 0
        %3412 = vmatpush.bf16.msra.mxu0 0
        %3413 = vmatpush.bf16.msra.mxu0 %v3401
        %3414 = vmatmul.bf16.gmra.mxu0 %v3404
        %v3415 = vpop.f32.mrf.mxu0
        %v3416 = vadd.f32 0.0, %v3415
        %v3417 = vpop.f32.mrf.mxu0
        %v3418 = vadd.f32 0.0, %v3417
        %3419 = vdwg.mxu0
        %v3422 = vunpack.c.l.b16 %v3250
        %v3423 = vunpack.c.l.b16 %v3251
        %v3424 = vpack.c.b16 %v3423, %v3422
        %3425 = vrot.lane.b32.xlu0 %v2167, 96
        %v3426 = vpop.permute.xlu0 %3425
        %v3429 = vsel %vm1605, %v3424, 0
        %3431 = vmatpush.bf16.msra.mxu0 0
        %3432 = vmatpush.bf16.msra.mxu0 0
        %3433 = vmatpush.bf16.msra.mxu0 0
        %3434 = vmatpush.bf16.msra.mxu0 0
        %3435 = vmatpush.bf16.msra.mxu0 0
        %3436 = vmatpush.bf16.msra.mxu0 0
        %3437 = vmatpush.bf16.msra.mxu0 0
        %3438 = vmatpush.bf16.msra.mxu0 %v3426
        %3439 = vmatmul.bf16.gmra.mxu0 %v3429
        %v3440 = vpop.f32.mrf.mxu0
        %v3441 = vadd.f32 0.0, %v3440
        %v3442 = vpop.f32.mrf.mxu0
        %v3443 = vadd.f32 0.0, %v3442
        %3444 = vdwg.mxu0
        %v3447 = vunpack.c.l.b16 %v3252
        %v3448 = vunpack.c.l.b16 %v3253
        %v3449 = vpack.c.b16 %v3448, %v3447
        %3450 = vrot.lane.b32.xlu0 %v2195, 96
        %v3451 = vpop.permute.xlu0 %3450
        %v3454 = vsel %vm1605, %v3449, 0
        %3456 = vmatpush.bf16.msra.mxu0 0
        %3457 = vmatpush.bf16.msra.mxu0 0
        %3458 = vmatpush.bf16.msra.mxu0 0
        %3459 = vmatpush.bf16.msra.mxu0 0
        %3460 = vmatpush.bf16.msra.mxu0 0
        %3461 = vmatpush.bf16.msra.mxu0 0
        %3462 = vmatpush.bf16.msra.mxu0 0
        %3463 = vmatpush.bf16.msra.mxu0 %v3451
        %3464 = vmatmul.bf16.gmra.mxu0 %v3454
        %v3465 = vpop.f32.mrf.mxu0
        %v3466 = vadd.f32 0.0, %v3465
        %v3467 = vpop.f32.mrf.mxu0
        %v3468 = vadd.f32 0.0, %v3467
        %3469 = vdwg.mxu0
        %v3472 = vunpack.c.l.b16 %v3254
        %v3473 = vunpack.c.l.b16 %v3255
        %v3474 = vpack.c.b16 %v3473, %v3472
        %3475 = vrot.lane.b32.xlu0 %v2223, 96
        %v3476 = vpop.permute.xlu0 %3475
        %v3479 = vsel %vm1605, %v3474, 0
        %3481 = vmatpush.bf16.msra.mxu0 0
        %3482 = vmatpush.bf16.msra.mxu0 0
        %3483 = vmatpush.bf16.msra.mxu0 0
        %3484 = vmatpush.bf16.msra.mxu0 0
        %3485 = vmatpush.bf16.msra.mxu0 0
        %3486 = vmatpush.bf16.msra.mxu0 0
        %3487 = vmatpush.bf16.msra.mxu0 0
        %3488 = vmatpush.bf16.msra.mxu0 %v3476
        %3489 = vmatmul.bf16.gmra.mxu0 %v3479
        %v3490 = vpop.f32.mrf.mxu0
        %v3491 = vadd.f32 0.0, %v3490
        %v3492 = vpop.f32.mrf.mxu0
        %v3493 = vadd.f32 0.0, %v3492
        %3494 = vdwg.mxu0
        %v3497 = vunpack.c.l.b16 %v3256
        %v3498 = vunpack.c.l.b16 %v3257
        %v3499 = vpack.c.b16 %v3498, %v3497
        %3500 = vrot.lane.b32.xlu0 %v2251, 96
        %v3501 = vpop.permute.xlu0 %3500
        %v3504 = vsel %vm1605, %v3499, 0
        %3506 = vmatpush.bf16.msra.mxu0 0
        %3507 = vmatpush.bf16.msra.mxu0 0
        %3508 = vmatpush.bf16.msra.mxu0 0
        %3509 = vmatpush.bf16.msra.mxu0 0
        %3510 = vmatpush.bf16.msra.mxu0 0
        %3511 = vmatpush.bf16.msra.mxu0 0
        %3512 = vmatpush.bf16.msra.mxu0 0
        %3513 = vmatpush.bf16.msra.mxu0 %v3501
        %3514 = vmatmul.bf16.gmra.mxu0 %v3504
        %v3515 = vpop.f32.mrf.mxu0
        %v3516 = vadd.f32 0.0, %v3515
        %v3517 = vpop.f32.mrf.mxu0
        %v3518 = vadd.f32 0.0, %v3517
        %3519 = vdwg.mxu0
        %v3522 = vunpack.c.l.b16 %v3258
        %v3523 = vunpack.c.l.b16 %v3259
        %v3524 = vpack.c.b16 %v3523, %v3522
        %3525 = vrot.lane.b32.xlu0 %v2279, 96
        %v3526 = vpop.permute.xlu0 %3525
        %v3529 = vsel %vm1605, %v3524, 0
        %3531 = vmatpush.bf16.msra.mxu0 0
        %3532 = vmatpush.bf16.msra.mxu0 0
        %3533 = vmatpush.bf16.msra.mxu0 0
        %3534 = vmatpush.bf16.msra.mxu0 0
        %3535 = vmatpush.bf16.msra.mxu0 0
        %3536 = vmatpush.bf16.msra.mxu0 0
        %3537 = vmatpush.bf16.msra.mxu0 0
        %3538 = vmatpush.bf16.msra.mxu0 %v3526
        %3539 = vmatmul.bf16.gmra.mxu0 %v3529
        %v3540 = vpop.f32.mrf.mxu0
        %v3541 = vadd.f32 0.0, %v3540
        %v3542 = vpop.f32.mrf.mxu0
        %v3543 = vadd.f32 0.0, %v3542
        %3544 = vdwg.mxu0
        %v3547 = vunpack.c.l.b16 %v3260
        %v3548 = vunpack.c.l.b16 %v3261
        %v3549 = vpack.c.b16 %v3548, %v3547
        %3550 = vrot.lane.b32.xlu0 %v2307, 96
        %v3551 = vpop.permute.xlu0 %3550
        %v3554 = vsel %vm1605, %v3549, 0
        %3556 = vmatpush.bf16.msra.mxu0 0
        %3557 = vmatpush.bf16.msra.mxu0 0
        %3558 = vmatpush.bf16.msra.mxu0 0
        %3559 = vmatpush.bf16.msra.mxu0 0
        %3560 = vmatpush.bf16.msra.mxu0 0
        %3561 = vmatpush.bf16.msra.mxu0 0
        %3562 = vmatpush.bf16.msra.mxu0 0
        %3563 = vmatpush.bf16.msra.mxu0 %v3551
        %3564 = vmatmul.bf16.gmra.mxu0 %v3554
        %v3565 = vpop.f32.mrf.mxu0
        %v3566 = vadd.f32 0.0, %v3565
        %v3567 = vpop.f32.mrf.mxu0
        %v3568 = vadd.f32 0.0, %v3567
        %3569 = vdwg.mxu0
        %v3572 = vunpack.c.l.b16 %v3262
        %v3573 = vunpack.c.l.b16 %v3263
        %v3574 = vpack.c.b16 %v3573, %v3572
        %3575 = vrot.lane.b32.xlu0 %v2335, 96
        %v3576 = vpop.permute.xlu0 %3575
        %v3579 = vsel %vm1605, %v3574, 0
        %3581 = vmatpush.bf16.msra.mxu0 0
        %3582 = vmatpush.bf16.msra.mxu0 0
        %3583 = vmatpush.bf16.msra.mxu0 0
        %3584 = vmatpush.bf16.msra.mxu0 0
        %3585 = vmatpush.bf16.msra.mxu0 0
        %3586 = vmatpush.bf16.msra.mxu0 0
        %3587 = vmatpush.bf16.msra.mxu0 0
        %3588 = vmatpush.bf16.msra.mxu0 %v3576
        %3589 = vmatmul.bf16.gmra.mxu0 %v3579
        %v3590 = vpop.f32.mrf.mxu0
        %v3591 = vadd.f32 0.0, %v3590
        %v3592 = vpop.f32.mrf.mxu0
        %v3593 = vadd.f32 0.0, %v3592
        %3594 = vdwg.mxu0
        %v3597 = vunpack.c.l.b16 %v3264
        %v3598 = vunpack.c.l.b16 %v3265
        %v3599 = vpack.c.b16 %v3598, %v3597
        %3600 = vrot.lane.b32.xlu0 %v2363, 96
        %v3601 = vpop.permute.xlu0 %3600
        %v3604 = vsel %vm1605, %v3599, 0
        %3606 = vmatpush.bf16.msra.mxu0 0
        %3607 = vmatpush.bf16.msra.mxu0 0
        %3608 = vmatpush.bf16.msra.mxu0 0
        %3609 = vmatpush.bf16.msra.mxu0 0
        %3610 = vmatpush.bf16.msra.mxu0 0
        %3611 = vmatpush.bf16.msra.mxu0 0
        %3612 = vmatpush.bf16.msra.mxu0 0
        %3613 = vmatpush.bf16.msra.mxu0 %v3601
        %3614 = vmatmul.bf16.gmra.mxu0 %v3604
        %v3615 = vpop.f32.mrf.mxu0
        %v3616 = vadd.f32 0.0, %v3615
        %v3617 = vpop.f32.mrf.mxu0
        %v3618 = vadd.f32 0.0, %v3617
        %3619 = vdwg.mxu0
        %v3622 = vunpack.c.l.b16 %v3266
        %v3623 = vunpack.c.l.b16 %v3267
        %v3624 = vpack.c.b16 %v3623, %v3622
        %3625 = vrot.lane.b32.xlu0 %v2391, 96
        %v3626 = vpop.permute.xlu0 %3625
        %v3629 = vsel %vm1605, %v3624, 0
        %3631 = vmatpush.bf16.msra.mxu0 0
        %3632 = vmatpush.bf16.msra.mxu0 0
        %3633 = vmatpush.bf16.msra.mxu0 0
        %3634 = vmatpush.bf16.msra.mxu0 0
        %3635 = vmatpush.bf16.msra.mxu0 0
        %3636 = vmatpush.bf16.msra.mxu0 0
        %3637 = vmatpush.bf16.msra.mxu0 0
        %3638 = vmatpush.bf16.msra.mxu0 %v3626
        %3639 = vmatmul.bf16.gmra.mxu0 %v3629
        %v3640 = vpop.f32.mrf.mxu0
        %v3641 = vadd.f32 0.0, %v3640
        %v3642 = vpop.f32.mrf.mxu0
        %v3643 = vadd.f32 0.0, %v3642
        %3644 = vdwg.mxu0
        %v3647 = vunpack.c.l.b16 %v3268
        %v3648 = vunpack.c.l.b16 %v3269
        %v3649 = vpack.c.b16 %v3648, %v3647
        %3650 = vrot.lane.b32.xlu0 %v2419, 96
        %v3651 = vpop.permute.xlu0 %3650
        %v3654 = vsel %vm1605, %v3649, 0
        %3656 = vmatpush.bf16.msra.mxu0 0
        %3657 = vmatpush.bf16.msra.mxu0 0
        %3658 = vmatpush.bf16.msra.mxu0 0
        %3659 = vmatpush.bf16.msra.mxu0 0
        %3660 = vmatpush.bf16.msra.mxu0 0
        %3661 = vmatpush.bf16.msra.mxu0 0
        %3662 = vmatpush.bf16.msra.mxu0 0
        %3663 = vmatpush.bf16.msra.mxu0 %v3651
        %3664 = vmatmul.bf16.gmra.mxu0 %v3654
        %v3665 = vpop.f32.mrf.mxu0
        %v3666 = vadd.f32 0.0, %v3665
        %v3667 = vpop.f32.mrf.mxu0
        %v3668 = vadd.f32 0.0, %v3667
        %3669 = vdwg.mxu0
        %v3670 = vpack.c.bf16 %v3291, %v3291
        %v3671 = vpack.c.bf16 %v3293, %v3293
        %v3672 = vpack.c.bf16 %v3316, %v3316
        %v3673 = vpack.c.bf16 %v3318, %v3318
        %v3674 = vpack.c.bf16 %v3341, %v3341
        %v3675 = vpack.c.bf16 %v3343, %v3343
        %v3676 = vpack.c.bf16 %v3366, %v3366
        %v3677 = vpack.c.bf16 %v3368, %v3368
        %v3678 = vpack.c.bf16 %v3391, %v3391
        %v3679 = vpack.c.bf16 %v3393, %v3393
        %v3680 = vpack.c.bf16 %v3416, %v3416
        %v3681 = vpack.c.bf16 %v3418, %v3418
        %v3682 = vpack.c.bf16 %v3441, %v3441
        %v3683 = vpack.c.bf16 %v3443, %v3443
        %v3684 = vpack.c.bf16 %v3466, %v3466
        %v3685 = vpack.c.bf16 %v3468, %v3468
        %v3686 = vpack.c.bf16 %v3491, %v3491
        %v3687 = vpack.c.bf16 %v3493, %v3493
        %v3688 = vpack.c.bf16 %v3516, %v3516
        %v3689 = vpack.c.bf16 %v3518, %v3518
        %v3690 = vpack.c.bf16 %v3541, %v3541
        %v3691 = vpack.c.bf16 %v3543, %v3543
        %v3692 = vpack.c.bf16 %v3566, %v3566
        %v3693 = vpack.c.bf16 %v3568, %v3568
        %v3694 = vpack.c.bf16 %v3591, %v3591
        %v3695 = vpack.c.bf16 %v3593, %v3593
        %v3696 = vpack.c.bf16 %v3616, %v3616
        %v3697 = vpack.c.bf16 %v3618, %v3618
        %v3698 = vpack.c.bf16 %v3641, %v3641
        %v3699 = vpack.c.bf16 %v3643, %v3643
        %v3700 = vpack.c.bf16 %v3666, %v3666
        %v3701 = vpack.c.bf16 %v3668, %v3668
        %3702 = vrot.lane.b32.xlu0 %v1050, 64
        %v3703 = vpop.permute.xlu0 %3702
        %3704 = vrot.lane.b32.xlu0 %v1055, 64
        %v3705 = vpop.permute.xlu0 %3704
        %v3707 = vsel %vm1056, %v3703, 0
        %v3710 = vsel %vm1056, %v3705, 0
        %3712 = vmatpush.bf16.xpose.msra.mxu0 0
        %3713 = vmatpush.bf16.xpose.msra.mxu0 0
        %3714 = vmatpush.bf16.xpose.msra.mxu0 0
        %3715 = vmatpush.bf16.xpose.msra.mxu0 0
        %3716 = vmatpush.bf16.xpose.msra.mxu0 0
        %3717 = vmatpush.bf16.xpose.msra.mxu0 0
        %3718 = vmatpush.bf16.xpose.msra.mxu0 0
        %3719 = vmatpush.bf16.xpose.msra.mxu0 %v3710
        %3720 = vmatmul.bf16.gmra.mxu0 %v3707
        %v3721 = vpop.f32.mrf.mxu0
        %v3722 = vadd.f32 0.0, %v3721
        %v3723 = vpop.f32.mrf.mxu0
        %v3724 = vadd.f32 0.0, %v3723
        %3725 = vdwg.mxu0
        %3726 = vrot.lane.b32.xlu0 %v1081, 64
        %v3727 = vpop.permute.xlu0 %3726
        %3728 = vrot.lane.b32.xlu0 %v1086, 64
        %v3729 = vpop.permute.xlu0 %3728
        %v3731 = vsel %vm1056, %v3727, 0
        %v3734 = vsel %vm1056, %v3729, 0
        %3736 = vmatpush.bf16.xpose.msra.mxu0 0
        %3737 = vmatpush.bf16.xpose.msra.mxu0 0
        %3738 = vmatpush.bf16.xpose.msra.mxu0 0
        %3739 = vmatpush.bf16.xpose.msra.mxu0 0
        %3740 = vmatpush.bf16.xpose.msra.mxu0 0
        %3741 = vmatpush.bf16.xpose.msra.mxu0 0
        %3742 = vmatpush.bf16.xpose.msra.mxu0 0
        %3743 = vmatpush.bf16.xpose.msra.mxu0 %v3734
        %3744 = vmatmul.bf16.gmra.mxu0 %v3731
        %v3745 = vpop.f32.mrf.mxu0
        %v3746 = vadd.f32 0.0, %v3745
        %v3747 = vpop.f32.mrf.mxu0
        %v3748 = vadd.f32 0.0, %v3747
        %3749 = vdwg.mxu0
        %3750 = vrot.lane.b32.xlu0 %v1111, 64
        %v3751 = vpop.permute.xlu0 %3750
        %3752 = vrot.lane.b32.xlu0 %v1116, 64
        %v3753 = vpop.permute.xlu0 %3752
        %v3755 = vsel %vm1056, %v3751, 0
        %v3758 = vsel %vm1056, %v3753, 0
        %3760 = vmatpush.bf16.xpose.msra.mxu0 0
        %3761 = vmatpush.bf16.xpose.msra.mxu0 0
        %3762 = vmatpush.bf16.xpose.msra.mxu0 0
        %3763 = vmatpush.bf16.xpose.msra.mxu0 0
        %3764 = vmatpush.bf16.xpose.msra.mxu0 0
        %3765 = vmatpush.bf16.xpose.msra.mxu0 0
        %3766 = vmatpush.bf16.xpose.msra.mxu0 0
        %3767 = vmatpush.bf16.xpose.msra.mxu0 %v3758
        %3768 = vmatmul.bf16.gmra.mxu0 %v3755
        %v3769 = vpop.f32.mrf.mxu0
        %v3770 = vadd.f32 0.0, %v3769
        %v3771 = vpop.f32.mrf.mxu0
        %v3772 = vadd.f32 0.0, %v3771
        %3773 = vdwg.mxu0
        %3774 = vrot.lane.b32.xlu0 %v1141, 64
        %v3775 = vpop.permute.xlu0 %3774
        %3776 = vrot.lane.b32.xlu0 %v1146, 64
        %v3777 = vpop.permute.xlu0 %3776
        %v3779 = vsel %vm1056, %v3775, 0
        %v3782 = vsel %vm1056, %v3777, 0
        %3784 = vmatpush.bf16.xpose.msra.mxu0 0
        %3785 = vmatpush.bf16.xpose.msra.mxu0 0
        %3786 = vmatpush.bf16.xpose.msra.mxu0 0
        %3787 = vmatpush.bf16.xpose.msra.mxu0 0
        %3788 = vmatpush.bf16.xpose.msra.mxu0 0
        %3789 = vmatpush.bf16.xpose.msra.mxu0 0
        %3790 = vmatpush.bf16.xpose.msra.mxu0 0
        %3791 = vmatpush.bf16.xpose.msra.mxu0 %v3782
        %3792 = vmatmul.bf16.gmra.mxu0 %v3779
        %v3793 = vpop.f32.mrf.mxu0
        %v3794 = vadd.f32 0.0, %v3793
        %v3795 = vpop.f32.mrf.mxu0
        %v3796 = vadd.f32 0.0, %v3795
        %3797 = vdwg.mxu0
        %3798 = vrot.lane.b32.xlu0 %v1171, 64
        %v3799 = vpop.permute.xlu0 %3798
        %3800 = vrot.lane.b32.xlu0 %v1176, 64
        %v3801 = vpop.permute.xlu0 %3800
        %v3803 = vsel %vm1056, %v3799, 0
        %v3806 = vsel %vm1056, %v3801, 0
        %3808 = vmatpush.bf16.xpose.msra.mxu0 0
        %3809 = vmatpush.bf16.xpose.msra.mxu0 0
        %3810 = vmatpush.bf16.xpose.msra.mxu0 0
        %3811 = vmatpush.bf16.xpose.msra.mxu0 0
        %3812 = vmatpush.bf16.xpose.msra.mxu0 0
        %3813 = vmatpush.bf16.xpose.msra.mxu0 0
        %3814 = vmatpush.bf16.xpose.msra.mxu0 0
        %3815 = vmatpush.bf16.xpose.msra.mxu0 %v3806
        %3816 = vmatmul.bf16.gmra.mxu0 %v3803
        %v3817 = vpop.f32.mrf.mxu0
        %v3818 = vadd.f32 0.0, %v3817
        %v3819 = vpop.f32.mrf.mxu0
        %v3820 = vadd.f32 0.0, %v3819
        %3821 = vdwg.mxu0
        %3822 = vrot.lane.b32.xlu0 %v1201, 64
        %v3823 = vpop.permute.xlu0 %3822
        %3824 = vrot.lane.b32.xlu0 %v1206, 64
        %v3825 = vpop.permute.xlu0 %3824
        %v3827 = vsel %vm1056, %v3823, 0
        %v3830 = vsel %vm1056, %v3825, 0
        %3832 = vmatpush.bf16.xpose.msra.mxu0 0
        %3833 = vmatpush.bf16.xpose.msra.mxu0 0
        %3834 = vmatpush.bf16.xpose.msra.mxu0 0
        %3835 = vmatpush.bf16.xpose.msra.mxu0 0
        %3836 = vmatpush.bf16.xpose.msra.mxu0 0
        %3837 = vmatpush.bf16.xpose.msra.mxu0 0
        %3838 = vmatpush.bf16.xpose.msra.mxu0 0
        %3839 = vmatpush.bf16.xpose.msra.mxu0 %v3830
        %3840 = vmatmul.bf16.gmra.mxu0 %v3827
        %v3841 = vpop.f32.mrf.mxu0
        %v3842 = vadd.f32 0.0, %v3841
        %v3843 = vpop.f32.mrf.mxu0
        %v3844 = vadd.f32 0.0, %v3843
        %3845 = vdwg.mxu0
        %3846 = vrot.lane.b32.xlu0 %v1231, 64
        %v3847 = vpop.permute.xlu0 %3846
        %3848 = vrot.lane.b32.xlu0 %v1236, 64
        %v3849 = vpop.permute.xlu0 %3848
        %v3851 = vsel %vm1056, %v3847, 0
        %v3854 = vsel %vm1056, %v3849, 0
        %3856 = vmatpush.bf16.xpose.msra.mxu0 0
        %3857 = vmatpush.bf16.xpose.msra.mxu0 0
        %3858 = vmatpush.bf16.xpose.msra.mxu0 0
        %3859 = vmatpush.bf16.xpose.msra.mxu0 0
        %3860 = vmatpush.bf16.xpose.msra.mxu0 0
        %3861 = vmatpush.bf16.xpose.msra.mxu0 0
        %3862 = vmatpush.bf16.xpose.msra.mxu0 0
        %3863 = vmatpush.bf16.xpose.msra.mxu0 %v3854
        %3864 = vmatmul.bf16.gmra.mxu0 %v3851
        %v3865 = vpop.f32.mrf.mxu0
        %v3866 = vadd.f32 0.0, %v3865
        %v3867 = vpop.f32.mrf.mxu0
        %v3868 = vadd.f32 0.0, %v3867
        %3869 = vdwg.mxu0
        %3870 = vrot.lane.b32.xlu0 %v1261, 64
        %v3871 = vpop.permute.xlu0 %3870
        %3872 = vrot.lane.b32.xlu0 %v1266, 64
        %v3873 = vpop.permute.xlu0 %3872
        %v3875 = vsel %vm1056, %v3871, 0
        %v3878 = vsel %vm1056, %v3873, 0
        %3880 = vmatpush.bf16.xpose.msra.mxu0 0
        %3881 = vmatpush.bf16.xpose.msra.mxu0 0
        %3882 = vmatpush.bf16.xpose.msra.mxu0 0
        %3883 = vmatpush.bf16.xpose.msra.mxu0 0
        %3884 = vmatpush.bf16.xpose.msra.mxu0 0
        %3885 = vmatpush.bf16.xpose.msra.mxu0 0
        %3886 = vmatpush.bf16.xpose.msra.mxu0 0
        %3887 = vmatpush.bf16.xpose.msra.mxu0 %v3878
        %3888 = vmatmul.bf16.gmra.mxu0 %v3875
        %v3889 = vpop.f32.mrf.mxu0
        %v3890 = vadd.f32 0.0, %v3889
        %v3891 = vpop.f32.mrf.mxu0
        %v3892 = vadd.f32 0.0, %v3891
        %3893 = vdwg.mxu0
        %3894 = vrot.lane.b32.xlu0 %v1291, 64
        %v3895 = vpop.permute.xlu0 %3894
        %3896 = vrot.lane.b32.xlu0 %v1296, 64
        %v3897 = vpop.permute.xlu0 %3896
        %v3899 = vsel %vm1056, %v3895, 0
        %v3902 = vsel %vm1056, %v3897, 0
        %3904 = vmatpush.bf16.xpose.msra.mxu0 0
        %3905 = vmatpush.bf16.xpose.msra.mxu0 0
        %3906 = vmatpush.bf16.xpose.msra.mxu0 0
        %3907 = vmatpush.bf16.xpose.msra.mxu0 0
        %3908 = vmatpush.bf16.xpose.msra.mxu0 0
        %3909 = vmatpush.bf16.xpose.msra.mxu0 0
        %3910 = vmatpush.bf16.xpose.msra.mxu0 0
        %3911 = vmatpush.bf16.xpose.msra.mxu0 %v3902
        %3912 = vmatmul.bf16.gmra.mxu0 %v3899
        %v3913 = vpop.f32.mrf.mxu0
        %v3914 = vadd.f32 0.0, %v3913
        %v3915 = vpop.f32.mrf.mxu0
        %v3916 = vadd.f32 0.0, %v3915
        %3917 = vdwg.mxu0
        %3918 = vrot.lane.b32.xlu0 %v1321, 64
        %v3919 = vpop.permute.xlu0 %3918
        %3920 = vrot.lane.b32.xlu0 %v1326, 64
        %v3921 = vpop.permute.xlu0 %3920
        %v3923 = vsel %vm1056, %v3919, 0
        %v3926 = vsel %vm1056, %v3921, 0
        %3928 = vmatpush.bf16.xpose.msra.mxu0 0
        %3929 = vmatpush.bf16.xpose.msra.mxu0 0
        %3930 = vmatpush.bf16.xpose.msra.mxu0 0
        %3931 = vmatpush.bf16.xpose.msra.mxu0 0
        %3932 = vmatpush.bf16.xpose.msra.mxu0 0
        %3933 = vmatpush.bf16.xpose.msra.mxu0 0
        %3934 = vmatpush.bf16.xpose.msra.mxu0 0
        %3935 = vmatpush.bf16.xpose.msra.mxu0 %v3926
        %3936 = vmatmul.bf16.gmra.mxu0 %v3923
        %v3937 = vpop.f32.mrf.mxu0
        %v3938 = vadd.f32 0.0, %v3937
        %v3939 = vpop.f32.mrf.mxu0
        %v3940 = vadd.f32 0.0, %v3939
        %3941 = vdwg.mxu0
        %3942 = vrot.lane.b32.xlu0 %v1351, 64
        %v3943 = vpop.permute.xlu0 %3942
        %3944 = vrot.lane.b32.xlu0 %v1356, 64
        %v3945 = vpop.permute.xlu0 %3944
        %v3947 = vsel %vm1056, %v3943, 0
        %v3950 = vsel %vm1056, %v3945, 0
        %3952 = vmatpush.bf16.xpose.msra.mxu0 0
        %3953 = vmatpush.bf16.xpose.msra.mxu0 0
        %3954 = vmatpush.bf16.xpose.msra.mxu0 0
        %3955 = vmatpush.bf16.xpose.msra.mxu0 0
        %3956 = vmatpush.bf16.xpose.msra.mxu0 0
        %3957 = vmatpush.bf16.xpose.msra.mxu0 0
        %3958 = vmatpush.bf16.xpose.msra.mxu0 0
        %3959 = vmatpush.bf16.xpose.msra.mxu0 %v3950
        %3960 = vmatmul.bf16.gmra.mxu0 %v3947
        %v3961 = vpop.f32.mrf.mxu0
        %v3962 = vadd.f32 0.0, %v3961
        %v3963 = vpop.f32.mrf.mxu0
        %v3964 = vadd.f32 0.0, %v3963
        %3965 = vdwg.mxu0
        %3966 = vrot.lane.b32.xlu0 %v1381, 64
        %v3967 = vpop.permute.xlu0 %3966
        %3968 = vrot.lane.b32.xlu0 %v1386, 64
        %v3969 = vpop.permute.xlu0 %3968
        %v3971 = vsel %vm1056, %v3967, 0
        %v3974 = vsel %vm1056, %v3969, 0
        %3976 = vmatpush.bf16.xpose.msra.mxu0 0
        %3977 = vmatpush.bf16.xpose.msra.mxu0 0
        %3978 = vmatpush.bf16.xpose.msra.mxu0 0
        %3979 = vmatpush.bf16.xpose.msra.mxu0 0
        %3980 = vmatpush.bf16.xpose.msra.mxu0 0
        %3981 = vmatpush.bf16.xpose.msra.mxu0 0
        %3982 = vmatpush.bf16.xpose.msra.mxu0 0
        %3983 = vmatpush.bf16.xpose.msra.mxu0 %v3974
        %3984 = vmatmul.bf16.gmra.mxu0 %v3971
        %v3985 = vpop.f32.mrf.mxu0
        %v3986 = vadd.f32 0.0, %v3985
        %v3987 = vpop.f32.mrf.mxu0
        %v3988 = vadd.f32 0.0, %v3987
        %3989 = vdwg.mxu0
        %3990 = vrot.lane.b32.xlu0 %v1411, 64
        %v3991 = vpop.permute.xlu0 %3990
        %3992 = vrot.lane.b32.xlu0 %v1416, 64
        %v3993 = vpop.permute.xlu0 %3992
        %v3995 = vsel %vm1056, %v3991, 0
        %v3998 = vsel %vm1056, %v3993, 0
        %4000 = vmatpush.bf16.xpose.msra.mxu0 0
        %4001 = vmatpush.bf16.xpose.msra.mxu0 0
        %4002 = vmatpush.bf16.xpose.msra.mxu0 0
        %4003 = vmatpush.bf16.xpose.msra.mxu0 0
        %4004 = vmatpush.bf16.xpose.msra.mxu0 0
        %4005 = vmatpush.bf16.xpose.msra.mxu0 0
        %4006 = vmatpush.bf16.xpose.msra.mxu0 0
        %4007 = vmatpush.bf16.xpose.msra.mxu0 %v3998
        %4008 = vmatmul.bf16.gmra.mxu0 %v3995
        %v4009 = vpop.f32.mrf.mxu0
        %v4010 = vadd.f32 0.0, %v4009
        %v4011 = vpop.f32.mrf.mxu0
        %v4012 = vadd.f32 0.0, %v4011
        %4013 = vdwg.mxu0
        %4014 = vrot.lane.b32.xlu0 %v1441, 64
        %v4015 = vpop.permute.xlu0 %4014
        %4016 = vrot.lane.b32.xlu0 %v1446, 64
        %v4017 = vpop.permute.xlu0 %4016
        %v4019 = vsel %vm1056, %v4015, 0
        %v4022 = vsel %vm1056, %v4017, 0
        %4024 = vmatpush.bf16.xpose.msra.mxu0 0
        %4025 = vmatpush.bf16.xpose.msra.mxu0 0
        %4026 = vmatpush.bf16.xpose.msra.mxu0 0
        %4027 = vmatpush.bf16.xpose.msra.mxu0 0
        %4028 = vmatpush.bf16.xpose.msra.mxu0 0
        %4029 = vmatpush.bf16.xpose.msra.mxu0 0
        %4030 = vmatpush.bf16.xpose.msra.mxu0 0
        %4031 = vmatpush.bf16.xpose.msra.mxu0 %v4022
        %4032 = vmatmul.bf16.gmra.mxu0 %v4019
        %v4033 = vpop.f32.mrf.mxu0
        %v4034 = vadd.f32 0.0, %v4033
        %v4035 = vpop.f32.mrf.mxu0
        %v4036 = vadd.f32 0.0, %v4035
        %4037 = vdwg.mxu0
        %4038 = vrot.lane.b32.xlu0 %v1471, 64
        %v4039 = vpop.permute.xlu0 %4038
        %4040 = vrot.lane.b32.xlu0 %v1476, 64
        %v4041 = vpop.permute.xlu0 %4040
        %v4043 = vsel %vm1056, %v4039, 0
        %v4046 = vsel %vm1056, %v4041, 0
        %4048 = vmatpush.bf16.xpose.msra.mxu0 0
        %4049 = vmatpush.bf16.xpose.msra.mxu0 0
        %4050 = vmatpush.bf16.xpose.msra.mxu0 0
        %4051 = vmatpush.bf16.xpose.msra.mxu0 0
        %4052 = vmatpush.bf16.xpose.msra.mxu0 0
        %4053 = vmatpush.bf16.xpose.msra.mxu0 0
        %4054 = vmatpush.bf16.xpose.msra.mxu0 0
        %4055 = vmatpush.bf16.xpose.msra.mxu0 %v4046
        %4056 = vmatmul.bf16.gmra.mxu0 %v4043
        %v4057 = vpop.f32.mrf.mxu0
        %v4058 = vadd.f32 0.0, %v4057
        %v4059 = vpop.f32.mrf.mxu0
        %v4060 = vadd.f32 0.0, %v4059
        %4061 = vdwg.mxu0
        %4062 = vrot.lane.b32.xlu0 %v1501, 64
        %v4063 = vpop.permute.xlu0 %4062
        %4064 = vrot.lane.b32.xlu0 %v1506, 64
        %v4065 = vpop.permute.xlu0 %4064
        %v4067 = vsel %vm1056, %v4063, 0
        %v4070 = vsel %vm1056, %v4065, 0
        %4072 = vmatpush.bf16.xpose.msra.mxu0 0
        %4073 = vmatpush.bf16.xpose.msra.mxu0 0
        %4074 = vmatpush.bf16.xpose.msra.mxu0 0
        %4075 = vmatpush.bf16.xpose.msra.mxu0 0
        %4076 = vmatpush.bf16.xpose.msra.mxu0 0
        %4077 = vmatpush.bf16.xpose.msra.mxu0 0
        %4078 = vmatpush.bf16.xpose.msra.mxu0 0
        %4079 = vmatpush.bf16.xpose.msra.mxu0 %v4070
        %4080 = vmatmul.bf16.gmra.mxu0 %v4067
        %v4081 = vpop.f32.mrf.mxu0
        %v4082 = vadd.f32 0.0, %v4081
        %v4083 = vpop.f32.mrf.mxu0
        %v4084 = vadd.f32 0.0, %v4083
        %4085 = vdwg.mxu0
        %v4086 = vsel %vm1557, %v3722, -1e+09
        %v4087 = vsel %vm1557, %v3724, -1e+09
        %v4088 = vsel %vm1558, %v3746, -1e+09
        %v4089 = vsel %vm1558, %v3748, -1e+09
        %v4090 = vsel %vm1559, %v3770, -1e+09
        %v4091 = vsel %vm1559, %v3772, -1e+09
        %v4092 = vsel %vm1560, %v3794, -1e+09
        %v4093 = vsel %vm1560, %v3796, -1e+09
        %v4094 = vsel %vm1561, %v3818, -1e+09
        %v4095 = vsel %vm1561, %v3820, -1e+09
        %v4096 = vsel %vm1562, %v3842, -1e+09
        %v4097 = vsel %vm1562, %v3844, -1e+09
        %v4098 = vsel %vm1563, %v3866, -1e+09
        %v4099 = vsel %vm1563, %v3868, -1e+09
        %v4100 = vsel %vm1564, %v3890, -1e+09
        %v4101 = vsel %vm1564, %v3892, -1e+09
        %v4102 = vsel %vm1565, %v3914, -1e+09
        %v4103 = vsel %vm1565, %v3916, -1e+09
        %v4104 = vsel %vm1566, %v3938, -1e+09
        %v4105 = vsel %vm1566, %v3940, -1e+09
        %v4106 = vsel %vm1567, %v3962, -1e+09
        %v4107 = vsel %vm1567, %v3964, -1e+09
        %v4108 = vsel %vm1568, %v3986, -1e+09
        %v4109 = vsel %vm1568, %v3988, -1e+09
        %v4110 = vsel %vm1569, %v4010, -1e+09
        %v4111 = vsel %vm1569, %v4012, -1e+09
        %v4112 = vsel %vm1570, %v4034, -1e+09
        %v4113 = vsel %vm1570, %v4036, -1e+09
        %v4114 = vsel %vm1571, %v4058, -1e+09
        %v4115 = vsel %vm1571, %v4060, -1e+09
        %v4116 = vsel %vm1572, %v4082, -1e+09
        %v4117 = vsel %vm1572, %v4084, -1e+09
        %v4118 = vsel %vm1605, %v4086, -inf
        %4119 = vmax.xlane.f32.xlu0 %v4118
        %v4120 = vpop.xlane.xlu0 %4119
        %v4121 = vsel %vm1605, %v4087, -inf
        %4122 = vmax.xlane.f32.xlu0 %v4121
        %v4123 = vpop.xlane.xlu0 %4122
        %v4124 = vsel %vm1605, %v4088, -inf
        %4125 = vmax.xlane.f32.xlu0 %v4124
        %v4126 = vpop.xlane.xlu0 %4125
        %v4127 = vsel %vm1605, %v4089, -inf
        %4128 = vmax.xlane.f32.xlu0 %v4127
        %v4129 = vpop.xlane.xlu0 %4128
        %v4130 = vsel %vm1605, %v4090, -inf
        %4131 = vmax.xlane.f32.xlu0 %v4130
        %v4132 = vpop.xlane.xlu0 %4131
        %v4133 = vsel %vm1605, %v4091, -inf
        %4134 = vmax.xlane.f32.xlu0 %v4133
        %v4135 = vpop.xlane.xlu0 %4134
        %v4136 = vsel %vm1605, %v4092, -inf
        %4137 = vmax.xlane.f32.xlu0 %v4136
        %v4138 = vpop.xlane.xlu0 %4137
        %v4139 = vsel %vm1605, %v4093, -inf
        %4140 = vmax.xlane.f32.xlu0 %v4139
        %v4141 = vpop.xlane.xlu0 %4140
        %v4142 = vsel %vm1605, %v4094, -inf
        %4143 = vmax.xlane.f32.xlu0 %v4142
        %v4144 = vpop.xlane.xlu0 %4143
        %v4145 = vsel %vm1605, %v4095, -inf
        %4146 = vmax.xlane.f32.xlu0 %v4145
        %v4147 = vpop.xlane.xlu0 %4146
        %v4148 = vsel %vm1605, %v4096, -inf
        %4149 = vmax.xlane.f32.xlu0 %v4148
        %v4150 = vpop.xlane.xlu0 %4149
        %v4151 = vsel %vm1605, %v4097, -inf
        %4152 = vmax.xlane.f32.xlu0 %v4151
        %v4153 = vpop.xlane.xlu0 %4152
        %v4154 = vsel %vm1605, %v4098, -inf
        %4155 = vmax.xlane.f32.xlu0 %v4154
        %v4156 = vpop.xlane.xlu0 %4155
        %v4157 = vsel %vm1605, %v4099, -inf
        %4158 = vmax.xlane.f32.xlu0 %v4157
        %v4159 = vpop.xlane.xlu0 %4158
        %v4160 = vsel %vm1605, %v4100, -inf
        %4161 = vmax.xlane.f32.xlu0 %v4160
        %v4162 = vpop.xlane.xlu0 %4161
        %v4163 = vsel %vm1605, %v4101, -inf
        %4164 = vmax.xlane.f32.xlu0 %v4163
        %v4165 = vpop.xlane.xlu0 %4164
        %v4166 = vsel %vm1605, %v4102, -inf
        %4167 = vmax.xlane.f32.xlu0 %v4166
        %v4168 = vpop.xlane.xlu0 %4167
        %v4169 = vsel %vm1605, %v4103, -inf
        %4170 = vmax.xlane.f32.xlu0 %v4169
        %v4171 = vpop.xlane.xlu0 %4170
        %v4172 = vsel %vm1605, %v4104, -inf
        %4173 = vmax.xlane.f32.xlu0 %v4172
        %v4174 = vpop.xlane.xlu0 %4173
        %v4175 = vsel %vm1605, %v4105, -inf
        %4176 = vmax.xlane.f32.xlu0 %v4175
        %v4177 = vpop.xlane.xlu0 %4176
        %v4178 = vsel %vm1605, %v4106, -inf
        %4179 = vmax.xlane.f32.xlu0 %v4178
        %v4180 = vpop.xlane.xlu0 %4179
        %v4181 = vsel %vm1605, %v4107, -inf
        %4182 = vmax.xlane.f32.xlu0 %v4181
        %v4183 = vpop.xlane.xlu0 %4182
        %v4184 = vsel %vm1605, %v4108, -inf
        %4185 = vmax.xlane.f32.xlu0 %v4184
        %v4186 = vpop.xlane.xlu0 %4185
        %v4187 = vsel %vm1605, %v4109, -inf
        %4188 = vmax.xlane.f32.xlu0 %v4187
        %v4189 = vpop.xlane.xlu0 %4188
        %v4190 = vsel %vm1605, %v4110, -inf
        %4191 = vmax.xlane.f32.xlu0 %v4190
        %v4192 = vpop.xlane.xlu0 %4191
        %v4193 = vsel %vm1605, %v4111, -inf
        %4194 = vmax.xlane.f32.xlu0 %v4193
        %v4195 = vpop.xlane.xlu0 %4194
        %v4196 = vsel %vm1605, %v4112, -inf
        %4197 = vmax.xlane.f32.xlu0 %v4196
        %v4198 = vpop.xlane.xlu0 %4197
        %v4199 = vsel %vm1605, %v4113, -inf
        %4200 = vmax.xlane.f32.xlu0 %v4199
        %v4201 = vpop.xlane.xlu0 %4200
        %v4202 = vsel %vm1605, %v4114, -inf
        %4203 = vmax.xlane.f32.xlu0 %v4202
        %v4204 = vpop.xlane.xlu0 %4203
        %v4205 = vsel %vm1605, %v4115, -inf
        %4206 = vmax.xlane.f32.xlu0 %v4205
        %v4207 = vpop.xlane.xlu0 %4206
        %v4208 = vsel %vm1605, %v4116, -inf
        %4209 = vmax.xlane.f32.xlu0 %v4208
        %v4210 = vpop.xlane.xlu0 %4209
        %v4211 = vsel %vm1605, %v4117, -inf
        %4212 = vmax.xlane.f32.xlu0 %v4211
        %v4213 = vpop.xlane.xlu0 %4212
        %v4214 = vsub.f32 %v4086, %v4120
        %v4215 = vsub.f32 %v4087, %v4123
        %v4216 = vsub.f32 %v4088, %v4126
        %v4217 = vsub.f32 %v4089, %v4129
        %v4218 = vsub.f32 %v4090, %v4132
        %v4219 = vsub.f32 %v4091, %v4135
        %v4220 = vsub.f32 %v4092, %v4138
        %v4221 = vsub.f32 %v4093, %v4141
        %v4222 = vsub.f32 %v4094, %v4144
        %v4223 = vsub.f32 %v4095, %v4147
        %v4224 = vsub.f32 %v4096, %v4150
        %v4225 = vsub.f32 %v4097, %v4153
        %v4226 = vsub.f32 %v4098, %v4156
        %v4227 = vsub.f32 %v4099, %v4159
        %v4228 = vsub.f32 %v4100, %v4162
        %v4229 = vsub.f32 %v4101, %v4165
        %v4230 = vsub.f32 %v4102, %v4168
        %v4231 = vsub.f32 %v4103, %v4171
        %v4232 = vsub.f32 %v4104, %v4174
        %v4233 = vsub.f32 %v4105, %v4177
        %v4234 = vsub.f32 %v4106, %v4180
        %v4235 = vsub.f32 %v4107, %v4183
        %v4236 = vsub.f32 %v4108, %v4186
        %v4237 = vsub.f32 %v4109, %v4189
        %v4238 = vsub.f32 %v4110, %v4192
        %v4239 = vsub.f32 %v4111, %v4195
        %v4240 = vsub.f32 %v4112, %v4198
        %v4241 = vsub.f32 %v4113, %v4201
        %v4242 = vsub.f32 %v4114, %v4204
        %v4243 = vsub.f32 %v4115, %v4207
        %v4244 = vsub.f32 %v4116, %v4210
        %v4245 = vsub.f32 %v4117, %v4213
        %v4246 = vmul.f32 %v4214, 1.442695
        %v4247 = vpow.pop %v4246
        %v4248 = vmul.f32 %v4215, 1.442695
        %v4249 = vpow.pop %v4248
        %v4250 = vmul.f32 %v4216, 1.442695
        %v4251 = vpow.pop %v4250
        %v4252 = vmul.f32 %v4217, 1.442695
        %v4253 = vpow.pop %v4252
        %v4254 = vmul.f32 %v4218, 1.442695
        %v4255 = vpow.pop %v4254
        %v4256 = vmul.f32 %v4219, 1.442695
        %v4257 = vpow.pop %v4256
        %v4258 = vmul.f32 %v4220, 1.442695
        %v4259 = vpow.pop %v4258
        %v4260 = vmul.f32 %v4221, 1.442695
        %v4261 = vpow.pop %v4260
        %v4262 = vmul.f32 %v4222, 1.442695
        %v4263 = vpow.pop %v4262
        %v4264 = vmul.f32 %v4223, 1.442695
        %v4265 = vpow.pop %v4264
        %v4266 = vmul.f32 %v4224, 1.442695
        %v4267 = vpow.pop %v4266
        %v4268 = vmul.f32 %v4225, 1.442695
        %v4269 = vpow.pop %v4268
        %v4270 = vmul.f32 %v4226, 1.442695
        %v4271 = vpow.pop %v4270
        %v4272 = vmul.f32 %v4227, 1.442695
        %v4273 = vpow.pop %v4272
        %v4274 = vmul.f32 %v4228, 1.442695
        %v4275 = vpow.pop %v4274
        %v4276 = vmul.f32 %v4229, 1.442695
        %v4277 = vpow.pop %v4276
        %v4278 = vmul.f32 %v4230, 1.442695
        %v4279 = vpow.pop %v4278
        %v4280 = vmul.f32 %v4231, 1.442695
        %v4281 = vpow.pop %v4280
        %v4282 = vmul.f32 %v4232, 1.442695
        %v4283 = vpow.pop %v4282
        %v4284 = vmul.f32 %v4233, 1.442695
        %v4285 = vpow.pop %v4284
        %v4286 = vmul.f32 %v4234, 1.442695
        %v4287 = vpow.pop %v4286
        %v4288 = vmul.f32 %v4235, 1.442695
        %v4289 = vpow.pop %v4288
        %v4290 = vmul.f32 %v4236, 1.442695
        %v4291 = vpow.pop %v4290
        %v4292 = vmul.f32 %v4237, 1.442695
        %v4293 = vpow.pop %v4292
        %v4294 = vmul.f32 %v4238, 1.442695
        %v4295 = vpow.pop %v4294
        %v4296 = vmul.f32 %v4239, 1.442695
        %v4297 = vpow.pop %v4296
        %v4298 = vmul.f32 %v4240, 1.442695
        %v4299 = vpow.pop %v4298
        %v4300 = vmul.f32 %v4241, 1.442695
        %v4301 = vpow.pop %v4300
        %v4302 = vmul.f32 %v4242, 1.442695
        %v4303 = vpow.pop %v4302
        %v4304 = vmul.f32 %v4243, 1.442695
        %v4305 = vpow.pop %v4304
        %v4306 = vmul.f32 %v4244, 1.442695
        %v4307 = vpow.pop %v4306
        %v4308 = vmul.f32 %v4245, 1.442695
        %v4309 = vpow.pop %v4308
        %v4310 = vsel %vm1605, %v4247, 0.0
        %4311 = vadd.xlane.f32.xlu0 %v4310
        %v4312 = vpop.xlane.xlu0 %4311
        %v4313 = vsel %vm1605, %v4249, 0.0
        %4314 = vadd.xlane.f32.xlu0 %v4313
        %v4315 = vpop.xlane.xlu0 %4314
        %v4316 = vsel %vm1605, %v4251, 0.0
        %4317 = vadd.xlane.f32.xlu0 %v4316
        %v4318 = vpop.xlane.xlu0 %4317
        %v4319 = vsel %vm1605, %v4253, 0.0
        %4320 = vadd.xlane.f32.xlu0 %v4319
        %v4321 = vpop.xlane.xlu0 %4320
        %v4322 = vsel %vm1605, %v4255, 0.0
        %4323 = vadd.xlane.f32.xlu0 %v4322
        %v4324 = vpop.xlane.xlu0 %4323
        %v4325 = vsel %vm1605, %v4257, 0.0
        %4326 = vadd.xlane.f32.xlu0 %v4325
        %v4327 = vpop.xlane.xlu0 %4326
        %v4328 = vsel %vm1605, %v4259, 0.0
        %4329 = vadd.xlane.f32.xlu0 %v4328
        %v4330 = vpop.xlane.xlu0 %4329
        %v4331 = vsel %vm1605, %v4261, 0.0
        %4332 = vadd.xlane.f32.xlu0 %v4331
        %v4333 = vpop.xlane.xlu0 %4332
        %v4334 = vsel %vm1605, %v4263, 0.0
        %4335 = vadd.xlane.f32.xlu0 %v4334
        %v4336 = vpop.xlane.xlu0 %4335
        %v4337 = vsel %vm1605, %v4265, 0.0
        %4338 = vadd.xlane.f32.xlu0 %v4337
        %v4339 = vpop.xlane.xlu0 %4338
        %v4340 = vsel %vm1605, %v4267, 0.0
        %4341 = vadd.xlane.f32.xlu0 %v4340
        %v4342 = vpop.xlane.xlu0 %4341
        %v4343 = vsel %vm1605, %v4269, 0.0
        %4344 = vadd.xlane.f32.xlu0 %v4343
        %v4345 = vpop.xlane.xlu0 %4344
        %v4346 = vsel %vm1605, %v4271, 0.0
        %4347 = vadd.xlane.f32.xlu0 %v4346
        %v4348 = vpop.xlane.xlu0 %4347
        %v4349 = vsel %vm1605, %v4273, 0.0
        %4350 = vadd.xlane.f32.xlu0 %v4349
        %v4351 = vpop.xlane.xlu0 %4350
        %v4352 = vsel %vm1605, %v4275, 0.0
        %4353 = vadd.xlane.f32.xlu0 %v4352
        %v4354 = vpop.xlane.xlu0 %4353
        %v4355 = vsel %vm1605, %v4277, 0.0
        %4356 = vadd.xlane.f32.xlu0 %v4355
        %v4357 = vpop.xlane.xlu0 %4356
        %v4358 = vsel %vm1605, %v4279, 0.0
        %4359 = vadd.xlane.f32.xlu0 %v4358
        %v4360 = vpop.xlane.xlu0 %4359
        %v4361 = vsel %vm1605, %v4281, 0.0
        %4362 = vadd.xlane.f32.xlu0 %v4361
        %v4363 = vpop.xlane.xlu0 %4362
        %v4364 = vsel %vm1605, %v4283, 0.0
        %4365 = vadd.xlane.f32.xlu0 %v4364
        %v4366 = vpop.xlane.xlu0 %4365
        %v4367 = vsel %vm1605, %v4285, 0.0
        %4368 = vadd.xlane.f32.xlu0 %v4367
        %v4369 = vpop.xlane.xlu0 %4368
        %v4370 = vsel %vm1605, %v4287, 0.0
        %4371 = vadd.xlane.f32.xlu0 %v4370
        %v4372 = vpop.xlane.xlu0 %4371
        %v4373 = vsel %vm1605, %v4289, 0.0
        %4374 = vadd.xlane.f32.xlu0 %v4373
        %v4375 = vpop.xlane.xlu0 %4374
        %v4376 = vsel %vm1605, %v4291, 0.0
        %4377 = vadd.xlane.f32.xlu0 %v4376
        %v4378 = vpop.xlane.xlu0 %4377
        %v4379 = vsel %vm1605, %v4293, 0.0
        %4380 = vadd.xlane.f32.xlu0 %v4379
        %v4381 = vpop.xlane.xlu0 %4380
        %v4382 = vsel %vm1605, %v4295, 0.0
        %4383 = vadd.xlane.f32.xlu0 %v4382
        %v4384 = vpop.xlane.xlu0 %4383
        %v4385 = vsel %vm1605, %v4297, 0.0
        %4386 = vadd.xlane.f32.xlu0 %v4385
        %v4387 = vpop.xlane.xlu0 %4386
        %v4388 = vsel %vm1605, %v4299, 0.0
        %4389 = vadd.xlane.f32.xlu0 %v4388
        %v4390 = vpop.xlane.xlu0 %4389
        %v4391 = vsel %vm1605, %v4301, 0.0
        %4392 = vadd.xlane.f32.xlu0 %v4391
        %v4393 = vpop.xlane.xlu0 %4392
        %v4394 = vsel %vm1605, %v4303, 0.0
        %4395 = vadd.xlane.f32.xlu0 %v4394
        %v4396 = vpop.xlane.xlu0 %4395
        %v4397 = vsel %vm1605, %v4305, 0.0
        %4398 = vadd.xlane.f32.xlu0 %v4397
        %v4399 = vpop.xlane.xlu0 %4398
        %v4400 = vsel %vm1605, %v4307, 0.0
        %4401 = vadd.xlane.f32.xlu0 %v4400
        %v4402 = vpop.xlane.xlu0 %4401
        %v4403 = vsel %vm1605, %v4309, 0.0
        %4404 = vadd.xlane.f32.xlu0 %v4403
        %v4405 = vpop.xlane.xlu0 %4404
        %v4406 = vrcp.pop %v4312
        %v4407 = vrcp.pop %v4315
        %v4408 = vrcp.pop %v4318
        %v4409 = vrcp.pop %v4321
        %v4410 = vrcp.pop %v4324
        %v4411 = vrcp.pop %v4327
        %v4412 = vrcp.pop %v4330
        %v4413 = vrcp.pop %v4333
        %v4414 = vrcp.pop %v4336
        %v4415 = vrcp.pop %v4339
        %v4416 = vrcp.pop %v4342
        %v4417 = vrcp.pop %v4345
        %v4418 = vrcp.pop %v4348
        %v4419 = vrcp.pop %v4351
        %v4420 = vrcp.pop %v4354
        %v4421 = vrcp.pop %v4357
        %v4422 = vrcp.pop %v4360
        %v4423 = vrcp.pop %v4363
        %v4424 = vrcp.pop %v4366
        %v4425 = vrcp.pop %v4369
        %v4426 = vrcp.pop %v4372
        %v4427 = vrcp.pop %v4375
        %v4428 = vrcp.pop %v4378
        %v4429 = vrcp.pop %v4381
        %v4430 = vrcp.pop %v4384
        %v4431 = vrcp.pop %v4387
        %v4432 = vrcp.pop %v4390
        %v4433 = vrcp.pop %v4393
        %v4434 = vrcp.pop %v4396
        %v4435 = vrcp.pop %v4399
        %v4436 = vrcp.pop %v4402
        %v4437 = vrcp.pop %v4405
        %v4438 = vmul.f32 %v4247, %v4406
        %v4439 = vmul.f32 %v4249, %v4407
        %v4440 = vmul.f32 %v4251, %v4408
        %v4441 = vmul.f32 %v4253, %v4409
        %v4442 = vmul.f32 %v4255, %v4410
        %v4443 = vmul.f32 %v4257, %v4411
        %v4444 = vmul.f32 %v4259, %v4412
        %v4445 = vmul.f32 %v4261, %v4413
        %v4446 = vmul.f32 %v4263, %v4414
        %v4447 = vmul.f32 %v4265, %v4415
        %v4448 = vmul.f32 %v4267, %v4416
        %v4449 = vmul.f32 %v4269, %v4417
        %v4450 = vmul.f32 %v4271, %v4418
        %v4451 = vmul.f32 %v4273, %v4419
        %v4452 = vmul.f32 %v4275, %v4420
        %v4453 = vmul.f32 %v4277, %v4421
        %v4454 = vmul.f32 %v4279, %v4422
        %v4455 = vmul.f32 %v4281, %v4423
        %v4456 = vmul.f32 %v4283, %v4424
        %v4457 = vmul.f32 %v4285, %v4425
        %v4458 = vmul.f32 %v4287, %v4426
        %v4459 = vmul.f32 %v4289, %v4427
        %v4460 = vmul.f32 %v4291, %v4428
        %v4461 = vmul.f32 %v4293, %v4429
        %v4462 = vmul.f32 %v4295, %v4430
        %v4463 = vmul.f32 %v4297, %v4431
        %v4464 = vmul.f32 %v4299, %v4432
        %v4465 = vmul.f32 %v4301, %v4433
        %v4466 = vmul.f32 %v4303, %v4434
        %v4467 = vmul.f32 %v4305, %v4435
        %v4468 = vmul.f32 %v4307, %v4436
        %v4469 = vmul.f32 %v4309, %v4437
        %v4470 = vpack.c.bf16 %v4438, %v4438
        %v4471 = vpack.c.bf16 %v4439, %v4439
        %v4472 = vpack.c.bf16 %v4440, %v4440
        %v4473 = vpack.c.bf16 %v4441, %v4441
        %v4474 = vpack.c.bf16 %v4442, %v4442
        %v4475 = vpack.c.bf16 %v4443, %v4443
        %v4476 = vpack.c.bf16 %v4444, %v4444
        %v4477 = vpack.c.bf16 %v4445, %v4445
        %v4478 = vpack.c.bf16 %v4446, %v4446
        %v4479 = vpack.c.bf16 %v4447, %v4447
        %v4480 = vpack.c.bf16 %v4448, %v4448
        %v4481 = vpack.c.bf16 %v4449, %v4449
        %v4482 = vpack.c.bf16 %v4450, %v4450
        %v4483 = vpack.c.bf16 %v4451, %v4451
        %v4484 = vpack.c.bf16 %v4452, %v4452
        %v4485 = vpack.c.bf16 %v4453, %v4453
        %v4486 = vpack.c.bf16 %v4454, %v4454
        %v4487 = vpack.c.bf16 %v4455, %v4455
        %v4488 = vpack.c.bf16 %v4456, %v4456
        %v4489 = vpack.c.bf16 %v4457, %v4457
        %v4490 = vpack.c.bf16 %v4458, %v4458
        %v4491 = vpack.c.bf16 %v4459, %v4459
        %v4492 = vpack.c.bf16 %v4460, %v4460
        %v4493 = vpack.c.bf16 %v4461, %v4461
        %v4494 = vpack.c.bf16 %v4462, %v4462
        %v4495 = vpack.c.bf16 %v4463, %v4463
        %v4496 = vpack.c.bf16 %v4464, %v4464
        %v4497 = vpack.c.bf16 %v4465, %v4465
        %v4498 = vpack.c.bf16 %v4466, %v4466
        %v4499 = vpack.c.bf16 %v4467, %v4467
        %v4500 = vpack.c.bf16 %v4468, %v4468
        %v4501 = vpack.c.bf16 %v4469, %v4469
        %v4504 = vunpack.c.l.b16 %v4470
        %v4505 = vunpack.c.l.b16 %v4471
        %v4506 = vpack.c.b16 %v4505, %v4504
        %4507 = vrot.lane.b32.xlu0 %v1999, 64
        %v4508 = vpop.permute.xlu0 %4507
        %v4511 = vsel %vm1605, %v4506, 0
        %4513 = vmatpush.bf16.msra.mxu0 0
        %4514 = vmatpush.bf16.msra.mxu0 0
        %4515 = vmatpush.bf16.msra.mxu0 0
        %4516 = vmatpush.bf16.msra.mxu0 0
        %4517 = vmatpush.bf16.msra.mxu0 0
        %4518 = vmatpush.bf16.msra.mxu0 0
        %4519 = vmatpush.bf16.msra.mxu0 0
        %4520 = vmatpush.bf16.msra.mxu0 %v4508
        %4521 = vmatmul.bf16.gmra.mxu0 %v4511
        %v4522 = vpop.f32.mrf.mxu0
        %v4523 = vadd.f32 0.0, %v4522
        %v4524 = vpop.f32.mrf.mxu0
        %v4525 = vadd.f32 0.0, %v4524
        %4526 = vdwg.mxu0
        %v4529 = vunpack.c.l.b16 %v4472
        %v4530 = vunpack.c.l.b16 %v4473
        %v4531 = vpack.c.b16 %v4530, %v4529
        %4532 = vrot.lane.b32.xlu0 %v2027, 64
        %v4533 = vpop.permute.xlu0 %4532
        %v4536 = vsel %vm1605, %v4531, 0
        %4538 = vmatpush.bf16.msra.mxu0 0
        %4539 = vmatpush.bf16.msra.mxu0 0
        %4540 = vmatpush.bf16.msra.mxu0 0
        %4541 = vmatpush.bf16.msra.mxu0 0
        %4542 = vmatpush.bf16.msra.mxu0 0
        %4543 = vmatpush.bf16.msra.mxu0 0
        %4544 = vmatpush.bf16.msra.mxu0 0
        %4545 = vmatpush.bf16.msra.mxu0 %v4533
        %4546 = vmatmul.bf16.gmra.mxu0 %v4536
        %v4547 = vpop.f32.mrf.mxu0
        %v4548 = vadd.f32 0.0, %v4547
        %v4549 = vpop.f32.mrf.mxu0
        %v4550 = vadd.f32 0.0, %v4549
        %4551 = vdwg.mxu0
        %v4554 = vunpack.c.l.b16 %v4474
        %v4555 = vunpack.c.l.b16 %v4475
        %v4556 = vpack.c.b16 %v4555, %v4554
        %4557 = vrot.lane.b32.xlu0 %v2055, 64
        %v4558 = vpop.permute.xlu0 %4557
        %v4561 = vsel %vm1605, %v4556, 0
        %4563 = vmatpush.bf16.msra.mxu0 0
        %4564 = vmatpush.bf16.msra.mxu0 0
        %4565 = vmatpush.bf16.msra.mxu0 0
        %4566 = vmatpush.bf16.msra.mxu0 0
        %4567 = vmatpush.bf16.msra.mxu0 0
        %4568 = vmatpush.bf16.msra.mxu0 0
        %4569 = vmatpush.bf16.msra.mxu0 0
        %4570 = vmatpush.bf16.msra.mxu0 %v4558
        %4571 = vmatmul.bf16.gmra.mxu0 %v4561
        %v4572 = vpop.f32.mrf.mxu0
        %v4573 = vadd.f32 0.0, %v4572
        %v4574 = vpop.f32.mrf.mxu0
        %v4575 = vadd.f32 0.0, %v4574
        %4576 = vdwg.mxu0
        %v4579 = vunpack.c.l.b16 %v4476
        %v4580 = vunpack.c.l.b16 %v4477
        %v4581 = vpack.c.b16 %v4580, %v4579
        %4582 = vrot.lane.b32.xlu0 %v2083, 64
        %v4583 = vpop.permute.xlu0 %4582
        %v4586 = vsel %vm1605, %v4581, 0
        %4588 = vmatpush.bf16.msra.mxu0 0
        %4589 = vmatpush.bf16.msra.mxu0 0
        %4590 = vmatpush.bf16.msra.mxu0 0
        %4591 = vmatpush.bf16.msra.mxu0 0
        %4592 = vmatpush.bf16.msra.mxu0 0
        %4593 = vmatpush.bf16.msra.mxu0 0
        %4594 = vmatpush.bf16.msra.mxu0 0
        %4595 = vmatpush.bf16.msra.mxu0 %v4583
        %4596 = vmatmul.bf16.gmra.mxu0 %v4586
        %v4597 = vpop.f32.mrf.mxu0
        %v4598 = vadd.f32 0.0, %v4597
        %v4599 = vpop.f32.mrf.mxu0
        %v4600 = vadd.f32 0.0, %v4599
        %4601 = vdwg.mxu0
        %v4604 = vunpack.c.l.b16 %v4478
        %v4605 = vunpack.c.l.b16 %v4479
        %v4606 = vpack.c.b16 %v4605, %v4604
        %4607 = vrot.lane.b32.xlu0 %v2111, 64
        %v4608 = vpop.permute.xlu0 %4607
        %v4611 = vsel %vm1605, %v4606, 0
        %4613 = vmatpush.bf16.msra.mxu0 0
        %4614 = vmatpush.bf16.msra.mxu0 0
        %4615 = vmatpush.bf16.msra.mxu0 0
        %4616 = vmatpush.bf16.msra.mxu0 0
        %4617 = vmatpush.bf16.msra.mxu0 0
        %4618 = vmatpush.bf16.msra.mxu0 0
        %4619 = vmatpush.bf16.msra.mxu0 0
        %4620 = vmatpush.bf16.msra.mxu0 %v4608
        %4621 = vmatmul.bf16.gmra.mxu0 %v4611
        %v4622 = vpop.f32.mrf.mxu0
        %v4623 = vadd.f32 0.0, %v4622
        %v4624 = vpop.f32.mrf.mxu0
        %v4625 = vadd.f32 0.0, %v4624
        %4626 = vdwg.mxu0
        %v4629 = vunpack.c.l.b16 %v4480
        %v4630 = vunpack.c.l.b16 %v4481
        %v4631 = vpack.c.b16 %v4630, %v4629
        %4632 = vrot.lane.b32.xlu0 %v2139, 64
        %v4633 = vpop.permute.xlu0 %4632
        %v4636 = vsel %vm1605, %v4631, 0
        %4638 = vmatpush.bf16.msra.mxu0 0
        %4639 = vmatpush.bf16.msra.mxu0 0
        %4640 = vmatpush.bf16.msra.mxu0 0
        %4641 = vmatpush.bf16.msra.mxu0 0
        %4642 = vmatpush.bf16.msra.mxu0 0
        %4643 = vmatpush.bf16.msra.mxu0 0
        %4644 = vmatpush.bf16.msra.mxu0 0
        %4645 = vmatpush.bf16.msra.mxu0 %v4633
        %4646 = vmatmul.bf16.gmra.mxu0 %v4636
        %v4647 = vpop.f32.mrf.mxu0
        %v4648 = vadd.f32 0.0, %v4647
        %v4649 = vpop.f32.mrf.mxu0
        %v4650 = vadd.f32 0.0, %v4649
        %4651 = vdwg.mxu0
        %v4654 = vunpack.c.l.b16 %v4482
        %v4655 = vunpack.c.l.b16 %v4483
        %v4656 = vpack.c.b16 %v4655, %v4654
        %4657 = vrot.lane.b32.xlu0 %v2167, 64
        %v4658 = vpop.permute.xlu0 %4657
        %v4661 = vsel %vm1605, %v4656, 0
        %4663 = vmatpush.bf16.msra.mxu0 0
        %4664 = vmatpush.bf16.msra.mxu0 0
        %4665 = vmatpush.bf16.msra.mxu0 0
        %4666 = vmatpush.bf16.msra.mxu0 0
        %4667 = vmatpush.bf16.msra.mxu0 0
        %4668 = vmatpush.bf16.msra.mxu0 0
        %4669 = vmatpush.bf16.msra.mxu0 0
        %4670 = vmatpush.bf16.msra.mxu0 %v4658
        %4671 = vmatmul.bf16.gmra.mxu0 %v4661
        %v4672 = vpop.f32.mrf.mxu0
        %v4673 = vadd.f32 0.0, %v4672
        %v4674 = vpop.f32.mrf.mxu0
        %v4675 = vadd.f32 0.0, %v4674
        %4676 = vdwg.mxu0
        %v4679 = vunpack.c.l.b16 %v4484
        %v4680 = vunpack.c.l.b16 %v4485
        %v4681 = vpack.c.b16 %v4680, %v4679
        %4682 = vrot.lane.b32.xlu0 %v2195, 64
        %v4683 = vpop.permute.xlu0 %4682
        %v4686 = vsel %vm1605, %v4681, 0
        %4688 = vmatpush.bf16.msra.mxu0 0
        %4689 = vmatpush.bf16.msra.mxu0 0
        %4690 = vmatpush.bf16.msra.mxu0 0
        %4691 = vmatpush.bf16.msra.mxu0 0
        %4692 = vmatpush.bf16.msra.mxu0 0
        %4693 = vmatpush.bf16.msra.mxu0 0
        %4694 = vmatpush.bf16.msra.mxu0 0
        %4695 = vmatpush.bf16.msra.mxu0 %v4683
        %4696 = vmatmul.bf16.gmra.mxu0 %v4686
        %v4697 = vpop.f32.mrf.mxu0
        %v4698 = vadd.f32 0.0, %v4697
        %v4699 = vpop.f32.mrf.mxu0
        %v4700 = vadd.f32 0.0, %v4699
        %4701 = vdwg.mxu0
        %v4704 = vunpack.c.l.b16 %v4486
        %v4705 = vunpack.c.l.b16 %v4487
        %v4706 = vpack.c.b16 %v4705, %v4704
        %4707 = vrot.lane.b32.xlu0 %v2223, 64
        %v4708 = vpop.permute.xlu0 %4707
        %v4711 = vsel %vm1605, %v4706, 0
        %4713 = vmatpush.bf16.msra.mxu0 0
        %4714 = vmatpush.bf16.msra.mxu0 0
        %4715 = vmatpush.bf16.msra.mxu0 0
        %4716 = vmatpush.bf16.msra.mxu0 0
        %4717 = vmatpush.bf16.msra.mxu0 0
        %4718 = vmatpush.bf16.msra.mxu0 0
        %4719 = vmatpush.bf16.msra.mxu0 0
        %4720 = vmatpush.bf16.msra.mxu0 %v4708
        %4721 = vmatmul.bf16.gmra.mxu0 %v4711
        %v4722 = vpop.f32.mrf.mxu0
        %v4723 = vadd.f32 0.0, %v4722
        %v4724 = vpop.f32.mrf.mxu0
        %v4725 = vadd.f32 0.0, %v4724
        %4726 = vdwg.mxu0
        %v4729 = vunpack.c.l.b16 %v4488
        %v4730 = vunpack.c.l.b16 %v4489
        %v4731 = vpack.c.b16 %v4730, %v4729
        %4732 = vrot.lane.b32.xlu0 %v2251, 64
        %v4733 = vpop.permute.xlu0 %4732
        %v4736 = vsel %vm1605, %v4731, 0
        %4738 = vmatpush.bf16.msra.mxu0 0
        %4739 = vmatpush.bf16.msra.mxu0 0
        %4740 = vmatpush.bf16.msra.mxu0 0
        %4741 = vmatpush.bf16.msra.mxu0 0
        %4742 = vmatpush.bf16.msra.mxu0 0
        %4743 = vmatpush.bf16.msra.mxu0 0
        %4744 = vmatpush.bf16.msra.mxu0 0
        %4745 = vmatpush.bf16.msra.mxu0 %v4733
        %4746 = vmatmul.bf16.gmra.mxu0 %v4736
        %v4747 = vpop.f32.mrf.mxu0
        %v4748 = vadd.f32 0.0, %v4747
        %v4749 = vpop.f32.mrf.mxu0
        %v4750 = vadd.f32 0.0, %v4749
        %4751 = vdwg.mxu0
        %v4754 = vunpack.c.l.b16 %v4490
        %v4755 = vunpack.c.l.b16 %v4491
        %v4756 = vpack.c.b16 %v4755, %v4754
        %4757 = vrot.lane.b32.xlu0 %v2279, 64
        %v4758 = vpop.permute.xlu0 %4757
        %v4761 = vsel %vm1605, %v4756, 0
        %4763 = vmatpush.bf16.msra.mxu0 0
        %4764 = vmatpush.bf16.msra.mxu0 0
        %4765 = vmatpush.bf16.msra.mxu0 0
        %4766 = vmatpush.bf16.msra.mxu0 0
        %4767 = vmatpush.bf16.msra.mxu0 0
        %4768 = vmatpush.bf16.msra.mxu0 0
        %4769 = vmatpush.bf16.msra.mxu0 0
        %4770 = vmatpush.bf16.msra.mxu0 %v4758
        %4771 = vmatmul.bf16.gmra.mxu0 %v4761
        %v4772 = vpop.f32.mrf.mxu0
        %v4773 = vadd.f32 0.0, %v4772
        %v4774 = vpop.f32.mrf.mxu0
        %v4775 = vadd.f32 0.0, %v4774
        %4776 = vdwg.mxu0
        %v4779 = vunpack.c.l.b16 %v4492
        %v4780 = vunpack.c.l.b16 %v4493
        %v4781 = vpack.c.b16 %v4780, %v4779
        %4782 = vrot.lane.b32.xlu0 %v2307, 64
        %v4783 = vpop.permute.xlu0 %4782
        %v4786 = vsel %vm1605, %v4781, 0
        %4788 = vmatpush.bf16.msra.mxu0 0
        %4789 = vmatpush.bf16.msra.mxu0 0
        %4790 = vmatpush.bf16.msra.mxu0 0
        %4791 = vmatpush.bf16.msra.mxu0 0
        %4792 = vmatpush.bf16.msra.mxu0 0
        %4793 = vmatpush.bf16.msra.mxu0 0
        %4794 = vmatpush.bf16.msra.mxu0 0
        %4795 = vmatpush.bf16.msra.mxu0 %v4783
        %4796 = vmatmul.bf16.gmra.mxu0 %v4786
        %v4797 = vpop.f32.mrf.mxu0
        %v4798 = vadd.f32 0.0, %v4797
        %v4799 = vpop.f32.mrf.mxu0
        %v4800 = vadd.f32 0.0, %v4799
        %4801 = vdwg.mxu0
        %v4804 = vunpack.c.l.b16 %v4494
        %v4805 = vunpack.c.l.b16 %v4495
        %v4806 = vpack.c.b16 %v4805, %v4804
        %4807 = vrot.lane.b32.xlu0 %v2335, 64
        %v4808 = vpop.permute.xlu0 %4807
        %v4811 = vsel %vm1605, %v4806, 0
        %4813 = vmatpush.bf16.msra.mxu0 0
        %4814 = vmatpush.bf16.msra.mxu0 0
        %4815 = vmatpush.bf16.msra.mxu0 0
        %4816 = vmatpush.bf16.msra.mxu0 0
        %4817 = vmatpush.bf16.msra.mxu0 0
        %4818 = vmatpush.bf16.msra.mxu0 0
        %4819 = vmatpush.bf16.msra.mxu0 0
        %4820 = vmatpush.bf16.msra.mxu0 %v4808
        %4821 = vmatmul.bf16.gmra.mxu0 %v4811
        %v4822 = vpop.f32.mrf.mxu0
        %v4823 = vadd.f32 0.0, %v4822
        %v4824 = vpop.f32.mrf.mxu0
        %v4825 = vadd.f32 0.0, %v4824
        %4826 = vdwg.mxu0
        %v4829 = vunpack.c.l.b16 %v4496
        %v4830 = vunpack.c.l.b16 %v4497
        %v4831 = vpack.c.b16 %v4830, %v4829
        %4832 = vrot.lane.b32.xlu0 %v2363, 64
        %v4833 = vpop.permute.xlu0 %4832
        %v4836 = vsel %vm1605, %v4831, 0
        %4838 = vmatpush.bf16.msra.mxu0 0
        %4839 = vmatpush.bf16.msra.mxu0 0
        %4840 = vmatpush.bf16.msra.mxu0 0
        %4841 = vmatpush.bf16.msra.mxu0 0
        %4842 = vmatpush.bf16.msra.mxu0 0
        %4843 = vmatpush.bf16.msra.mxu0 0
        %4844 = vmatpush.bf16.msra.mxu0 0
        %4845 = vmatpush.bf16.msra.mxu0 %v4833
        %4846 = vmatmul.bf16.gmra.mxu0 %v4836
        %v4847 = vpop.f32.mrf.mxu0
        %v4848 = vadd.f32 0.0, %v4847
        %v4849 = vpop.f32.mrf.mxu0
        %v4850 = vadd.f32 0.0, %v4849
        %4851 = vdwg.mxu0
        %v4854 = vunpack.c.l.b16 %v4498
        %v4855 = vunpack.c.l.b16 %v4499
        %v4856 = vpack.c.b16 %v4855, %v4854
        %4857 = vrot.lane.b32.xlu0 %v2391, 64
        %v4858 = vpop.permute.xlu0 %4857
        %v4861 = vsel %vm1605, %v4856, 0
        %4863 = vmatpush.bf16.msra.mxu0 0
        %4864 = vmatpush.bf16.msra.mxu0 0
        %4865 = vmatpush.bf16.msra.mxu0 0
        %4866 = vmatpush.bf16.msra.mxu0 0
        %4867 = vmatpush.bf16.msra.mxu0 0
        %4868 = vmatpush.bf16.msra.mxu0 0
        %4869 = vmatpush.bf16.msra.mxu0 0
        %4870 = vmatpush.bf16.msra.mxu0 %v4858
        %4871 = vmatmul.bf16.gmra.mxu0 %v4861
        %v4872 = vpop.f32.mrf.mxu0
        %v4873 = vadd.f32 0.0, %v4872
        %v4874 = vpop.f32.mrf.mxu0
        %v4875 = vadd.f32 0.0, %v4874
        %4876 = vdwg.mxu0
        %v4879 = vunpack.c.l.b16 %v4500
        %v4880 = vunpack.c.l.b16 %v4501
        %v4881 = vpack.c.b16 %v4880, %v4879
        %4882 = vrot.lane.b32.xlu0 %v2419, 64
        %v4883 = vpop.permute.xlu0 %4882
        %v4886 = vsel %vm1605, %v4881, 0
        %4888 = vmatpush.bf16.msra.mxu0 0
        %4889 = vmatpush.bf16.msra.mxu0 0
        %4890 = vmatpush.bf16.msra.mxu0 0
        %4891 = vmatpush.bf16.msra.mxu0 0
        %4892 = vmatpush.bf16.msra.mxu0 0
        %4893 = vmatpush.bf16.msra.mxu0 0
        %4894 = vmatpush.bf16.msra.mxu0 0
        %4895 = vmatpush.bf16.msra.mxu0 %v4883
        %4896 = vmatmul.bf16.gmra.mxu0 %v4886
        %v4897 = vpop.f32.mrf.mxu0
        %v4898 = vadd.f32 0.0, %v4897
        %v4899 = vpop.f32.mrf.mxu0
        %v4900 = vadd.f32 0.0, %v4899
        %4901 = vdwg.mxu0
        %v4902 = vpack.c.bf16 %v4523, %v4523
        %v4903 = vpack.c.bf16 %v4525, %v4525
        %v4904 = vpack.c.bf16 %v4548, %v4548
        %v4905 = vpack.c.bf16 %v4550, %v4550
        %v4906 = vpack.c.bf16 %v4573, %v4573
        %v4907 = vpack.c.bf16 %v4575, %v4575
        %v4908 = vpack.c.bf16 %v4598, %v4598
        %v4909 = vpack.c.bf16 %v4600, %v4600
        %v4910 = vpack.c.bf16 %v4623, %v4623
        %v4911 = vpack.c.bf16 %v4625, %v4625
        %v4912 = vpack.c.bf16 %v4648, %v4648
        %v4913 = vpack.c.bf16 %v4650, %v4650
        %v4914 = vpack.c.bf16 %v4673, %v4673
        %v4915 = vpack.c.bf16 %v4675, %v4675
        %v4916 = vpack.c.bf16 %v4698, %v4698
        %v4917 = vpack.c.bf16 %v4700, %v4700
        %v4918 = vpack.c.bf16 %v4723, %v4723
        %v4919 = vpack.c.bf16 %v4725, %v4725
        %v4920 = vpack.c.bf16 %v4748, %v4748
        %v4921 = vpack.c.bf16 %v4750, %v4750
        %v4922 = vpack.c.bf16 %v4773, %v4773
        %v4923 = vpack.c.bf16 %v4775, %v4775
        %v4924 = vpack.c.bf16 %v4798, %v4798
        %v4925 = vpack.c.bf16 %v4800, %v4800
        %v4926 = vpack.c.bf16 %v4823, %v4823
        %v4927 = vpack.c.bf16 %v4825, %v4825
        %v4928 = vpack.c.bf16 %v4848, %v4848
        %v4929 = vpack.c.bf16 %v4850, %v4850
        %v4930 = vpack.c.bf16 %v4873, %v4873
        %v4931 = vpack.c.bf16 %v4875, %v4875
        %v4932 = vpack.c.bf16 %v4898, %v4898
        %v4933 = vpack.c.bf16 %v4900, %v4900
        %4934 = vrot.lane.b32.xlu0 %v1050, 32
        %v4935 = vpop.permute.xlu0 %4934
        %4936 = vrot.lane.b32.xlu0 %v1055, 32
        %v4937 = vpop.permute.xlu0 %4936
        %v4939 = vsel %vm1056, %v4935, 0
        %v4942 = vsel %vm1056, %v4937, 0
        %4944 = vmatpush.bf16.xpose.msra.mxu0 0
        %4945 = vmatpush.bf16.xpose.msra.mxu0 0
        %4946 = vmatpush.bf16.xpose.msra.mxu0 0
        %4947 = vmatpush.bf16.xpose.msra.mxu0 0
        %4948 = vmatpush.bf16.xpose.msra.mxu0 0
        %4949 = vmatpush.bf16.xpose.msra.mxu0 0
        %4950 = vmatpush.bf16.xpose.msra.mxu0 0
        %4951 = vmatpush.bf16.xpose.msra.mxu0 %v4942
        %4952 = vmatmul.bf16.gmra.mxu0 %v4939
        %v4953 = vpop.f32.mrf.mxu0
        %v4954 = vadd.f32 0.0, %v4953
        %v4955 = vpop.f32.mrf.mxu0
        %v4956 = vadd.f32 0.0, %v4955
        %4957 = vdwg.mxu0
        %4958 = vrot.lane.b32.xlu0 %v1081, 32
        %v4959 = vpop.permute.xlu0 %4958
        %4960 = vrot.lane.b32.xlu0 %v1086, 32
        %v4961 = vpop.permute.xlu0 %4960
        %v4963 = vsel %vm1056, %v4959, 0
        %v4966 = vsel %vm1056, %v4961, 0
        %4968 = vmatpush.bf16.xpose.msra.mxu0 0
        %4969 = vmatpush.bf16.xpose.msra.mxu0 0
        %4970 = vmatpush.bf16.xpose.msra.mxu0 0
        %4971 = vmatpush.bf16.xpose.msra.mxu0 0
        %4972 = vmatpush.bf16.xpose.msra.mxu0 0
        %4973 = vmatpush.bf16.xpose.msra.mxu0 0
        %4974 = vmatpush.bf16.xpose.msra.mxu0 0
        %4975 = vmatpush.bf16.xpose.msra.mxu0 %v4966
        %4976 = vmatmul.bf16.gmra.mxu0 %v4963
        %v4977 = vpop.f32.mrf.mxu0
        %v4978 = vadd.f32 0.0, %v4977
        %v4979 = vpop.f32.mrf.mxu0
        %v4980 = vadd.f32 0.0, %v4979
        %4981 = vdwg.mxu0
        %4982 = vrot.lane.b32.xlu0 %v1111, 32
        %v4983 = vpop.permute.xlu0 %4982
        %4984 = vrot.lane.b32.xlu0 %v1116, 32
        %v4985 = vpop.permute.xlu0 %4984
        %v4987 = vsel %vm1056, %v4983, 0
        %v4990 = vsel %vm1056, %v4985, 0
        %4992 = vmatpush.bf16.xpose.msra.mxu0 0
        %4993 = vmatpush.bf16.xpose.msra.mxu0 0
        %4994 = vmatpush.bf16.xpose.msra.mxu0 0
        %4995 = vmatpush.bf16.xpose.msra.mxu0 0
        %4996 = vmatpush.bf16.xpose.msra.mxu0 0
        %4997 = vmatpush.bf16.xpose.msra.mxu0 0
        %4998 = vmatpush.bf16.xpose.msra.mxu0 0
        %4999 = vmatpush.bf16.xpose.msra.mxu0 %v4990
        %5000 = vmatmul.bf16.gmra.mxu0 %v4987
        %v5001 = vpop.f32.mrf.mxu0
        %v5002 = vadd.f32 0.0, %v5001
        %v5003 = vpop.f32.mrf.mxu0
        %v5004 = vadd.f32 0.0, %v5003
        %5005 = vdwg.mxu0
        %5006 = vrot.lane.b32.xlu0 %v1141, 32
        %v5007 = vpop.permute.xlu0 %5006
        %5008 = vrot.lane.b32.xlu0 %v1146, 32
        %v5009 = vpop.permute.xlu0 %5008
        %v5011 = vsel %vm1056, %v5007, 0
        %v5014 = vsel %vm1056, %v5009, 0
        %5016 = vmatpush.bf16.xpose.msra.mxu0 0
        %5017 = vmatpush.bf16.xpose.msra.mxu0 0
        %5018 = vmatpush.bf16.xpose.msra.mxu0 0
        %5019 = vmatpush.bf16.xpose.msra.mxu0 0
        %5020 = vmatpush.bf16.xpose.msra.mxu0 0
        %5021 = vmatpush.bf16.xpose.msra.mxu0 0
        %5022 = vmatpush.bf16.xpose.msra.mxu0 0
        %5023 = vmatpush.bf16.xpose.msra.mxu0 %v5014
        %5024 = vmatmul.bf16.gmra.mxu0 %v5011
        %v5025 = vpop.f32.mrf.mxu0
        %v5026 = vadd.f32 0.0, %v5025
        %v5027 = vpop.f32.mrf.mxu0
        %v5028 = vadd.f32 0.0, %v5027
        %5029 = vdwg.mxu0
        %5030 = vrot.lane.b32.xlu0 %v1171, 32
        %v5031 = vpop.permute.xlu0 %5030
        %5032 = vrot.lane.b32.xlu0 %v1176, 32
        %v5033 = vpop.permute.xlu0 %5032
        %v5035 = vsel %vm1056, %v5031, 0
        %v5038 = vsel %vm1056, %v5033, 0
        %5040 = vmatpush.bf16.xpose.msra.mxu0 0
        %5041 = vmatpush.bf16.xpose.msra.mxu0 0
        %5042 = vmatpush.bf16.xpose.msra.mxu0 0
        %5043 = vmatpush.bf16.xpose.msra.mxu0 0
        %5044 = vmatpush.bf16.xpose.msra.mxu0 0
        %5045 = vmatpush.bf16.xpose.msra.mxu0 0
        %5046 = vmatpush.bf16.xpose.msra.mxu0 0
        %5047 = vmatpush.bf16.xpose.msra.mxu0 %v5038
        %5048 = vmatmul.bf16.gmra.mxu0 %v5035
        %v5049 = vpop.f32.mrf.mxu0
        %v5050 = vadd.f32 0.0, %v5049
        %v5051 = vpop.f32.mrf.mxu0
        %v5052 = vadd.f32 0.0, %v5051
        %5053 = vdwg.mxu0
        %5054 = vrot.lane.b32.xlu0 %v1201, 32
        %v5055 = vpop.permute.xlu0 %5054
        %5056 = vrot.lane.b32.xlu0 %v1206, 32
        %v5057 = vpop.permute.xlu0 %5056
        %v5059 = vsel %vm1056, %v5055, 0
        %v5062 = vsel %vm1056, %v5057, 0
        %5064 = vmatpush.bf16.xpose.msra.mxu0 0
        %5065 = vmatpush.bf16.xpose.msra.mxu0 0
        %5066 = vmatpush.bf16.xpose.msra.mxu0 0
        %5067 = vmatpush.bf16.xpose.msra.mxu0 0
        %5068 = vmatpush.bf16.xpose.msra.mxu0 0
        %5069 = vmatpush.bf16.xpose.msra.mxu0 0
        %5070 = vmatpush.bf16.xpose.msra.mxu0 0
        %5071 = vmatpush.bf16.xpose.msra.mxu0 %v5062
        %5072 = vmatmul.bf16.gmra.mxu0 %v5059
        %v5073 = vpop.f32.mrf.mxu0
        %v5074 = vadd.f32 0.0, %v5073
        %v5075 = vpop.f32.mrf.mxu0
        %v5076 = vadd.f32 0.0, %v5075
        %5077 = vdwg.mxu0
        %5078 = vrot.lane.b32.xlu0 %v1231, 32
        %v5079 = vpop.permute.xlu0 %5078
        %5080 = vrot.lane.b32.xlu0 %v1236, 32
        %v5081 = vpop.permute.xlu0 %5080
        %v5083 = vsel %vm1056, %v5079, 0
        %v5086 = vsel %vm1056, %v5081, 0
        %5088 = vmatpush.bf16.xpose.msra.mxu0 0
        %5089 = vmatpush.bf16.xpose.msra.mxu0 0
        %5090 = vmatpush.bf16.xpose.msra.mxu0 0
        %5091 = vmatpush.bf16.xpose.msra.mxu0 0
        %5092 = vmatpush.bf16.xpose.msra.mxu0 0
        %5093 = vmatpush.bf16.xpose.msra.mxu0 0
        %5094 = vmatpush.bf16.xpose.msra.mxu0 0
        %5095 = vmatpush.bf16.xpose.msra.mxu0 %v5086
        %5096 = vmatmul.bf16.gmra.mxu0 %v5083
        %v5097 = vpop.f32.mrf.mxu0
        %v5098 = vadd.f32 0.0, %v5097
        %v5099 = vpop.f32.mrf.mxu0
        %v5100 = vadd.f32 0.0, %v5099
        %5101 = vdwg.mxu0
        %5102 = vrot.lane.b32.xlu0 %v1261, 32
        %v5103 = vpop.permute.xlu0 %5102
        %5104 = vrot.lane.b32.xlu0 %v1266, 32
        %v5105 = vpop.permute.xlu0 %5104
        %v5107 = vsel %vm1056, %v5103, 0
        %v5110 = vsel %vm1056, %v5105, 0
        %5112 = vmatpush.bf16.xpose.msra.mxu0 0
        %5113 = vmatpush.bf16.xpose.msra.mxu0 0
        %5114 = vmatpush.bf16.xpose.msra.mxu0 0
        %5115 = vmatpush.bf16.xpose.msra.mxu0 0
        %5116 = vmatpush.bf16.xpose.msra.mxu0 0
        %5117 = vmatpush.bf16.xpose.msra.mxu0 0
        %5118 = vmatpush.bf16.xpose.msra.mxu0 0
        %5119 = vmatpush.bf16.xpose.msra.mxu0 %v5110
        %5120 = vmatmul.bf16.gmra.mxu0 %v5107
        %v5121 = vpop.f32.mrf.mxu0
        %v5122 = vadd.f32 0.0, %v5121
        %v5123 = vpop.f32.mrf.mxu0
        %v5124 = vadd.f32 0.0, %v5123
        %5125 = vdwg.mxu0
        %5126 = vrot.lane.b32.xlu0 %v1291, 32
        %v5127 = vpop.permute.xlu0 %5126
        %5128 = vrot.lane.b32.xlu0 %v1296, 32
        %v5129 = vpop.permute.xlu0 %5128
        %v5131 = vsel %vm1056, %v5127, 0
        %v5134 = vsel %vm1056, %v5129, 0
        %5136 = vmatpush.bf16.xpose.msra.mxu0 0
        %5137 = vmatpush.bf16.xpose.msra.mxu0 0
        %5138 = vmatpush.bf16.xpose.msra.mxu0 0
        %5139 = vmatpush.bf16.xpose.msra.mxu0 0
        %5140 = vmatpush.bf16.xpose.msra.mxu0 0
        %5141 = vmatpush.bf16.xpose.msra.mxu0 0
        %5142 = vmatpush.bf16.xpose.msra.mxu0 0
        %5143 = vmatpush.bf16.xpose.msra.mxu0 %v5134
        %5144 = vmatmul.bf16.gmra.mxu0 %v5131
        %v5145 = vpop.f32.mrf.mxu0
        %v5146 = vadd.f32 0.0, %v5145
        %v5147 = vpop.f32.mrf.mxu0
        %v5148 = vadd.f32 0.0, %v5147
        %5149 = vdwg.mxu0
        %5150 = vrot.lane.b32.xlu0 %v1321, 32
        %v5151 = vpop.permute.xlu0 %5150
        %5152 = vrot.lane.b32.xlu0 %v1326, 32
        %v5153 = vpop.permute.xlu0 %5152
        %v5155 = vsel %vm1056, %v5151, 0
        %v5158 = vsel %vm1056, %v5153, 0
        %5160 = vmatpush.bf16.xpose.msra.mxu0 0
        %5161 = vmatpush.bf16.xpose.msra.mxu0 0
        %5162 = vmatpush.bf16.xpose.msra.mxu0 0
        %5163 = vmatpush.bf16.xpose.msra.mxu0 0
        %5164 = vmatpush.bf16.xpose.msra.mxu0 0
        %5165 = vmatpush.bf16.xpose.msra.mxu0 0
        %5166 = vmatpush.bf16.xpose.msra.mxu0 0
        %5167 = vmatpush.bf16.xpose.msra.mxu0 %v5158
        %5168 = vmatmul.bf16.gmra.mxu0 %v5155
        %v5169 = vpop.f32.mrf.mxu0
        %v5170 = vadd.f32 0.0, %v5169
        %v5171 = vpop.f32.mrf.mxu0
        %v5172 = vadd.f32 0.0, %v5171
        %5173 = vdwg.mxu0
        %5174 = vrot.lane.b32.xlu0 %v1351, 32
        %v5175 = vpop.permute.xlu0 %5174
        %5176 = vrot.lane.b32.xlu0 %v1356, 32
        %v5177 = vpop.permute.xlu0 %5176
        %v5179 = vsel %vm1056, %v5175, 0
        %v5182 = vsel %vm1056, %v5177, 0
        %5184 = vmatpush.bf16.xpose.msra.mxu0 0
        %5185 = vmatpush.bf16.xpose.msra.mxu0 0
        %5186 = vmatpush.bf16.xpose.msra.mxu0 0
        %5187 = vmatpush.bf16.xpose.msra.mxu0 0
        %5188 = vmatpush.bf16.xpose.msra.mxu0 0
        %5189 = vmatpush.bf16.xpose.msra.mxu0 0
        %5190 = vmatpush.bf16.xpose.msra.mxu0 0
        %5191 = vmatpush.bf16.xpose.msra.mxu0 %v5182
        %5192 = vmatmul.bf16.gmra.mxu0 %v5179
        %v5193 = vpop.f32.mrf.mxu0
        %v5194 = vadd.f32 0.0, %v5193
        %v5195 = vpop.f32.mrf.mxu0
        %v5196 = vadd.f32 0.0, %v5195
        %5197 = vdwg.mxu0
        %5198 = vrot.lane.b32.xlu0 %v1381, 32
        %v5199 = vpop.permute.xlu0 %5198
        %5200 = vrot.lane.b32.xlu0 %v1386, 32
        %v5201 = vpop.permute.xlu0 %5200
        %v5203 = vsel %vm1056, %v5199, 0
        %v5206 = vsel %vm1056, %v5201, 0
        %5208 = vmatpush.bf16.xpose.msra.mxu0 0
        %5209 = vmatpush.bf16.xpose.msra.mxu0 0
        %5210 = vmatpush.bf16.xpose.msra.mxu0 0
        %5211 = vmatpush.bf16.xpose.msra.mxu0 0
        %5212 = vmatpush.bf16.xpose.msra.mxu0 0
        %5213 = vmatpush.bf16.xpose.msra.mxu0 0
        %5214 = vmatpush.bf16.xpose.msra.mxu0 0
        %5215 = vmatpush.bf16.xpose.msra.mxu0 %v5206
        %5216 = vmatmul.bf16.gmra.mxu0 %v5203
        %v5217 = vpop.f32.mrf.mxu0
        %v5218 = vadd.f32 0.0, %v5217
        %v5219 = vpop.f32.mrf.mxu0
        %v5220 = vadd.f32 0.0, %v5219
        %5221 = vdwg.mxu0
        %5222 = vrot.lane.b32.xlu0 %v1411, 32
        %v5223 = vpop.permute.xlu0 %5222
        %5224 = vrot.lane.b32.xlu0 %v1416, 32
        %v5225 = vpop.permute.xlu0 %5224
        %v5227 = vsel %vm1056, %v5223, 0
        %v5230 = vsel %vm1056, %v5225, 0
        %5232 = vmatpush.bf16.xpose.msra.mxu0 0
        %5233 = vmatpush.bf16.xpose.msra.mxu0 0
        %5234 = vmatpush.bf16.xpose.msra.mxu0 0
        %5235 = vmatpush.bf16.xpose.msra.mxu0 0
        %5236 = vmatpush.bf16.xpose.msra.mxu0 0
        %5237 = vmatpush.bf16.xpose.msra.mxu0 0
        %5238 = vmatpush.bf16.xpose.msra.mxu0 0
        %5239 = vmatpush.bf16.xpose.msra.mxu0 %v5230
        %5240 = vmatmul.bf16.gmra.mxu0 %v5227
        %v5241 = vpop.f32.mrf.mxu0
        %v5242 = vadd.f32 0.0, %v5241
        %v5243 = vpop.f32.mrf.mxu0
        %v5244 = vadd.f32 0.0, %v5243
        %5245 = vdwg.mxu0
        %5246 = vrot.lane.b32.xlu0 %v1441, 32
        %v5247 = vpop.permute.xlu0 %5246
        %5248 = vrot.lane.b32.xlu0 %v1446, 32
        %v5249 = vpop.permute.xlu0 %5248
        %v5251 = vsel %vm1056, %v5247, 0
        %v5254 = vsel %vm1056, %v5249, 0
        %5256 = vmatpush.bf16.xpose.msra.mxu0 0
        %5257 = vmatpush.bf16.xpose.msra.mxu0 0
        %5258 = vmatpush.bf16.xpose.msra.mxu0 0
        %5259 = vmatpush.bf16.xpose.msra.mxu0 0
        %5260 = vmatpush.bf16.xpose.msra.mxu0 0
        %5261 = vmatpush.bf16.xpose.msra.mxu0 0
        %5262 = vmatpush.bf16.xpose.msra.mxu0 0
        %5263 = vmatpush.bf16.xpose.msra.mxu0 %v5254
        %5264 = vmatmul.bf16.gmra.mxu0 %v5251
        %v5265 = vpop.f32.mrf.mxu0
        %v5266 = vadd.f32 0.0, %v5265
        %v5267 = vpop.f32.mrf.mxu0
        %v5268 = vadd.f32 0.0, %v5267
        %5269 = vdwg.mxu0
        %5270 = vrot.lane.b32.xlu0 %v1471, 32
        %v5271 = vpop.permute.xlu0 %5270
        %5272 = vrot.lane.b32.xlu0 %v1476, 32
        %v5273 = vpop.permute.xlu0 %5272
        %v5275 = vsel %vm1056, %v5271, 0
        %v5278 = vsel %vm1056, %v5273, 0
        %5280 = vmatpush.bf16.xpose.msra.mxu0 0
        %5281 = vmatpush.bf16.xpose.msra.mxu0 0
        %5282 = vmatpush.bf16.xpose.msra.mxu0 0
        %5283 = vmatpush.bf16.xpose.msra.mxu0 0
        %5284 = vmatpush.bf16.xpose.msra.mxu0 0
        %5285 = vmatpush.bf16.xpose.msra.mxu0 0
        %5286 = vmatpush.bf16.xpose.msra.mxu0 0
        %5287 = vmatpush.bf16.xpose.msra.mxu0 %v5278
        %5288 = vmatmul.bf16.gmra.mxu0 %v5275
        %v5289 = vpop.f32.mrf.mxu0
        %v5290 = vadd.f32 0.0, %v5289
        %v5291 = vpop.f32.mrf.mxu0
        %v5292 = vadd.f32 0.0, %v5291
        %5293 = vdwg.mxu0
        %5294 = vrot.lane.b32.xlu0 %v1501, 32
        %v5295 = vpop.permute.xlu0 %5294
        %5296 = vrot.lane.b32.xlu0 %v1506, 32
        %v5297 = vpop.permute.xlu0 %5296
        %v5299 = vsel %vm1056, %v5295, 0
        %v5302 = vsel %vm1056, %v5297, 0
        %5304 = vmatpush.bf16.xpose.msra.mxu0 0
        %5305 = vmatpush.bf16.xpose.msra.mxu0 0
        %5306 = vmatpush.bf16.xpose.msra.mxu0 0
        %5307 = vmatpush.bf16.xpose.msra.mxu0 0
        %5308 = vmatpush.bf16.xpose.msra.mxu0 0
        %5309 = vmatpush.bf16.xpose.msra.mxu0 0
        %5310 = vmatpush.bf16.xpose.msra.mxu0 0
        %5311 = vmatpush.bf16.xpose.msra.mxu0 %v5302
        %5312 = vmatmul.bf16.gmra.mxu0 %v5299
        %v5313 = vpop.f32.mrf.mxu0
        %v5314 = vadd.f32 0.0, %v5313
        %v5315 = vpop.f32.mrf.mxu0
        %v5316 = vadd.f32 0.0, %v5315
        %5317 = vdwg.mxu0
        %v5318 = vsel %vm1557, %v4954, -1e+09
        %v5319 = vsel %vm1557, %v4956, -1e+09
        %v5320 = vsel %vm1558, %v4978, -1e+09
        %v5321 = vsel %vm1558, %v4980, -1e+09
        %v5322 = vsel %vm1559, %v5002, -1e+09
        %v5323 = vsel %vm1559, %v5004, -1e+09
        %v5324 = vsel %vm1560, %v5026, -1e+09
        %v5325 = vsel %vm1560, %v5028, -1e+09
        %v5326 = vsel %vm1561, %v5050, -1e+09
        %v5327 = vsel %vm1561, %v5052, -1e+09
        %v5328 = vsel %vm1562, %v5074, -1e+09
        %v5329 = vsel %vm1562, %v5076, -1e+09
        %v5330 = vsel %vm1563, %v5098, -1e+09
        %v5331 = vsel %vm1563, %v5100, -1e+09
        %v5332 = vsel %vm1564, %v5122, -1e+09
        %v5333 = vsel %vm1564, %v5124, -1e+09
        %v5334 = vsel %vm1565, %v5146, -1e+09
        %v5335 = vsel %vm1565, %v5148, -1e+09
        %v5336 = vsel %vm1566, %v5170, -1e+09
        %v5337 = vsel %vm1566, %v5172, -1e+09
        %v5338 = vsel %vm1567, %v5194, -1e+09
        %v5339 = vsel %vm1567, %v5196, -1e+09
        %v5340 = vsel %vm1568, %v5218, -1e+09
        %v5341 = vsel %vm1568, %v5220, -1e+09
        %v5342 = vsel %vm1569, %v5242, -1e+09
        %v5343 = vsel %vm1569, %v5244, -1e+09
        %v5344 = vsel %vm1570, %v5266, -1e+09
        %v5345 = vsel %vm1570, %v5268, -1e+09
        %v5346 = vsel %vm1571, %v5290, -1e+09
        %v5347 = vsel %vm1571, %v5292, -1e+09
        %v5348 = vsel %vm1572, %v5314, -1e+09
        %v5349 = vsel %vm1572, %v5316, -1e+09
        %v5350 = vsel %vm1605, %v5318, -inf
        %5351 = vmax.xlane.f32.xlu0 %v5350
        %v5352 = vpop.xlane.xlu0 %5351
        %v5353 = vsel %vm1605, %v5319, -inf
        %5354 = vmax.xlane.f32.xlu0 %v5353
        %v5355 = vpop.xlane.xlu0 %5354
        %v5356 = vsel %vm1605, %v5320, -inf
        %5357 = vmax.xlane.f32.xlu0 %v5356
        %v5358 = vpop.xlane.xlu0 %5357
        %v5359 = vsel %vm1605, %v5321, -inf
        %5360 = vmax.xlane.f32.xlu0 %v5359
        %v5361 = vpop.xlane.xlu0 %5360
        %v5362 = vsel %vm1605, %v5322, -inf
        %5363 = vmax.xlane.f32.xlu0 %v5362
        %v5364 = vpop.xlane.xlu0 %5363
        %v5365 = vsel %vm1605, %v5323, -inf
        %5366 = vmax.xlane.f32.xlu0 %v5365
        %v5367 = vpop.xlane.xlu0 %5366
        %v5368 = vsel %vm1605, %v5324, -inf
        %5369 = vmax.xlane.f32.xlu0 %v5368
        %v5370 = vpop.xlane.xlu0 %5369
        %v5371 = vsel %vm1605, %v5325, -inf
        %5372 = vmax.xlane.f32.xlu0 %v5371
        %v5373 = vpop.xlane.xlu0 %5372
        %v5374 = vsel %vm1605, %v5326, -inf
        %5375 = vmax.xlane.f32.xlu0 %v5374
        %v5376 = vpop.xlane.xlu0 %5375
        %v5377 = vsel %vm1605, %v5327, -inf
        %5378 = vmax.xlane.f32.xlu0 %v5377
        %v5379 = vpop.xlane.xlu0 %5378
        %v5380 = vsel %vm1605, %v5328, -inf
        %5381 = vmax.xlane.f32.xlu0 %v5380
        %v5382 = vpop.xlane.xlu0 %5381
        %v5383 = vsel %vm1605, %v5329, -inf
        %5384 = vmax.xlane.f32.xlu0 %v5383
        %v5385 = vpop.xlane.xlu0 %5384
        %v5386 = vsel %vm1605, %v5330, -inf
        %5387 = vmax.xlane.f32.xlu0 %v5386
        %v5388 = vpop.xlane.xlu0 %5387
        %v5389 = vsel %vm1605, %v5331, -inf
        %5390 = vmax.xlane.f32.xlu0 %v5389
        %v5391 = vpop.xlane.xlu0 %5390
        %v5392 = vsel %vm1605, %v5332, -inf
        %5393 = vmax.xlane.f32.xlu0 %v5392
        %v5394 = vpop.xlane.xlu0 %5393
        %v5395 = vsel %vm1605, %v5333, -inf
        %5396 = vmax.xlane.f32.xlu0 %v5395
        %v5397 = vpop.xlane.xlu0 %5396
        %v5398 = vsel %vm1605, %v5334, -inf
        %5399 = vmax.xlane.f32.xlu0 %v5398
        %v5400 = vpop.xlane.xlu0 %5399
        %v5401 = vsel %vm1605, %v5335, -inf
        %5402 = vmax.xlane.f32.xlu0 %v5401
        %v5403 = vpop.xlane.xlu0 %5402
        %v5404 = vsel %vm1605, %v5336, -inf
        %5405 = vmax.xlane.f32.xlu0 %v5404
        %v5406 = vpop.xlane.xlu0 %5405
        %v5407 = vsel %vm1605, %v5337, -inf
        %5408 = vmax.xlane.f32.xlu0 %v5407
        %v5409 = vpop.xlane.xlu0 %5408
        %v5410 = vsel %vm1605, %v5338, -inf
        %5411 = vmax.xlane.f32.xlu0 %v5410
        %v5412 = vpop.xlane.xlu0 %5411
        %v5413 = vsel %vm1605, %v5339, -inf
        %5414 = vmax.xlane.f32.xlu0 %v5413
        %v5415 = vpop.xlane.xlu0 %5414
        %v5416 = vsel %vm1605, %v5340, -inf
        %5417 = vmax.xlane.f32.xlu0 %v5416
        %v5418 = vpop.xlane.xlu0 %5417
        %v5419 = vsel %vm1605, %v5341, -inf
        %5420 = vmax.xlane.f32.xlu0 %v5419
        %v5421 = vpop.xlane.xlu0 %5420
        %v5422 = vsel %vm1605, %v5342, -inf
        %5423 = vmax.xlane.f32.xlu0 %v5422
        %v5424 = vpop.xlane.xlu0 %5423
        %v5425 = vsel %vm1605, %v5343, -inf
        %5426 = vmax.xlane.f32.xlu0 %v5425
        %v5427 = vpop.xlane.xlu0 %5426
        %v5428 = vsel %vm1605, %v5344, -inf
        %5429 = vmax.xlane.f32.xlu0 %v5428
        %v5430 = vpop.xlane.xlu0 %5429
        %v5431 = vsel %vm1605, %v5345, -inf
        %5432 = vmax.xlane.f32.xlu0 %v5431
        %v5433 = vpop.xlane.xlu0 %5432
        %v5434 = vsel %vm1605, %v5346, -inf
        %5435 = vmax.xlane.f32.xlu0 %v5434
        %v5436 = vpop.xlane.xlu0 %5435
        %v5437 = vsel %vm1605, %v5347, -inf
        %5438 = vmax.xlane.f32.xlu0 %v5437
        %v5439 = vpop.xlane.xlu0 %5438
        %v5440 = vsel %vm1605, %v5348, -inf
        %5441 = vmax.xlane.f32.xlu0 %v5440
        %v5442 = vpop.xlane.xlu0 %5441
        %v5443 = vsel %vm1605, %v5349, -inf
        %5444 = vmax.xlane.f32.xlu0 %v5443
        %v5445 = vpop.xlane.xlu0 %5444
        %v5446 = vsub.f32 %v5318, %v5352
        %v5447 = vsub.f32 %v5319, %v5355
        %v5448 = vsub.f32 %v5320, %v5358
        %v5449 = vsub.f32 %v5321, %v5361
        %v5450 = vsub.f32 %v5322, %v5364
        %v5451 = vsub.f32 %v5323, %v5367
        %v5452 = vsub.f32 %v5324, %v5370
        %v5453 = vsub.f32 %v5325, %v5373
        %v5454 = vsub.f32 %v5326, %v5376
        %v5455 = vsub.f32 %v5327, %v5379
        %v5456 = vsub.f32 %v5328, %v5382
        %v5457 = vsub.f32 %v5329, %v5385
        %v5458 = vsub.f32 %v5330, %v5388
        %v5459 = vsub.f32 %v5331, %v5391
        %v5460 = vsub.f32 %v5332, %v5394
        %v5461 = vsub.f32 %v5333, %v5397
        %v5462 = vsub.f32 %v5334, %v5400
        %v5463 = vsub.f32 %v5335, %v5403
        %v5464 = vsub.f32 %v5336, %v5406
        %v5465 = vsub.f32 %v5337, %v5409
        %v5466 = vsub.f32 %v5338, %v5412
        %v5467 = vsub.f32 %v5339, %v5415
        %v5468 = vsub.f32 %v5340, %v5418
        %v5469 = vsub.f32 %v5341, %v5421
        %v5470 = vsub.f32 %v5342, %v5424
        %v5471 = vsub.f32 %v5343, %v5427
        %v5472 = vsub.f32 %v5344, %v5430
        %v5473 = vsub.f32 %v5345, %v5433
        %v5474 = vsub.f32 %v5346, %v5436
        %v5475 = vsub.f32 %v5347, %v5439
        %v5476 = vsub.f32 %v5348, %v5442
        %v5477 = vsub.f32 %v5349, %v5445
        %v5478 = vmul.f32 %v5446, 1.442695
        %v5479 = vpow.pop %v5478
        %v5480 = vmul.f32 %v5447, 1.442695
        %v5481 = vpow.pop %v5480
        %v5482 = vmul.f32 %v5448, 1.442695
        %v5483 = vpow.pop %v5482
        %v5484 = vmul.f32 %v5449, 1.442695
        %v5485 = vpow.pop %v5484
        %v5486 = vmul.f32 %v5450, 1.442695
        %v5487 = vpow.pop %v5486
        %v5488 = vmul.f32 %v5451, 1.442695
        %v5489 = vpow.pop %v5488
        %v5490 = vmul.f32 %v5452, 1.442695
        %v5491 = vpow.pop %v5490
        %v5492 = vmul.f32 %v5453, 1.442695
        %v5493 = vpow.pop %v5492
        %v5494 = vmul.f32 %v5454, 1.442695
        %v5495 = vpow.pop %v5494
        %v5496 = vmul.f32 %v5455, 1.442695
        %v5497 = vpow.pop %v5496
        %v5498 = vmul.f32 %v5456, 1.442695
        %v5499 = vpow.pop %v5498
        %v5500 = vmul.f32 %v5457, 1.442695
        %v5501 = vpow.pop %v5500
        %v5502 = vmul.f32 %v5458, 1.442695
        %v5503 = vpow.pop %v5502
        %v5504 = vmul.f32 %v5459, 1.442695
        %v5505 = vpow.pop %v5504
        %v5506 = vmul.f32 %v5460, 1.442695
        %v5507 = vpow.pop %v5506
        %v5508 = vmul.f32 %v5461, 1.442695
        %v5509 = vpow.pop %v5508
        %v5510 = vmul.f32 %v5462, 1.442695
        %v5511 = vpow.pop %v5510
        %v5512 = vmul.f32 %v5463, 1.442695
        %v5513 = vpow.pop %v5512
        %v5514 = vmul.f32 %v5464, 1.442695
        %v5515 = vpow.pop %v5514
        %v5516 = vmul.f32 %v5465, 1.442695
        %v5517 = vpow.pop %v5516
        %v5518 = vmul.f32 %v5466, 1.442695
        %v5519 = vpow.pop %v5518
        %v5520 = vmul.f32 %v5467, 1.442695
        %v5521 = vpow.pop %v5520
        %v5522 = vmul.f32 %v5468, 1.442695
        %v5523 = vpow.pop %v5522
        %v5524 = vmul.f32 %v5469, 1.442695
        %v5525 = vpow.pop %v5524
        %v5526 = vmul.f32 %v5470, 1.442695
        %v5527 = vpow.pop %v5526
        %v5528 = vmul.f32 %v5471, 1.442695
        %v5529 = vpow.pop %v5528
        %v5530 = vmul.f32 %v5472, 1.442695
        %v5531 = vpow.pop %v5530
        %v5532 = vmul.f32 %v5473, 1.442695
        %v5533 = vpow.pop %v5532
        %v5534 = vmul.f32 %v5474, 1.442695
        %v5535 = vpow.pop %v5534
        %v5536 = vmul.f32 %v5475, 1.442695
        %v5537 = vpow.pop %v5536
        %v5538 = vmul.f32 %v5476, 1.442695
        %v5539 = vpow.pop %v5538
        %v5540 = vmul.f32 %v5477, 1.442695
        %v5541 = vpow.pop %v5540
        %v5542 = vsel %vm1605, %v5479, 0.0
        %5543 = vadd.xlane.f32.xlu0 %v5542
        %v5544 = vpop.xlane.xlu0 %5543
        %v5545 = vsel %vm1605, %v5481, 0.0
        %5546 = vadd.xlane.f32.xlu0 %v5545
        %v5547 = vpop.xlane.xlu0 %5546
        %v5548 = vsel %vm1605, %v5483, 0.0
        %5549 = vadd.xlane.f32.xlu0 %v5548
        %v5550 = vpop.xlane.xlu0 %5549
        %v5551 = vsel %vm1605, %v5485, 0.0
        %5552 = vadd.xlane.f32.xlu0 %v5551
        %v5553 = vpop.xlane.xlu0 %5552
        %v5554 = vsel %vm1605, %v5487, 0.0
        %5555 = vadd.xlane.f32.xlu0 %v5554
        %v5556 = vpop.xlane.xlu0 %5555
        %v5557 = vsel %vm1605, %v5489, 0.0
        %5558 = vadd.xlane.f32.xlu0 %v5557
        %v5559 = vpop.xlane.xlu0 %5558
        %v5560 = vsel %vm1605, %v5491, 0.0
        %5561 = vadd.xlane.f32.xlu0 %v5560
        %v5562 = vpop.xlane.xlu0 %5561
        %v5563 = vsel %vm1605, %v5493, 0.0
        %5564 = vadd.xlane.f32.xlu0 %v5563
        %v5565 = vpop.xlane.xlu0 %5564
        %v5566 = vsel %vm1605, %v5495, 0.0
        %5567 = vadd.xlane.f32.xlu0 %v5566
        %v5568 = vpop.xlane.xlu0 %5567
        %v5569 = vsel %vm1605, %v5497, 0.0
        %5570 = vadd.xlane.f32.xlu0 %v5569
        %v5571 = vpop.xlane.xlu0 %5570
        %v5572 = vsel %vm1605, %v5499, 0.0
        %5573 = vadd.xlane.f32.xlu0 %v5572
        %v5574 = vpop.xlane.xlu0 %5573
        %v5575 = vsel %vm1605, %v5501, 0.0
        %5576 = vadd.xlane.f32.xlu0 %v5575
        %v5577 = vpop.xlane.xlu0 %5576
        %v5578 = vsel %vm1605, %v5503, 0.0
        %5579 = vadd.xlane.f32.xlu0 %v5578
        %v5580 = vpop.xlane.xlu0 %5579
        %v5581 = vsel %vm1605, %v5505, 0.0
        %5582 = vadd.xlane.f32.xlu0 %v5581
        %v5583 = vpop.xlane.xlu0 %5582
        %v5584 = vsel %vm1605, %v5507, 0.0
        %5585 = vadd.xlane.f32.xlu0 %v5584
        %v5586 = vpop.xlane.xlu0 %5585
        %v5587 = vsel %vm1605, %v5509, 0.0
        %5588 = vadd.xlane.f32.xlu0 %v5587
        %v5589 = vpop.xlane.xlu0 %5588
        %v5590 = vsel %vm1605, %v5511, 0.0
        %5591 = vadd.xlane.f32.xlu0 %v5590
        %v5592 = vpop.xlane.xlu0 %5591
        %v5593 = vsel %vm1605, %v5513, 0.0
        %5594 = vadd.xlane.f32.xlu0 %v5593
        %v5595 = vpop.xlane.xlu0 %5594
        %v5596 = vsel %vm1605, %v5515, 0.0
        %5597 = vadd.xlane.f32.xlu0 %v5596
        %v5598 = vpop.xlane.xlu0 %5597
        %v5599 = vsel %vm1605, %v5517, 0.0
        %5600 = vadd.xlane.f32.xlu0 %v5599
        %v5601 = vpop.xlane.xlu0 %5600
        %v5602 = vsel %vm1605, %v5519, 0.0
        %5603 = vadd.xlane.f32.xlu0 %v5602
        %v5604 = vpop.xlane.xlu0 %5603
        %v5605 = vsel %vm1605, %v5521, 0.0
        %5606 = vadd.xlane.f32.xlu0 %v5605
        %v5607 = vpop.xlane.xlu0 %5606
        %v5608 = vsel %vm1605, %v5523, 0.0
        %5609 = vadd.xlane.f32.xlu0 %v5608
        %v5610 = vpop.xlane.xlu0 %5609
        %v5611 = vsel %vm1605, %v5525, 0.0
        %5612 = vadd.xlane.f32.xlu0 %v5611
        %v5613 = vpop.xlane.xlu0 %5612
        %v5614 = vsel %vm1605, %v5527, 0.0
        %5615 = vadd.xlane.f32.xlu0 %v5614
        %v5616 = vpop.xlane.xlu0 %5615
        %v5617 = vsel %vm1605, %v5529, 0.0
        %5618 = vadd.xlane.f32.xlu0 %v5617
        %v5619 = vpop.xlane.xlu0 %5618
        %v5620 = vsel %vm1605, %v5531, 0.0
        %5621 = vadd.xlane.f32.xlu0 %v5620
        %v5622 = vpop.xlane.xlu0 %5621
        %v5623 = vsel %vm1605, %v5533, 0.0
        %5624 = vadd.xlane.f32.xlu0 %v5623
        %v5625 = vpop.xlane.xlu0 %5624
        %v5626 = vsel %vm1605, %v5535, 0.0
        %5627 = vadd.xlane.f32.xlu0 %v5626
        %v5628 = vpop.xlane.xlu0 %5627
        %v5629 = vsel %vm1605, %v5537, 0.0
        %5630 = vadd.xlane.f32.xlu0 %v5629
        %v5631 = vpop.xlane.xlu0 %5630
        %v5632 = vsel %vm1605, %v5539, 0.0
        %5633 = vadd.xlane.f32.xlu0 %v5632
        %v5634 = vpop.xlane.xlu0 %5633
        %v5635 = vsel %vm1605, %v5541, 0.0
        %5636 = vadd.xlane.f32.xlu0 %v5635
        %v5637 = vpop.xlane.xlu0 %5636
        %v5638 = vrcp.pop %v5544
        %v5639 = vrcp.pop %v5547
        %v5640 = vrcp.pop %v5550
        %v5641 = vrcp.pop %v5553
        %v5642 = vrcp.pop %v5556
        %v5643 = vrcp.pop %v5559
        %v5644 = vrcp.pop %v5562
        %v5645 = vrcp.pop %v5565
        %v5646 = vrcp.pop %v5568
        %v5647 = vrcp.pop %v5571
        %v5648 = vrcp.pop %v5574
        %v5649 = vrcp.pop %v5577
        %v5650 = vrcp.pop %v5580
        %v5651 = vrcp.pop %v5583
        %v5652 = vrcp.pop %v5586
        %v5653 = vrcp.pop %v5589
        %v5654 = vrcp.pop %v5592
        %v5655 = vrcp.pop %v5595
        %v5656 = vrcp.pop %v5598
        %v5657 = vrcp.pop %v5601
        %v5658 = vrcp.pop %v5604
        %v5659 = vrcp.pop %v5607
        %v5660 = vrcp.pop %v5610
        %v5661 = vrcp.pop %v5613
        %v5662 = vrcp.pop %v5616
        %v5663 = vrcp.pop %v5619
        %v5664 = vrcp.pop %v5622
        %v5665 = vrcp.pop %v5625
        %v5666 = vrcp.pop %v5628
        %v5667 = vrcp.pop %v5631
        %v5668 = vrcp.pop %v5634
        %v5669 = vrcp.pop %v5637
        %v5670 = vmul.f32 %v5479, %v5638
        %v5671 = vmul.f32 %v5481, %v5639
        %v5672 = vmul.f32 %v5483, %v5640
        %v5673 = vmul.f32 %v5485, %v5641
        %v5674 = vmul.f32 %v5487, %v5642
        %v5675 = vmul.f32 %v5489, %v5643
        %v5676 = vmul.f32 %v5491, %v5644
        %v5677 = vmul.f32 %v5493, %v5645
        %v5678 = vmul.f32 %v5495, %v5646
        %v5679 = vmul.f32 %v5497, %v5647
        %v5680 = vmul.f32 %v5499, %v5648
        %v5681 = vmul.f32 %v5501, %v5649
        %v5682 = vmul.f32 %v5503, %v5650
        %v5683 = vmul.f32 %v5505, %v5651
        %v5684 = vmul.f32 %v5507, %v5652
        %v5685 = vmul.f32 %v5509, %v5653
        %v5686 = vmul.f32 %v5511, %v5654
        %v5687 = vmul.f32 %v5513, %v5655
        %v5688 = vmul.f32 %v5515, %v5656
        %v5689 = vmul.f32 %v5517, %v5657
        %v5690 = vmul.f32 %v5519, %v5658
        %v5691 = vmul.f32 %v5521, %v5659
        %v5692 = vmul.f32 %v5523, %v5660
        %v5693 = vmul.f32 %v5525, %v5661
        %v5694 = vmul.f32 %v5527, %v5662
        %v5695 = vmul.f32 %v5529, %v5663
        %v5696 = vmul.f32 %v5531, %v5664
        %v5697 = vmul.f32 %v5533, %v5665
        %v5698 = vmul.f32 %v5535, %v5666
        %v5699 = vmul.f32 %v5537, %v5667
        %v5700 = vmul.f32 %v5539, %v5668
        %v5701 = vmul.f32 %v5541, %v5669
        %v5702 = vpack.c.bf16 %v5670, %v5670
        %v5703 = vpack.c.bf16 %v5671, %v5671
        %v5704 = vpack.c.bf16 %v5672, %v5672
        %v5705 = vpack.c.bf16 %v5673, %v5673
        %v5706 = vpack.c.bf16 %v5674, %v5674
        %v5707 = vpack.c.bf16 %v5675, %v5675
        %v5708 = vpack.c.bf16 %v5676, %v5676
        %v5709 = vpack.c.bf16 %v5677, %v5677
        %v5710 = vpack.c.bf16 %v5678, %v5678
        %v5711 = vpack.c.bf16 %v5679, %v5679
        %v5712 = vpack.c.bf16 %v5680, %v5680
        %v5713 = vpack.c.bf16 %v5681, %v5681
        %v5714 = vpack.c.bf16 %v5682, %v5682
        %v5715 = vpack.c.bf16 %v5683, %v5683
        %v5716 = vpack.c.bf16 %v5684, %v5684
        %v5717 = vpack.c.bf16 %v5685, %v5685
        %v5718 = vpack.c.bf16 %v5686, %v5686
        %v5719 = vpack.c.bf16 %v5687, %v5687
        %v5720 = vpack.c.bf16 %v5688, %v5688
        %v5721 = vpack.c.bf16 %v5689, %v5689
        %v5722 = vpack.c.bf16 %v5690, %v5690
        %v5723 = vpack.c.bf16 %v5691, %v5691
        %v5724 = vpack.c.bf16 %v5692, %v5692
        %v5725 = vpack.c.bf16 %v5693, %v5693
        %v5726 = vpack.c.bf16 %v5694, %v5694
        %v5727 = vpack.c.bf16 %v5695, %v5695
        %v5728 = vpack.c.bf16 %v5696, %v5696
        %v5729 = vpack.c.bf16 %v5697, %v5697
        %v5730 = vpack.c.bf16 %v5698, %v5698
        %v5731 = vpack.c.bf16 %v5699, %v5699
        %v5732 = vpack.c.bf16 %v5700, %v5700
        %v5733 = vpack.c.bf16 %v5701, %v5701
        %v5736 = vunpack.c.l.b16 %v5702
        %v5737 = vunpack.c.l.b16 %v5703
        %v5738 = vpack.c.b16 %v5737, %v5736
        %5739 = vrot.lane.b32.xlu0 %v1999, 32
        %v5740 = vpop.permute.xlu0 %5739
        %v5743 = vsel %vm1605, %v5738, 0
        %5745 = vmatpush.bf16.msra.mxu0 0
        %5746 = vmatpush.bf16.msra.mxu0 0
        %5747 = vmatpush.bf16.msra.mxu0 0
        %5748 = vmatpush.bf16.msra.mxu0 0
        %5749 = vmatpush.bf16.msra.mxu0 0
        %5750 = vmatpush.bf16.msra.mxu0 0
        %5751 = vmatpush.bf16.msra.mxu0 0
        %5752 = vmatpush.bf16.msra.mxu0 %v5740
        %5753 = vmatmul.bf16.gmra.mxu0 %v5743
        %v5754 = vpop.f32.mrf.mxu0
        %v5755 = vadd.f32 0.0, %v5754
        %v5756 = vpop.f32.mrf.mxu0
        %v5757 = vadd.f32 0.0, %v5756
        %5758 = vdwg.mxu0
        %v5761 = vunpack.c.l.b16 %v5704
        %v5762 = vunpack.c.l.b16 %v5705
        %v5763 = vpack.c.b16 %v5762, %v5761
        %5764 = vrot.lane.b32.xlu0 %v2027, 32
        %v5765 = vpop.permute.xlu0 %5764
        %v5768 = vsel %vm1605, %v5763, 0
        %5770 = vmatpush.bf16.msra.mxu0 0
        %5771 = vmatpush.bf16.msra.mxu0 0
        %5772 = vmatpush.bf16.msra.mxu0 0
        %5773 = vmatpush.bf16.msra.mxu0 0
        %5774 = vmatpush.bf16.msra.mxu0 0
        %5775 = vmatpush.bf16.msra.mxu0 0
        %5776 = vmatpush.bf16.msra.mxu0 0
        %5777 = vmatpush.bf16.msra.mxu0 %v5765
        %5778 = vmatmul.bf16.gmra.mxu0 %v5768
        %v5779 = vpop.f32.mrf.mxu0
        %v5780 = vadd.f32 0.0, %v5779
        %v5781 = vpop.f32.mrf.mxu0
        %v5782 = vadd.f32 0.0, %v5781
        %5783 = vdwg.mxu0
        %v5786 = vunpack.c.l.b16 %v5706
        %v5787 = vunpack.c.l.b16 %v5707
        %v5788 = vpack.c.b16 %v5787, %v5786
        %5789 = vrot.lane.b32.xlu0 %v2055, 32
        %v5790 = vpop.permute.xlu0 %5789
        %v5793 = vsel %vm1605, %v5788, 0
        %5795 = vmatpush.bf16.msra.mxu0 0
        %5796 = vmatpush.bf16.msra.mxu0 0
        %5797 = vmatpush.bf16.msra.mxu0 0
        %5798 = vmatpush.bf16.msra.mxu0 0
        %5799 = vmatpush.bf16.msra.mxu0 0
        %5800 = vmatpush.bf16.msra.mxu0 0
        %5801 = vmatpush.bf16.msra.mxu0 0
        %5802 = vmatpush.bf16.msra.mxu0 %v5790
        %5803 = vmatmul.bf16.gmra.mxu0 %v5793
        %v5804 = vpop.f32.mrf.mxu0
        %v5805 = vadd.f32 0.0, %v5804
        %v5806 = vpop.f32.mrf.mxu0
        %v5807 = vadd.f32 0.0, %v5806
        %5808 = vdwg.mxu0
        %v5811 = vunpack.c.l.b16 %v5708
        %v5812 = vunpack.c.l.b16 %v5709
        %v5813 = vpack.c.b16 %v5812, %v5811
        %5814 = vrot.lane.b32.xlu0 %v2083, 32
        %v5815 = vpop.permute.xlu0 %5814
        %v5818 = vsel %vm1605, %v5813, 0
        %5820 = vmatpush.bf16.msra.mxu0 0
        %5821 = vmatpush.bf16.msra.mxu0 0
        %5822 = vmatpush.bf16.msra.mxu0 0
        %5823 = vmatpush.bf16.msra.mxu0 0
        %5824 = vmatpush.bf16.msra.mxu0 0
        %5825 = vmatpush.bf16.msra.mxu0 0
        %5826 = vmatpush.bf16.msra.mxu0 0
        %5827 = vmatpush.bf16.msra.mxu0 %v5815
        %5828 = vmatmul.bf16.gmra.mxu0 %v5818
        %v5829 = vpop.f32.mrf.mxu0
        %v5830 = vadd.f32 0.0, %v5829
        %v5831 = vpop.f32.mrf.mxu0
        %v5832 = vadd.f32 0.0, %v5831
        %5833 = vdwg.mxu0
        %v5836 = vunpack.c.l.b16 %v5710
        %v5837 = vunpack.c.l.b16 %v5711
        %v5838 = vpack.c.b16 %v5837, %v5836
        %5839 = vrot.lane.b32.xlu0 %v2111, 32
        %v5840 = vpop.permute.xlu0 %5839
        %v5843 = vsel %vm1605, %v5838, 0
        %5845 = vmatpush.bf16.msra.mxu0 0
        %5846 = vmatpush.bf16.msra.mxu0 0
        %5847 = vmatpush.bf16.msra.mxu0 0
        %5848 = vmatpush.bf16.msra.mxu0 0
        %5849 = vmatpush.bf16.msra.mxu0 0
        %5850 = vmatpush.bf16.msra.mxu0 0
        %5851 = vmatpush.bf16.msra.mxu0 0
        %5852 = vmatpush.bf16.msra.mxu0 %v5840
        %5853 = vmatmul.bf16.gmra.mxu0 %v5843
        %v5854 = vpop.f32.mrf.mxu0
        %v5855 = vadd.f32 0.0, %v5854
        %v5856 = vpop.f32.mrf.mxu0
        %v5857 = vadd.f32 0.0, %v5856
        %5858 = vdwg.mxu0
        %v5861 = vunpack.c.l.b16 %v5712
        %v5862 = vunpack.c.l.b16 %v5713
        %v5863 = vpack.c.b16 %v5862, %v5861
        %5864 = vrot.lane.b32.xlu0 %v2139, 32
        %v5865 = vpop.permute.xlu0 %5864
        %v5868 = vsel %vm1605, %v5863, 0
        %5870 = vmatpush.bf16.msra.mxu0 0
        %5871 = vmatpush.bf16.msra.mxu0 0
        %5872 = vmatpush.bf16.msra.mxu0 0
        %5873 = vmatpush.bf16.msra.mxu0 0
        %5874 = vmatpush.bf16.msra.mxu0 0
        %5875 = vmatpush.bf16.msra.mxu0 0
        %5876 = vmatpush.bf16.msra.mxu0 0
        %5877 = vmatpush.bf16.msra.mxu0 %v5865
        %5878 = vmatmul.bf16.gmra.mxu0 %v5868
        %v5879 = vpop.f32.mrf.mxu0
        %v5880 = vadd.f32 0.0, %v5879
        %v5881 = vpop.f32.mrf.mxu0
        %v5882 = vadd.f32 0.0, %v5881
        %5883 = vdwg.mxu0
        %v5886 = vunpack.c.l.b16 %v5714
        %v5887 = vunpack.c.l.b16 %v5715
        %v5888 = vpack.c.b16 %v5887, %v5886
        %5889 = vrot.lane.b32.xlu0 %v2167, 32
        %v5890 = vpop.permute.xlu0 %5889
        %v5893 = vsel %vm1605, %v5888, 0
        %5895 = vmatpush.bf16.msra.mxu0 0
        %5896 = vmatpush.bf16.msra.mxu0 0
        %5897 = vmatpush.bf16.msra.mxu0 0
        %5898 = vmatpush.bf16.msra.mxu0 0
        %5899 = vmatpush.bf16.msra.mxu0 0
        %5900 = vmatpush.bf16.msra.mxu0 0
        %5901 = vmatpush.bf16.msra.mxu0 0
        %5902 = vmatpush.bf16.msra.mxu0 %v5890
        %5903 = vmatmul.bf16.gmra.mxu0 %v5893
        %v5904 = vpop.f32.mrf.mxu0
        %v5905 = vadd.f32 0.0, %v5904
        %v5906 = vpop.f32.mrf.mxu0
        %v5907 = vadd.f32 0.0, %v5906
        %5908 = vdwg.mxu0
        %v5911 = vunpack.c.l.b16 %v5716
        %v5912 = vunpack.c.l.b16 %v5717
        %v5913 = vpack.c.b16 %v5912, %v5911
        %5914 = vrot.lane.b32.xlu0 %v2195, 32
        %v5915 = vpop.permute.xlu0 %5914
        %v5918 = vsel %vm1605, %v5913, 0
        %5920 = vmatpush.bf16.msra.mxu0 0
        %5921 = vmatpush.bf16.msra.mxu0 0
        %5922 = vmatpush.bf16.msra.mxu0 0
        %5923 = vmatpush.bf16.msra.mxu0 0
        %5924 = vmatpush.bf16.msra.mxu0 0
        %5925 = vmatpush.bf16.msra.mxu0 0
        %5926 = vmatpush.bf16.msra.mxu0 0
        %5927 = vmatpush.bf16.msra.mxu0 %v5915
        %5928 = vmatmul.bf16.gmra.mxu0 %v5918
        %v5929 = vpop.f32.mrf.mxu0
        %v5930 = vadd.f32 0.0, %v5929
        %v5931 = vpop.f32.mrf.mxu0
        %v5932 = vadd.f32 0.0, %v5931
        %5933 = vdwg.mxu0
        %v5936 = vunpack.c.l.b16 %v5718
        %v5937 = vunpack.c.l.b16 %v5719
        %v5938 = vpack.c.b16 %v5937, %v5936
        %5939 = vrot.lane.b32.xlu0 %v2223, 32
        %v5940 = vpop.permute.xlu0 %5939
        %v5943 = vsel %vm1605, %v5938, 0
        %5945 = vmatpush.bf16.msra.mxu0 0
        %5946 = vmatpush.bf16.msra.mxu0 0
        %5947 = vmatpush.bf16.msra.mxu0 0
        %5948 = vmatpush.bf16.msra.mxu0 0
        %5949 = vmatpush.bf16.msra.mxu0 0
        %5950 = vmatpush.bf16.msra.mxu0 0
        %5951 = vmatpush.bf16.msra.mxu0 0
        %5952 = vmatpush.bf16.msra.mxu0 %v5940
        %5953 = vmatmul.bf16.gmra.mxu0 %v5943
        %v5954 = vpop.f32.mrf.mxu0
        %v5955 = vadd.f32 0.0, %v5954
        %v5956 = vpop.f32.mrf.mxu0
        %v5957 = vadd.f32 0.0, %v5956
        %5958 = vdwg.mxu0
        %v5961 = vunpack.c.l.b16 %v5720
        %v5962 = vunpack.c.l.b16 %v5721
        %v5963 = vpack.c.b16 %v5962, %v5961
        %5964 = vrot.lane.b32.xlu0 %v2251, 32
        %v5965 = vpop.permute.xlu0 %5964
        %v5968 = vsel %vm1605, %v5963, 0
        %5970 = vmatpush.bf16.msra.mxu0 0
        %5971 = vmatpush.bf16.msra.mxu0 0
        %5972 = vmatpush.bf16.msra.mxu0 0
        %5973 = vmatpush.bf16.msra.mxu0 0
        %5974 = vmatpush.bf16.msra.mxu0 0
        %5975 = vmatpush.bf16.msra.mxu0 0
        %5976 = vmatpush.bf16.msra.mxu0 0
        %5977 = vmatpush.bf16.msra.mxu0 %v5965
        %5978 = vmatmul.bf16.gmra.mxu0 %v5968
        %v5979 = vpop.f32.mrf.mxu0
        %v5980 = vadd.f32 0.0, %v5979
        %v5981 = vpop.f32.mrf.mxu0
        %v5982 = vadd.f32 0.0, %v5981
        %5983 = vdwg.mxu0
        %v5986 = vunpack.c.l.b16 %v5722
        %v5987 = vunpack.c.l.b16 %v5723
        %v5988 = vpack.c.b16 %v5987, %v5986
        %5989 = vrot.lane.b32.xlu0 %v2279, 32
        %v5990 = vpop.permute.xlu0 %5989
        %v5993 = vsel %vm1605, %v5988, 0
        %5995 = vmatpush.bf16.msra.mxu0 0
        %5996 = vmatpush.bf16.msra.mxu0 0
        %5997 = vmatpush.bf16.msra.mxu0 0
        %5998 = vmatpush.bf16.msra.mxu0 0
        %5999 = vmatpush.bf16.msra.mxu0 0
        %6000 = vmatpush.bf16.msra.mxu0 0
        %6001 = vmatpush.bf16.msra.mxu0 0
        %6002 = vmatpush.bf16.msra.mxu0 %v5990
        %6003 = vmatmul.bf16.gmra.mxu0 %v5993
        %v6004 = vpop.f32.mrf.mxu0
        %v6005 = vadd.f32 0.0, %v6004
        %v6006 = vpop.f32.mrf.mxu0
        %v6007 = vadd.f32 0.0, %v6006
        %6008 = vdwg.mxu0
        %v6011 = vunpack.c.l.b16 %v5724
        %v6012 = vunpack.c.l.b16 %v5725
        %v6013 = vpack.c.b16 %v6012, %v6011
        %6014 = vrot.lane.b32.xlu0 %v2307, 32
        %v6015 = vpop.permute.xlu0 %6014
        %v6018 = vsel %vm1605, %v6013, 0
        %6020 = vmatpush.bf16.msra.mxu0 0
        %6021 = vmatpush.bf16.msra.mxu0 0
        %6022 = vmatpush.bf16.msra.mxu0 0
        %6023 = vmatpush.bf16.msra.mxu0 0
        %6024 = vmatpush.bf16.msra.mxu0 0
        %6025 = vmatpush.bf16.msra.mxu0 0
        %6026 = vmatpush.bf16.msra.mxu0 0
        %6027 = vmatpush.bf16.msra.mxu0 %v6015
        %6028 = vmatmul.bf16.gmra.mxu0 %v6018
        %v6029 = vpop.f32.mrf.mxu0
        %v6030 = vadd.f32 0.0, %v6029
        %v6031 = vpop.f32.mrf.mxu0
        %v6032 = vadd.f32 0.0, %v6031
        %6033 = vdwg.mxu0
        %v6036 = vunpack.c.l.b16 %v5726
        %v6037 = vunpack.c.l.b16 %v5727
        %v6038 = vpack.c.b16 %v6037, %v6036
        %6039 = vrot.lane.b32.xlu0 %v2335, 32
        %v6040 = vpop.permute.xlu0 %6039
        %v6043 = vsel %vm1605, %v6038, 0
        %6045 = vmatpush.bf16.msra.mxu0 0
        %6046 = vmatpush.bf16.msra.mxu0 0
        %6047 = vmatpush.bf16.msra.mxu0 0
        %6048 = vmatpush.bf16.msra.mxu0 0
        %6049 = vmatpush.bf16.msra.mxu0 0
        %6050 = vmatpush.bf16.msra.mxu0 0
        %6051 = vmatpush.bf16.msra.mxu0 0
        %6052 = vmatpush.bf16.msra.mxu0 %v6040
        %6053 = vmatmul.bf16.gmra.mxu0 %v6043
        %v6054 = vpop.f32.mrf.mxu0
        %v6055 = vadd.f32 0.0, %v6054
        %v6056 = vpop.f32.mrf.mxu0
        %v6057 = vadd.f32 0.0, %v6056
        %6058 = vdwg.mxu0
        %v6061 = vunpack.c.l.b16 %v5728
        %v6062 = vunpack.c.l.b16 %v5729
        %v6063 = vpack.c.b16 %v6062, %v6061
        %6064 = vrot.lane.b32.xlu0 %v2363, 32
        %v6065 = vpop.permute.xlu0 %6064
        %v6068 = vsel %vm1605, %v6063, 0
        %6070 = vmatpush.bf16.msra.mxu0 0
        %6071 = vmatpush.bf16.msra.mxu0 0
        %6072 = vmatpush.bf16.msra.mxu0 0
        %6073 = vmatpush.bf16.msra.mxu0 0
        %6074 = vmatpush.bf16.msra.mxu0 0
        %6075 = vmatpush.bf16.msra.mxu0 0
        %6076 = vmatpush.bf16.msra.mxu0 0
        %6077 = vmatpush.bf16.msra.mxu0 %v6065
        %6078 = vmatmul.bf16.gmra.mxu0 %v6068
        %v6079 = vpop.f32.mrf.mxu0
        %v6080 = vadd.f32 0.0, %v6079
        %v6081 = vpop.f32.mrf.mxu0
        %v6082 = vadd.f32 0.0, %v6081
        %6083 = vdwg.mxu0
        %v6086 = vunpack.c.l.b16 %v5730
        %v6087 = vunpack.c.l.b16 %v5731
        %v6088 = vpack.c.b16 %v6087, %v6086
        %6089 = vrot.lane.b32.xlu0 %v2391, 32
        %v6090 = vpop.permute.xlu0 %6089
        %v6093 = vsel %vm1605, %v6088, 0
        %6095 = vmatpush.bf16.msra.mxu0 0
        %6096 = vmatpush.bf16.msra.mxu0 0
        %6097 = vmatpush.bf16.msra.mxu0 0
        %6098 = vmatpush.bf16.msra.mxu0 0
        %6099 = vmatpush.bf16.msra.mxu0 0
        %6100 = vmatpush.bf16.msra.mxu0 0
        %6101 = vmatpush.bf16.msra.mxu0 0
        %6102 = vmatpush.bf16.msra.mxu0 %v6090
        %6103 = vmatmul.bf16.gmra.mxu0 %v6093
        %v6104 = vpop.f32.mrf.mxu0
        %v6105 = vadd.f32 0.0, %v6104
        %v6106 = vpop.f32.mrf.mxu0
        %v6107 = vadd.f32 0.0, %v6106
        %6108 = vdwg.mxu0
        %v6111 = vunpack.c.l.b16 %v5732
        %v6112 = vunpack.c.l.b16 %v5733
        %v6113 = vpack.c.b16 %v6112, %v6111
        %6114 = vrot.lane.b32.xlu0 %v2419, 32
        %v6115 = vpop.permute.xlu0 %6114
        %v6118 = vsel %vm1605, %v6113, 0
        %6120 = vmatpush.bf16.msra.mxu0 0
        %6121 = vmatpush.bf16.msra.mxu0 0
        %6122 = vmatpush.bf16.msra.mxu0 0
        %6123 = vmatpush.bf16.msra.mxu0 0
        %6124 = vmatpush.bf16.msra.mxu0 0
        %6125 = vmatpush.bf16.msra.mxu0 0
        %6126 = vmatpush.bf16.msra.mxu0 0
        %6127 = vmatpush.bf16.msra.mxu0 %v6115
        %6128 = vmatmul.bf16.gmra.mxu0 %v6118
        %v6129 = vpop.f32.mrf.mxu0
        %v6130 = vadd.f32 0.0, %v6129
        %v6131 = vpop.f32.mrf.mxu0
        %v6132 = vadd.f32 0.0, %v6131
        %6133 = vdwg.mxu0
        %v6134 = vpack.c.bf16 %v5755, %v5755
        %v6135 = vpack.c.bf16 %v5757, %v5757
        %v6136 = vpack.c.bf16 %v5780, %v5780
        %v6137 = vpack.c.bf16 %v5782, %v5782
        %v6138 = vpack.c.bf16 %v5805, %v5805
        %v6139 = vpack.c.bf16 %v5807, %v5807
        %v6140 = vpack.c.bf16 %v5830, %v5830
        %v6141 = vpack.c.bf16 %v5832, %v5832
        %v6142 = vpack.c.bf16 %v5855, %v5855
        %v6143 = vpack.c.bf16 %v5857, %v5857
        %v6144 = vpack.c.bf16 %v5880, %v5880
        %v6145 = vpack.c.bf16 %v5882, %v5882
        %v6146 = vpack.c.bf16 %v5905, %v5905
        %v6147 = vpack.c.bf16 %v5907, %v5907
        %v6148 = vpack.c.bf16 %v5930, %v5930
        %v6149 = vpack.c.bf16 %v5932, %v5932
        %v6150 = vpack.c.bf16 %v5955, %v5955
        %v6151 = vpack.c.bf16 %v5957, %v5957
        %v6152 = vpack.c.bf16 %v5980, %v5980
        %v6153 = vpack.c.bf16 %v5982, %v5982
        %v6154 = vpack.c.bf16 %v6005, %v6005
        %v6155 = vpack.c.bf16 %v6007, %v6007
        %v6156 = vpack.c.bf16 %v6030, %v6030
        %v6157 = vpack.c.bf16 %v6032, %v6032
        %v6158 = vpack.c.bf16 %v6055, %v6055
        %v6159 = vpack.c.bf16 %v6057, %v6057
        %v6160 = vpack.c.bf16 %v6080, %v6080
        %v6161 = vpack.c.bf16 %v6082, %v6082
        %v6162 = vpack.c.bf16 %v6105, %v6105
        %v6163 = vpack.c.bf16 %v6107, %v6107
        %v6164 = vpack.c.bf16 %v6130, %v6130
        %v6165 = vpack.c.bf16 %v6132, %v6132
        %v6198 = vunpack.c.l.b16 %v2438
        %v6199 = vunpack.c.l.b16 %v2439
        %v6200 = vunpack.c.l.b16 %v2440
        %v6201 = vunpack.c.l.b16 %v2441
        %v6202 = vunpack.c.l.b16 %v2442
        %v6203 = vunpack.c.l.b16 %v2443
        %v6204 = vunpack.c.l.b16 %v2444
        %v6205 = vunpack.c.l.b16 %v2445
        %v6206 = vunpack.c.l.b16 %v2446
        %v6207 = vunpack.c.l.b16 %v2447
        %v6208 = vunpack.c.l.b16 %v2448
        %v6209 = vunpack.c.l.b16 %v2449
        %v6210 = vunpack.c.l.b16 %v2450
        %v6211 = vunpack.c.l.b16 %v2451
        %v6212 = vunpack.c.l.b16 %v2452
        %v6213 = vunpack.c.l.b16 %v2453
        %v6214 = vunpack.c.l.b16 %v2454
        %v6215 = vunpack.c.l.b16 %v2455
        %v6216 = vunpack.c.l.b16 %v2456
        %v6217 = vunpack.c.l.b16 %v2457
        %v6218 = vunpack.c.l.b16 %v2458
        %v6219 = vunpack.c.l.b16 %v2459
        %v6220 = vunpack.c.l.b16 %v2460
        %v6221 = vunpack.c.l.b16 %v2461
        %v6222 = vunpack.c.l.b16 %v2462
        %v6223 = vunpack.c.l.b16 %v2463
        %v6224 = vunpack.c.l.b16 %v2464
        %v6225 = vunpack.c.l.b16 %v2465
        %v6226 = vunpack.c.l.b16 %v2466
        %v6227 = vunpack.c.l.b16 %v2467
        %v6228 = vunpack.c.l.b16 %v2468
        %v6229 = vunpack.c.l.b16 %v2469
        %v6230 = vpack.c.b16 %v6199, %v6198
        %v6231 = vpack.c.b16 %v6201, %v6200
        %v6232 = vpack.c.b16 %v6203, %v6202
        %v6233 = vpack.c.b16 %v6205, %v6204
        %v6234 = vpack.c.b16 %v6207, %v6206
        %v6235 = vpack.c.b16 %v6209, %v6208
        %v6236 = vpack.c.b16 %v6211, %v6210
        %v6237 = vpack.c.b16 %v6213, %v6212
        %v6238 = vpack.c.b16 %v6215, %v6214
        %v6239 = vpack.c.b16 %v6217, %v6216
        %v6240 = vpack.c.b16 %v6219, %v6218
        %v6241 = vpack.c.b16 %v6221, %v6220
        %v6242 = vpack.c.b16 %v6223, %v6222
        %v6243 = vpack.c.b16 %v6225, %v6224
        %v6244 = vpack.c.b16 %v6227, %v6226
        %v6245 = vpack.c.b16 %v6229, %v6228
        %v6278 = vunpack.c.l.b16 %v3670
        %v6279 = vunpack.c.l.b16 %v3671
        %v6280 = vunpack.c.l.b16 %v3672
        %v6281 = vunpack.c.l.b16 %v3673
        %v6282 = vunpack.c.l.b16 %v3674
        %v6283 = vunpack.c.l.b16 %v3675
        %v6284 = vunpack.c.l.b16 %v3676
        %v6285 = vunpack.c.l.b16 %v3677
        %v6286 = vunpack.c.l.b16 %v3678
        %v6287 = vunpack.c.l.b16 %v3679
        %v6288 = vunpack.c.l.b16 %v3680
        %v6289 = vunpack.c.l.b16 %v3681
        %v6290 = vunpack.c.l.b16 %v3682
        %v6291 = vunpack.c.l.b16 %v3683
        %v6292 = vunpack.c.l.b16 %v3684
        %v6293 = vunpack.c.l.b16 %v3685
        %v6294 = vunpack.c.l.b16 %v3686
        %v6295 = vunpack.c.l.b16 %v3687
        %v6296 = vunpack.c.l.b16 %v3688
        %v6297 = vunpack.c.l.b16 %v3689
        %v6298 = vunpack.c.l.b16 %v3690
        %v6299 = vunpack.c.l.b16 %v3691
        %v6300 = vunpack.c.l.b16 %v3692
        %v6301 = vunpack.c.l.b16 %v3693
        %v6302 = vunpack.c.l.b16 %v3694
        %v6303 = vunpack.c.l.b16 %v3695
        %v6304 = vunpack.c.l.b16 %v3696
        %v6305 = vunpack.c.l.b16 %v3697
        %v6306 = vunpack.c.l.b16 %v3698
        %v6307 = vunpack.c.l.b16 %v3699
        %v6308 = vunpack.c.l.b16 %v3700
        %v6309 = vunpack.c.l.b16 %v3701
        %v6310 = vpack.c.b16 %v6279, %v6278
        %v6311 = vpack.c.b16 %v6281, %v6280
        %v6312 = vpack.c.b16 %v6283, %v6282
        %v6313 = vpack.c.b16 %v6285, %v6284
        %v6314 = vpack.c.b16 %v6287, %v6286
        %v6315 = vpack.c.b16 %v6289, %v6288
        %v6316 = vpack.c.b16 %v6291, %v6290
        %v6317 = vpack.c.b16 %v6293, %v6292
        %v6318 = vpack.c.b16 %v6295, %v6294
        %v6319 = vpack.c.b16 %v6297, %v6296
        %v6320 = vpack.c.b16 %v6299, %v6298
        %v6321 = vpack.c.b16 %v6301, %v6300
        %v6322 = vpack.c.b16 %v6303, %v6302
        %v6323 = vpack.c.b16 %v6305, %v6304
        %v6324 = vpack.c.b16 %v6307, %v6306
        %v6325 = vpack.c.b16 %v6309, %v6308
        %6326 = vrot.lane.b32.xlu0 %v6310, 32
        %v6327 = vpop.permute.xlu0 %6326
        %6328 = vrot.lane.b32.xlu0 %v6311, 32
        %v6329 = vpop.permute.xlu0 %6328
        %6330 = vrot.lane.b32.xlu0 %v6312, 32
        %v6331 = vpop.permute.xlu0 %6330
        %6332 = vrot.lane.b32.xlu0 %v6313, 32
        %v6333 = vpop.permute.xlu0 %6332
        %6334 = vrot.lane.b32.xlu0 %v6314, 32
        %v6335 = vpop.permute.xlu0 %6334
        %6336 = vrot.lane.b32.xlu0 %v6315, 32
        %v6337 = vpop.permute.xlu0 %6336
        %6338 = vrot.lane.b32.xlu0 %v6316, 32
        %v6339 = vpop.permute.xlu0 %6338
        %6340 = vrot.lane.b32.xlu0 %v6317, 32
        %v6341 = vpop.permute.xlu0 %6340
        %6342 = vrot.lane.b32.xlu0 %v6318, 32
        %v6343 = vpop.permute.xlu0 %6342
        %6344 = vrot.lane.b32.xlu0 %v6319, 32
        %v6345 = vpop.permute.xlu0 %6344
        %6346 = vrot.lane.b32.xlu0 %v6320, 32
        %v6347 = vpop.permute.xlu0 %6346
        %6348 = vrot.lane.b32.xlu0 %v6321, 32
        %v6349 = vpop.permute.xlu0 %6348
        %6350 = vrot.lane.b32.xlu0 %v6322, 32
        %v6351 = vpop.permute.xlu0 %6350
        %6352 = vrot.lane.b32.xlu0 %v6323, 32
        %v6353 = vpop.permute.xlu0 %6352
        %6354 = vrot.lane.b32.xlu0 %v6324, 32
        %v6355 = vpop.permute.xlu0 %6354
        %6356 = vrot.lane.b32.xlu0 %v6325, 32
        %v6357 = vpop.permute.xlu0 %6356
        %v6390 = vunpack.c.l.b16 %v4902
        %v6391 = vunpack.c.l.b16 %v4903
        %v6392 = vunpack.c.l.b16 %v4904
        %v6393 = vunpack.c.l.b16 %v4905
        %v6394 = vunpack.c.l.b16 %v4906
        %v6395 = vunpack.c.l.b16 %v4907
        %v6396 = vunpack.c.l.b16 %v4908
        %v6397 = vunpack.c.l.b16 %v4909
        %v6398 = vunpack.c.l.b16 %v4910
        %v6399 = vunpack.c.l.b16 %v4911
        %v6400 = vunpack.c.l.b16 %v4912
        %v6401 = vunpack.c.l.b16 %v4913
        %v6402 = vunpack.c.l.b16 %v4914
        %v6403 = vunpack.c.l.b16 %v4915
        %v6404 = vunpack.c.l.b16 %v4916
        %v6405 = vunpack.c.l.b16 %v4917
        %v6406 = vunpack.c.l.b16 %v4918
        %v6407 = vunpack.c.l.b16 %v4919
        %v6408 = vunpack.c.l.b16 %v4920
        %v6409 = vunpack.c.l.b16 %v4921
        %v6410 = vunpack.c.l.b16 %v4922
        %v6411 = vunpack.c.l.b16 %v4923
        %v6412 = vunpack.c.l.b16 %v4924
        %v6413 = vunpack.c.l.b16 %v4925
        %v6414 = vunpack.c.l.b16 %v4926
        %v6415 = vunpack.c.l.b16 %v4927
        %v6416 = vunpack.c.l.b16 %v4928
        %v6417 = vunpack.c.l.b16 %v4929
        %v6418 = vunpack.c.l.b16 %v4930
        %v6419 = vunpack.c.l.b16 %v4931
        %v6420 = vunpack.c.l.b16 %v4932
        %v6421 = vunpack.c.l.b16 %v4933
        %v6422 = vpack.c.b16 %v6391, %v6390
        %v6423 = vpack.c.b16 %v6393, %v6392
        %v6424 = vpack.c.b16 %v6395, %v6394
        %v6425 = vpack.c.b16 %v6397, %v6396
        %v6426 = vpack.c.b16 %v6399, %v6398
        %v6427 = vpack.c.b16 %v6401, %v6400
        %v6428 = vpack.c.b16 %v6403, %v6402
        %v6429 = vpack.c.b16 %v6405, %v6404
        %v6430 = vpack.c.b16 %v6407, %v6406
        %v6431 = vpack.c.b16 %v6409, %v6408
        %v6432 = vpack.c.b16 %v6411, %v6410
        %v6433 = vpack.c.b16 %v6413, %v6412
        %v6434 = vpack.c.b16 %v6415, %v6414
        %v6435 = vpack.c.b16 %v6417, %v6416
        %v6436 = vpack.c.b16 %v6419, %v6418
        %v6437 = vpack.c.b16 %v6421, %v6420
        %6438 = vrot.lane.b32.xlu0 %v6422, 64
        %v6439 = vpop.permute.xlu0 %6438
        %6440 = vrot.lane.b32.xlu0 %v6423, 64
        %v6441 = vpop.permute.xlu0 %6440
        %6442 = vrot.lane.b32.xlu0 %v6424, 64
        %v6443 = vpop.permute.xlu0 %6442
        %6444 = vrot.lane.b32.xlu0 %v6425, 64
        %v6445 = vpop.permute.xlu0 %6444
        %6446 = vrot.lane.b32.xlu0 %v6426, 64
        %v6447 = vpop.permute.xlu0 %6446
        %6448 = vrot.lane.b32.xlu0 %v6427, 64
        %v6449 = vpop.permute.xlu0 %6448
        %6450 = vrot.lane.b32.xlu0 %v6428, 64
        %v6451 = vpop.permute.xlu0 %6450
        %6452 = vrot.lane.b32.xlu0 %v6429, 64
        %v6453 = vpop.permute.xlu0 %6452
        %6454 = vrot.lane.b32.xlu0 %v6430, 64
        %v6455 = vpop.permute.xlu0 %6454
        %6456 = vrot.lane.b32.xlu0 %v6431, 64
        %v6457 = vpop.permute.xlu0 %6456
        %6458 = vrot.lane.b32.xlu0 %v6432, 64
        %v6459 = vpop.permute.xlu0 %6458
        %6460 = vrot.lane.b32.xlu0 %v6433, 64
        %v6461 = vpop.permute.xlu0 %6460
        %6462 = vrot.lane.b32.xlu0 %v6434, 64
        %v6463 = vpop.permute.xlu0 %6462
        %6464 = vrot.lane.b32.xlu0 %v6435, 64
        %v6465 = vpop.permute.xlu0 %6464
        %6466 = vrot.lane.b32.xlu0 %v6436, 64
        %v6467 = vpop.permute.xlu0 %6466
        %6468 = vrot.lane.b32.xlu0 %v6437, 64
        %v6469 = vpop.permute.xlu0 %6468
        %v6502 = vunpack.c.l.b16 %v6134
        %v6503 = vunpack.c.l.b16 %v6135
        %v6504 = vunpack.c.l.b16 %v6136
        %v6505 = vunpack.c.l.b16 %v6137
        %v6506 = vunpack.c.l.b16 %v6138
        %v6507 = vunpack.c.l.b16 %v6139
        %v6508 = vunpack.c.l.b16 %v6140
        %v6509 = vunpack.c.l.b16 %v6141
        %v6510 = vunpack.c.l.b16 %v6142
        %v6511 = vunpack.c.l.b16 %v6143
        %v6512 = vunpack.c.l.b16 %v6144
        %v6513 = vunpack.c.l.b16 %v6145
        %v6514 = vunpack.c.l.b16 %v6146
        %v6515 = vunpack.c.l.b16 %v6147
        %v6516 = vunpack.c.l.b16 %v6148
        %v6517 = vunpack.c.l.b16 %v6149
        %v6518 = vunpack.c.l.b16 %v6150
        %v6519 = vunpack.c.l.b16 %v6151
        %v6520 = vunpack.c.l.b16 %v6152
        %v6521 = vunpack.c.l.b16 %v6153
        %v6522 = vunpack.c.l.b16 %v6154
        %v6523 = vunpack.c.l.b16 %v6155
        %v6524 = vunpack.c.l.b16 %v6156
        %v6525 = vunpack.c.l.b16 %v6157
        %v6526 = vunpack.c.l.b16 %v6158
        %v6527 = vunpack.c.l.b16 %v6159
        %v6528 = vunpack.c.l.b16 %v6160
        %v6529 = vunpack.c.l.b16 %v6161
        %v6530 = vunpack.c.l.b16 %v6162
        %v6531 = vunpack.c.l.b16 %v6163
        %v6532 = vunpack.c.l.b16 %v6164
        %v6533 = vunpack.c.l.b16 %v6165
        %v6534 = vpack.c.b16 %v6503, %v6502
        %v6535 = vpack.c.b16 %v6505, %v6504
        %v6536 = vpack.c.b16 %v6507, %v6506
        %v6537 = vpack.c.b16 %v6509, %v6508
        %v6538 = vpack.c.b16 %v6511, %v6510
        %v6539 = vpack.c.b16 %v6513, %v6512
        %v6540 = vpack.c.b16 %v6515, %v6514
        %v6541 = vpack.c.b16 %v6517, %v6516
        %v6542 = vpack.c.b16 %v6519, %v6518
        %v6543 = vpack.c.b16 %v6521, %v6520
        %v6544 = vpack.c.b16 %v6523, %v6522
        %v6545 = vpack.c.b16 %v6525, %v6524
        %v6546 = vpack.c.b16 %v6527, %v6526
        %v6547 = vpack.c.b16 %v6529, %v6528
        %v6548 = vpack.c.b16 %v6531, %v6530
        %v6549 = vpack.c.b16 %v6533, %v6532
        %6550 = vrot.lane.b32.xlu0 %v6534, 96
        %v6551 = vpop.permute.xlu0 %6550
        %6552 = vrot.lane.b32.xlu0 %v6535, 96
        %v6553 = vpop.permute.xlu0 %6552
        %6554 = vrot.lane.b32.xlu0 %v6536, 96
        %v6555 = vpop.permute.xlu0 %6554
        %6556 = vrot.lane.b32.xlu0 %v6537, 96
        %v6557 = vpop.permute.xlu0 %6556
        %6558 = vrot.lane.b32.xlu0 %v6538, 96
        %v6559 = vpop.permute.xlu0 %6558
        %6560 = vrot.lane.b32.xlu0 %v6539, 96
        %v6561 = vpop.permute.xlu0 %6560
        %6562 = vrot.lane.b32.xlu0 %v6540, 96
        %v6563 = vpop.permute.xlu0 %6562
        %6564 = vrot.lane.b32.xlu0 %v6541, 96
        %v6565 = vpop.permute.xlu0 %6564
        %6566 = vrot.lane.b32.xlu0 %v6542, 96
        %v6567 = vpop.permute.xlu0 %6566
        %6568 = vrot.lane.b32.xlu0 %v6543, 96
        %v6569 = vpop.permute.xlu0 %6568
        %6570 = vrot.lane.b32.xlu0 %v6544, 96
        %v6571 = vpop.permute.xlu0 %6570
        %6572 = vrot.lane.b32.xlu0 %v6545, 96
        %v6573 = vpop.permute.xlu0 %6572
        %6574 = vrot.lane.b32.xlu0 %v6546, 96
        %v6575 = vpop.permute.xlu0 %6574
        %6576 = vrot.lane.b32.xlu0 %v6547, 96
        %v6577 = vpop.permute.xlu0 %6576
        %6578 = vrot.lane.b32.xlu0 %v6548, 96
        %v6579 = vpop.permute.xlu0 %6578
        %6580 = vrot.lane.b32.xlu0 %v6549, 96
        %v6581 = vpop.permute.xlu0 %6580
        %v6584 = vsel %vm1056, %v6230, %v6327
        %v6587 = vsel %vm1056, %v6231, %v6329
        %v6590 = vsel %vm1056, %v6232, %v6331
        %v6593 = vsel %vm1056, %v6233, %v6333
        %v6596 = vsel %vm1056, %v6234, %v6335
        %v6599 = vsel %vm1056, %v6235, %v6337
        %v6602 = vsel %vm1056, %v6236, %v6339
        %v6605 = vsel %vm1056, %v6237, %v6341
        %v6608 = vsel %vm1056, %v6238, %v6343
        %v6611 = vsel %vm1056, %v6239, %v6345
        %v6614 = vsel %vm1056, %v6240, %v6347
        %v6617 = vsel %vm1056, %v6241, %v6349
        %v6620 = vsel %vm1056, %v6242, %v6351
        %v6623 = vsel %vm1056, %v6243, %v6353
        %v6626 = vsel %vm1056, %v6244, %v6355
        %v6629 = vsel %vm1056, %v6245, %v6357
        %vm6630 = vcmask 523264
        %v6632 = vsel %vm6630, %v6584, %v6439
        %v6634 = vsel %vm6630, %v6587, %v6441
        %v6636 = vsel %vm6630, %v6590, %v6443
        %v6638 = vsel %vm6630, %v6593, %v6445
        %v6640 = vsel %vm6630, %v6596, %v6447
        %v6642 = vsel %vm6630, %v6599, %v6449
        %v6644 = vsel %vm6630, %v6602, %v6451
        %v6646 = vsel %vm6630, %v6605, %v6453
        %v6648 = vsel %vm6630, %v6608, %v6455
        %v6650 = vsel %vm6630, %v6611, %v6457
        %v6652 = vsel %vm6630, %v6614, %v6459
        %v6654 = vsel %vm6630, %v6617, %v6461
        %v6656 = vsel %vm6630, %v6620, %v6463
        %v6658 = vsel %vm6630, %v6623, %v6465
        %v6660 = vsel %vm6630, %v6626, %v6467
        %v6662 = vsel %vm6630, %v6629, %v6469
        %vm6663 = vcmask 785408
        %v6665 = vsel %vm6663, %v6632, %v6551
        %v6668 = vsel %vm6663, %v6634, %v6553
        %v6671 = vsel %vm6663, %v6636, %v6555
        %v6674 = vsel %vm6663, %v6638, %v6557
        %v6677 = vsel %vm6663, %v6640, %v6559
        %v6680 = vsel %vm6663, %v6642, %v6561
        %v6683 = vsel %vm6663, %v6644, %v6563
        %v6686 = vsel %vm6663, %v6646, %v6565
        %v6689 = vsel %vm6663, %v6648, %v6567
        %v6692 = vsel %vm6663, %v6650, %v6569
        %v6695 = vsel %vm6663, %v6652, %v6571
        %v6698 = vsel %vm6663, %v6654, %v6573
        %v6701 = vsel %vm6663, %v6656, %v6575
        %v6704 = vsel %vm6663, %v6658, %v6577
        %v6707 = vsel %vm6663, %v6660, %v6579
        %v6710 = vsel %vm6663, %v6662, %v6581
        %v6712 = vld [vmem:[#allocation5 + $0xc] sm:$0xf]
        %v6713 = vld [vmem:[#allocation5 + $0x20] sm:$0xf]
        %v6714 = vld [vmem:[#allocation5 + $0x34] sm:$0xf]
        %v6715 = vld [vmem:[#allocation5 + $0x48] sm:$0xf]
        %v6716 = vld [vmem:[#allocation5 + $0x5c] sm:$0xf]
        %v6717 = vld [vmem:[#allocation5 + $0x70] sm:$0xf]
        %v6718 = vld [vmem:[#allocation5 + $0x84] sm:$0xf]
        %v6719 = vld [vmem:[#allocation5 + $0x98] sm:$0xf]
        %v6720 = vld [vmem:[#allocation5 + $0xac] sm:$0xf]
        %v6721 = vld [vmem:[#allocation5 + $0xc0] sm:$0xf]
        %v6722 = vld [vmem:[#allocation5 + $0xd4] sm:$0xf]
        %v6723 = vld [vmem:[#allocation5 + $0xe8] sm:$0xf]
        %v6724 = vld [vmem:[#allocation5 + $0xfc] sm:$0xf]
        %v6725 = vld [vmem:[#allocation5 + $0x110] sm:$0xf]
        %v6726 = vld [vmem:[#allocation5 + $0x124] sm:$0xf]
        %v6727 = vld [vmem:[#allocation5 + $0x138] sm:$0xf]
        %v6728 = vperm.slane %v327, 3
        %v6745 = vunpack.c.l.b16 %v6712
        %v6746 = vunpack.c.l.b16 %v6713
        %v6747 = vunpack.c.l.b16 %v6714
        %v6748 = vunpack.c.l.b16 %v6715
        %v6749 = vunpack.c.l.b16 %v6716
        %v6750 = vunpack.c.l.b16 %v6717
        %v6751 = vunpack.c.l.b16 %v6718
        %v6752 = vunpack.c.l.b16 %v6719
        %v6753 = vunpack.c.l.b16 %v6720
        %v6754 = vunpack.c.l.b16 %v6721
        %v6755 = vunpack.c.l.b16 %v6722
        %v6756 = vunpack.c.l.b16 %v6723
        %v6757 = vunpack.c.l.b16 %v6724
        %v6758 = vunpack.c.l.b16 %v6725
        %v6759 = vunpack.c.l.b16 %v6726
        %v6760 = vunpack.c.l.b16 %v6727
        %v6761 = vpack.c.b16 %v6746, %v6745
        %v6762 = vpack.c.b16 %v6748, %v6747
        %v6763 = vpack.c.b16 %v6750, %v6749
        %v6764 = vpack.c.b16 %v6752, %v6751
        %v6765 = vpack.c.b16 %v6754, %v6753
        %v6766 = vpack.c.b16 %v6756, %v6755
        %v6767 = vpack.c.b16 %v6758, %v6757
        %v6768 = vpack.c.b16 %v6760, %v6759
        %6777 = vmatpush.bf16.msra.mxu0 %v6768
        %6778 = vmatpush.bf16.msra.mxu0 %v6767
        %6779 = vmatpush.bf16.msra.mxu0 %v6766
        %6780 = vmatpush.bf16.msra.mxu0 %v6765
        %6781 = vmatpush.bf16.msra.mxu0 %v6764
        %6782 = vmatpush.bf16.msra.mxu0 %v6763
        %6783 = vmatpush.bf16.msra.mxu0 %v6762
        %6784 = vmatpush.bf16.msra.mxu0 %v6761
        %6785 = vmatmul.bf16.gmra.mxu0 %v6665
        %v6786 = vpop.f32.mrf.mxu0
        %v6787 = vadd.f32 %v6728, %v6786
        %v6788 = vpop.f32.mrf.mxu0
        %v6789 = vadd.f32 %v6728, %v6788
        %6790 = vmatmul.bf16.gmra.mxu0 %v6668
        %v6791 = vpop.f32.mrf.mxu0
        %v6792 = vadd.f32 %v6728, %v6791
        %v6793 = vpop.f32.mrf.mxu0
        %v6794 = vadd.f32 %v6728, %v6793
        %6795 = vmatmul.bf16.gmra.mxu0 %v6671
        %v6796 = vpop.f32.mrf.mxu0
        %v6797 = vadd.f32 %v6728, %v6796
        %v6798 = vpop.f32.mrf.mxu0
        %v6799 = vadd.f32 %v6728, %v6798
        %6800 = vmatmul.bf16.gmra.mxu0 %v6674
        %v6801 = vpop.f32.mrf.mxu0
        %v6802 = vadd.f32 %v6728, %v6801
        %v6803 = vpop.f32.mrf.mxu0
        %v6804 = vadd.f32 %v6728, %v6803
        %6805 = vmatmul.bf16.gmra.mxu0 %v6677
        %v6806 = vpop.f32.mrf.mxu0
        %v6807 = vadd.f32 %v6728, %v6806
        %v6808 = vpop.f32.mrf.mxu0
        %v6809 = vadd.f32 %v6728, %v6808
        %6810 = vmatmul.bf16.gmra.mxu0 %v6680
        %v6811 = vpop.f32.mrf.mxu0
        %v6812 = vadd.f32 %v6728, %v6811
        %v6813 = vpop.f32.mrf.mxu0
        %v6814 = vadd.f32 %v6728, %v6813
        %6815 = vmatmul.bf16.gmra.mxu0 %v6683
        %v6816 = vpop.f32.mrf.mxu0
        %v6817 = vadd.f32 %v6728, %v6816
        %v6818 = vpop.f32.mrf.mxu0
        %v6819 = vadd.f32 %v6728, %v6818
        %6820 = vmatmul.bf16.gmra.mxu0 %v6686
        %v6821 = vpop.f32.mrf.mxu0
        %v6822 = vadd.f32 %v6728, %v6821
        %v6823 = vpop.f32.mrf.mxu0
        %v6824 = vadd.f32 %v6728, %v6823
        %6825 = vmatmul.bf16.gmra.mxu0 %v6689
        %v6826 = vpop.f32.mrf.mxu0
        %v6827 = vadd.f32 %v6728, %v6826
        %v6828 = vpop.f32.mrf.mxu0
        %v6829 = vadd.f32 %v6728, %v6828
        %6830 = vmatmul.bf16.gmra.mxu0 %v6692
        %v6831 = vpop.f32.mrf.mxu0
        %v6832 = vadd.f32 %v6728, %v6831
        %v6833 = vpop.f32.mrf.mxu0
        %v6834 = vadd.f32 %v6728, %v6833
        %6835 = vmatmul.bf16.gmra.mxu0 %v6695
        %v6836 = vpop.f32.mrf.mxu0
        %v6837 = vadd.f32 %v6728, %v6836
        %v6838 = vpop.f32.mrf.mxu0
        %v6839 = vadd.f32 %v6728, %v6838
        %6840 = vmatmul.bf16.gmra.mxu0 %v6698
        %v6841 = vpop.f32.mrf.mxu0
        %v6842 = vadd.f32 %v6728, %v6841
        %v6843 = vpop.f32.mrf.mxu0
        %v6844 = vadd.f32 %v6728, %v6843
        %6845 = vmatmul.bf16.gmra.mxu0 %v6701
        %v6846 = vpop.f32.mrf.mxu0
        %v6847 = vadd.f32 %v6728, %v6846
        %v6848 = vpop.f32.mrf.mxu0
        %v6849 = vadd.f32 %v6728, %v6848
        %6850 = vmatmul.bf16.gmra.mxu0 %v6704
        %v6851 = vpop.f32.mrf.mxu0
        %v6852 = vadd.f32 %v6728, %v6851
        %v6853 = vpop.f32.mrf.mxu0
        %v6854 = vadd.f32 %v6728, %v6853
        %6855 = vmatmul.bf16.gmra.mxu0 %v6707
        %v6856 = vpop.f32.mrf.mxu0
        %v6857 = vadd.f32 %v6728, %v6856
        %v6858 = vpop.f32.mrf.mxu0
        %v6859 = vadd.f32 %v6728, %v6858
        %6860 = vmatmul.bf16.gmra.mxu0 %v6710
        %v6861 = vpop.f32.mrf.mxu0
        %v6862 = vadd.f32 %v6728, %v6861
        %v6863 = vpop.f32.mrf.mxu0
        %v6864 = vadd.f32 %v6728, %v6863
        %6865 = vdwg.mxu0
        %v6866 = vpack.c.bf16 %v6789, %v6787
        %v6867 = vpack.c.bf16 %v6794, %v6792
        %v6868 = vpack.c.bf16 %v6799, %v6797
        %v6869 = vpack.c.bf16 %v6804, %v6802
        %v6870 = vpack.c.bf16 %v6809, %v6807
        %v6871 = vpack.c.bf16 %v6814, %v6812
        %v6872 = vpack.c.bf16 %v6819, %v6817
        %v6873 = vpack.c.bf16 %v6824, %v6822
        %v6874 = vpack.c.bf16 %v6829, %v6827
        %v6875 = vpack.c.bf16 %v6834, %v6832
        %v6876 = vpack.c.bf16 %v6839, %v6837
        %v6877 = vpack.c.bf16 %v6844, %v6842
        %v6878 = vpack.c.bf16 %v6849, %v6847
        %v6879 = vpack.c.bf16 %v6854, %v6852
        %v6880 = vpack.c.bf16 %v6859, %v6857
        %v6881 = vpack.c.bf16 %v6864, %v6862
        %v6882 = vld [vmem:[#allocation5 + $0x10] sm:$0xf]
        %v6883 = vld [vmem:[#allocation5 + $0x24] sm:$0xf]
        %v6884 = vld [vmem:[#allocation5 + $0x38] sm:$0xf]
        %v6885 = vld [vmem:[#allocation5 + $0x4c] sm:$0xf]
        %v6886 = vld [vmem:[#allocation5 + $0x60] sm:$0xf]
        %v6887 = vld [vmem:[#allocation5 + $0x74] sm:$0xf]
        %v6888 = vld [vmem:[#allocation5 + $0x88] sm:$0xf]
        %v6889 = vld [vmem:[#allocation5 + $0x9c] sm:$0xf]
        %v6890 = vld [vmem:[#allocation5 + $0xb0] sm:$0xf]
        %v6891 = vld [vmem:[#allocation5 + $0xc4] sm:$0xf]
        %v6892 = vld [vmem:[#allocation5 + $0xd8] sm:$0xf]
        %v6893 = vld [vmem:[#allocation5 + $0xec] sm:$0xf]
        %v6894 = vld [vmem:[#allocation5 + $0x100] sm:$0xf]
        %v6895 = vld [vmem:[#allocation5 + $0x114] sm:$0xf]
        %v6896 = vld [vmem:[#allocation5 + $0x128] sm:$0xf]
        %v6897 = vld [vmem:[#allocation5 + $0x13c] sm:$0xf]
        %v6898 = vperm.slane %v327, 4
        %v6915 = vunpack.c.l.b16 %v6882
        %v6916 = vunpack.c.l.b16 %v6883
        %v6917 = vunpack.c.l.b16 %v6884
        %v6918 = vunpack.c.l.b16 %v6885
        %v6919 = vunpack.c.l.b16 %v6886
        %v6920 = vunpack.c.l.b16 %v6887
        %v6921 = vunpack.c.l.b16 %v6888
        %v6922 = vunpack.c.l.b16 %v6889
        %v6923 = vunpack.c.l.b16 %v6890
        %v6924 = vunpack.c.l.b16 %v6891
        %v6925 = vunpack.c.l.b16 %v6892
        %v6926 = vunpack.c.l.b16 %v6893
        %v6927 = vunpack.c.l.b16 %v6894
        %v6928 = vunpack.c.l.b16 %v6895
        %v6929 = vunpack.c.l.b16 %v6896
        %v6930 = vunpack.c.l.b16 %v6897
        %v6931 = vpack.c.b16 %v6916, %v6915
        %v6932 = vpack.c.b16 %v6918, %v6917
        %v6933 = vpack.c.b16 %v6920, %v6919
        %v6934 = vpack.c.b16 %v6922, %v6921
        %v6935 = vpack.c.b16 %v6924, %v6923
        %v6936 = vpack.c.b16 %v6926, %v6925
        %v6937 = vpack.c.b16 %v6928, %v6927
        %v6938 = vpack.c.b16 %v6930, %v6929
        %6947 = vmatpush.bf16.msra.mxu0 %v6938
        %6948 = vmatpush.bf16.msra.mxu0 %v6937
        %6949 = vmatpush.bf16.msra.mxu0 %v6936
        %6950 = vmatpush.bf16.msra.mxu0 %v6935
        %6951 = vmatpush.bf16.msra.mxu0 %v6934
        %6952 = vmatpush.bf16.msra.mxu0 %v6933
        %6953 = vmatpush.bf16.msra.mxu0 %v6932
        %6954 = vmatpush.bf16.msra.mxu0 %v6931
        %6955 = vmatmul.bf16.gmra.mxu0 %v6866
        %v6956 = vpop.f32.mrf.mxu0
        %v6957 = vadd.f32 %v6898, %v6956
        %v6958 = vpop.f32.mrf.mxu0
        %v6959 = vadd.f32 %v6898, %v6958
        %6960 = vmatmul.bf16.gmra.mxu0 %v6867
        %v6961 = vpop.f32.mrf.mxu0
        %v6962 = vadd.f32 %v6898, %v6961
        %v6963 = vpop.f32.mrf.mxu0
        %v6964 = vadd.f32 %v6898, %v6963
        %6965 = vmatmul.bf16.gmra.mxu0 %v6868
        %v6966 = vpop.f32.mrf.mxu0
        %v6967 = vadd.f32 %v6898, %v6966
        %v6968 = vpop.f32.mrf.mxu0
        %v6969 = vadd.f32 %v6898, %v6968
        %6970 = vmatmul.bf16.gmra.mxu0 %v6869
        %v6971 = vpop.f32.mrf.mxu0
        %v6972 = vadd.f32 %v6898, %v6971
        %v6973 = vpop.f32.mrf.mxu0
        %v6974 = vadd.f32 %v6898, %v6973
        %6975 = vmatmul.bf16.gmra.mxu0 %v6870
        %v6976 = vpop.f32.mrf.mxu0
        %v6977 = vadd.f32 %v6898, %v6976
        %v6978 = vpop.f32.mrf.mxu0
        %v6979 = vadd.f32 %v6898, %v6978
        %6980 = vmatmul.bf16.gmra.mxu0 %v6871
        %v6981 = vpop.f32.mrf.mxu0
        %v6982 = vadd.f32 %v6898, %v6981
        %v6983 = vpop.f32.mrf.mxu0
        %v6984 = vadd.f32 %v6898, %v6983
        %6985 = vmatmul.bf16.gmra.mxu0 %v6872
        %v6986 = vpop.f32.mrf.mxu0
        %v6987 = vadd.f32 %v6898, %v6986
        %v6988 = vpop.f32.mrf.mxu0
        %v6989 = vadd.f32 %v6898, %v6988
        %6990 = vmatmul.bf16.gmra.mxu0 %v6873
        %v6991 = vpop.f32.mrf.mxu0
        %v6992 = vadd.f32 %v6898, %v6991
        %v6993 = vpop.f32.mrf.mxu0
        %v6994 = vadd.f32 %v6898, %v6993
        %6995 = vmatmul.bf16.gmra.mxu0 %v6874
        %v6996 = vpop.f32.mrf.mxu0
        %v6997 = vadd.f32 %v6898, %v6996
        %v6998 = vpop.f32.mrf.mxu0
        %v6999 = vadd.f32 %v6898, %v6998
        %7000 = vmatmul.bf16.gmra.mxu0 %v6875
        %v7001 = vpop.f32.mrf.mxu0
        %v7002 = vadd.f32 %v6898, %v7001
        %v7003 = vpop.f32.mrf.mxu0
        %v7004 = vadd.f32 %v6898, %v7003
        %7005 = vmatmul.bf16.gmra.mxu0 %v6876
        %v7006 = vpop.f32.mrf.mxu0
        %v7007 = vadd.f32 %v6898, %v7006
        %v7008 = vpop.f32.mrf.mxu0
        %v7009 = vadd.f32 %v6898, %v7008
        %7010 = vmatmul.bf16.gmra.mxu0 %v6877
        %v7011 = vpop.f32.mrf.mxu0
        %v7012 = vadd.f32 %v6898, %v7011
        %v7013 = vpop.f32.mrf.mxu0
        %v7014 = vadd.f32 %v6898, %v7013
        %7015 = vmatmul.bf16.gmra.mxu0 %v6878
        %v7016 = vpop.f32.mrf.mxu0
        %v7017 = vadd.f32 %v6898, %v7016
        %v7018 = vpop.f32.mrf.mxu0
        %v7019 = vadd.f32 %v6898, %v7018
        %7020 = vmatmul.bf16.gmra.mxu0 %v6879
        %v7021 = vpop.f32.mrf.mxu0
        %v7022 = vadd.f32 %v6898, %v7021
        %v7023 = vpop.f32.mrf.mxu0
        %v7024 = vadd.f32 %v6898, %v7023
        %7025 = vmatmul.bf16.gmra.mxu0 %v6880
        %v7026 = vpop.f32.mrf.mxu0
        %v7027 = vadd.f32 %v6898, %v7026
        %v7028 = vpop.f32.mrf.mxu0
        %v7029 = vadd.f32 %v6898, %v7028
        %7030 = vmatmul.bf16.gmra.mxu0 %v6881
        %v7031 = vpop.f32.mrf.mxu0
        %v7032 = vadd.f32 %v6898, %v7031
        %v7033 = vpop.f32.mrf.mxu0
        %v7034 = vadd.f32 %v6898, %v7033
        %7035 = vdwg.mxu0
        %v7036 = vtanh.pop %v6957
        %v7037 = vtanh.pop %v6959
        %v7038 = vtanh.pop %v6962
        %v7039 = vtanh.pop %v6964
        %v7040 = vtanh.pop %v6967
        %v7041 = vtanh.pop %v6969
        %v7042 = vtanh.pop %v6972
        %v7043 = vtanh.pop %v6974
        %v7044 = vtanh.pop %v6977
        %v7045 = vtanh.pop %v6979
        %v7046 = vtanh.pop %v6982
        %v7047 = vtanh.pop %v6984
        %v7048 = vtanh.pop %v6987
        %v7049 = vtanh.pop %v6989
        %v7050 = vtanh.pop %v6992
        %v7051 = vtanh.pop %v6994
        %v7052 = vtanh.pop %v6997
        %v7053 = vtanh.pop %v6999
        %v7054 = vtanh.pop %v7002
        %v7055 = vtanh.pop %v7004
        %v7056 = vtanh.pop %v7007
        %v7057 = vtanh.pop %v7009
        %v7058 = vtanh.pop %v7012
        %v7059 = vtanh.pop %v7014
        %v7060 = vtanh.pop %v7017
        %v7061 = vtanh.pop %v7019
        %v7062 = vtanh.pop %v7022
        %v7063 = vtanh.pop %v7024
        %v7064 = vtanh.pop %v7027
        %v7065 = vtanh.pop %v7029
        %v7066 = vtanh.pop %v7032
        %v7067 = vtanh.pop %v7034
        %v7068 = vperm.slane %v327, 5
        %v7069 = vmul.f32 %v7036, %v7068
        %v7070 = vmul.f32 %v7037, %v7068
        %v7071 = vmul.f32 %v7038, %v7068
        %v7072 = vmul.f32 %v7039, %v7068
        %v7073 = vmul.f32 %v7040, %v7068
        %v7074 = vmul.f32 %v7041, %v7068
        %v7075 = vmul.f32 %v7042, %v7068
        %v7076 = vmul.f32 %v7043, %v7068
        %v7077 = vmul.f32 %v7044, %v7068
        %v7078 = vmul.f32 %v7045, %v7068
        %v7079 = vmul.f32 %v7046, %v7068
        %v7080 = vmul.f32 %v7047, %v7068
        %v7081 = vmul.f32 %v7048, %v7068
        %v7082 = vmul.f32 %v7049, %v7068
        %v7083 = vmul.f32 %v7050, %v7068
        %v7084 = vmul.f32 %v7051, %v7068
        %v7085 = vmul.f32 %v7052, %v7068
        %v7086 = vmul.f32 %v7053, %v7068
        %v7087 = vmul.f32 %v7054, %v7068
        %v7088 = vmul.f32 %v7055, %v7068
        %v7089 = vmul.f32 %v7056, %v7068
        %v7090 = vmul.f32 %v7057, %v7068
        %v7091 = vmul.f32 %v7058, %v7068
        %v7092 = vmul.f32 %v7059, %v7068
        %v7093 = vmul.f32 %v7060, %v7068
        %v7094 = vmul.f32 %v7061, %v7068
        %v7095 = vmul.f32 %v7062, %v7068
        %v7096 = vmul.f32 %v7063, %v7068
        %v7097 = vmul.f32 %v7064, %v7068
        %v7098 = vmul.f32 %v7065, %v7068
        %v7099 = vmul.f32 %v7066, %v7068
        %v7100 = vmul.f32 %v7067, %v7068
        %7101 = vadd.xlane.f32.xlu0 %v7069
        %v7102 = vpop.xlane.xlu0 %7101
        %7103 = vadd.xlane.f32.xlu0 %v7070
        %v7104 = vpop.xlane.xlu0 %7103
        %7105 = vadd.xlane.f32.xlu0 %v7071
        %v7106 = vpop.xlane.xlu0 %7105
        %7107 = vadd.xlane.f32.xlu0 %v7072
        %v7108 = vpop.xlane.xlu0 %7107
        %7109 = vadd.xlane.f32.xlu0 %v7073
        %v7110 = vpop.xlane.xlu0 %7109
        %7111 = vadd.xlane.f32.xlu0 %v7074
        %v7112 = vpop.xlane.xlu0 %7111
        %7113 = vadd.xlane.f32.xlu0 %v7075
        %v7114 = vpop.xlane.xlu0 %7113
        %7115 = vadd.xlane.f32.xlu0 %v7076
        %v7116 = vpop.xlane.xlu0 %7115
        %7117 = vadd.xlane.f32.xlu0 %v7077
        %v7118 = vpop.xlane.xlu0 %7117
        %7119 = vadd.xlane.f32.xlu0 %v7078
        %v7120 = vpop.xlane.xlu0 %7119
        %7121 = vadd.xlane.f32.xlu0 %v7079
        %v7122 = vpop.xlane.xlu0 %7121
        %7123 = vadd.xlane.f32.xlu0 %v7080
        %v7124 = vpop.xlane.xlu0 %7123
        %7125 = vadd.xlane.f32.xlu0 %v7081
        %v7126 = vpop.xlane.xlu0 %7125
        %7127 = vadd.xlane.f32.xlu0 %v7082
        %v7128 = vpop.xlane.xlu0 %7127
        %7129 = vadd.xlane.f32.xlu0 %v7083
        %v7130 = vpop.xlane.xlu0 %7129
        %7131 = vadd.xlane.f32.xlu0 %v7084
        %v7132 = vpop.xlane.xlu0 %7131
        %7133 = vadd.xlane.f32.xlu0 %v7085
        %v7134 = vpop.xlane.xlu0 %7133
        %7135 = vadd.xlane.f32.xlu0 %v7086
        %v7136 = vpop.xlane.xlu0 %7135
        %7137 = vadd.xlane.f32.xlu0 %v7087
        %v7138 = vpop.xlane.xlu0 %7137
        %7139 = vadd.xlane.f32.xlu0 %v7088
        %v7140 = vpop.xlane.xlu0 %7139
        %7141 = vadd.xlane.f32.xlu0 %v7089
        %v7142 = vpop.xlane.xlu0 %7141
        %7143 = vadd.xlane.f32.xlu0 %v7090
        %v7144 = vpop.xlane.xlu0 %7143
        %7145 = vadd.xlane.f32.xlu0 %v7091
        %v7146 = vpop.xlane.xlu0 %7145
        %7147 = vadd.xlane.f32.xlu0 %v7092
        %v7148 = vpop.xlane.xlu0 %7147
        %7149 = vadd.xlane.f32.xlu0 %v7093
        %v7150 = vpop.xlane.xlu0 %7149
        %7151 = vadd.xlane.f32.xlu0 %v7094
        %v7152 = vpop.xlane.xlu0 %7151
        %7153 = vadd.xlane.f32.xlu0 %v7095
        %v7154 = vpop.xlane.xlu0 %7153
        %7155 = vadd.xlane.f32.xlu0 %v7096
        %v7156 = vpop.xlane.xlu0 %7155
        %7157 = vadd.xlane.f32.xlu0 %v7097
        %v7158 = vpop.xlane.xlu0 %7157
        %7159 = vadd.xlane.f32.xlu0 %v7098
        %v7160 = vpop.xlane.xlu0 %7159
        %7161 = vadd.xlane.f32.xlu0 %v7099
        %v7162 = vpop.xlane.xlu0 %7161
        %7163 = vadd.xlane.f32.xlu0 %v7100
        %v7164 = vpop.xlane.xlu0 %7163
        %v7197 = vlaneseq
        %v7198 = vand.u32 %v7197, 127
        %v7199 = vperm.slane %v7102, %v7198
        %v7200 = vadd.s32 %v7198, 4294967288
        %v7201 = vperm.slane %v7104, %v7200
        %vm7202 = vcmask 130112
        %v7203 = vsel %vm7202, %v7201, %v7199
        %v7204 = vperm.slane %v7106, %v7198
        %v7205 = vperm.slane %v7108, %v7200
        %v7206 = vsel %vm7202, %v7205, %v7204
        %v7207 = vperm.slane %v7110, %v7198
        %v7208 = vperm.slane %v7112, %v7200
        %v7209 = vsel %vm7202, %v7208, %v7207
        %v7210 = vperm.slane %v7114, %v7198
        %v7211 = vperm.slane %v7116, %v7200
        %v7212 = vsel %vm7202, %v7211, %v7210
        %v7213 = vperm.slane %v7118, %v7198
        %v7214 = vperm.slane %v7120, %v7200
        %v7215 = vsel %vm7202, %v7214, %v7213
        %v7216 = vperm.slane %v7122, %v7198
        %v7217 = vperm.slane %v7124, %v7200
        %v7218 = vsel %vm7202, %v7217, %v7216
        %v7219 = vperm.slane %v7126, %v7198
        %v7220 = vperm.slane %v7128, %v7200
        %v7221 = vsel %vm7202, %v7220, %v7219
        %v7222 = vperm.slane %v7130, %v7198
        %v7223 = vperm.slane %v7132, %v7200
        %v7224 = vsel %vm7202, %v7223, %v7222
        %v7225 = vperm.slane %v7134, %v7198
        %v7226 = vperm.slane %v7136, %v7200
        %v7227 = vsel %vm7202, %v7226, %v7225
        %v7228 = vperm.slane %v7138, %v7198
        %v7229 = vperm.slane %v7140, %v7200
        %v7230 = vsel %vm7202, %v7229, %v7228
        %v7231 = vperm.slane %v7142, %v7198
        %v7232 = vperm.slane %v7144, %v7200
        %v7233 = vsel %vm7202, %v7232, %v7231
        %v7234 = vperm.slane %v7146, %v7198
        %v7235 = vperm.slane %v7148, %v7200
        %v7236 = vsel %vm7202, %v7235, %v7234
        %v7237 = vperm.slane %v7150, %v7198
        %v7238 = vperm.slane %v7152, %v7200
        %v7239 = vsel %vm7202, %v7238, %v7237
        %v7240 = vperm.slane %v7154, %v7198
        %v7241 = vperm.slane %v7156, %v7200
        %v7242 = vsel %vm7202, %v7241, %v7240
        %v7243 = vperm.slane %v7158, %v7198
        %v7244 = vperm.slane %v7160, %v7200
        %v7245 = vsel %vm7202, %v7244, %v7243
        %v7246 = vperm.slane %v7162, %v7198
        %v7247 = vperm.slane %v7164, %v7200
        %v7248 = vsel %vm7202, %v7247, %v7246
        %vm7249 = vcmask 1041409
        %v7250 = vsel %vm7249, %v7206, %v7203
        %vm7251 = vcmask 1042434
        %v7252 = vsel %vm7251, %v7209, %v7250
        %vm7253 = vcmask 1043459
        %v7254 = vsel %vm7253, %v7212, %v7252
        %vm7255 = vcmask 1044484
        %v7256 = vsel %vm7255, %v7215, %v7254
        %vm7257 = vcmask 1045509
        %v7258 = vsel %vm7257, %v7218, %v7256
        %vm7259 = vcmask 1046534
        %v7260 = vsel %vm7259, %v7221, %v7258
        %vm7261 = vcmask 1047559
        %v7262 = vsel %vm7261, %v7224, %v7260
        %v7263 = vsel %vm7249, %v7230, %v7227
        %v7264 = vsel %vm7251, %v7233, %v7263
        %v7265 = vsel %vm7253, %v7236, %v7264
        %v7266 = vsel %vm7255, %v7239, %v7265
        %v7267 = vsel %vm7257, %v7242, %v7266
        %v7268 = vsel %vm7259, %v7245, %v7267
        %v7269 = vsel %vm7261, %v7248, %v7268
        %v7272 = vsel %vm295, %v7262, -1e+09
        %v7273 = vsel %vm296, %v7269, -1e+09
        %v7274 = vsel %vm1605, %v7272, -inf
        %7275 = vmax.xlane.f32.xlu0 %v7274
        %v7276 = vpop.xlane.xlu0 %7275
        %v7277 = vsel %vm1605, %v7273, -inf
        %7278 = vmax.xlane.f32.xlu0 %v7277
        %v7279 = vpop.xlane.xlu0 %7278
        %v7280 = vsub.f32 %v7272, %v7276
        %v7281 = vsub.f32 %v7273, %v7279
        %v7282 = vmul.f32 %v7280, 1.442695
        %v7283 = vpow.pop %v7282
        %v7284 = vmul.f32 %v7281, 1.442695
        %v7285 = vpow.pop %v7284
        %v7286 = vsel %vm1605, %v7283, 0.0
        %7287 = vadd.xlane.f32.xlu0 %v7286
        %v7288 = vpop.xlane.xlu0 %7287
        %v7289 = vsel %vm1605, %v7285, 0.0
        %7290 = vadd.xlane.f32.xlu0 %v7289
        %v7291 = vpop.xlane.xlu0 %7290
        %v7292 = vrcp.pop %v7288
        %v7293 = vrcp.pop %v7291
        %v7294 = vmul.f32 %v7283, %v7292
        %v7295 = vmul.f32 %v7285, %v7293
        %v7296 = vperm.slane %v7294, 0
        %v7297 = vlaneseq
        %v7298 = vshrl.u32 %v7297, 7
        %7300 = vset.pattern.permute.xlu0 %v7298
        %7301 = vperm.xlu0 %7300, %v7296
        %v7302 = vpop.permute.xlu0 %7301
        %v7303 = vlaneseq
        %v7304 = vshrl.u32 %v7303, 7
        %v7305 = vadd.s32 %v7304, 8
        %7306 = vset.pattern.permute.xlu0 %v7305
        %7307 = vperm.xlu0 %7306, %v7296
        %v7308 = vpop.permute.xlu0 %7307
        %v7309 = vperm.slane %v7294, 1
        %v7310 = vlaneseq
        %v7311 = vshrl.u32 %v7310, 7
        %7313 = vset.pattern.permute.xlu0 %v7311
        %7314 = vperm.xlu0 %7313, %v7309
        %v7315 = vpop.permute.xlu0 %7314
        %v7316 = vlaneseq
        %v7317 = vshrl.u32 %v7316, 7
        %v7318 = vadd.s32 %v7317, 8
        %7319 = vset.pattern.permute.xlu0 %v7318
        %7320 = vperm.xlu0 %7319, %v7309
        %v7321 = vpop.permute.xlu0 %7320
        %v7322 = vperm.slane %v7294, 2
        %v7323 = vlaneseq
        %v7324 = vshrl.u32 %v7323, 7
        %7326 = vset.pattern.permute.xlu0 %v7324
        %7327 = vperm.xlu0 %7326, %v7322
        %v7328 = vpop.permute.xlu0 %7327
        %v7329 = vlaneseq
        %v7330 = vshrl.u32 %v7329, 7
        %v7331 = vadd.s32 %v7330, 8
        %7332 = vset.pattern.permute.xlu0 %v7331
        %7333 = vperm.xlu0 %7332, %v7322
        %v7334 = vpop.permute.xlu0 %7333
        %v7335 = vperm.slane %v7294, 3
        %v7336 = vlaneseq
        %v7337 = vshrl.u32 %v7336, 7
        %7339 = vset.pattern.permute.xlu0 %v7337
        %7340 = vperm.xlu0 %7339, %v7335
        %v7341 = vpop.permute.xlu0 %7340
        %v7342 = vlaneseq
        %v7343 = vshrl.u32 %v7342, 7
        %v7344 = vadd.s32 %v7343, 8
        %7345 = vset.pattern.permute.xlu0 %v7344
        %7346 = vperm.xlu0 %7345, %v7335
        %v7347 = vpop.permute.xlu0 %7346
        %v7348 = vperm.slane %v7294, 4
        %v7349 = vlaneseq
        %v7350 = vshrl.u32 %v7349, 7
        %7352 = vset.pattern.permute.xlu0 %v7350
        %7353 = vperm.xlu0 %7352, %v7348
        %v7354 = vpop.permute.xlu0 %7353
        %v7355 = vlaneseq
        %v7356 = vshrl.u32 %v7355, 7
        %v7357 = vadd.s32 %v7356, 8
        %7358 = vset.pattern.permute.xlu0 %v7357
        %7359 = vperm.xlu0 %7358, %v7348
        %v7360 = vpop.permute.xlu0 %7359
        %v7361 = vperm.slane %v7294, 5
        %v7362 = vlaneseq
        %v7363 = vshrl.u32 %v7362, 7
        %7365 = vset.pattern.permute.xlu0 %v7363
        %7366 = vperm.xlu0 %7365, %v7361
        %v7367 = vpop.permute.xlu0 %7366
        %v7368 = vlaneseq
        %v7369 = vshrl.u32 %v7368, 7
        %v7370 = vadd.s32 %v7369, 8
        %7371 = vset.pattern.permute.xlu0 %v7370
        %7372 = vperm.xlu0 %7371, %v7361
        %v7373 = vpop.permute.xlu0 %7372
        %v7374 = vperm.slane %v7294, 6
        %v7375 = vlaneseq
        %v7376 = vshrl.u32 %v7375, 7
        %7378 = vset.pattern.permute.xlu0 %v7376
        %7379 = vperm.xlu0 %7378, %v7374
        %v7380 = vpop.permute.xlu0 %7379
        %v7381 = vlaneseq
        %v7382 = vshrl.u32 %v7381, 7
        %v7383 = vadd.s32 %v7382, 8
        %7384 = vset.pattern.permute.xlu0 %v7383
        %7385 = vperm.xlu0 %7384, %v7374
        %v7386 = vpop.permute.xlu0 %7385
        %v7387 = vperm.slane %v7294, 7
        %v7388 = vlaneseq
        %v7389 = vshrl.u32 %v7388, 7
        %7391 = vset.pattern.permute.xlu0 %v7389
        %7392 = vperm.xlu0 %7391, %v7387
        %v7393 = vpop.permute.xlu0 %7392
        %v7394 = vlaneseq
        %v7395 = vshrl.u32 %v7394, 7
        %v7396 = vadd.s32 %v7395, 8
        %7397 = vset.pattern.permute.xlu0 %v7396
        %7398 = vperm.xlu0 %7397, %v7387
        %v7399 = vpop.permute.xlu0 %7398
        %v7400 = vperm.slane %v7295, 0
        %v7401 = vlaneseq
        %v7402 = vshrl.u32 %v7401, 7
        %7404 = vset.pattern.permute.xlu0 %v7402
        %7405 = vperm.xlu0 %7404, %v7400
        %v7406 = vpop.permute.xlu0 %7405
        %v7407 = vlaneseq
        %v7408 = vshrl.u32 %v7407, 7
        %v7409 = vadd.s32 %v7408, 8
        %7410 = vset.pattern.permute.xlu0 %v7409
        %7411 = vperm.xlu0 %7410, %v7400
        %v7412 = vpop.permute.xlu0 %7411
        %v7413 = vperm.slane %v7295, 1
        %v7414 = vlaneseq
        %v7415 = vshrl.u32 %v7414, 7
        %7417 = vset.pattern.permute.xlu0 %v7415
        %7418 = vperm.xlu0 %7417, %v7413
        %v7419 = vpop.permute.xlu0 %7418
        %v7420 = vlaneseq
        %v7421 = vshrl.u32 %v7420, 7
        %v7422 = vadd.s32 %v7421, 8
        %7423 = vset.pattern.permute.xlu0 %v7422
        %7424 = vperm.xlu0 %7423, %v7413
        %v7425 = vpop.permute.xlu0 %7424
        %v7426 = vperm.slane %v7295, 2
        %v7427 = vlaneseq
        %v7428 = vshrl.u32 %v7427, 7
        %7430 = vset.pattern.permute.xlu0 %v7428
        %7431 = vperm.xlu0 %7430, %v7426
        %v7432 = vpop.permute.xlu0 %7431
        %v7433 = vlaneseq
        %v7434 = vshrl.u32 %v7433, 7
        %v7435 = vadd.s32 %v7434, 8
        %7436 = vset.pattern.permute.xlu0 %v7435
        %7437 = vperm.xlu0 %7436, %v7426
        %v7438 = vpop.permute.xlu0 %7437
        %v7439 = vperm.slane %v7295, 3
        %v7440 = vlaneseq
        %v7441 = vshrl.u32 %v7440, 7
        %7443 = vset.pattern.permute.xlu0 %v7441
        %7444 = vperm.xlu0 %7443, %v7439
        %v7445 = vpop.permute.xlu0 %7444
        %v7446 = vlaneseq
        %v7447 = vshrl.u32 %v7446, 7
        %v7448 = vadd.s32 %v7447, 8
        %7449 = vset.pattern.permute.xlu0 %v7448
        %7450 = vperm.xlu0 %7449, %v7439
        %v7451 = vpop.permute.xlu0 %7450
        %v7452 = vperm.slane %v7295, 4
        %v7453 = vlaneseq
        %v7454 = vshrl.u32 %v7453, 7
        %7456 = vset.pattern.permute.xlu0 %v7454
        %7457 = vperm.xlu0 %7456, %v7452
        %v7458 = vpop.permute.xlu0 %7457
        %v7459 = vlaneseq
        %v7460 = vshrl.u32 %v7459, 7
        %v7461 = vadd.s32 %v7460, 8
        %7462 = vset.pattern.permute.xlu0 %v7461
        %7463 = vperm.xlu0 %7462, %v7452
        %v7464 = vpop.permute.xlu0 %7463
        %v7465 = vperm.slane %v7295, 5
        %v7466 = vlaneseq
        %v7467 = vshrl.u32 %v7466, 7
        %7469 = vset.pattern.permute.xlu0 %v7467
        %7470 = vperm.xlu0 %7469, %v7465
        %v7471 = vpop.permute.xlu0 %7470
        %v7472 = vlaneseq
        %v7473 = vshrl.u32 %v7472, 7
        %v7474 = vadd.s32 %v7473, 8
        %7475 = vset.pattern.permute.xlu0 %v7474
        %7476 = vperm.xlu0 %7475, %v7465
        %v7477 = vpop.permute.xlu0 %7476
        %v7478 = vperm.slane %v7295, 6
        %v7479 = vlaneseq
        %v7480 = vshrl.u32 %v7479, 7
        %7482 = vset.pattern.permute.xlu0 %v7480
        %7483 = vperm.xlu0 %7482, %v7478
        %v7484 = vpop.permute.xlu0 %7483
        %v7485 = vlaneseq
        %v7486 = vshrl.u32 %v7485, 7
        %v7487 = vadd.s32 %v7486, 8
        %7488 = vset.pattern.permute.xlu0 %v7487
        %7489 = vperm.xlu0 %7488, %v7478
        %v7490 = vpop.permute.xlu0 %7489
        %v7491 = vperm.slane %v7295, 7
        %v7492 = vlaneseq
        %v7493 = vshrl.u32 %v7492, 7
        %7495 = vset.pattern.permute.xlu0 %v7493
        %7496 = vperm.xlu0 %7495, %v7491
        %v7497 = vpop.permute.xlu0 %7496
        %v7498 = vlaneseq
        %v7499 = vshrl.u32 %v7498, 7
        %v7500 = vadd.s32 %v7499, 8
        %7501 = vset.pattern.permute.xlu0 %v7500
        %7502 = vperm.xlu0 %7501, %v7491
        %v7503 = vpop.permute.xlu0 %7502
        %v7504 = vmul.f32 %v7302, %v6787
        %v7505 = vmul.f32 %v7308, %v6789
        %v7506 = vmul.f32 %v7315, %v6792
        %v7507 = vmul.f32 %v7321, %v6794
        %v7508 = vmul.f32 %v7328, %v6797
        %v7509 = vmul.f32 %v7334, %v6799
        %v7510 = vmul.f32 %v7341, %v6802
        %v7511 = vmul.f32 %v7347, %v6804
        %v7512 = vmul.f32 %v7354, %v6807
        %v7513 = vmul.f32 %v7360, %v6809
        %v7514 = vmul.f32 %v7367, %v6812
        %v7515 = vmul.f32 %v7373, %v6814
        %v7516 = vmul.f32 %v7380, %v6817
        %v7517 = vmul.f32 %v7386, %v6819
        %v7518 = vmul.f32 %v7393, %v6822
        %v7519 = vmul.f32 %v7399, %v6824
        %v7520 = vmul.f32 %v7406, %v6827
        %v7521 = vmul.f32 %v7412, %v6829
        %v7522 = vmul.f32 %v7419, %v6832
        %v7523 = vmul.f32 %v7425, %v6834
        %v7524 = vmul.f32 %v7432, %v6837
        %v7525 = vmul.f32 %v7438, %v6839
        %v7526 = vmul.f32 %v7445, %v6842
        %v7527 = vmul.f32 %v7451, %v6844
        %v7528 = vmul.f32 %v7458, %v6847
        %v7529 = vmul.f32 %v7464, %v6849
        %v7530 = vmul.f32 %v7471, %v6852
        %v7531 = vmul.f32 %v7477, %v6854
        %v7532 = vmul.f32 %v7484, %v6857
        %v7533 = vmul.f32 %v7490, %v6859
        %v7534 = vmul.f32 %v7497, %v6862
        %v7535 = vmul.f32 %v7503, %v6864
        %v7536 = vadd.f32 %v7504, %v7505
        %v7537 = vrot.slane %v7536, 4
        %v7538 = vadd.f32 %v7536, %v7537
        %v7539 = vrot.slane %v7538, 2
        %v7540 = vadd.f32 %v7538, %v7539
        %v7541 = vrot.slane %v7540, 1
        %v7542 = vadd.f32 %v7540, %v7541
        %v7543 = vadd.f32 %v7506, %v7507
        %v7544 = vrot.slane %v7543, 4
        %v7545 = vadd.f32 %v7543, %v7544
        %v7546 = vrot.slane %v7545, 2
        %v7547 = vadd.f32 %v7545, %v7546
        %v7548 = vrot.slane %v7547, 1
        %v7549 = vadd.f32 %v7547, %v7548
        %v7550 = vadd.f32 %v7508, %v7509
        %v7551 = vrot.slane %v7550, 4
        %v7552 = vadd.f32 %v7550, %v7551
        %v7553 = vrot.slane %v7552, 2
        %v7554 = vadd.f32 %v7552, %v7553
        %v7555 = vrot.slane %v7554, 1
        %v7556 = vadd.f32 %v7554, %v7555
        %v7557 = vadd.f32 %v7510, %v7511
        %v7558 = vrot.slane %v7557, 4
        %v7559 = vadd.f32 %v7557, %v7558
        %v7560 = vrot.slane %v7559, 2
        %v7561 = vadd.f32 %v7559, %v7560
        %v7562 = vrot.slane %v7561, 1
        %v7563 = vadd.f32 %v7561, %v7562
        %v7564 = vadd.f32 %v7512, %v7513
        %v7565 = vrot.slane %v7564, 4
        %v7566 = vadd.f32 %v7564, %v7565
        %v7567 = vrot.slane %v7566, 2
        %v7568 = vadd.f32 %v7566, %v7567
        %v7569 = vrot.slane %v7568, 1
        %v7570 = vadd.f32 %v7568, %v7569
        %v7571 = vadd.f32 %v7514, %v7515
        %v7572 = vrot.slane %v7571, 4
        %v7573 = vadd.f32 %v7571, %v7572
        %v7574 = vrot.slane %v7573, 2
        %v7575 = vadd.f32 %v7573, %v7574
        %v7576 = vrot.slane %v7575, 1
        %v7577 = vadd.f32 %v7575, %v7576
        %v7578 = vadd.f32 %v7516, %v7517
        %v7579 = vrot.slane %v7578, 4
        %v7580 = vadd.f32 %v7578, %v7579
        %v7581 = vrot.slane %v7580, 2
        %v7582 = vadd.f32 %v7580, %v7581
        %v7583 = vrot.slane %v7582, 1
        %v7584 = vadd.f32 %v7582, %v7583
        %v7585 = vadd.f32 %v7518, %v7519
        %v7586 = vrot.slane %v7585, 4
        %v7587 = vadd.f32 %v7585, %v7586
        %v7588 = vrot.slane %v7587, 2
        %v7589 = vadd.f32 %v7587, %v7588
        %v7590 = vrot.slane %v7589, 1
        %v7591 = vadd.f32 %v7589, %v7590
        %v7592 = vadd.f32 %v7520, %v7521
        %v7593 = vrot.slane %v7592, 4
        %v7594 = vadd.f32 %v7592, %v7593
        %v7595 = vrot.slane %v7594, 2
        %v7596 = vadd.f32 %v7594, %v7595
        %v7597 = vrot.slane %v7596, 1
        %v7598 = vadd.f32 %v7596, %v7597
        %v7599 = vadd.f32 %v7522, %v7523
        %v7600 = vrot.slane %v7599, 4
        %v7601 = vadd.f32 %v7599, %v7600
        %v7602 = vrot.slane %v7601, 2
        %v7603 = vadd.f32 %v7601, %v7602
        %v7604 = vrot.slane %v7603, 1
        %v7605 = vadd.f32 %v7603, %v7604
        %v7606 = vadd.f32 %v7524, %v7525
        %v7607 = vrot.slane %v7606, 4
        %v7608 = vadd.f32 %v7606, %v7607
        %v7609 = vrot.slane %v7608, 2
        %v7610 = vadd.f32 %v7608, %v7609
        %v7611 = vrot.slane %v7610, 1
        %v7612 = vadd.f32 %v7610, %v7611
        %v7613 = vadd.f32 %v7526, %v7527
        %v7614 = vrot.slane %v7613, 4
        %v7615 = vadd.f32 %v7613, %v7614
        %v7616 = vrot.slane %v7615, 2
        %v7617 = vadd.f32 %v7615, %v7616
        %v7618 = vrot.slane %v7617, 1
        %v7619 = vadd.f32 %v7617, %v7618
        %v7620 = vadd.f32 %v7528, %v7529
        %v7621 = vrot.slane %v7620, 4
        %v7622 = vadd.f32 %v7620, %v7621
        %v7623 = vrot.slane %v7622, 2
        %v7624 = vadd.f32 %v7622, %v7623
        %v7625 = vrot.slane %v7624, 1
        %v7626 = vadd.f32 %v7624, %v7625
        %v7627 = vadd.f32 %v7530, %v7531
        %v7628 = vrot.slane %v7627, 4
        %v7629 = vadd.f32 %v7627, %v7628
        %v7630 = vrot.slane %v7629, 2
        %v7631 = vadd.f32 %v7629, %v7630
        %v7632 = vrot.slane %v7631, 1
        %v7633 = vadd.f32 %v7631, %v7632
        %v7634 = vadd.f32 %v7532, %v7533
        %v7635 = vrot.slane %v7634, 4
        %v7636 = vadd.f32 %v7634, %v7635
        %v7637 = vrot.slane %v7636, 2
        %v7638 = vadd.f32 %v7636, %v7637
        %v7639 = vrot.slane %v7638, 1
        %v7640 = vadd.f32 %v7638, %v7639
        %v7641 = vadd.f32 %v7534, %v7535
        %v7642 = vrot.slane %v7641, 4
        %v7643 = vadd.f32 %v7641, %v7642
        %v7644 = vrot.slane %v7643, 2
        %v7645 = vadd.f32 %v7643, %v7644
        %v7646 = vrot.slane %v7645, 1
        %v7647 = vadd.f32 %v7645, %v7646
        %v7664 = vsel %vm7249, %v7549, %v7542
        %v7665 = vsel %vm7251, %v7556, %v7664
        %v7666 = vsel %vm7253, %v7563, %v7665
        %v7667 = vsel %vm7255, %v7570, %v7666
        %v7668 = vsel %vm7257, %v7577, %v7667
        %v7669 = vsel %vm7259, %v7584, %v7668
        %v7670 = vsel %vm7261, %v7591, %v7669
        %v7671 = vsel %vm7249, %v7605, %v7598
        %v7672 = vsel %vm7251, %v7612, %v7671
        %v7673 = vsel %vm7253, %v7619, %v7672
        %v7674 = vsel %vm7255, %v7626, %v7673
        %v7675 = vsel %vm7257, %v7633, %v7674
        %v7676 = vsel %vm7259, %v7640, %v7675
        %v7677 = vsel %vm7261, %v7647, %v7676
        %7680 = vst [vmem:[%s251] sm:$0xff] %v7670
        %7681 = vst [vmem:[%s251 + $0x8] sm:$0xff] %v7677
        %s7682 = sand.u32 %s124, 1
        %s7683 = scalar_lea.sflag [#allocation4], %s7682
        %s7684 = sand.u32 %s124, 1
        %s7685 = smul.addr %s7684, 16
        %s7686 = scalar_lea.vmem [#allocation7], %s7685
        // Predicated region
        $region45: #{tpu_custom_call.1} parent=35 // pred_check
          %p7687 = pneg %p134
        $region46: #{tpu_custom_call.1} parent=35 // pred_check_branch
          %7689 = sbr.rel (%p7687) target = $region48
        $region47: #{tpu_custom_call.1} parent=35 // pred_region
          %s7690 = smul.u32 2, %s22
          %7692 = vsyncadd %s7683, 0
          %s7693 = smul.addr %s7690, 8
          %s7694 = scalar_lea.hbm %s4, %s7693
          %s7695 = sshll.u32 %s7686, 4
          %s7696 = int_to_ptr.vmem [resolvable:$true] %s7695
          %s7697 = sshll.u32 %s7694, 4
          %s7698 = int_to_ptr.hbm [resolvable:$true] %s7697
          %7703 = dma.vmem_to_hbm [thread:$0]  %s7696, 256, %s7698, %s7683, 128, 128, 8
        $region48: #{tpu_custom_call.1} parent=35 // pred_fallthru
          _
      $region36: #{tpu_custom_call.1} parent=5 // pred_fallthru
        _
      %p7704 = scmp.le.s32.totalorder 2, %s17
      // Predicated region
      $region49: #{tpu_custom_call.1} parent=5 // pred_check
        %p7705 = pneg %p7704
      $region50: #{tpu_custom_call.1} parent=5 // pred_check_branch
        %7707 = sbr.rel (%p7705) target = $region52
      $region51: #{tpu_custom_call.1} parent=5 // pred_region
        %s7708 = ssub.s32 %s17, 2
        // Predicated region
        $region53: #{tpu_custom_call.1} parent=51 // pred_check
          %p7709 = pneg %p140
        $region54: #{tpu_custom_call.1} parent=51 // pred_check_branch
          %7711 = sbr.rel (%p7709) target = $region56
        $region55: #{tpu_custom_call.1} parent=51 // pred_region
          %s7712 = sand.u32 %s125, 1
          %s7713 = scalar_lea.sflag [#allocation4], %s7712
          %s7714 = sand.u32 %s125, 1
          %s7715 = smul.addr %s7714, 16
          %s7716 = scalar_lea.vmem [#allocation7], %s7715
          %7718 = dma.done %s7713, 256
        $region56: #{tpu_custom_call.1} parent=51 // pred_fallthru
          _
      $region52: #{tpu_custom_call.1} parent=5 // pred_fallthru
        _
    $region6: #{tpu_custom_call.1} parent=1 // loop_footer
      %s21 = sadd.s32 1, %s17
    $region7: #{tpu_custom_call.1} parent=1 // loop_footer_branch
      %16 = sbr.rel target = $region3
    $region8: #{tpu_custom_call.1} parent=1 // loop_exit
      _
    %7719 = vsyncpa [#allocation3], 1
    %s7720 = scalar_lea.sflag [#allocation3], 1
    %7721 = vsyncpa %s7720, 1
    %7722 = vsyncpa [#allocation6], 1
    %7723 = vsyncpa [#allocation4], 1
    %s7724 = scalar_lea.sflag [#allocation4], 1
    %7725 = vsyncpa %s7724, 1

</llo_original>
